<compile_context>
chip_gen: v7x
topology: tpu7x:2x2x1
jax: 0.10.0
libtpu: 0.0.40
codegen_flags: <defaults>
</compile_context>

<pallas_src>
import jax
import jax.numpy as jnp
import numpy as np
from jax.experimental import pallas as pl
from jax.experimental.pallas import tpu as pltpu

_BN_EPS = 1e-5


# ----------------------------------------------------------------------------
# Pallas kernels
# ----------------------------------------------------------------------------
def _conv_gemm_kernel(a_ref, w_ref, b_ref, o_ref):
    # A tile: (tm, g*K) bf16 row-grouped im2col patches; W: (g*K, 128) bf16
    # block-diagonal with BN scale folded in; b: (1, 128) f32 folded BN bias.
    y = jnp.dot(a_ref[...], w_ref[...],
                preferred_element_type=jnp.float32) + b_ref[...]
    o_ref[...] = jnp.maximum(y, 0.2 * y).astype(o_ref.dtype)   # LeakyReLU(0.2)


def _conv5_head_kernel(a_ref, w_ref, b_ref, wexp_ref, sel_ref, o_ref):
    # Fused conv5 + (fc, aux_fc, embedding projection) head.
    #   a:    (M5, K5)      bf16 im2col patches of conv4 output (M5 = B*49)
    #   w:    (K5, C5)      bf16 conv5 weight with BN scale folded in
    #   b:    (1,  C5)      f32 folded BN bias
    #   wexp: (P, M5, C5)   f32 per-row head planes (fc, aux_0..aux_{C-1}, embed)
    #   sel:  (M5, B)       f32 one-hot batch selector
    #   out:  (P, B)        f32: row 0 = fc, rows 1..C = aux, row C+1 = proj
    y = jnp.dot(a_ref[...], w_ref[...],
                preferred_element_type=jnp.float32) + b_ref[...]
    act = jnp.maximum(y, 0.2 * y)                               # (M5, C5) f32
    rowdot = jnp.sum(act[None, :, :] * wexp_ref[...], axis=-1)  # (P, M5)
    o_ref[...] = jnp.dot(rowdot, sel_ref[...],
                         preferred_element_type=jnp.float32)    # (P, B)


# ----------------------------------------------------------------------------
# Helpers
# ----------------------------------------------------------------------------
def _pick_tile_rows(m, target_steps=4, min_tm=64, max_tm=512):
    """Row tile: multiple of 16, 64..512 rows, ~4 grid steps when possible."""
    tm = -(-m // target_steps)
    tm = max(min_tm, min(max_tm, tm))
    tm = -(-tm // 16) * 16
    tm = min(tm, -(-m // 16) * 16)
    mp = -(-m // tm) * tm
    return tm, mp


def _im2col(x_nhwc, kh, kw, stride, pad):
    n, h, w, cin = x_nhwc.shape
    oh = (h + 2 * pad - kh) // stride + 1
    ow = (w + 2 * pad - kw) // stride + 1
    xp = jnp.pad(x_nhwc.astype(jnp.bfloat16),
                 ((0, 0), (pad, pad), (pad, pad), (0, 0)))
    cols = [xp[:, i:i + stride * oh:stride, j:j + stride * ow:stride, :]
            for i in range(kh) for j in range(kw)]
    patches = jnp.stack(cols, axis=3)              # (n, oh, ow, kh*kw, cin)
    return patches.reshape(n * oh * ow, kh * kw * cin), oh, ow


# ----------------------------------------------------------------------------
# Conv (+ folded BN) + LeakyReLU as a lane-dense GEMM
# ----------------------------------------------------------------------------
def conv2d_bn_lrelu(x_nhwc, w_bd, bias, *, stride=2, pad=2, kh=5, kw=5):
    n, h, w, cin = x_nhwc.shape
    k = kh * kw * cin
    gk, lanes = w_bd.shape
    g = gk // k                                    # row-group factor (128/Cout)
    cout = lanes // g

    a, oh, ow = _im2col(x_nhwc, kh, kw, stride, pad)
    m = n * oh * ow

    mr = -(-m // g)                                # rows after g-regroup
    tm, mrp = _pick_tile_rows(mr)
    pad_rows = mrp * g - m
    if pad_rows:
        a = jnp.pad(a, ((0, pad_rows), (0, 0)))
    a = a.reshape(mrp, g * k)                      # free row-major regroup

    out = pl.pallas_call(
        _conv_gemm_kernel,
        out_shape=jax.ShapeDtypeStruct((mrp, lanes), jnp.bfloat16),
        grid_spec=pltpu.PrefetchScalarGridSpec(
            num_scalar_prefetch=0,
            grid=(mrp // tm,),
            in_specs=[
                pl.BlockSpec((tm, g * k), lambda i: (i, 0)),
                pl.BlockSpec((g * k, lanes), lambda i: (0, 0)),
                pl.BlockSpec((1, lanes), lambda i: (0, 0)),
            ],
            out_specs=pl.BlockSpec((tm, lanes), lambda i: (i, 0)),
        ),
        compiler_params=pltpu.CompilerParams(
            dimension_semantics=("parallel",),
            vmem_limit_bytes=32 * 1024 * 1024),
        cost_estimate=pl.CostEstimate(
            flops=2 * mrp * (g * k) * lanes,
            transcendentals=0,
            bytes_accessed=(mrp * g * k + g * k * lanes + mrp * lanes) * 2),
    )(a, w_bd, bias)

    # (mrp, 128) viewed as (mrp*g, cout) is the original output, row for row.
    return out.reshape(mrp * g, cout)[:m].reshape(n, oh, ow, cout)


# ----------------------------------------------------------------------------
# Fused conv5 + head (fc, aux classifier, label-embedding projection)
# ----------------------------------------------------------------------------
def conv5_and_head(x_nhwc, w5, b5, head_planes, embed_pc, labels,
                   *, stride=2, pad=2, kh=5, kw=5):
    n = x_nhwc.shape[0]
    c5 = w5.shape[1]
    a, oh, ow = _im2col(x_nhwc, kh, kw, stride, pad)   # (n*hw, 25*cin) bf16
    hw = oh * ow
    m = n * hw
    k5 = a.shape[1]

    nplanes = head_planes.shape[0]                     # 1 + num_classes
    # Per-row head planes in (batch, position) row order matching `a`'s rows.
    wb = jnp.broadcast_to(head_planes[:, None], (nplanes, n, hw, c5))
    wb = wb.reshape(nplanes, m, c5)
    eb = embed_pc[labels].reshape(1, m, c5)            # label-gathered embedding
    wexp = jnp.concatenate([wb, eb], axis=0)           # (nplanes+1, m, c5) f32
    sel = (jnp.arange(m)[:, None] // hw ==
           jnp.arange(n)[None, :]).astype(jnp.float32)  # (m, n) one-hot batch

    p = nplanes + 1
    z = pl.pallas_call(
        _conv5_head_kernel,
        out_shape=jax.ShapeDtypeStruct((p, n), jnp.float32),
        grid_spec=pltpu.PrefetchScalarGridSpec(
            num_scalar_prefetch=0,
            grid=(1,),
            in_specs=[
                pl.BlockSpec((m, k5), lambda i: (0, 0)),
                pl.BlockSpec((k5, c5), lambda i: (0, 0)),
                pl.BlockSpec((1, c5), lambda i: (0, 0)),
                pl.BlockSpec((p, m, c5), lambda i: (0, 0, 0)),
                pl.BlockSpec((m, n), lambda i: (0, 0)),
            ],
            out_specs=pl.BlockSpec((p, n), lambda i: (0, 0)),
        ),
        compiler_params=pltpu.CompilerParams(
            dimension_semantics=("arbitrary",),
            vmem_limit_bytes=32 * 1024 * 1024),
        cost_estimate=pl.CostEstimate(
            flops=2 * m * k5 * c5 + 2 * p * m * c5 + 2 * p * m * n,
            transcendentals=0,
            bytes_accessed=(m * k5 + k5 * c5) * 2 + p * m * c5 * 4 + m * n * 4),
    )(a, w5, b5, wexp, sel)

    final_logit = (z[0] + z[p - 1])[:, None]           # fc(x) + <x, embed(label)>
    class_logits = jnp.transpose(z[1:nplanes])         # (n, num_classes)
    return final_logit, class_logits


# ----------------------------------------------------------------------------
# One-time parameter preparation (hoisted out of the per-call graph)
# ----------------------------------------------------------------------------
def prepare_params(params, num_classes):
    d = params["w1"].shape[0]
    prep = {}

    def fold(w_oihw, scale, bias):
        cout, cin, kh, kw = w_oihw.shape
        k = kh * kw * cin
        wm = jnp.transpose(w_oihw, (2, 3, 1, 0)).reshape(k, cout) * scale[None, :]
        g = 128 // cout if (cout < 128 and 128 % cout == 0) else 1
        if g > 1:                                      # lane-dense block-diagonal
            wm = jnp.kron(jnp.eye(g, dtype=wm.dtype), wm)   # (g*k, g*cout)
            bias = jnp.tile(bias, g)
        return wm.astype(jnp.bfloat16), bias.reshape(1, -1).astype(jnp.float32)

    prep["w1"], prep["b1"] = fold(params["w1"],
                                  jnp.ones((d,), jnp.float32),
                                  jnp.zeros((d,), jnp.float32))
    for i in (2, 3, 4):
        gamma, beta, mean, var = params[f"bn{i}"]
        scale = gamma / jnp.sqrt(var + _BN_EPS)
        prep[f"w{i}"], prep[f"b{i}"] = fold(params[f"w{i}"], scale,
                                            beta - mean * scale)

    # conv5 (fused with head) keeps its natural 16*d output lanes.
    gamma, beta, mean, var = params["bn5"]
    scale = gamma / jnp.sqrt(var + _BN_EPS)
    c5 = params["w5"].shape[0]
    w5 = jnp.transpose(params["w5"], (2, 3, 1, 0)).reshape(-1, c5) * scale[None, :]
    prep["w5"] = w5.astype(jnp.bfloat16)
    prep["b5"] = (beta - mean * scale).reshape(1, c5).astype(jnp.float32)

    # Head parameters permuted from PyTorch CHW-flatten order to
    # (spatial position, channel) order used by the fused kernel.
    hw = params["fc_w"].shape[1] // c5
    fcp = params["fc_w"].reshape(1, c5, hw).transpose(0, 2, 1)
    auxp = params["aux_w"].reshape(num_classes, c5, hw).transpose(0, 2, 1)
    prep["head_planes"] = jnp.concatenate([fcp, auxp], 0).astype(jnp.float32)
    prep["embed_pc"] = params["embed"].reshape(num_classes, c5, hw) \
                                      .transpose(0, 2, 1).astype(jnp.float32)
    return prep


# ----------------------------------------------------------------------------
# Full forward (eval mode)
# ----------------------------------------------------------------------------
def discriminator_forward(prep, x_nchw, labels):
    x = jnp.transpose(x_nchw, (0, 2, 3, 1))            # NCHW -> NHWC
    for i in (1, 2, 3, 4):
        x = conv2d_bn_lrelu(x, prep[f"w{i}"], prep[f"b{i}"])
    return conv5_and_head(x, prep["w5"], prep["b5"],
                          prep["head_planes"], prep["embed_pc"], labels)


# ----------------------------------------------------------------------------
# Pure-JAX reference (for correctness check)
# ----------------------------------------------------------------------------
def reference_forward(params, x_nchw, labels):
    def conv(x, w):
        return jax.lax.conv_general_dilated(
            x, w, (2, 2), ((2, 2), (2, 2)),
            dimension_numbers=("NCHW", "OIHW", "NCHW"),
            precision=jax.lax.Precision.HIGHEST)

    def lrelu(x):
        return jnp.where(x >= 0, x, 0.2 * x)

    x = lrelu(conv(x_nchw, params["w1"]))
    for i in (2, 3, 4, 5):
        g, b, m, v = params[f"bn{i}"]
        y = conv(x, params[f"w{i}"])
        y = ((y - m[None, :, None, None]) / jnp.sqrt(v + _BN_EPS)[None, :, None, None]
             * g[None, :, None, None] + b[None, :, None, None])
        x = lrelu(y)
    xf = x.reshape(x.shape[0], -1)
    img = xf @ params["fc_w"].T
    emb = params["embed"][labels]
    proj = jnp.sum(xf * emb, axis=1, keepdims=True)
    cls = xf @ params["aux_w"].T
    return img + proj, cls


# ----------------------------------------------------------------------------
# Deterministic parameter init (shapes follow the module __init__)
# ----------------------------------------------------------------------------
def init_params(key, input_channels=1, num_classes=7, d=8):
    ks = jax.random.split(key, 20)
    feat = 16 * d * 7 * 7

    def w(k, shape, s=0.05):
        return jax.random.normal(k, shape, jnp.float32) * s

    params = {
        "w1": w(ks[0], (d, input_channels, 5, 5)),
        "w2": w(ks[1], (2 * d, d, 5, 5)),
        "w3": w(ks[2], (4 * d, 2 * d, 5, 5)),
        "w4": w(ks[3], (8 * d, 4 * d, 5, 5)),
        "w5": w(ks[4], (16 * d, 8 * d, 5, 5)),
        "fc_w": w(ks[5], (1, feat), 0.02),
        "aux_w": w(ks[6], (num_classes, feat), 0.02),
        "embed": w(ks[7], (num_classes, feat), 0.02),
    }
    for idx, i in enumerate((2, 3, 4, 5)):
        c = (2 ** (i - 1)) * d
        kg, kb, km, kv = jax.random.split(ks[8 + idx], 4)
        gamma = 1.0 + 0.1 * jax.random.normal(kg, (c,), jnp.float32)
        beta = 0.1 * jax.random.normal(kb, (c,), jnp.float32)
        mean = 0.1 * jax.random.normal(km, (c,), jnp.float32)
        var = 0.9 + 0.2 * jax.random.uniform(kv, (c,), jnp.float32)
        params[f"bn{i}"] = (gamma, beta, mean, var)
    return params


# ----------------------------------------------------------------------------
if __name__ == "__main__":
    key = jax.random.PRNGKey(0)
    k_param, k_x, k_lbl = jax.random.split(key, 3)

    # 224 -> 112 -> 56 -> 28 -> 14 -> 7 spatially (matches fc = 16*d*7*7);
    # small d keeps the synthetic run light.
    B, CIN, H, W = 2, 1, 224, 224
    NUM_CLASSES, D = 7, 8

    params = init_params(k_param, input_channels=CIN, num_classes=NUM_CLASSES, d=D)
    prep = prepare_params(params, NUM_CLASSES)          # hoisted, runs once
    x = jax.random.normal(k_x, (B, CIN, H, W), jnp.float32)
    labels = jax.random.randint(k_lbl, (B,), 0, NUM_CLASSES, jnp.int32)

    fwd = jax.jit(discriminator_forward)
    final_logit, class_logits = fwd(prep, x, labels)
    jax.block_until_ready((final_logit, class_logits))

    assert final_logit.shape == (B, 1)
    assert class_logits.shape == (B, NUM_CLASSES)

    ref_final, ref_cls = jax.jit(reference_forward)(params, x, labels)
    np.testing.assert_allclose(np.asarray(final_logit), np.asarray(ref_final),
                               rtol=5e-2, atol=5e-2)
    np.testing.assert_allclose(np.asarray(class_logits), np.asarray(ref_cls),
                               rtol=5e-2, atol=5e-2)

    print("KERNEL_OK")
</pallas_src>

<mosaic_0001>
module attributes {stable_mosaic.version = 11 : i64} {
  func.func @_conv_gemm_kernel(%arg0: i32, %arg1: memref<400x400xbf16, #tpu.memory_space<vmem>>, %arg2: memref<400x128xbf16, #tpu.memory_space<vmem>>, %arg3: memref<1x128xf32, #tpu.memory_space<vmem>>, %arg4: memref<400x128xbf16, #tpu.memory_space<vmem>>) attributes {dimension_semantics = [#tpu.dimension_semantics<parallel>], iteration_bounds = array<i64: 4>, scalar_prefetch = 0 : i64, scratch_operands = 0 : i64, tpu.core_type = #tpu.core_type<tc>, window_params = [{transform_indices = @transform_0, window_bounds = array<i64: 400, 400>}, {pipeline_mode = #tpu.pipeline_mode<synchronous>, transform_indices = @transform_1, window_bounds = array<i64: 400, 128>}, {pipeline_mode = #tpu.pipeline_mode<synchronous>, transform_indices = @transform_2, window_bounds = array<i64: 1, 128>}, {transform_indices = @transform_3, window_bounds = array<i64: 400, 128>}]} {
    %c0 = arith.constant 0 : index
    %c0_0 = arith.constant 0 : index
    %0 = vector.load %arg1[%c0, %c0_0] : memref<400x400xbf16, #tpu.memory_space<vmem>>, vector<400x400xbf16>
    %c0_1 = arith.constant 0 : index
    %c0_2 = arith.constant 0 : index
    %1 = vector.load %arg2[%c0_1, %c0_2] : memref<400x128xbf16, #tpu.memory_space<vmem>>, vector<400x128xbf16>
    %cst = arith.constant dense<0.000000e+00> : vector<400x128xf32>
    %2 = tpu.matmul %0, %1, %cst {dimension_numbers = #tpu.dot_dimension_numbers<[1], [0], [0], [1], [0, 0, 1, 1], [], []>} : vector<400x400xbf16>, vector<400x128xbf16>, vector<400x128xf32> -> vector<400x128xf32>
    %c0_3 = arith.constant 0 : index
    %c0_4 = arith.constant 0 : index
    %3 = vector.load %arg3[%c0_3, %c0_4] : memref<1x128xf32, #tpu.memory_space<vmem>>, vector<1x128xf32>
    %4 = vector.broadcast %3 : vector<1x128xf32> to vector<400x128xf32>
    %5 = arith.addf %2, %4 : vector<400x128xf32>
    %cst_5 = arith.constant 2.000000e-01 : f32
    %6 = vector.broadcast %cst_5 : f32 to vector<400x128xf32>
    %7 = arith.mulf %6, %5 : vector<400x128xf32>
    %8 = arith.maximumf %5, %7 : vector<400x128xf32>
    %9 = arith.truncf %8 : vector<400x128xf32> to vector<400x128xbf16>
    %c0_6 = arith.constant 0 : index
    %c0_7 = arith.constant 0 : index
    %10 = vector.load %arg4[%c0_6, %c0_7] : memref<400x128xbf16, #tpu.memory_space<vmem>>, vector<400x128xbf16>
    tpu.vector_store %arg4[%c0_6, %c0_7], %9 {strides = array<i32>} : memref<400x128xbf16, #tpu.memory_space<vmem>>, vector<400x128xbf16>,
    return
  }
  func.func @transform_0(%arg0: i32) -> (i32, i32) {
    %c0_i32 = arith.constant 0 : i32
    %c0_i32_0 = arith.constant 0 : i32
    return %arg0, %c0_i32 : i32, i32
  }
  func.func @transform_1(%arg0: i32) -> (i32, i32) {
    %c0_i32 = arith.constant 0 : i32
    %c0_i32_0 = arith.constant 0 : i32
    %c0_i32_1 = arith.constant 0 : i32
    return %c0_i32, %c0_i32_0 : i32, i32
  }
  func.func @transform_2(%arg0: i32) -> (i32, i32) {
    %c0_i32 = arith.constant 0 : i32
    %c0_i32_0 = arith.constant 0 : i32
    %c0_i32_1 = arith.constant 0 : i32
    return %c0_i32, %c0_i32_0 : i32, i32
  }
  func.func @transform_3(%arg0: i32) -> (i32, i32) {
    %c0_i32 = arith.constant 0 : i32
    %c0_i32_0 = arith.constant 0 : i32
    return %arg0, %c0_i32 : i32, i32
  }
}

module attributes {stable_mosaic.version = 11 : i64} {
  func.func @_conv_gemm_kernel(%arg0: i32, %arg1: memref<208x1600xbf16, #tpu.memory_space<vmem>>, %arg2: memref<1600x128xbf16, #tpu.memory_space<vmem>>, %arg3: memref<1x128xf32, #tpu.memory_space<vmem>>, %arg4: memref<208x128xbf16, #tpu.memory_space<vmem>>) attributes {dimension_semantics = [#tpu.dimension_semantics<parallel>], iteration_bounds = array<i64: 4>, scalar_prefetch = 0 : i64, scratch_operands = 0 : i64, tpu.core_type = #tpu.core_type<tc>, window_params = [{transform_indices = @transform_0, window_bounds = array<i64: 208, 1600>}, {pipeline_mode = #tpu.pipeline_mode<synchronous>, transform_indices = @transform_1, window_bounds = array<i64: 1600, 128>}, {pipeline_mode = #tpu.pipeline_mode<synchronous>, transform_indices = @transform_2, window_bounds = array<i64: 1, 128>}, {transform_indices = @transform_3, window_bounds = array<i64: 208, 128>}]} {
    %c0 = arith.constant 0 : index
    %c0_0 = arith.constant 0 : index
    %0 = vector.load %arg1[%c0, %c0_0] : memref<208x1600xbf16, #tpu.memory_space<vmem>>, vector<208x1600xbf16>
    %c0_1 = arith.constant 0 : index
    %c0_2 = arith.constant 0 : index
    %1 = vector.load %arg2[%c0_1, %c0_2] : memref<1600x128xbf16, #tpu.memory_space<vmem>>, vector<1600x128xbf16>
    %cst = arith.constant dense<0.000000e+00> : vector<208x128xf32>
    %2 = tpu.matmul %0, %1, %cst {dimension_numbers = #tpu.dot_dimension_numbers<[1], [0], [0], [1], [0, 0, 1, 1], [], []>} : vector<208x1600xbf16>, vector<1600x128xbf16>, vector<208x128xf32> -> vector<208x128xf32>
    %c0_3 = arith.constant 0 : index
    %c0_4 = arith.constant 0 : index
    %3 = vector.load %arg3[%c0_3, %c0_4] : memref<1x128xf32, #tpu.memory_space<vmem>>, vector<1x128xf32>
    %4 = vector.broadcast %3 : vector<1x128xf32> to vector<208x128xf32>
    %5 = arith.addf %2, %4 : vector<208x128xf32>
    %cst_5 = arith.constant 2.000000e-01 : f32
    %6 = vector.broadcast %cst_5 : f32 to vector<208x128xf32>
    %7 = arith.mulf %6, %5 : vector<208x128xf32>
    %8 = arith.maximumf %5, %7 : vector<208x128xf32>
    %9 = arith.truncf %8 : vector<208x128xf32> to vector<208x128xbf16>
    %c0_6 = arith.constant 0 : index
    %c0_7 = arith.constant 0 : index
    %10 = vector.load %arg4[%c0_6, %c0_7] : memref<208x128xbf16, #tpu.memory_space<vmem>>, vector<208x128xbf16>
    tpu.vector_store %arg4[%c0_6, %c0_7], %9 {strides = array<i32>} : memref<208x128xbf16, #tpu.memory_space<vmem>>, vector<208x128xbf16>,
    return
  }
  func.func @transform_0(%arg0: i32) -> (i32, i32) {
    %c0_i32 = arith.constant 0 : i32
    %c0_i32_0 = arith.constant 0 : i32
    return %arg0, %c0_i32 : i32, i32
  }
  func.func @transform_1(%arg0: i32) -> (i32, i32) {
    %c0_i32 = arith.constant 0 : i32
    %c0_i32_0 = arith.constant 0 : i32
    %c0_i32_1 = arith.constant 0 : i32
    return %c0_i32, %c0_i32_0 : i32, i32
  }
  func.func @transform_2(%arg0: i32) -> (i32, i32) {
    %c0_i32 = arith.constant 0 : i32
    %c0_i32_0 = arith.constant 0 : i32
    %c0_i32_1 = arith.constant 0 : i32
    return %c0_i32, %c0_i32_0 : i32, i32
  }
  func.func @transform_3(%arg0: i32) -> (i32, i32) {
    %c0_i32 = arith.constant 0 : i32
    %c0_i32_0 = arith.constant 0 : i32
    return %arg0, %c0_i32 : i32, i32
  }
}

module attributes {stable_mosaic.version = 11 : i64} {
  func.func @_conv_gemm_kernel(%arg0: i32, %arg1: memref<112x1600xbf16, #tpu.memory_space<vmem>>, %arg2: memref<1600x128xbf16, #tpu.memory_space<vmem>>, %arg3: memref<1x128xf32, #tpu.memory_space<vmem>>, %arg4: memref<112x128xbf16, #tpu.memory_space<vmem>>) attributes {dimension_semantics = [#tpu.dimension_semantics<parallel>], iteration_bounds = array<i64: 4>, scalar_prefetch = 0 : i64, scratch_operands = 0 : i64, tpu.core_type = #tpu.core_type<tc>, window_params = [{transform_indices = @transform_0, window_bounds = array<i64: 112, 1600>}, {pipeline_mode = #tpu.pipeline_mode<synchronous>, transform_indices = @transform_1, window_bounds = array<i64: 1600, 128>}, {pipeline_mode = #tpu.pipeline_mode<synchronous>, transform_indices = @transform_2, window_bounds = array<i64: 1, 128>}, {transform_indices = @transform_3, window_bounds = array<i64: 112, 128>}]} {
    %c0 = arith.constant 0 : index
    %c0_0 = arith.constant 0 : index
    %0 = vector.load %arg1[%c0, %c0_0] : memref<112x1600xbf16, #tpu.memory_space<vmem>>, vector<112x1600xbf16>
    %c0_1 = arith.constant 0 : index
    %c0_2 = arith.constant 0 : index
    %1 = vector.load %arg2[%c0_1, %c0_2] : memref<1600x128xbf16, #tpu.memory_space<vmem>>, vector<1600x128xbf16>
    %cst = arith.constant dense<0.000000e+00> : vector<112x128xf32>
    %2 = tpu.matmul %0, %1, %cst {dimension_numbers = #tpu.dot_dimension_numbers<[1], [0], [0], [1], [0, 0, 1, 1], [], []>} : vector<112x1600xbf16>, vector<1600x128xbf16>, vector<112x128xf32> -> vector<112x128xf32>
    %c0_3 = arith.constant 0 : index
    %c0_4 = arith.constant 0 : index
    %3 = vector.load %arg3[%c0_3, %c0_4] : memref<1x128xf32, #tpu.memory_space<vmem>>, vector<1x128xf32>
    %4 = vector.broadcast %3 : vector<1x128xf32> to vector<112x128xf32>
    %5 = arith.addf %2, %4 : vector<112x128xf32>
    %cst_5 = arith.constant 2.000000e-01 : f32
    %6 = vector.broadcast %cst_5 : f32 to vector<112x128xf32>
    %7 = arith.mulf %6, %5 : vector<112x128xf32>
    %8 = arith.maximumf %5, %7 : vector<112x128xf32>
    %9 = arith.truncf %8 : vector<112x128xf32> to vector<112x128xbf16>
    %c0_6 = arith.constant 0 : index
    %c0_7 = arith.constant 0 : index
    %10 = vector.load %arg4[%c0_6, %c0_7] : memref<112x128xbf16, #tpu.memory_space<vmem>>, vector<112x128xbf16>
    tpu.vector_store %arg4[%c0_6, %c0_7], %9 {strides = array<i32>} : memref<112x128xbf16, #tpu.memory_space<vmem>>, vector<112x128xbf16>,
    return
  }
  func.func @transform_0(%arg0: i32) -> (i32, i32) {
    %c0_i32 = arith.constant 0 : i32
    %c0_i32_0 = arith.constant 0 : i32
    return %arg0, %c0_i32 : i32, i32
  }
  func.func @transform_1(%arg0: i32) -> (i32, i32) {
    %c0_i32 = arith.constant 0 : i32
    %c0_i32_0 = arith.constant 0 : i32
    %c0_i32_1 = arith.constant 0 : i32
    return %c0_i32, %c0_i32_0 : i32, i32
  }
  func.func @transform_2(%arg0: i32) -> (i32, i32) {
    %c0_i32 = arith.constant 0 : i32
    %c0_i32_0 = arith.constant 0 : i32
    %c0_i32_1 = arith.constant 0 : i32
    return %c0_i32, %c0_i32_0 : i32, i32
  }
  func.func @transform_3(%arg0: i32) -> (i32, i32) {
    %c0_i32 = arith.constant 0 : i32
    %c0_i32_0 = arith.constant 0 : i32
    return %arg0, %c0_i32 : i32, i32
  }
}

module attributes {stable_mosaic.version = 11 : i64} {
  func.func @_conv_gemm_kernel(%arg0: i32, %arg1: memref<64x1600xbf16, #tpu.memory_space<vmem>>, %arg2: memref<1600x128xbf16, #tpu.memory_space<vmem>>, %arg3: memref<1x128xf32, #tpu.memory_space<vmem>>, %arg4: memref<64x128xbf16, #tpu.memory_space<vmem>>) attributes {dimension_semantics = [#tpu.dimension_semantics<parallel>], iteration_bounds = array<i64: 4>, scalar_prefetch = 0 : i64, scratch_operands = 0 : i64, tpu.core_type = #tpu.core_type<tc>, window_params = [{transform_indices = @transform_0, window_bounds = array<i64: 64, 1600>}, {pipeline_mode = #tpu.pipeline_mode<synchronous>, transform_indices = @transform_1, window_bounds = array<i64: 1600, 128>}, {pipeline_mode = #tpu.pipeline_mode<synchronous>, transform_indices = @transform_2, window_bounds = array<i64: 1, 128>}, {transform_indices = @transform_3, window_bounds = array<i64: 64, 128>}]} {
    %c0 = arith.constant 0 : index
    %c0_0 = arith.constant 0 : index
    %0 = vector.load %arg1[%c0, %c0_0] : memref<64x1600xbf16, #tpu.memory_space<vmem>>, vector<64x1600xbf16>
    %c0_1 = arith.constant 0 : index
    %c0_2 = arith.constant 0 : index
    %1 = vector.load %arg2[%c0_1, %c0_2] : memref<1600x128xbf16, #tpu.memory_space<vmem>>, vector<1600x128xbf16>
    %cst = arith.constant dense<0.000000e+00> : vector<64x128xf32>
    %2 = tpu.matmul %0, %1, %cst {dimension_numbers = #tpu.dot_dimension_numbers<[1], [0], [0], [1], [0, 0, 1, 1], [], []>} : vector<64x1600xbf16>, vector<1600x128xbf16>, vector<64x128xf32> -> vector<64x128xf32>
    %c0_3 = arith.constant 0 : index
    %c0_4 = arith.constant 0 : index
    %3 = vector.load %arg3[%c0_3, %c0_4] : memref<1x128xf32, #tpu.memory_space<vmem>>, vector<1x128xf32>
    %4 = vector.broadcast %3 : vector<1x128xf32> to vector<64x128xf32>
    %5 = arith.addf %2, %4 : vector<64x128xf32>
    %cst_5 = arith.constant 2.000000e-01 : f32
    %6 = vector.broadcast %cst_5 : f32 to vector<64x128xf32>
    %7 = arith.mulf %6, %5 : vector<64x128xf32>
    %8 = arith.maximumf %5, %7 : vector<64x128xf32>
    %9 = arith.truncf %8 : vector<64x128xf32> to vector<64x128xbf16>
    %c0_6 = arith.constant 0 : index
    %c0_7 = arith.constant 0 : index
    %10 = vector.load %arg4[%c0_6, %c0_7] : memref<64x128xbf16, #tpu.memory_space<vmem>>, vector<64x128xbf16>
    tpu.vector_store %arg4[%c0_6, %c0_7], %9 {strides = array<i32>} : memref<64x128xbf16, #tpu.memory_space<vmem>>, vector<64x128xbf16>,
    return
  }
  func.func @transform_0(%arg0: i32) -> (i32, i32) {
    %c0_i32 = arith.constant 0 : i32
    %c0_i32_0 = arith.constant 0 : i32
    return %arg0, %c0_i32 : i32, i32
  }
  func.func @transform_1(%arg0: i32) -> (i32, i32) {
    %c0_i32 = arith.constant 0 : i32
    %c0_i32_0 = arith.constant 0 : i32
    %c0_i32_1 = arith.constant 0 : i32
    return %c0_i32, %c0_i32_0 : i32, i32
  }
  func.func @transform_2(%arg0: i32) -> (i32, i32) {
    %c0_i32 = arith.constant 0 : i32
    %c0_i32_0 = arith.constant 0 : i32
    %c0_i32_1 = arith.constant 0 : i32
    return %c0_i32, %c0_i32_0 : i32, i32
  }
  func.func @transform_3(%arg0: i32) -> (i32, i32) {
    %c0_i32 = arith.constant 0 : i32
    %c0_i32_0 = arith.constant 0 : i32
    return %arg0, %c0_i32 : i32, i32
  }
}

module attributes {stable_mosaic.version = 11 : i64} {
  func.func @_conv5_head_kernel(%arg0: i32, %arg1: memref<98x1600xbf16, #tpu.memory_space<vmem>>, %arg2: memref<1600x128xbf16, #tpu.memory_space<vmem>>, %arg3: memref<1x128xf32, #tpu.memory_space<vmem>>, %arg4: memref<9x98x128xf32, #tpu.memory_space<vmem>>, %arg5: memref<98x2xf32, #tpu.memory_space<vmem>>, %arg6: memref<9x2xf32, #tpu.memory_space<vmem>>) attributes {dimension_semantics = [#tpu.dimension_semantics<arbitrary>], iteration_bounds = array<i64: 1>, scalar_prefetch = 0 : i64, scratch_operands = 0 : i64, tpu.core_type = #tpu.core_type<tc>, window_params = [{pipeline_mode = #tpu.pipeline_mode<synchronous>, transform_indices = @transform_0, window_bounds = array<i64: 98, 1600>}, {pipeline_mode = #tpu.pipeline_mode<synchronous>, transform_indices = @transform_1, window_bounds = array<i64: 1600, 128>}, {pipeline_mode = #tpu.pipeline_mode<synchronous>, transform_indices = @transform_2, window_bounds = array<i64: 1, 128>}, {pipeline_mode = #tpu.pipeline_mode<synchronous>, transform_indices = @transform_3, window_bounds = array<i64: 9, 98, 128>}, {pipeline_mode = #tpu.pipeline_mode<synchronous>, transform_indices = @transform_4, window_bounds = array<i64: 98, 2>}, {pipeline_mode = #tpu.pipeline_mode<synchronous>, transform_indices = @transform_5, window_bounds = array<i64: 9, 2>}]} {
    %c0 = arith.constant 0 : index
    %c0_0 = arith.constant 0 : index
    %0 = vector.load %arg1[%c0, %c0_0] : memref<98x1600xbf16, #tpu.memory_space<vmem>>, vector<98x1600xbf16>
    %c0_1 = arith.constant 0 : index
    %c0_2 = arith.constant 0 : index
    %1 = vector.load %arg2[%c0_1, %c0_2] : memref<1600x128xbf16, #tpu.memory_space<vmem>>, vector<1600x128xbf16>
    %cst = arith.constant dense<0.000000e+00> : vector<98x128xf32>
    %2 = tpu.matmul %0, %1, %cst {dimension_numbers = #tpu.dot_dimension_numbers<[1], [0], [0], [1], [0, 0, 1, 1], [], []>} : vector<98x1600xbf16>, vector<1600x128xbf16>, vector<98x128xf32> -> vector<98x128xf32>
    %c0_3 = arith.constant 0 : index
    %c0_4 = arith.constant 0 : index
    %3 = vector.load %arg3[%c0_3, %c0_4] : memref<1x128xf32, #tpu.memory_space<vmem>>, vector<1x128xf32>
    %4 = vector.broadcast %3 : vector<1x128xf32> to vector<98x128xf32>
    %5 = arith.addf %2, %4 : vector<98x128xf32>
    %cst_5 = arith.constant 2.000000e-01 : f32
    %6 = vector.broadcast %cst_5 : f32 to vector<98x128xf32>
    %7 = arith.mulf %6, %5 : vector<98x128xf32>
    %8 = arith.maximumf %5, %7 : vector<98x128xf32>
    %9 = vector.shape_cast %8 : vector<98x128xf32> to vector<1x98x128xf32>
    %c0_6 = arith.constant 0 : index
    %c0_7 = arith.constant 0 : index
    %c0_8 = arith.constant 0 : index
    %10 = vector.load %arg4[%c0_6, %c0_7, %c0_8] : memref<9x98x128xf32, #tpu.memory_space<vmem>>, vector<9x98x128xf32>
    %11 = vector.broadcast %9 : vector<1x98x128xf32> to vector<9x98x128xf32>
    %12 = arith.mulf %11, %10 : vector<9x98x128xf32>
    %cst_9 = arith.constant dense<0.000000e+00> : vector<9x98xf32>
    %13 = vector.multi_reduction <add>, %12, %cst_9 [2] : vector<9x98x128xf32> to vector<9x98xf32>
    %c0_10 = arith.constant 0 : index
    %c0_11 = arith.constant 0 : index
    %14 = vector.load %arg5[%c0_10, %c0_11] : memref<98x2xf32, #tpu.memory_space<vmem>>, vector<98x2xf32>
    %cst_12 = arith.constant dense<0.000000e+00> : vector<9x2xf32>
    %15 = tpu.matmul %13, %14, %cst_12 {dimension_numbers = #tpu.dot_dimension_numbers<[1], [0], [0], [1], [0, 0, 1, 1], [], []>} : vector<9x98xf32>, vector<98x2xf32>, vector<9x2xf32> -> vector<9x2xf32>
    %c0_13 = arith.constant 0 : index
    %c0_14 = arith.constant 0 : index
    %16 = vector.load %arg6[%c0_13, %c0_14] : memref<9x2xf32, #tpu.memory_space<vmem>>, vector<9x2xf32>
    tpu.vector_store %arg6[%c0_13, %c0_14], %15 {strides = array<i32>} : memref<9x2xf32, #tpu.memory_space<vmem>>, vector<9x2xf32>,
    return
  }
  func.func @transform_0(%arg0: i32) -> (i32, i32) {
    %c0_i32 = arith.constant 0 : i32
    %c0_i32_0 = arith.constant 0 : i32
    %c0_i32_1 = arith.constant 0 : i32
    return %c0_i32, %c0_i32_0 : i32, i32
  }
  func.func @transform_1(%arg0: i32) -> (i32, i32) {
    %c0_i32 = arith.constant 0 : i32
    %c0_i32_0 = arith.constant 0 : i32
    %c0_i32_1 = arith.constant 0 : i32
    return %c0_i32, %c0_i32_0 : i32, i32
  }
  func.func @transform_2(%arg0: i32) -> (i32, i32) {
    %c0_i32 = arith.constant 0 : i32
    %c0_i32_0 = arith.constant 0 : i32
    %c0_i32_1 = arith.constant 0 : i32
    return %c0_i32, %c0_i32_0 : i32, i32
  }
  func.func @transform_3(%arg0: i32) -> (i32, i32, i32) {
    %c0_i32 = arith.constant 0 : i32
    %c0_i32_0 = arith.constant 0 : i32
    %c0_i32_1 = arith.constant 0 : i32
    %c0_i32_2 = arith.constant 0 : i32
    return %c0_i32, %c0_i32_0, %c0_i32_1 : i32, i32, i32
  }
  func.func @transform_4(%arg0: i32) -> (i32, i32) {
    %c0_i32 = arith.constant 0 : i32
    %c0_i32_0 = arith.constant 0 : i32
    %c0_i32_1 = arith.constant 0 : i32
    return %c0_i32, %c0_i32_0 : i32, i32
  }
  func.func @transform_5(%arg0: i32) -> (i32, i32) {
    %c0_i32 = arith.constant 0 : i32
    %c0_i32_0 = arith.constant 0 : i32
    %c0_i32_1 = arith.constant 0 : i32
    return %c0_i32, %c0_i32_0 : i32, i32
  }
}

</mosaic_0001>

<llo_original>
// kernel: discriminator_forward.5
$region0: #{discriminator_forward.5}
  #allocation0 [shape = 'u32[]', space=smem, size = 0x4, offset = 0x4, fixed_abs, tag = 'smem constant byte address 0x4 - core index']
  #allocation1 [shape = 'u32[144,128]{1,0:T(1,128)}', space=vmem, size = 0x12000, scoped, tag = 'internal scratch']
  %s0 = inlined_call_operand.vmem [shape: bf16[1600,400], index: 0, kind: input, shape index: {}]
  %s1 = inlined_call_operand.vmem [shape: bf16[400,128], index: 1, kind: input, shape index: {}]
  %s2 = inlined_call_operand.vmem [shape: f32[1,128], index: 2, kind: input, shape index: {}]
  %s3 = inlined_call_operand.vmem [shape: bf16[1600,128], index: 3, kind: output, shape index: {}]
  %s4 = sld [smem:[#allocation0]]
  $region45: #{discriminator_forward.5} parent=0
    _
  %s6 = ssub.s32 1, %s4
  %s7 = scalar_select 0, %s6, %s4
  loop: start=0, step=1, limit=6
  $region2: #{discriminator_forward.5} parent=0 // loop_pre_header
    _
  $region3: #{discriminator_forward.5} parent=0 // loop_header
    %s9 = sphi 0, %s13
    %p10 = scmp.ge.s32.totalorder %s9, 6
    %s19 = sphi 0, %s21
    %s22 = sphi 0, %s19
    %s23 = sphi 0, %s22
    %s39 = sphi 0, %s23
    %s43 = sphi 0, %s43
    %s45 = sphi 0, %s43
    %s46 = sphi 0, %s45
    %s60 = sphi 0, %s46
    %s64 = sphi 0, %s64
    %s66 = sphi 0, %s64
    %s67 = sphi 0, %s66
    %s81 = sphi 0, %s67
    %s87 = sphi 0, %s89
    %s90 = sphi 0, %s87
    %s91 = sphi 0, %s90
    %s107 = sphi 0, %s91
  $region4: #{discriminator_forward.5} parent=0 // loop_header_branch
    %12 = sbr.rel (%p10) target = $region8
  $region5: #{discriminator_forward.5} parent=0 // loop_body
    %s14 = ssub.s32 %s9, 1
    %s15 = ssub.s32 %s9, 2
    %s16 = sadd.s32 %s9, 1
    %s17 = ssub.s32 %s9, %s16
    %p18 = scmp.eq.s32.totalorder %s17, 0
    %s20 = sadd.s32 %s19, 1
    %s21 = scalar_select %p18, %s19, %s20
    %p24 = pneg %p18
    %p25 = scmp.eq.s32.totalorder %s9, 3
    %p26 = por %p24, %p25
    %p27 = scmp.ne.s32.totalorder %s19, %s22
    %p28 = scmp.eq.s32.totalorder %s9, 0
    %p29 = por %p27, %p28
    %p30 = scmp.ne.s32.totalorder %s19, %s22
    %p31 = scmp.eq.s32.totalorder %s14, 3
    %p32 = por %p30, %p31
    %p33 = scmp.ne.s32.totalorder %s22, %s23
    %p34 = scmp.eq.s32.totalorder %s14, 0
    %p35 = por %p33, %p34
    %p36 = scmp.ne.s32.totalorder %s22, %s23
    %p37 = scmp.eq.s32.totalorder %s15, 3
    %p38 = por %p36, %p37
    %p40 = scmp.ne.s32.totalorder %s23, %s39
    %p41 = scmp.eq.s32.totalorder %s15, 0
    %p42 = por %p40, %p41
    %s44 = sadd.s32 %s43, 1
    %p47 = scmp.eq.s32.totalorder %s9, 3
    %p48 = scmp.ne.s32.totalorder %s43, %s45
    %p49 = scmp.eq.s32.totalorder %s9, 0
    %p50 = por %p48, %p49
    %p51 = scmp.ne.s32.totalorder %s43, %s45
    %p52 = scmp.eq.s32.totalorder %s14, 3
    %p53 = por %p51, %p52
    %p54 = scmp.ne.s32.totalorder %s45, %s46
    %p55 = scmp.eq.s32.totalorder %s14, 0
    %p56 = por %p54, %p55
    %p57 = scmp.ne.s32.totalorder %s45, %s46
    %p58 = scmp.eq.s32.totalorder %s15, 3
    %p59 = por %p57, %p58
    %p61 = scmp.ne.s32.totalorder %s46, %s60
    %p62 = scmp.eq.s32.totalorder %s15, 0
    %p63 = por %p61, %p62
    %s65 = sadd.s32 %s64, 1
    %p68 = scmp.eq.s32.totalorder %s9, 3
    %p69 = scmp.ne.s32.totalorder %s64, %s66
    %p70 = scmp.eq.s32.totalorder %s9, 0
    %p71 = por %p69, %p70
    %p72 = scmp.ne.s32.totalorder %s64, %s66
    %p73 = scmp.eq.s32.totalorder %s14, 3
    %p74 = por %p72, %p73
    %p75 = scmp.ne.s32.totalorder %s66, %s67
    %p76 = scmp.eq.s32.totalorder %s14, 0
    %p77 = por %p75, %p76
    %p78 = scmp.ne.s32.totalorder %s66, %s67
    %p79 = scmp.eq.s32.totalorder %s15, 3
    %p80 = por %p78, %p79
    %p82 = scmp.ne.s32.totalorder %s67, %s81
    %p83 = scmp.eq.s32.totalorder %s15, 0
    %p84 = por %p82, %p83
    %s85 = ssub.s32 %s9, %s16
    %p86 = scmp.eq.s32.totalorder %s85, 0
    %s88 = sadd.s32 %s87, 1
    %s89 = scalar_select %p86, %s87, %s88
    %p92 = pneg %p86
    %p93 = scmp.eq.s32.totalorder %s9, 3
    %p94 = por %p92, %p93
    %p95 = scmp.ne.s32.totalorder %s87, %s90
    %p96 = scmp.eq.s32.totalorder %s9, 0
    %p97 = por %p95, %p96
    %p98 = scmp.ne.s32.totalorder %s87, %s90
    %p99 = scmp.eq.s32.totalorder %s14, 3
    %p100 = por %p98, %p99
    %p101 = scmp.ne.s32.totalorder %s90, %s91
    %p102 = scmp.eq.s32.totalorder %s14, 0
    %p103 = por %p101, %p102
    %p104 = scmp.ne.s32.totalorder %s90, %s91
    %p105 = scmp.eq.s32.totalorder %s15, 3
    %p106 = por %p104, %p105
    %p108 = scmp.ne.s32.totalorder %s91, %s107
    %p109 = scmp.eq.s32.totalorder %s15, 0
    %p110 = por %p108, %p109
    %p111 = scmp.le.s32.totalorder 1, %s9
    %p112 = scmp.lt.s32.totalorder %s9, 5
    %p113 = pnand %p111, %p112
    %p114 = pneg %p113
    // Predicated region
    $region9: #{discriminator_forward.5} parent=5 // pred_check
      _
    $region10: #{discriminator_forward.5} parent=5 // pred_check_branch
      %116 = sbr.rel (%p113) target = $region12
    $region11: #{discriminator_forward.5} parent=5 // pred_region
      %s117 = ssub.s32 %s9, 1
      // Predicated region
      $region13: #{discriminator_forward.5} parent=11 // pred_check
        %p118 = pneg %p56
      $region14: #{discriminator_forward.5} parent=11 // pred_check_branch
        %120 = sbr.rel (%p118) target = $region16
      $region15: #{discriminator_forward.5} parent=11 // pred_region
        _
      $region16: #{discriminator_forward.5} parent=11 // pred_fallthru
        _
      // Predicated region
      $region17: #{discriminator_forward.5} parent=11 // pred_check
        %p121 = pneg %p77
      $region18: #{discriminator_forward.5} parent=11 // pred_check_branch
        %123 = sbr.rel (%p121) target = $region20
      $region19: #{discriminator_forward.5} parent=11 // pred_region
        _
      $region20: #{discriminator_forward.5} parent=11 // pred_fallthru
        _
    $region12: #{discriminator_forward.5} parent=5 // pred_fallthru
      _
    %p124 = scmp.lt.s32.totalorder %s9, 4
    // Predicated region
    $region21: #{discriminator_forward.5} parent=5 // pred_check
      %p125 = pneg %p124
    $region22: #{discriminator_forward.5} parent=5 // pred_check_branch
      %127 = sbr.rel (%p125) target = $region24
    $region23: #{discriminator_forward.5} parent=5 // pred_region
      // Predicated region
      $region25: #{discriminator_forward.5} parent=23 // pred_check
        %p128 = pneg %p29
      $region26: #{discriminator_forward.5} parent=23 // pred_check_branch
        %130 = sbr.rel (%p128) target = $region28
      $region27: #{discriminator_forward.5} parent=23 // pred_region
        %s131 = smul.u32 50, %s9
        %p132 = scmp.lt.s32.totalorder %s131, 199
        %s133 = scalar_select %p132, %s131, 199
        %s134 = smul.addr %s133, 4
        %s135 = smul.addr %s134, 4
        %s136 = scalar_lea.vmem %s0, %s135
        %s137 = smul.u32 50, %s9
      $region28: #{discriminator_forward.5} parent=23 // pred_fallthru
        _
    $region24: #{discriminator_forward.5} parent=5 // pred_fallthru
      _
    %p138 = scmp.le.s32.totalorder 1, %s9
    %p139 = scmp.lt.s32.totalorder %s9, 5
    %p140 = pnand %p138, %p139
    %p141 = pneg %p140
    // Predicated region
    $region29: #{discriminator_forward.5} parent=5 // pred_check
      _
    $region30: #{discriminator_forward.5} parent=5 // pred_check_branch
      %143 = sbr.rel (%p140) target = $region32
    $region31: #{discriminator_forward.5} parent=5 // pred_region
      %s144 = ssub.s32 %s9, 1
      %s145 = smul.u32 50, %s14
      %p146 = scmp.lt.s32.totalorder %s145, 199
      %s147 = scalar_select %p146, %s145, 199
      %s148 = smul.addr %s147, 4
      %s149 = smul.addr %s148, 4
      %s150 = scalar_lea.vmem %s0, %s149
      %p151 = pneg %p35
      %p152 = pneg %p32
      %p153 = pneg %p56
      %p154 = pneg %p53
      %p155 = pneg %p77
      %p156 = pneg %p74
      %p157 = pneg %p103
      %p158 = pneg %p100
      %s159 = smul.u32 50, %s14
      %p160 = scmp.lt.s32.totalorder %s159, 199
      %s161 = scalar_select %p160, %s159, 199
      %s162 = smul.addr %s161, 4
      %s163 = scalar_lea.vmem %s3, %s162
      %s164 = smul.u32 50, %s14
      %p165 = scmp.lt.s32.totalorder %s164, 199
      %s166 = scalar_select %p165, %s164, 199
      %s167 = smul.addr %s166, 4
      %s168 = smul.addr %s167, 4
      %s169 = scalar_lea.vmem %s0, %s168
      %s170 = smul.u32 50, %s14
      %s171 = smul.u32 50, %s14
      %p172 = scmp.lt.s32.totalorder %s171, 199
      %s173 = scalar_select %p172, %s171, 199
      %s174 = smul.addr %s173, 4
      %s175 = scalar_lea.vmem %s3, %s174
      %s176 = smul.u32 50, %s14
      %v178 = vld [vmem:[%s169] sm:$0xff]
      %v179 = vld [vmem:[%s169 + $0x8] sm:$0xff]
      %v180 = vld [vmem:[%s169 + $0x10] sm:$0xff]
      %v181 = vld [vmem:[%s169 + $0x18] sm:$0xff]
      %v182 = vld [vmem:[%s169 + $0x20] sm:$0xff]
      %v183 = vld [vmem:[%s169 + $0x28] sm:$0xff]
      %v184 = vld [vmem:[%s169 + $0x30] sm:$0xff]
      %v185 = vld [vmem:[%s169 + $0x38] sm:$0xff]
      %v186 = vld [vmem:[%s169 + $0x40] sm:$0xff]
      %v187 = vld [vmem:[%s169 + $0x48] sm:$0xff]
      %v188 = vld [vmem:[%s169 + $0x50] sm:$0xff]
      %v189 = vld [vmem:[%s169 + $0x58] sm:$0xff]
      %v190 = vld [vmem:[%s169 + $0x60] sm:$0xff]
      %v191 = vld [vmem:[%s169 + $0x68] sm:$0xff]
      %v192 = vld [vmem:[%s169 + $0x70] sm:$0xff]
      %v193 = vld [vmem:[%s169 + $0x78] sm:$0xff]
      %v194 = vld [vmem:[%s169 + $0x80] sm:$0xff]
      %v195 = vld [vmem:[%s169 + $0x88] sm:$0xff]
      %v196 = vld [vmem:[%s169 + $0x90] sm:$0xff]
      %v197 = vld [vmem:[%s169 + $0x98] sm:$0xff]
      %v198 = vld [vmem:[%s169 + $0xa0] sm:$0xff]
      %v199 = vld [vmem:[%s169 + $0xa8] sm:$0xff]
      %v200 = vld [vmem:[%s169 + $0xb0] sm:$0xff]
      %v201 = vld [vmem:[%s169 + $0xb8] sm:$0xff]
      %v202 = vld [vmem:[%s169 + $0xc0] sm:$0xff]
      %v203 = vld [vmem:[%s169 + $0xc8] sm:$0xff]
      %v204 = vld [vmem:[%s169 + $0xd0] sm:$0xff]
      %v205 = vld [vmem:[%s169 + $0xd8] sm:$0xff]
      %v206 = vld [vmem:[%s169 + $0xe0] sm:$0xff]
      %v207 = vld [vmem:[%s169 + $0xe8] sm:$0xff]
      %v208 = vld [vmem:[%s169 + $0xf0] sm:$0xff]
      %v209 = vld [vmem:[%s169 + $0xf8] sm:$0xff]
      %v210 = vld [vmem:[%s169 + $0x100] sm:$0xff]
      %v211 = vld [vmem:[%s169 + $0x108] sm:$0xff]
      %v212 = vld [vmem:[%s169 + $0x110] sm:$0xff]
      %v213 = vld [vmem:[%s169 + $0x118] sm:$0xff]
      %v214 = vld [vmem:[%s169 + $0x120] sm:$0xff]
      %v215 = vld [vmem:[%s169 + $0x128] sm:$0xff]
      %v216 = vld [vmem:[%s169 + $0x130] sm:$0xff]
      %v217 = vld [vmem:[%s169 + $0x138] sm:$0xff]
      %v218 = vld [vmem:[%s169 + $0x140] sm:$0xff]
      %v219 = vld [vmem:[%s169 + $0x148] sm:$0xff]
      %v220 = vld [vmem:[%s169 + $0x150] sm:$0xff]
      %v221 = vld [vmem:[%s169 + $0x158] sm:$0xff]
      %v222 = vld [vmem:[%s169 + $0x160] sm:$0xff]
      %v223 = vld [vmem:[%s169 + $0x168] sm:$0xff]
      %v224 = vld [vmem:[%s169 + $0x170] sm:$0xff]
      %v225 = vld [vmem:[%s169 + $0x178] sm:$0xff]
      %v226 = vld [vmem:[%s169 + $0x180] sm:$0xff]
      %v227 = vld [vmem:[%s169 + $0x188] sm:$0xff]
      %v228 = vld [vmem:[%s169 + $0x190] sm:$0xff]
      %v229 = vld [vmem:[%s169 + $0x198] sm:$0xff]
      %v230 = vld [vmem:[%s169 + $0x1a0] sm:$0xff]
      %v231 = vld [vmem:[%s169 + $0x1a8] sm:$0xff]
      %v232 = vld [vmem:[%s169 + $0x1b0] sm:$0xff]
      %v233 = vld [vmem:[%s169 + $0x1b8] sm:$0xff]
      %v234 = vld [vmem:[%s169 + $0x1c0] sm:$0xff]
      %v235 = vld [vmem:[%s169 + $0x1c8] sm:$0xff]
      %v236 = vld [vmem:[%s169 + $0x1d0] sm:$0xff]
      %v237 = vld [vmem:[%s169 + $0x1d8] sm:$0xff]
      %v238 = vld [vmem:[%s169 + $0x1e0] sm:$0xff]
      %v239 = vld [vmem:[%s169 + $0x1e8] sm:$0xff]
      %v240 = vld [vmem:[%s169 + $0x1f0] sm:$0xff]
      %v241 = vld [vmem:[%s169 + $0x1f8] sm:$0xff]
      %v242 = vld [vmem:[%s169 + $0x200] sm:$0xff]
      %v243 = vld [vmem:[%s169 + $0x208] sm:$0xff]
      %v244 = vld [vmem:[%s169 + $0x210] sm:$0xff]
      %v245 = vld [vmem:[%s169 + $0x218] sm:$0xff]
      %v246 = vld [vmem:[%s169 + $0x220] sm:$0xff]
      %v247 = vld [vmem:[%s169 + $0x228] sm:$0xff]
      %v248 = vld [vmem:[%s169 + $0x230] sm:$0xff]
      %v249 = vld [vmem:[%s169 + $0x238] sm:$0xff]
      %v250 = vld [vmem:[%s169 + $0x240] sm:$0xff]
      %v251 = vld [vmem:[%s169 + $0x248] sm:$0xff]
      %v252 = vld [vmem:[%s169 + $0x250] sm:$0xff]
      %v253 = vld [vmem:[%s169 + $0x258] sm:$0xff]
      %v254 = vld [vmem:[%s169 + $0x260] sm:$0xff]
      %v255 = vld [vmem:[%s169 + $0x268] sm:$0xff]
      %v256 = vld [vmem:[%s169 + $0x270] sm:$0xff]
      %v257 = vld [vmem:[%s169 + $0x278] sm:$0xff]
      %v258 = vld [vmem:[%s169 + $0x280] sm:$0xff]
      %v259 = vld [vmem:[%s169 + $0x288] sm:$0xff]
      %v260 = vld [vmem:[%s169 + $0x290] sm:$0xff]
      %v261 = vld [vmem:[%s169 + $0x298] sm:$0xff]
      %v262 = vld [vmem:[%s169 + $0x2a0] sm:$0xff]
      %v263 = vld [vmem:[%s169 + $0x2a8] sm:$0xff]
      %v264 = vld [vmem:[%s169 + $0x2b0] sm:$0xff]
      %v265 = vld [vmem:[%s169 + $0x2b8] sm:$0xff]
      %v266 = vld [vmem:[%s169 + $0x2c0] sm:$0xff]
      %v267 = vld [vmem:[%s169 + $0x2c8] sm:$0xff]
      %v268 = vld [vmem:[%s169 + $0x2d0] sm:$0xff]
      %v269 = vld [vmem:[%s169 + $0x2d8] sm:$0xff]
      %v270 = vld [vmem:[%s169 + $0x2e0] sm:$0xff]
      %v271 = vld [vmem:[%s169 + $0x2e8] sm:$0xff]
      %v272 = vld [vmem:[%s169 + $0x2f0] sm:$0xff]
      %v273 = vld [vmem:[%s169 + $0x2f8] sm:$0xff]
      %v274 = vld [vmem:[%s169 + $0x300] sm:$0xff]
      %v275 = vld [vmem:[%s169 + $0x308] sm:$0xff]
      %v276 = vld [vmem:[%s169 + $0x310] sm:$0xff]
      %v277 = vld [vmem:[%s169 + $0x318] sm:$0xff]
      %v278 = vld [vmem:[%s1] sm:$0xf]
      %v279 = vld [vmem:[%s1 + $0x4] sm:$0xf]
      %v280 = vld [vmem:[%s1 + $0x8] sm:$0xf]
      %v281 = vld [vmem:[%s1 + $0xc] sm:$0xf]
      %v282 = vld [vmem:[%s1 + $0x10] sm:$0xf]
      %v283 = vld [vmem:[%s1 + $0x14] sm:$0xf]
      %v284 = vld [vmem:[%s1 + $0x18] sm:$0xf]
      %v285 = vld [vmem:[%s1 + $0x1c] sm:$0xf]
      %v286 = vld [vmem:[%s1 + $0x20] sm:$0xf]
      %v287 = vld [vmem:[%s1 + $0x24] sm:$0xf]
      %v288 = vld [vmem:[%s1 + $0x28] sm:$0xf]
      %v289 = vld [vmem:[%s1 + $0x2c] sm:$0xf]
      %v290 = vld [vmem:[%s1 + $0x30] sm:$0xf]
      %v291 = vld [vmem:[%s1 + $0x34] sm:$0xf]
      %v292 = vld [vmem:[%s1 + $0x38] sm:$0xf]
      %v293 = vld [vmem:[%s1 + $0x3c] sm:$0xf]
      %v294 = vld [vmem:[%s1 + $0x40] sm:$0xf]
      %v295 = vld [vmem:[%s1 + $0x44] sm:$0xf]
      %v296 = vld [vmem:[%s1 + $0x48] sm:$0xf]
      %v297 = vld [vmem:[%s1 + $0x4c] sm:$0xf]
      %v298 = vld [vmem:[%s1 + $0x50] sm:$0xf]
      %v299 = vld [vmem:[%s1 + $0x54] sm:$0xf]
      %v300 = vld [vmem:[%s1 + $0x58] sm:$0xf]
      %v301 = vld [vmem:[%s1 + $0x5c] sm:$0xf]
      %v302 = vld [vmem:[%s1 + $0x60] sm:$0xf]
      %v303 = vld [vmem:[%s1 + $0x64] sm:$0xf]
      %v304 = vld [vmem:[%s1 + $0x68] sm:$0xf]
      %v305 = vld [vmem:[%s1 + $0x6c] sm:$0xf]
      %v306 = vld [vmem:[%s1 + $0x70] sm:$0xf]
      %v307 = vld [vmem:[%s1 + $0x74] sm:$0xf]
      %v308 = vld [vmem:[%s1 + $0x78] sm:$0xf]
      %v309 = vld [vmem:[%s1 + $0x7c] sm:$0xf]
      %v310 = vld [vmem:[%s1 + $0x80] sm:$0xf]
      %v311 = vld [vmem:[%s1 + $0x84] sm:$0xf]
      %v312 = vld [vmem:[%s1 + $0x88] sm:$0xf]
      %v313 = vld [vmem:[%s1 + $0x8c] sm:$0xf]
      %v314 = vld [vmem:[%s1 + $0x90] sm:$0xf]
      %v315 = vld [vmem:[%s1 + $0x94] sm:$0xf]
      %v316 = vld [vmem:[%s1 + $0x98] sm:$0xf]
      %v317 = vld [vmem:[%s1 + $0x9c] sm:$0xf]
      %v318 = vld [vmem:[%s1 + $0xa0] sm:$0xf]
      %v319 = vld [vmem:[%s1 + $0xa4] sm:$0xf]
      %v320 = vld [vmem:[%s1 + $0xa8] sm:$0xf]
      %v321 = vld [vmem:[%s1 + $0xac] sm:$0xf]
      %v322 = vld [vmem:[%s1 + $0xb0] sm:$0xf]
      %v323 = vld [vmem:[%s1 + $0xb4] sm:$0xf]
      %v324 = vld [vmem:[%s1 + $0xb8] sm:$0xf]
      %v325 = vld [vmem:[%s1 + $0xbc] sm:$0xf]
      %v326 = vld [vmem:[%s1 + $0xc0] sm:$0xf]
      %v327 = vld [vmem:[%s1 + $0xc4] sm:$0xf]
      %v328 = vld [vmem:[%s2] sm:$0x1]
      %v330 = vlaneseq
      %v331 = vshrl.u32 %v330, 7
      %v332 = vsub.s32 0, %v331
      %v333 = vrot.slane %v328, %v332
      %v435 = vunpack.c.l.b16 %v178
      %v436 = vunpack.c.h.b16 %v178
      %v437 = vunpack.c.l.b16 %v179
      %v438 = vunpack.c.h.b16 %v179
      %v439 = vunpack.c.l.b16 %v180
      %v440 = vunpack.c.h.b16 %v180
      %v441 = vunpack.c.l.b16 %v181
      %v442 = vunpack.c.h.b16 %v181
      %v443 = vunpack.c.l.b16 %v182
      %v444 = vunpack.c.h.b16 %v182
      %v445 = vunpack.c.l.b16 %v183
      %v446 = vunpack.c.h.b16 %v183
      %v447 = vunpack.c.l.b16 %v184
      %v448 = vunpack.c.h.b16 %v184
      %v449 = vunpack.c.l.b16 %v185
      %v450 = vunpack.c.h.b16 %v185
      %v451 = vunpack.c.l.b16 %v186
      %v452 = vunpack.c.h.b16 %v186
      %v453 = vunpack.c.l.b16 %v187
      %v454 = vunpack.c.h.b16 %v187
      %v455 = vunpack.c.l.b16 %v188
      %v456 = vunpack.c.h.b16 %v188
      %v457 = vunpack.c.l.b16 %v189
      %v458 = vunpack.c.h.b16 %v189
      %v459 = vunpack.c.l.b16 %v190
      %v460 = vunpack.c.h.b16 %v190
      %v461 = vunpack.c.l.b16 %v191
      %v462 = vunpack.c.h.b16 %v191
      %v463 = vunpack.c.l.b16 %v192
      %v464 = vunpack.c.h.b16 %v192
      %v465 = vunpack.c.l.b16 %v193
      %v466 = vunpack.c.h.b16 %v193
      %v467 = vunpack.c.l.b16 %v194
      %v468 = vunpack.c.h.b16 %v194
      %v469 = vunpack.c.l.b16 %v195
      %v470 = vunpack.c.h.b16 %v195
      %v471 = vunpack.c.l.b16 %v196
      %v472 = vunpack.c.h.b16 %v196
      %v473 = vunpack.c.l.b16 %v197
      %v474 = vunpack.c.h.b16 %v197
      %v475 = vunpack.c.l.b16 %v198
      %v476 = vunpack.c.h.b16 %v198
      %v477 = vunpack.c.l.b16 %v199
      %v478 = vunpack.c.h.b16 %v199
      %v479 = vunpack.c.l.b16 %v200
      %v480 = vunpack.c.h.b16 %v200
      %v481 = vunpack.c.l.b16 %v201
      %v482 = vunpack.c.h.b16 %v201
      %v483 = vunpack.c.l.b16 %v202
      %v484 = vunpack.c.h.b16 %v202
      %v485 = vunpack.c.l.b16 %v203
      %v486 = vunpack.c.h.b16 %v203
      %v487 = vunpack.c.l.b16 %v204
      %v488 = vunpack.c.h.b16 %v204
      %v489 = vunpack.c.l.b16 %v205
      %v490 = vunpack.c.h.b16 %v205
      %v491 = vunpack.c.l.b16 %v206
      %v492 = vunpack.c.h.b16 %v206
      %v493 = vunpack.c.l.b16 %v207
      %v494 = vunpack.c.h.b16 %v207
      %v495 = vunpack.c.l.b16 %v208
      %v496 = vunpack.c.h.b16 %v208
      %v497 = vunpack.c.l.b16 %v209
      %v498 = vunpack.c.h.b16 %v209
      %v499 = vunpack.c.l.b16 %v210
      %v500 = vunpack.c.h.b16 %v210
      %v501 = vunpack.c.l.b16 %v211
      %v502 = vunpack.c.h.b16 %v211
      %v503 = vunpack.c.l.b16 %v212
      %v504 = vunpack.c.h.b16 %v212
      %v505 = vunpack.c.l.b16 %v213
      %v506 = vunpack.c.h.b16 %v213
      %v507 = vunpack.c.l.b16 %v214
      %v508 = vunpack.c.h.b16 %v214
      %v509 = vunpack.c.l.b16 %v215
      %v510 = vunpack.c.h.b16 %v215
      %v511 = vunpack.c.l.b16 %v216
      %v512 = vunpack.c.h.b16 %v216
      %v513 = vunpack.c.l.b16 %v217
      %v514 = vunpack.c.h.b16 %v217
      %v515 = vunpack.c.l.b16 %v218
      %v516 = vunpack.c.h.b16 %v218
      %v517 = vunpack.c.l.b16 %v219
      %v518 = vunpack.c.h.b16 %v219
      %v519 = vunpack.c.l.b16 %v220
      %v520 = vunpack.c.h.b16 %v220
      %v521 = vunpack.c.l.b16 %v221
      %v522 = vunpack.c.h.b16 %v221
      %v523 = vunpack.c.l.b16 %v222
      %v524 = vunpack.c.h.b16 %v222
      %v525 = vunpack.c.l.b16 %v223
      %v526 = vunpack.c.h.b16 %v223
      %v527 = vunpack.c.l.b16 %v224
      %v528 = vunpack.c.h.b16 %v224
      %v529 = vunpack.c.l.b16 %v225
      %v530 = vunpack.c.h.b16 %v225
      %v531 = vunpack.c.l.b16 %v226
      %v532 = vunpack.c.h.b16 %v226
      %v533 = vunpack.c.l.b16 %v227
      %v534 = vunpack.c.h.b16 %v227
      %v535 = vunpack.c.l.b16 %v228
      %v536 = vunpack.c.h.b16 %v228
      %v537 = vunpack.c.l.b16 %v229
      %v538 = vunpack.c.h.b16 %v229
      %v539 = vunpack.c.l.b16 %v230
      %v540 = vunpack.c.h.b16 %v230
      %v541 = vunpack.c.l.b16 %v231
      %v542 = vunpack.c.h.b16 %v231
      %v543 = vunpack.c.l.b16 %v232
      %v544 = vunpack.c.h.b16 %v232
      %v545 = vunpack.c.l.b16 %v233
      %v546 = vunpack.c.h.b16 %v233
      %v547 = vunpack.c.l.b16 %v234
      %v548 = vunpack.c.h.b16 %v234
      %v549 = vunpack.c.l.b16 %v235
      %v550 = vunpack.c.h.b16 %v235
      %v551 = vunpack.c.l.b16 %v236
      %v552 = vunpack.c.h.b16 %v236
      %v553 = vunpack.c.l.b16 %v237
      %v554 = vunpack.c.h.b16 %v237
      %v555 = vunpack.c.l.b16 %v238
      %v556 = vunpack.c.h.b16 %v238
      %v557 = vunpack.c.l.b16 %v239
      %v558 = vunpack.c.h.b16 %v239
      %v559 = vunpack.c.l.b16 %v240
      %v560 = vunpack.c.h.b16 %v240
      %v561 = vunpack.c.l.b16 %v241
      %v562 = vunpack.c.h.b16 %v241
      %v563 = vunpack.c.l.b16 %v242
      %v564 = vunpack.c.h.b16 %v242
      %v565 = vunpack.c.l.b16 %v243
      %v566 = vunpack.c.h.b16 %v243
      %v567 = vunpack.c.l.b16 %v244
      %v568 = vunpack.c.h.b16 %v244
      %v569 = vunpack.c.l.b16 %v245
      %v570 = vunpack.c.h.b16 %v245
      %v571 = vunpack.c.l.b16 %v246
      %v572 = vunpack.c.h.b16 %v246
      %v573 = vunpack.c.l.b16 %v247
      %v574 = vunpack.c.h.b16 %v247
      %v575 = vunpack.c.l.b16 %v248
      %v576 = vunpack.c.h.b16 %v248
      %v577 = vunpack.c.l.b16 %v249
      %v578 = vunpack.c.h.b16 %v249
      %v579 = vunpack.c.l.b16 %v250
      %v580 = vunpack.c.h.b16 %v250
      %v581 = vunpack.c.l.b16 %v251
      %v582 = vunpack.c.h.b16 %v251
      %v583 = vunpack.c.l.b16 %v252
      %v584 = vunpack.c.h.b16 %v252
      %v585 = vunpack.c.l.b16 %v253
      %v586 = vunpack.c.h.b16 %v253
      %v587 = vunpack.c.l.b16 %v254
      %v588 = vunpack.c.h.b16 %v254
      %v589 = vunpack.c.l.b16 %v255
      %v590 = vunpack.c.h.b16 %v255
      %v591 = vunpack.c.l.b16 %v256
      %v592 = vunpack.c.h.b16 %v256
      %v593 = vunpack.c.l.b16 %v257
      %v594 = vunpack.c.h.b16 %v257
      %v595 = vunpack.c.l.b16 %v258
      %v596 = vunpack.c.h.b16 %v258
      %v597 = vunpack.c.l.b16 %v259
      %v598 = vunpack.c.h.b16 %v259
      %v599 = vunpack.c.l.b16 %v260
      %v600 = vunpack.c.h.b16 %v260
      %v601 = vunpack.c.l.b16 %v261
      %v602 = vunpack.c.h.b16 %v261
      %v603 = vunpack.c.l.b16 %v262
      %v604 = vunpack.c.h.b16 %v262
      %v605 = vunpack.c.l.b16 %v263
      %v606 = vunpack.c.h.b16 %v263
      %v607 = vunpack.c.l.b16 %v264
      %v608 = vunpack.c.h.b16 %v264
      %v609 = vunpack.c.l.b16 %v265
      %v610 = vunpack.c.h.b16 %v265
      %v611 = vunpack.c.l.b16 %v266
      %v612 = vunpack.c.h.b16 %v266
      %v613 = vunpack.c.l.b16 %v267
      %v614 = vunpack.c.h.b16 %v267
      %v615 = vunpack.c.l.b16 %v268
      %v616 = vunpack.c.h.b16 %v268
      %v617 = vunpack.c.l.b16 %v269
      %v618 = vunpack.c.h.b16 %v269
      %v619 = vunpack.c.l.b16 %v270
      %v620 = vunpack.c.h.b16 %v270
      %v621 = vunpack.c.l.b16 %v271
      %v622 = vunpack.c.h.b16 %v271
      %v623 = vunpack.c.l.b16 %v272
      %v624 = vunpack.c.h.b16 %v272
      %v625 = vunpack.c.l.b16 %v273
      %v626 = vunpack.c.h.b16 %v273
      %v627 = vunpack.c.l.b16 %v274
      %v628 = vunpack.c.h.b16 %v274
      %v629 = vunpack.c.l.b16 %v275
      %v630 = vunpack.c.h.b16 %v275
      %v631 = vunpack.c.l.b16 %v276
      %v632 = vunpack.c.h.b16 %v276
      %v633 = vunpack.c.l.b16 %v277
      %v634 = vunpack.c.h.b16 %v277
      %v635 = vpack.c.b16 %v439, %v435
      %v636 = vpack.c.b16 %v440, %v436
      %v637 = vpack.c.b16 %v441, %v437
      %v638 = vpack.c.b16 %v442, %v438
      %v639 = vpack.c.b16 %v447, %v443
      %v640 = vpack.c.b16 %v448, %v444
      %v641 = vpack.c.b16 %v449, %v445
      %v642 = vpack.c.b16 %v450, %v446
      %v643 = vpack.c.b16 %v455, %v451
      %v644 = vpack.c.b16 %v456, %v452
      %v645 = vpack.c.b16 %v457, %v453
      %v646 = vpack.c.b16 %v458, %v454
      %v647 = vpack.c.b16 %v463, %v459
      %v648 = vpack.c.b16 %v464, %v460
      %v649 = vpack.c.b16 %v465, %v461
      %v650 = vpack.c.b16 %v466, %v462
      %v651 = vpack.c.b16 %v471, %v467
      %v652 = vpack.c.b16 %v472, %v468
      %v653 = vpack.c.b16 %v473, %v469
      %v654 = vpack.c.b16 %v474, %v470
      %v655 = vpack.c.b16 %v479, %v475
      %v656 = vpack.c.b16 %v480, %v476
      %v657 = vpack.c.b16 %v481, %v477
      %v658 = vpack.c.b16 %v482, %v478
      %v659 = vpack.c.b16 %v487, %v483
      %v660 = vpack.c.b16 %v488, %v484
      %v661 = vpack.c.b16 %v489, %v485
      %v662 = vpack.c.b16 %v490, %v486
      %v663 = vpack.c.b16 %v495, %v491
      %v664 = vpack.c.b16 %v496, %v492
      %v665 = vpack.c.b16 %v497, %v493
      %v666 = vpack.c.b16 %v498, %v494
      %v667 = vpack.c.b16 %v503, %v499
      %v668 = vpack.c.b16 %v504, %v500
      %v669 = vpack.c.b16 %v505, %v501
      %v670 = vpack.c.b16 %v506, %v502
      %v671 = vpack.c.b16 %v511, %v507
      %v672 = vpack.c.b16 %v512, %v508
      %v673 = vpack.c.b16 %v513, %v509
      %v674 = vpack.c.b16 %v514, %v510
      %v675 = vpack.c.b16 %v519, %v515
      %v676 = vpack.c.b16 %v520, %v516
      %v677 = vpack.c.b16 %v521, %v517
      %v678 = vpack.c.b16 %v522, %v518
      %v679 = vpack.c.b16 %v527, %v523
      %v680 = vpack.c.b16 %v528, %v524
      %v681 = vpack.c.b16 %v529, %v525
      %v682 = vpack.c.b16 %v530, %v526
      %v683 = vpack.c.b16 %v535, %v531
      %v684 = vpack.c.b16 %v536, %v532
      %v685 = vpack.c.b16 %v537, %v533
      %v686 = vpack.c.b16 %v538, %v534
      %v687 = vpack.c.b16 %v543, %v539
      %v688 = vpack.c.b16 %v544, %v540
      %v689 = vpack.c.b16 %v545, %v541
      %v690 = vpack.c.b16 %v546, %v542
      %v691 = vpack.c.b16 %v551, %v547
      %v692 = vpack.c.b16 %v552, %v548
      %v693 = vpack.c.b16 %v553, %v549
      %v694 = vpack.c.b16 %v554, %v550
      %v695 = vpack.c.b16 %v559, %v555
      %v696 = vpack.c.b16 %v560, %v556
      %v697 = vpack.c.b16 %v561, %v557
      %v698 = vpack.c.b16 %v562, %v558
      %v699 = vpack.c.b16 %v567, %v563
      %v700 = vpack.c.b16 %v568, %v564
      %v701 = vpack.c.b16 %v569, %v565
      %v702 = vpack.c.b16 %v570, %v566
      %v703 = vpack.c.b16 %v575, %v571
      %v704 = vpack.c.b16 %v576, %v572
      %v705 = vpack.c.b16 %v577, %v573
      %v706 = vpack.c.b16 %v578, %v574
      %v707 = vpack.c.b16 %v583, %v579
      %v708 = vpack.c.b16 %v584, %v580
      %v709 = vpack.c.b16 %v585, %v581
      %v710 = vpack.c.b16 %v586, %v582
      %v711 = vpack.c.b16 %v591, %v587
      %v712 = vpack.c.b16 %v592, %v588
      %v713 = vpack.c.b16 %v593, %v589
      %v714 = vpack.c.b16 %v594, %v590
      %v715 = vpack.c.b16 %v599, %v595
      %v716 = vpack.c.b16 %v600, %v596
      %v717 = vpack.c.b16 %v601, %v597
      %v718 = vpack.c.b16 %v602, %v598
      %v719 = vpack.c.b16 %v607, %v603
      %v720 = vpack.c.b16 %v608, %v604
      %v721 = vpack.c.b16 %v609, %v605
      %v722 = vpack.c.b16 %v610, %v606
      %v723 = vpack.c.b16 %v615, %v611
      %v724 = vpack.c.b16 %v616, %v612
      %v725 = vpack.c.b16 %v617, %v613
      %v726 = vpack.c.b16 %v618, %v614
      %v727 = vpack.c.b16 %v623, %v619
      %v728 = vpack.c.b16 %v624, %v620
      %v729 = vpack.c.b16 %v625, %v621
      %v730 = vpack.c.b16 %v626, %v622
      %v731 = vpack.c.b16 %v631, %v627
      %v732 = vpack.c.b16 %v632, %v628
      %v733 = vpack.c.b16 %v633, %v629
      %v734 = vpack.c.b16 %v634, %v630
      %v860 = vunpack.c.l.b16 %v278
      %v861 = vunpack.c.l.b16 %v279
      %v862 = vunpack.c.l.b16 %v280
      %v863 = vunpack.c.l.b16 %v281
      %v864 = vunpack.c.l.b16 %v282
      %v865 = vunpack.c.l.b16 %v283
      %v866 = vunpack.c.l.b16 %v284
      %v867 = vunpack.c.l.b16 %v285
      %v868 = vunpack.c.l.b16 %v286
      %v869 = vunpack.c.l.b16 %v287
      %v870 = vunpack.c.l.b16 %v288
      %v871 = vunpack.c.l.b16 %v289
      %v872 = vunpack.c.l.b16 %v290
      %v873 = vunpack.c.l.b16 %v291
      %v874 = vunpack.c.l.b16 %v292
      %v875 = vunpack.c.l.b16 %v293
      %v876 = vunpack.c.l.b16 %v294
      %v877 = vunpack.c.l.b16 %v295
      %v878 = vunpack.c.l.b16 %v296
      %v879 = vunpack.c.l.b16 %v297
      %v880 = vunpack.c.l.b16 %v298
      %v881 = vunpack.c.l.b16 %v299
      %v882 = vunpack.c.l.b16 %v300
      %v883 = vunpack.c.l.b16 %v301
      %v884 = vunpack.c.l.b16 %v302
      %v885 = vunpack.c.l.b16 %v303
      %v886 = vunpack.c.l.b16 %v304
      %v887 = vunpack.c.l.b16 %v305
      %v888 = vunpack.c.l.b16 %v306
      %v889 = vunpack.c.l.b16 %v307
      %v890 = vunpack.c.l.b16 %v308
      %v891 = vunpack.c.l.b16 %v309
      %v892 = vunpack.c.l.b16 %v310
      %v893 = vunpack.c.l.b16 %v311
      %v894 = vunpack.c.l.b16 %v312
      %v895 = vunpack.c.l.b16 %v313
      %v896 = vunpack.c.l.b16 %v314
      %v897 = vunpack.c.l.b16 %v315
      %v898 = vunpack.c.l.b16 %v316
      %v899 = vunpack.c.l.b16 %v317
      %v900 = vunpack.c.l.b16 %v318
      %v901 = vunpack.c.l.b16 %v319
      %v902 = vunpack.c.l.b16 %v320
      %v903 = vunpack.c.l.b16 %v321
      %v904 = vunpack.c.l.b16 %v322
      %v905 = vunpack.c.l.b16 %v323
      %v906 = vunpack.c.l.b16 %v324
      %v907 = vunpack.c.l.b16 %v325
      %v908 = vunpack.c.l.b16 %v326
      %v909 = vunpack.c.l.b16 %v327
      %v910 = vpack.c.b16 %v861, %v860
      %v911 = vpack.c.b16 %v863, %v862
      %v912 = vpack.c.b16 %v865, %v864
      %v913 = vpack.c.b16 %v867, %v866
      %v914 = vpack.c.b16 %v869, %v868
      %v915 = vpack.c.b16 %v871, %v870
      %v916 = vpack.c.b16 %v873, %v872
      %v917 = vpack.c.b16 %v875, %v874
      %v918 = vpack.c.b16 %v877, %v876
      %v919 = vpack.c.b16 %v879, %v878
      %v920 = vpack.c.b16 %v881, %v880
      %v921 = vpack.c.b16 %v883, %v882
      %v922 = vpack.c.b16 %v885, %v884
      %v923 = vpack.c.b16 %v887, %v886
      %v924 = vpack.c.b16 %v889, %v888
      %v925 = vpack.c.b16 %v891, %v890
      %v926 = vpack.c.b16 %v893, %v892
      %v927 = vpack.c.b16 %v895, %v894
      %v928 = vpack.c.b16 %v897, %v896
      %v929 = vpack.c.b16 %v899, %v898
      %v930 = vpack.c.b16 %v901, %v900
      %v931 = vpack.c.b16 %v903, %v902
      %v932 = vpack.c.b16 %v905, %v904
      %v933 = vpack.c.b16 %v907, %v906
      %v934 = vpack.c.b16 %v909, %v908
      %vm960 = vcmask 130048
      %v962 = vsel %vm960, %v638, 0
      %v965 = vsel %vm960, %v642, 0
      %v968 = vsel %vm960, %v646, 0
      %v971 = vsel %vm960, %v650, 0
      %v974 = vsel %vm960, %v654, 0
      %v977 = vsel %vm960, %v658, 0
      %v980 = vsel %vm960, %v662, 0
      %v983 = vsel %vm960, %v666, 0
      %v986 = vsel %vm960, %v670, 0
      %v989 = vsel %vm960, %v674, 0
      %v992 = vsel %vm960, %v678, 0
      %v995 = vsel %vm960, %v682, 0
      %v998 = vsel %vm960, %v686, 0
      %v1001 = vsel %vm960, %v690, 0
      %v1004 = vsel %vm960, %v694, 0
      %v1007 = vsel %vm960, %v698, 0
      %v1010 = vsel %vm960, %v702, 0
      %v1013 = vsel %vm960, %v706, 0
      %v1016 = vsel %vm960, %v710, 0
      %v1019 = vsel %vm960, %v714, 0
      %v1022 = vsel %vm960, %v718, 0
      %v1025 = vsel %vm960, %v722, 0
      %v1028 = vsel %vm960, %v726, 0
      %v1031 = vsel %vm960, %v730, 0
      %v1034 = vsel %vm960, %v734, 0
      %1036 = vmatprep.subr.bf16.mxu0 0
      %1037 = vmatpush1.bf16.msra.mxu0 %v910
      %1038 = vmatprep.subr.bf16.mxu0 0
      %1039 = vmatpush1.bf16.msra.mxu0 %v911
      %1040 = vmatprep.subr.bf16.mxu0 0
      %1041 = vmatpush1.bf16.msra.mxu0 %v912
      %1042 = vmatprep.subr.bf16.mxu0 0
      %1043 = vmatpush1.bf16.msra.mxu0 %v913
      %1044 = vmatprep.subr.bf16.mxu0 0
      %1045 = vmatpush1.bf16.msra.mxu0 %v914
      %1046 = vmatprep.subr.bf16.mxu0 0
      %1047 = vmatpush1.bf16.msra.mxu0 %v915
      %1048 = vmatprep.subr.bf16.mxu0 0
      %1049 = vmatpush1.bf16.msra.mxu0 %v916
      %1050 = vmatprep.subr.bf16.mxu0 0
      %1051 = vmatpush1.bf16.msra.mxu0 %v917
      %1052 = vmatprep.subr.bf16.mxu0 0
      %1053 = vmatpush1.bf16.msra.mxu0 %v918
      %1054 = vmatprep.subr.bf16.mxu0 0
      %1055 = vmatpush1.bf16.msra.mxu0 %v919
      %1056 = vmatprep.subr.bf16.mxu0 0
      %1057 = vmatpush1.bf16.msra.mxu0 %v920
      %1058 = vmatprep.subr.bf16.mxu0 0
      %1059 = vmatpush1.bf16.msra.mxu0 %v921
      %1060 = vmatprep.subr.bf16.mxu0 0
      %1061 = vmatpush1.bf16.msra.mxu0 %v922
      %1062 = vmatprep.subr.bf16.mxu0 0
      %1063 = vmatpush1.bf16.msra.mxu0 %v923
      %1064 = vmatprep.subr.bf16.mxu0 0
      %1065 = vmatpush1.bf16.msra.mxu0 %v924
      %1066 = vmatprep.subr.bf16.mxu0 0
      %1067 = vmatpush1.bf16.msra.mxu0 %v925
      %1068 = vmatprep.mubr.bf16.mxu0 %v636
      %1069 = vmatmul.mubr.bf16.gmra.mrb[0].mxu0 %v635
      %v1070 = vpop.f32.mrb[0].mxu0
      %v1071 = vadd.f32 %v333, %v1070
      %v1072 = vpop.f32.mrb[0].mxu0
      %v1073 = vpop.f32.mrb[0].mxu0
      %v1074 = vadd.f32 %v333, %v1073
      %v1075 = vpop.f32.mrb[0].mxu0
      %1076 = vmatprep.mubr.bf16.mxu0 %v640
      %1077 = vmatmul.mubr.bf16.gmra.mrb[0].mxu0 %v639
      %v1078 = vpop.f32.mrb[0].mxu0
      %v1079 = vadd.f32 %v333, %v1078
      %v1080 = vpop.f32.mrb[0].mxu0
      %v1081 = vpop.f32.mrb[0].mxu0
      %v1082 = vadd.f32 %v333, %v1081
      %v1083 = vpop.f32.mrb[0].mxu0
      %1084 = vmatprep.mubr.bf16.mxu0 %v644
      %1085 = vmatmul.mubr.bf16.gmra.mrb[0].mxu0 %v643
      %v1086 = vpop.f32.mrb[0].mxu0
      %v1087 = vadd.f32 %v333, %v1086
      %v1088 = vpop.f32.mrb[0].mxu0
      %v1089 = vpop.f32.mrb[0].mxu0
      %v1090 = vadd.f32 %v333, %v1089
      %v1091 = vpop.f32.mrb[0].mxu0
      %1092 = vmatprep.mubr.bf16.mxu0 %v648
      %1093 = vmatmul.mubr.bf16.gmra.mrb[0].mxu0 %v647
      %v1094 = vpop.f32.mrb[0].mxu0
      %v1095 = vadd.f32 %v333, %v1094
      %v1096 = vpop.f32.mrb[0].mxu0
      %v1097 = vpop.f32.mrb[0].mxu0
      %v1098 = vadd.f32 %v333, %v1097
      %v1099 = vpop.f32.mrb[0].mxu0
      %1100 = vmatprep.mubr.bf16.mxu0 %v652
      %1101 = vmatmul.mubr.bf16.gmra.mrb[0].mxu0 %v651
      %v1102 = vpop.f32.mrb[0].mxu0
      %v1103 = vadd.f32 %v333, %v1102
      %v1104 = vpop.f32.mrb[0].mxu0
      %v1105 = vpop.f32.mrb[0].mxu0
      %v1106 = vadd.f32 %v333, %v1105
      %v1107 = vpop.f32.mrb[0].mxu0
      %1108 = vmatprep.mubr.bf16.mxu0 %v656
      %1109 = vmatmul.mubr.bf16.gmra.mrb[0].mxu0 %v655
      %v1110 = vpop.f32.mrb[0].mxu0
      %v1111 = vadd.f32 %v333, %v1110
      %v1112 = vpop.f32.mrb[0].mxu0
      %v1113 = vpop.f32.mrb[0].mxu0
      %v1114 = vadd.f32 %v333, %v1113
      %v1115 = vpop.f32.mrb[0].mxu0
      %1116 = vmatprep.mubr.bf16.mxu0 %v660
      %1117 = vmatmul.mubr.bf16.gmra.mrb[0].mxu0 %v659
      %v1118 = vpop.f32.mrb[0].mxu0
      %v1119 = vadd.f32 %v333, %v1118
      %v1120 = vpop.f32.mrb[0].mxu0
      %v1121 = vpop.f32.mrb[0].mxu0
      %v1122 = vadd.f32 %v333, %v1121
      %v1123 = vpop.f32.mrb[0].mxu0
      %1124 = vmatprep.mubr.bf16.mxu0 %v664
      %1125 = vmatmul.mubr.bf16.gmra.mrb[0].mxu0 %v663
      %v1126 = vpop.f32.mrb[0].mxu0
      %v1127 = vadd.f32 %v333, %v1126
      %v1128 = vpop.f32.mrb[0].mxu0
      %v1129 = vpop.f32.mrb[0].mxu0
      %v1130 = vadd.f32 %v333, %v1129
      %v1131 = vpop.f32.mrb[0].mxu0
      %1132 = vmatprep.mubr.bf16.mxu0 %v668
      %1133 = vmatmul.mubr.bf16.gmra.mrb[0].mxu0 %v667
      %v1134 = vpop.f32.mrb[0].mxu0
      %v1135 = vadd.f32 %v333, %v1134
      %v1136 = vpop.f32.mrb[0].mxu0
      %v1137 = vpop.f32.mrb[0].mxu0
      %v1138 = vadd.f32 %v333, %v1137
      %v1139 = vpop.f32.mrb[0].mxu0
      %1140 = vmatprep.mubr.bf16.mxu0 %v672
      %1141 = vmatmul.mubr.bf16.gmra.mrb[0].mxu0 %v671
      %v1142 = vpop.f32.mrb[0].mxu0
      %v1143 = vadd.f32 %v333, %v1142
      %v1144 = vpop.f32.mrb[0].mxu0
      %v1145 = vpop.f32.mrb[0].mxu0
      %v1146 = vadd.f32 %v333, %v1145
      %v1147 = vpop.f32.mrb[0].mxu0
      %1148 = vmatprep.mubr.bf16.mxu0 %v676
      %1149 = vmatmul.mubr.bf16.gmra.mrb[0].mxu0 %v675
      %v1150 = vpop.f32.mrb[0].mxu0
      %v1151 = vadd.f32 %v333, %v1150
      %v1152 = vpop.f32.mrb[0].mxu0
      %v1153 = vpop.f32.mrb[0].mxu0
      %v1154 = vadd.f32 %v333, %v1153
      %v1155 = vpop.f32.mrb[0].mxu0
      %1156 = vmatprep.mubr.bf16.mxu0 %v680
      %1157 = vmatmul.mubr.bf16.gmra.mrb[0].mxu0 %v679
      %v1158 = vpop.f32.mrb[0].mxu0
      %v1159 = vadd.f32 %v333, %v1158
      %v1160 = vpop.f32.mrb[0].mxu0
      %v1161 = vpop.f32.mrb[0].mxu0
      %v1162 = vadd.f32 %v333, %v1161
      %v1163 = vpop.f32.mrb[0].mxu0
      %1164 = vmatprep.mubr.bf16.mxu0 %v684
      %1165 = vmatmul.mubr.bf16.gmra.mrb[0].mxu0 %v683
      %v1166 = vpop.f32.mrb[0].mxu0
      %v1167 = vadd.f32 %v333, %v1166
      %v1168 = vpop.f32.mrb[0].mxu0
      %v1169 = vpop.f32.mrb[0].mxu0
      %v1170 = vadd.f32 %v333, %v1169
      %v1171 = vpop.f32.mrb[0].mxu0
      %1172 = vmatprep.mubr.bf16.mxu0 %v688
      %1173 = vmatmul.mubr.bf16.gmra.mrb[0].mxu0 %v687
      %v1174 = vpop.f32.mrb[0].mxu0
      %v1175 = vadd.f32 %v333, %v1174
      %v1176 = vpop.f32.mrb[0].mxu0
      %v1177 = vpop.f32.mrb[0].mxu0
      %v1178 = vadd.f32 %v333, %v1177
      %v1179 = vpop.f32.mrb[0].mxu0
      %1180 = vmatprep.mubr.bf16.mxu0 %v692
      %1181 = vmatmul.mubr.bf16.gmra.mrb[0].mxu0 %v691
      %v1182 = vpop.f32.mrb[0].mxu0
      %v1183 = vadd.f32 %v333, %v1182
      %v1184 = vpop.f32.mrb[0].mxu0
      %v1185 = vpop.f32.mrb[0].mxu0
      %v1186 = vadd.f32 %v333, %v1185
      %v1187 = vpop.f32.mrb[0].mxu0
      %1188 = vmatprep.mubr.bf16.mxu0 %v696
      %1189 = vmatmul.mubr.bf16.gmra.mrb[0].mxu0 %v695
      %v1190 = vpop.f32.mrb[0].mxu0
      %v1191 = vadd.f32 %v333, %v1190
      %v1192 = vpop.f32.mrb[0].mxu0
      %v1193 = vpop.f32.mrb[0].mxu0
      %v1194 = vadd.f32 %v333, %v1193
      %v1195 = vpop.f32.mrb[0].mxu0
      %1196 = vmatprep.mubr.bf16.mxu0 %v700
      %1197 = vmatmul.mubr.bf16.gmra.mrb[0].mxu0 %v699
      %v1198 = vpop.f32.mrb[0].mxu0
      %v1199 = vadd.f32 %v333, %v1198
      %v1200 = vpop.f32.mrb[0].mxu0
      %v1201 = vpop.f32.mrb[0].mxu0
      %v1202 = vadd.f32 %v333, %v1201
      %v1203 = vpop.f32.mrb[0].mxu0
      %1204 = vmatprep.mubr.bf16.mxu0 %v704
      %1205 = vmatmul.mubr.bf16.gmra.mrb[0].mxu0 %v703
      %v1206 = vpop.f32.mrb[0].mxu0
      %v1207 = vadd.f32 %v333, %v1206
      %v1208 = vpop.f32.mrb[0].mxu0
      %v1209 = vpop.f32.mrb[0].mxu0
      %v1210 = vadd.f32 %v333, %v1209
      %v1211 = vpop.f32.mrb[0].mxu0
      %1212 = vmatprep.mubr.bf16.mxu0 %v708
      %1213 = vmatmul.mubr.bf16.gmra.mrb[0].mxu0 %v707
      %v1214 = vpop.f32.mrb[0].mxu0
      %v1215 = vadd.f32 %v333, %v1214
      %v1216 = vpop.f32.mrb[0].mxu0
      %v1217 = vpop.f32.mrb[0].mxu0
      %v1218 = vadd.f32 %v333, %v1217
      %v1219 = vpop.f32.mrb[0].mxu0
      %1220 = vmatprep.mubr.bf16.mxu0 %v712
      %1221 = vmatmul.mubr.bf16.gmra.mrb[0].mxu0 %v711
      %v1222 = vpop.f32.mrb[0].mxu0
      %v1223 = vadd.f32 %v333, %v1222
      %v1224 = vpop.f32.mrb[0].mxu0
      %v1225 = vpop.f32.mrb[0].mxu0
      %v1226 = vadd.f32 %v333, %v1225
      %v1227 = vpop.f32.mrb[0].mxu0
      %1228 = vmatprep.mubr.bf16.mxu0 %v716
      %1229 = vmatmul.mubr.bf16.gmra.mrb[0].mxu0 %v715
      %v1230 = vpop.f32.mrb[0].mxu0
      %v1231 = vadd.f32 %v333, %v1230
      %v1232 = vpop.f32.mrb[0].mxu0
      %v1233 = vpop.f32.mrb[0].mxu0
      %v1234 = vadd.f32 %v333, %v1233
      %v1235 = vpop.f32.mrb[0].mxu0
      %1236 = vmatprep.mubr.bf16.mxu0 %v720
      %1237 = vmatmul.mubr.bf16.gmra.mrb[0].mxu0 %v719
      %v1238 = vpop.f32.mrb[0].mxu0
      %v1239 = vadd.f32 %v333, %v1238
      %v1240 = vpop.f32.mrb[0].mxu0
      %v1241 = vpop.f32.mrb[0].mxu0
      %v1242 = vadd.f32 %v333, %v1241
      %v1243 = vpop.f32.mrb[0].mxu0
      %1244 = vmatprep.mubr.bf16.mxu0 %v724
      %1245 = vmatmul.mubr.bf16.gmra.mrb[0].mxu0 %v723
      %v1246 = vpop.f32.mrb[0].mxu0
      %v1247 = vadd.f32 %v333, %v1246
      %v1248 = vpop.f32.mrb[0].mxu0
      %v1249 = vpop.f32.mrb[0].mxu0
      %v1250 = vadd.f32 %v333, %v1249
      %v1251 = vpop.f32.mrb[0].mxu0
      %1252 = vmatprep.mubr.bf16.mxu0 %v728
      %1253 = vmatmul.mubr.bf16.gmra.mrb[0].mxu0 %v727
      %v1254 = vpop.f32.mrb[0].mxu0
      %v1255 = vadd.f32 %v333, %v1254
      %v1256 = vpop.f32.mrb[0].mxu0
      %v1257 = vpop.f32.mrb[0].mxu0
      %v1258 = vadd.f32 %v333, %v1257
      %v1259 = vpop.f32.mrb[0].mxu0
      %1260 = vmatprep.mubr.bf16.mxu0 %v732
      %1261 = vmatmul.mubr.bf16.gmra.mrb[0].mxu0 %v731
      %v1262 = vpop.f32.mrb[0].mxu0
      %v1263 = vadd.f32 %v333, %v1262
      %v1264 = vpop.f32.mrb[0].mxu0
      %v1265 = vpop.f32.mrb[0].mxu0
      %v1266 = vadd.f32 %v333, %v1265
      %v1267 = vpop.f32.mrb[0].mxu0
      %1268 = vdwg.mxu0
      %1269 = vmatprep.subr.bf16.mxu0 0
      %1270 = vmatpush1.bf16.msra.mxu0 %v926
      %1271 = vmatprep.subr.bf16.mxu0 0
      %1272 = vmatpush1.bf16.msra.mxu0 %v927
      %1273 = vmatprep.subr.bf16.mxu0 0
      %1274 = vmatpush1.bf16.msra.mxu0 %v928
      %1275 = vmatprep.subr.bf16.mxu0 0
      %1276 = vmatpush1.bf16.msra.mxu0 %v929
      %1277 = vmatprep.subr.bf16.mxu0 0
      %1278 = vmatpush1.bf16.msra.mxu0 %v930
      %1279 = vmatprep.subr.bf16.mxu0 0
      %1280 = vmatpush1.bf16.msra.mxu0 %v931
      %1281 = vmatprep.subr.bf16.mxu0 0
      %1282 = vmatpush1.bf16.msra.mxu0 %v932
      %1283 = vmatprep.subr.bf16.mxu0 0
      %1284 = vmatpush1.bf16.msra.mxu0 %v933
      %1285 = vmatprep.subr.bf16.mxu0 0
      %1286 = vmatpush1.bf16.msra.mxu0 %v934
      %1287 = vmatprep.subr.bf16.mxu0 0
      %1288 = vmatpush1.bf16.msra.mxu0 0
      %1289 = vmatprep.subr.bf16.mxu0 0
      %1290 = vmatpush1.bf16.msra.mxu0 0
      %1291 = vmatprep.subr.bf16.mxu0 0
      %1292 = vmatpush1.bf16.msra.mxu0 0
      %1293 = vmatprep.subr.bf16.mxu0 0
      %1294 = vmatpush1.bf16.msra.mxu0 0
      %1295 = vmatprep.subr.bf16.mxu0 0
      %1296 = vmatpush1.bf16.msra.mxu0 0
      %1297 = vmatprep.subr.bf16.mxu0 0
      %1298 = vmatpush1.bf16.msra.mxu0 0
      %1299 = vmatprep.subr.bf16.mxu0 0
      %1300 = vmatpush1.bf16.msra.mxu0 0
      %1301 = vmatprep.mubr.bf16.mxu0 %v962
      %1302 = vmatmul.mubr.bf16.gmra.mrb[0].mxu0 %v637
      %v1303 = vpop.f32.mrb[0].mxu0
      %v1304 = vadd.f32 %v1071, %v1303
      %v1305 = vpop.f32.mrb[0].mxu0
      %v1306 = vpop.f32.mrb[0].mxu0
      %v1307 = vadd.f32 %v1074, %v1306
      %v1308 = vpop.f32.mrb[0].mxu0
      %1309 = vmatprep.mubr.bf16.mxu0 %v965
      %1310 = vmatmul.mubr.bf16.gmra.mrb[0].mxu0 %v641
      %v1311 = vpop.f32.mrb[0].mxu0
      %v1312 = vadd.f32 %v1079, %v1311
      %v1313 = vpop.f32.mrb[0].mxu0
      %v1314 = vpop.f32.mrb[0].mxu0
      %v1315 = vadd.f32 %v1082, %v1314
      %v1316 = vpop.f32.mrb[0].mxu0
      %1317 = vmatprep.mubr.bf16.mxu0 %v968
      %1318 = vmatmul.mubr.bf16.gmra.mrb[0].mxu0 %v645
      %v1319 = vpop.f32.mrb[0].mxu0
      %v1320 = vadd.f32 %v1087, %v1319
      %v1321 = vpop.f32.mrb[0].mxu0
      %v1322 = vpop.f32.mrb[0].mxu0
      %v1323 = vadd.f32 %v1090, %v1322
      %v1324 = vpop.f32.mrb[0].mxu0
      %1325 = vmatprep.mubr.bf16.mxu0 %v971
      %1326 = vmatmul.mubr.bf16.gmra.mrb[0].mxu0 %v649
      %v1327 = vpop.f32.mrb[0].mxu0
      %v1328 = vadd.f32 %v1095, %v1327
      %v1329 = vpop.f32.mrb[0].mxu0
      %v1330 = vpop.f32.mrb[0].mxu0
      %v1331 = vadd.f32 %v1098, %v1330
      %v1332 = vpop.f32.mrb[0].mxu0
      %1333 = vmatprep.mubr.bf16.mxu0 %v974
      %1334 = vmatmul.mubr.bf16.gmra.mrb[0].mxu0 %v653
      %v1335 = vpop.f32.mrb[0].mxu0
      %v1336 = vadd.f32 %v1103, %v1335
      %v1337 = vpop.f32.mrb[0].mxu0
      %v1338 = vpop.f32.mrb[0].mxu0
      %v1339 = vadd.f32 %v1106, %v1338
      %v1340 = vpop.f32.mrb[0].mxu0
      %1341 = vmatprep.mubr.bf16.mxu0 %v977
      %1342 = vmatmul.mubr.bf16.gmra.mrb[0].mxu0 %v657
      %v1343 = vpop.f32.mrb[0].mxu0
      %v1344 = vadd.f32 %v1111, %v1343
      %v1345 = vpop.f32.mrb[0].mxu0
      %v1346 = vpop.f32.mrb[0].mxu0
      %v1347 = vadd.f32 %v1114, %v1346
      %v1348 = vpop.f32.mrb[0].mxu0
      %1349 = vmatprep.mubr.bf16.mxu0 %v980
      %1350 = vmatmul.mubr.bf16.gmra.mrb[0].mxu0 %v661
      %v1351 = vpop.f32.mrb[0].mxu0
      %v1352 = vadd.f32 %v1119, %v1351
      %v1353 = vpop.f32.mrb[0].mxu0
      %v1354 = vpop.f32.mrb[0].mxu0
      %v1355 = vadd.f32 %v1122, %v1354
      %v1356 = vpop.f32.mrb[0].mxu0
      %1357 = vmatprep.mubr.bf16.mxu0 %v983
      %1358 = vmatmul.mubr.bf16.gmra.mrb[0].mxu0 %v665
      %v1359 = vpop.f32.mrb[0].mxu0
      %v1360 = vadd.f32 %v1127, %v1359
      %v1361 = vpop.f32.mrb[0].mxu0
      %v1362 = vpop.f32.mrb[0].mxu0
      %v1363 = vadd.f32 %v1130, %v1362
      %v1364 = vpop.f32.mrb[0].mxu0
      %1365 = vmatprep.mubr.bf16.mxu0 %v986
      %1366 = vmatmul.mubr.bf16.gmra.mrb[0].mxu0 %v669
      %v1367 = vpop.f32.mrb[0].mxu0
      %v1368 = vadd.f32 %v1135, %v1367
      %v1369 = vpop.f32.mrb[0].mxu0
      %v1370 = vpop.f32.mrb[0].mxu0
      %v1371 = vadd.f32 %v1138, %v1370
      %v1372 = vpop.f32.mrb[0].mxu0
      %1373 = vmatprep.mubr.bf16.mxu0 %v989
      %1374 = vmatmul.mubr.bf16.gmra.mrb[0].mxu0 %v673
      %v1375 = vpop.f32.mrb[0].mxu0
      %v1376 = vadd.f32 %v1143, %v1375
      %v1377 = vpop.f32.mrb[0].mxu0
      %v1378 = vpop.f32.mrb[0].mxu0
      %v1379 = vadd.f32 %v1146, %v1378
      %v1380 = vpop.f32.mrb[0].mxu0
      %1381 = vmatprep.mubr.bf16.mxu0 %v992
      %1382 = vmatmul.mubr.bf16.gmra.mrb[0].mxu0 %v677
      %v1383 = vpop.f32.mrb[0].mxu0
      %v1384 = vadd.f32 %v1151, %v1383
      %v1385 = vpop.f32.mrb[0].mxu0
      %v1386 = vpop.f32.mrb[0].mxu0
      %v1387 = vadd.f32 %v1154, %v1386
      %v1388 = vpop.f32.mrb[0].mxu0
      %1389 = vmatprep.mubr.bf16.mxu0 %v995
      %1390 = vmatmul.mubr.bf16.gmra.mrb[0].mxu0 %v681
      %v1391 = vpop.f32.mrb[0].mxu0
      %v1392 = vadd.f32 %v1159, %v1391
      %v1393 = vpop.f32.mrb[0].mxu0
      %v1394 = vpop.f32.mrb[0].mxu0
      %v1395 = vadd.f32 %v1162, %v1394
      %v1396 = vpop.f32.mrb[0].mxu0
      %1397 = vmatprep.mubr.bf16.mxu0 %v998
      %1398 = vmatmul.mubr.bf16.gmra.mrb[0].mxu0 %v685
      %v1399 = vpop.f32.mrb[0].mxu0
      %v1400 = vadd.f32 %v1167, %v1399
      %v1401 = vpop.f32.mrb[0].mxu0
      %v1402 = vpop.f32.mrb[0].mxu0
      %v1403 = vadd.f32 %v1170, %v1402
      %v1404 = vpop.f32.mrb[0].mxu0
      %1405 = vmatprep.mubr.bf16.mxu0 %v1001
      %1406 = vmatmul.mubr.bf16.gmra.mrb[0].mxu0 %v689
      %v1407 = vpop.f32.mrb[0].mxu0
      %v1408 = vadd.f32 %v1175, %v1407
      %v1409 = vpop.f32.mrb[0].mxu0
      %v1410 = vpop.f32.mrb[0].mxu0
      %v1411 = vadd.f32 %v1178, %v1410
      %v1412 = vpop.f32.mrb[0].mxu0
      %1413 = vmatprep.mubr.bf16.mxu0 %v1004
      %1414 = vmatmul.mubr.bf16.gmra.mrb[0].mxu0 %v693
      %v1415 = vpop.f32.mrb[0].mxu0
      %v1416 = vadd.f32 %v1183, %v1415
      %v1417 = vpop.f32.mrb[0].mxu0
      %v1418 = vpop.f32.mrb[0].mxu0
      %v1419 = vadd.f32 %v1186, %v1418
      %v1420 = vpop.f32.mrb[0].mxu0
      %1421 = vmatprep.mubr.bf16.mxu0 %v1007
      %1422 = vmatmul.mubr.bf16.gmra.mrb[0].mxu0 %v697
      %v1423 = vpop.f32.mrb[0].mxu0
      %v1424 = vadd.f32 %v1191, %v1423
      %v1425 = vpop.f32.mrb[0].mxu0
      %v1426 = vpop.f32.mrb[0].mxu0
      %v1427 = vadd.f32 %v1194, %v1426
      %v1428 = vpop.f32.mrb[0].mxu0
      %1429 = vmatprep.mubr.bf16.mxu0 %v1010
      %1430 = vmatmul.mubr.bf16.gmra.mrb[0].mxu0 %v701
      %v1431 = vpop.f32.mrb[0].mxu0
      %v1432 = vadd.f32 %v1199, %v1431
      %v1433 = vpop.f32.mrb[0].mxu0
      %v1434 = vpop.f32.mrb[0].mxu0
      %v1435 = vadd.f32 %v1202, %v1434
      %v1436 = vpop.f32.mrb[0].mxu0
      %1437 = vmatprep.mubr.bf16.mxu0 %v1013
      %1438 = vmatmul.mubr.bf16.gmra.mrb[0].mxu0 %v705
      %v1439 = vpop.f32.mrb[0].mxu0
      %v1440 = vadd.f32 %v1207, %v1439
      %v1441 = vpop.f32.mrb[0].mxu0
      %v1442 = vpop.f32.mrb[0].mxu0
      %v1443 = vadd.f32 %v1210, %v1442
      %v1444 = vpop.f32.mrb[0].mxu0
      %1445 = vmatprep.mubr.bf16.mxu0 %v1016
      %1446 = vmatmul.mubr.bf16.gmra.mrb[0].mxu0 %v709
      %v1447 = vpop.f32.mrb[0].mxu0
      %v1448 = vadd.f32 %v1215, %v1447
      %v1449 = vpop.f32.mrb[0].mxu0
      %v1450 = vpop.f32.mrb[0].mxu0
      %v1451 = vadd.f32 %v1218, %v1450
      %v1452 = vpop.f32.mrb[0].mxu0
      %1453 = vmatprep.mubr.bf16.mxu0 %v1019
      %1454 = vmatmul.mubr.bf16.gmra.mrb[0].mxu0 %v713
      %v1455 = vpop.f32.mrb[0].mxu0
      %v1456 = vadd.f32 %v1223, %v1455
      %v1457 = vpop.f32.mrb[0].mxu0
      %v1458 = vpop.f32.mrb[0].mxu0
      %v1459 = vadd.f32 %v1226, %v1458
      %v1460 = vpop.f32.mrb[0].mxu0
      %1461 = vmatprep.mubr.bf16.mxu0 %v1022
      %1462 = vmatmul.mubr.bf16.gmra.mrb[0].mxu0 %v717
      %v1463 = vpop.f32.mrb[0].mxu0
      %v1464 = vadd.f32 %v1231, %v1463
      %v1465 = vpop.f32.mrb[0].mxu0
      %v1466 = vpop.f32.mrb[0].mxu0
      %v1467 = vadd.f32 %v1234, %v1466
      %v1468 = vpop.f32.mrb[0].mxu0
      %1469 = vmatprep.mubr.bf16.mxu0 %v1025
      %1470 = vmatmul.mubr.bf16.gmra.mrb[0].mxu0 %v721
      %v1471 = vpop.f32.mrb[0].mxu0
      %v1472 = vadd.f32 %v1239, %v1471
      %v1473 = vpop.f32.mrb[0].mxu0
      %v1474 = vpop.f32.mrb[0].mxu0
      %v1475 = vadd.f32 %v1242, %v1474
      %v1476 = vpop.f32.mrb[0].mxu0
      %1477 = vmatprep.mubr.bf16.mxu0 %v1028
      %1478 = vmatmul.mubr.bf16.gmra.mrb[0].mxu0 %v725
      %v1479 = vpop.f32.mrb[0].mxu0
      %v1480 = vadd.f32 %v1247, %v1479
      %v1481 = vpop.f32.mrb[0].mxu0
      %v1482 = vpop.f32.mrb[0].mxu0
      %v1483 = vadd.f32 %v1250, %v1482
      %v1484 = vpop.f32.mrb[0].mxu0
      %1485 = vmatprep.mubr.bf16.mxu0 %v1031
      %1486 = vmatmul.mubr.bf16.gmra.mrb[0].mxu0 %v729
      %v1487 = vpop.f32.mrb[0].mxu0
      %v1488 = vadd.f32 %v1255, %v1487
      %v1489 = vpop.f32.mrb[0].mxu0
      %v1490 = vpop.f32.mrb[0].mxu0
      %v1491 = vadd.f32 %v1258, %v1490
      %v1492 = vpop.f32.mrb[0].mxu0
      %1493 = vmatprep.mubr.bf16.mxu0 %v1034
      %1494 = vmatmul.mubr.bf16.gmra.mrb[0].mxu0 %v733
      %v1495 = vpop.f32.mrb[0].mxu0
      %v1496 = vadd.f32 %v1263, %v1495
      %v1497 = vpop.f32.mrb[0].mxu0
      %v1498 = vpop.f32.mrb[0].mxu0
      %v1499 = vadd.f32 %v1266, %v1498
      %v1500 = vpop.f32.mrb[0].mxu0
      %1501 = vdwg.mxu0
      %v1502 = vmul.f32 %v1304, 0.2
      %v1503 = vmul.f32 %v1307, 0.2
      %v1504 = vmul.f32 %v1312, 0.2
      %v1505 = vmul.f32 %v1315, 0.2
      %v1506 = vmul.f32 %v1320, 0.2
      %v1507 = vmul.f32 %v1323, 0.2
      %v1508 = vmul.f32 %v1328, 0.2
      %v1509 = vmul.f32 %v1331, 0.2
      %v1510 = vmul.f32 %v1336, 0.2
      %v1511 = vmul.f32 %v1339, 0.2
      %v1512 = vmul.f32 %v1344, 0.2
      %v1513 = vmul.f32 %v1347, 0.2
      %v1514 = vmul.f32 %v1352, 0.2
      %v1515 = vmul.f32 %v1355, 0.2
      %v1516 = vmul.f32 %v1360, 0.2
      %v1517 = vmul.f32 %v1363, 0.2
      %v1518 = vmul.f32 %v1368, 0.2
      %v1519 = vmul.f32 %v1371, 0.2
      %v1520 = vmul.f32 %v1376, 0.2
      %v1521 = vmul.f32 %v1379, 0.2
      %v1522 = vmul.f32 %v1384, 0.2
      %v1523 = vmul.f32 %v1387, 0.2
      %v1524 = vmul.f32 %v1392, 0.2
      %v1525 = vmul.f32 %v1395, 0.2
      %v1526 = vmul.f32 %v1400, 0.2
      %v1527 = vmul.f32 %v1403, 0.2
      %v1528 = vmul.f32 %v1408, 0.2
      %v1529 = vmul.f32 %v1411, 0.2
      %v1530 = vmul.f32 %v1416, 0.2
      %v1531 = vmul.f32 %v1419, 0.2
      %v1532 = vmul.f32 %v1424, 0.2
      %v1533 = vmul.f32 %v1427, 0.2
      %v1534 = vmul.f32 %v1432, 0.2
      %v1535 = vmul.f32 %v1435, 0.2
      %v1536 = vmul.f32 %v1440, 0.2
      %v1537 = vmul.f32 %v1443, 0.2
      %v1538 = vmul.f32 %v1448, 0.2
      %v1539 = vmul.f32 %v1451, 0.2
      %v1540 = vmul.f32 %v1456, 0.2
      %v1541 = vmul.f32 %v1459, 0.2
      %v1542 = vmul.f32 %v1464, 0.2
      %v1543 = vmul.f32 %v1467, 0.2
      %v1544 = vmul.f32 %v1472, 0.2
      %v1545 = vmul.f32 %v1475, 0.2
      %v1546 = vmul.f32 %v1480, 0.2
      %v1547 = vmul.f32 %v1483, 0.2
      %v1548 = vmul.f32 %v1488, 0.2
      %v1549 = vmul.f32 %v1491, 0.2
      %v1550 = vmul.f32 %v1496, 0.2
      %v1551 = vmul.f32 %v1499, 0.2
      %v1552 = vmax.f32 %v1304, %v1502
      %v1553 = vmax.f32 %v1307, %v1503
      %v1554 = vmax.f32 %v1312, %v1504
      %v1555 = vmax.f32 %v1315, %v1505
      %v1556 = vmax.f32 %v1320, %v1506
      %v1557 = vmax.f32 %v1323, %v1507
      %v1558 = vmax.f32 %v1328, %v1508
      %v1559 = vmax.f32 %v1331, %v1509
      %v1560 = vmax.f32 %v1336, %v1510
      %v1561 = vmax.f32 %v1339, %v1511
      %v1562 = vmax.f32 %v1344, %v1512
      %v1563 = vmax.f32 %v1347, %v1513
      %v1564 = vmax.f32 %v1352, %v1514
      %v1565 = vmax.f32 %v1355, %v1515
      %v1566 = vmax.f32 %v1360, %v1516
      %v1567 = vmax.f32 %v1363, %v1517
      %v1568 = vmax.f32 %v1368, %v1518
      %v1569 = vmax.f32 %v1371, %v1519
      %v1570 = vmax.f32 %v1376, %v1520
      %v1571 = vmax.f32 %v1379, %v1521
      %v1572 = vmax.f32 %v1384, %v1522
      %v1573 = vmax.f32 %v1387, %v1523
      %v1574 = vmax.f32 %v1392, %v1524
      %v1575 = vmax.f32 %v1395, %v1525
      %v1576 = vmax.f32 %v1400, %v1526
      %v1577 = vmax.f32 %v1403, %v1527
      %v1578 = vmax.f32 %v1408, %v1528
      %v1579 = vmax.f32 %v1411, %v1529
      %v1580 = vmax.f32 %v1416, %v1530
      %v1581 = vmax.f32 %v1419, %v1531
      %v1582 = vmax.f32 %v1424, %v1532
      %v1583 = vmax.f32 %v1427, %v1533
      %v1584 = vmax.f32 %v1432, %v1534
      %v1585 = vmax.f32 %v1435, %v1535
      %v1586 = vmax.f32 %v1440, %v1536
      %v1587 = vmax.f32 %v1443, %v1537
      %v1588 = vmax.f32 %v1448, %v1538
      %v1589 = vmax.f32 %v1451, %v1539
      %v1590 = vmax.f32 %v1456, %v1540
      %v1591 = vmax.f32 %v1459, %v1541
      %v1592 = vmax.f32 %v1464, %v1542
      %v1593 = vmax.f32 %v1467, %v1543
      %v1594 = vmax.f32 %v1472, %v1544
      %v1595 = vmax.f32 %v1475, %v1545
      %v1596 = vmax.f32 %v1480, %v1546
      %v1597 = vmax.f32 %v1483, %v1547
      %v1598 = vmax.f32 %v1488, %v1548
      %v1599 = vmax.f32 %v1491, %v1549
      %v1600 = vmax.f32 %v1496, %v1550
      %v1601 = vmax.f32 %v1499, %v1551
      %v1602 = vpack.c.bf16 %v1553, %v1552
      %v1603 = vpack.c.bf16 %v1555, %v1554
      %v1604 = vpack.c.bf16 %v1557, %v1556
      %v1605 = vpack.c.bf16 %v1559, %v1558
      %v1606 = vpack.c.bf16 %v1561, %v1560
      %v1607 = vpack.c.bf16 %v1563, %v1562
      %v1608 = vpack.c.bf16 %v1565, %v1564
      %v1609 = vpack.c.bf16 %v1567, %v1566
      %v1610 = vpack.c.bf16 %v1569, %v1568
      %v1611 = vpack.c.bf16 %v1571, %v1570
      %v1612 = vpack.c.bf16 %v1573, %v1572
      %v1613 = vpack.c.bf16 %v1575, %v1574
      %v1614 = vpack.c.bf16 %v1577, %v1576
      %v1615 = vpack.c.bf16 %v1579, %v1578
      %v1616 = vpack.c.bf16 %v1581, %v1580
      %v1617 = vpack.c.bf16 %v1583, %v1582
      %v1618 = vpack.c.bf16 %v1585, %v1584
      %v1619 = vpack.c.bf16 %v1587, %v1586
      %v1620 = vpack.c.bf16 %v1589, %v1588
      %v1621 = vpack.c.bf16 %v1591, %v1590
      %v1622 = vpack.c.bf16 %v1593, %v1592
      %v1623 = vpack.c.bf16 %v1595, %v1594
      %v1624 = vpack.c.bf16 %v1597, %v1596
      %v1625 = vpack.c.bf16 %v1599, %v1598
      %v1626 = vpack.c.bf16 %v1601, %v1600
      %v1652 = vunpack.c.l.b16 %v1602
      %v1653 = vunpack.c.h.b16 %v1602
      %v1654 = vunpack.c.l.b16 %v1603
      %v1655 = vunpack.c.h.b16 %v1603
      %v1656 = vunpack.c.l.b16 %v1604
      %v1657 = vunpack.c.h.b16 %v1604
      %v1658 = vunpack.c.l.b16 %v1605
      %v1659 = vunpack.c.h.b16 %v1605
      %v1660 = vunpack.c.l.b16 %v1606
      %v1661 = vunpack.c.h.b16 %v1606
      %v1662 = vunpack.c.l.b16 %v1607
      %v1663 = vunpack.c.h.b16 %v1607
      %v1664 = vunpack.c.l.b16 %v1608
      %v1665 = vunpack.c.h.b16 %v1608
      %v1666 = vunpack.c.l.b16 %v1609
      %v1667 = vunpack.c.h.b16 %v1609
      %v1668 = vunpack.c.l.b16 %v1610
      %v1669 = vunpack.c.h.b16 %v1610
      %v1670 = vunpack.c.l.b16 %v1611
      %v1671 = vunpack.c.h.b16 %v1611
      %v1672 = vunpack.c.l.b16 %v1612
      %v1673 = vunpack.c.h.b16 %v1612
      %v1674 = vunpack.c.l.b16 %v1613
      %v1675 = vunpack.c.h.b16 %v1613
      %v1676 = vunpack.c.l.b16 %v1614
      %v1677 = vunpack.c.h.b16 %v1614
      %v1678 = vunpack.c.l.b16 %v1615
      %v1679 = vunpack.c.h.b16 %v1615
      %v1680 = vunpack.c.l.b16 %v1616
      %v1681 = vunpack.c.h.b16 %v1616
      %v1682 = vunpack.c.l.b16 %v1617
      %v1683 = vunpack.c.h.b16 %v1617
      %v1684 = vunpack.c.l.b16 %v1618
      %v1685 = vunpack.c.h.b16 %v1618
      %v1686 = vunpack.c.l.b16 %v1619
      %v1687 = vunpack.c.h.b16 %v1619
      %v1688 = vunpack.c.l.b16 %v1620
      %v1689 = vunpack.c.h.b16 %v1620
      %v1690 = vunpack.c.l.b16 %v1621
      %v1691 = vunpack.c.h.b16 %v1621
      %v1692 = vunpack.c.l.b16 %v1622
      %v1693 = vunpack.c.h.b16 %v1622
      %v1694 = vunpack.c.l.b16 %v1623
      %v1695 = vunpack.c.h.b16 %v1623
      %v1696 = vunpack.c.l.b16 %v1624
      %v1697 = vunpack.c.h.b16 %v1624
      %v1698 = vunpack.c.l.b16 %v1625
      %v1699 = vunpack.c.h.b16 %v1625
      %v1700 = vunpack.c.l.b16 %v1626
      %v1701 = vunpack.c.h.b16 %v1626
      %v1702 = vpack.c.b16 %v1652, %v1652
      %v1703 = vpack.c.b16 %v1653, %v1653
      %v1704 = vpack.c.b16 %v1654, %v1654
      %v1705 = vpack.c.b16 %v1655, %v1655
      %v1706 = vpack.c.b16 %v1656, %v1656
      %v1707 = vpack.c.b16 %v1657, %v1657
      %v1708 = vpack.c.b16 %v1658, %v1658
      %v1709 = vpack.c.b16 %v1659, %v1659
      %v1710 = vpack.c.b16 %v1660, %v1660
      %v1711 = vpack.c.b16 %v1661, %v1661
      %v1712 = vpack.c.b16 %v1662, %v1662
      %v1713 = vpack.c.b16 %v1663, %v1663
      %v1714 = vpack.c.b16 %v1664, %v1664
      %v1715 = vpack.c.b16 %v1665, %v1665
      %v1716 = vpack.c.b16 %v1666, %v1666
      %v1717 = vpack.c.b16 %v1667, %v1667
      %v1718 = vpack.c.b16 %v1668, %v1668
      %v1719 = vpack.c.b16 %v1669, %v1669
      %v1720 = vpack.c.b16 %v1670, %v1670
      %v1721 = vpack.c.b16 %v1671, %v1671
      %v1722 = vpack.c.b16 %v1672, %v1672
      %v1723 = vpack.c.b16 %v1673, %v1673
      %v1724 = vpack.c.b16 %v1674, %v1674
      %v1725 = vpack.c.b16 %v1675, %v1675
      %v1726 = vpack.c.b16 %v1676, %v1676
      %v1727 = vpack.c.b16 %v1677, %v1677
      %v1728 = vpack.c.b16 %v1678, %v1678
      %v1729 = vpack.c.b16 %v1679, %v1679
      %v1730 = vpack.c.b16 %v1680, %v1680
      %v1731 = vpack.c.b16 %v1681, %v1681
      %v1732 = vpack.c.b16 %v1682, %v1682
      %v1733 = vpack.c.b16 %v1683, %v1683
      %v1734 = vpack.c.b16 %v1684, %v1684
      %v1735 = vpack.c.b16 %v1685, %v1685
      %v1736 = vpack.c.b16 %v1686, %v1686
      %v1737 = vpack.c.b16 %v1687, %v1687
      %v1738 = vpack.c.b16 %v1688, %v1688
      %v1739 = vpack.c.b16 %v1689, %v1689
      %v1740 = vpack.c.b16 %v1690, %v1690
      %v1741 = vpack.c.b16 %v1691, %v1691
      %v1742 = vpack.c.b16 %v1692, %v1692
      %v1743 = vpack.c.b16 %v1693, %v1693
      %v1744 = vpack.c.b16 %v1694, %v1694
      %v1745 = vpack.c.b16 %v1695, %v1695
      %v1746 = vpack.c.b16 %v1696, %v1696
      %v1747 = vpack.c.b16 %v1697, %v1697
      %v1748 = vpack.c.b16 %v1698, %v1698
      %v1749 = vpack.c.b16 %v1699, %v1699
      %v1750 = vpack.c.b16 %v1700, %v1700
      %v1751 = vpack.c.b16 %v1701, %v1701
      %1802 = vst [vmem:[%s175] sm:$0xf] %v1702
      %1803 = vst [vmem:[%s175 + $0x4] sm:$0xf] %v1703
      %1804 = vst [vmem:[%s175 + $0x8] sm:$0xf] %v1704
      %1805 = vst [vmem:[%s175 + $0xc] sm:$0xf] %v1705
      %1806 = vst [vmem:[%s175 + $0x10] sm:$0xf] %v1706
      %1807 = vst [vmem:[%s175 + $0x14] sm:$0xf] %v1707
      %1808 = vst [vmem:[%s175 + $0x18] sm:$0xf] %v1708
      %1809 = vst [vmem:[%s175 + $0x1c] sm:$0xf] %v1709
      %1810 = vst [vmem:[%s175 + $0x20] sm:$0xf] %v1710
      %1811 = vst [vmem:[%s175 + $0x24] sm:$0xf] %v1711
      %1812 = vst [vmem:[%s175 + $0x28] sm:$0xf] %v1712
      %1813 = vst [vmem:[%s175 + $0x2c] sm:$0xf] %v1713
      %1814 = vst [vmem:[%s175 + $0x30] sm:$0xf] %v1714
      %1815 = vst [vmem:[%s175 + $0x34] sm:$0xf] %v1715
      %1816 = vst [vmem:[%s175 + $0x38] sm:$0xf] %v1716
      %1817 = vst [vmem:[%s175 + $0x3c] sm:$0xf] %v1717
      %1818 = vst [vmem:[%s175 + $0x40] sm:$0xf] %v1718
      %1819 = vst [vmem:[%s175 + $0x44] sm:$0xf] %v1719
      %1820 = vst [vmem:[%s175 + $0x48] sm:$0xf] %v1720
      %1821 = vst [vmem:[%s175 + $0x4c] sm:$0xf] %v1721
      %1822 = vst [vmem:[%s175 + $0x50] sm:$0xf] %v1722
      %1823 = vst [vmem:[%s175 + $0x54] sm:$0xf] %v1723
      %1824 = vst [vmem:[%s175 + $0x58] sm:$0xf] %v1724
      %1825 = vst [vmem:[%s175 + $0x5c] sm:$0xf] %v1725
      %1826 = vst [vmem:[%s175 + $0x60] sm:$0xf] %v1726
      %1827 = vst [vmem:[%s175 + $0x64] sm:$0xf] %v1727
      %1828 = vst [vmem:[%s175 + $0x68] sm:$0xf] %v1728
      %1829 = vst [vmem:[%s175 + $0x6c] sm:$0xf] %v1729
      %1830 = vst [vmem:[%s175 + $0x70] sm:$0xf] %v1730
      %1831 = vst [vmem:[%s175 + $0x74] sm:$0xf] %v1731
      %1832 = vst [vmem:[%s175 + $0x78] sm:$0xf] %v1732
      %1833 = vst [vmem:[%s175 + $0x7c] sm:$0xf] %v1733
      %1834 = vst [vmem:[%s175 + $0x80] sm:$0xf] %v1734
      %1835 = vst [vmem:[%s175 + $0x84] sm:$0xf] %v1735
      %1836 = vst [vmem:[%s175 + $0x88] sm:$0xf] %v1736
      %1837 = vst [vmem:[%s175 + $0x8c] sm:$0xf] %v1737
      %1838 = vst [vmem:[%s175 + $0x90] sm:$0xf] %v1738
      %1839 = vst [vmem:[%s175 + $0x94] sm:$0xf] %v1739
      %1840 = vst [vmem:[%s175 + $0x98] sm:$0xf] %v1740
      %1841 = vst [vmem:[%s175 + $0x9c] sm:$0xf] %v1741
      %1842 = vst [vmem:[%s175 + $0xa0] sm:$0xf] %v1742
      %1843 = vst [vmem:[%s175 + $0xa4] sm:$0xf] %v1743
      %1844 = vst [vmem:[%s175 + $0xa8] sm:$0xf] %v1744
      %1845 = vst [vmem:[%s175 + $0xac] sm:$0xf] %v1745
      %1846 = vst [vmem:[%s175 + $0xb0] sm:$0xf] %v1746
      %1847 = vst [vmem:[%s175 + $0xb4] sm:$0xf] %v1747
      %1848 = vst [vmem:[%s175 + $0xb8] sm:$0xf] %v1748
      %1849 = vst [vmem:[%s175 + $0xbc] sm:$0xf] %v1749
      %1850 = vst [vmem:[%s175 + $0xc0] sm:$0xf] %v1750
      %1851 = vst [vmem:[%s175 + $0xc4] sm:$0xf] %v1751
      %s1852 = smul.u32 50, %s14
      %p1853 = scmp.lt.s32.totalorder %s1852, 199
      %s1854 = scalar_select %p1853, %s1852, 199
      %s1855 = smul.addr %s1854, 4
      %s1856 = scalar_lea.vmem %s3, %s1855
      // Predicated region
      $region33: #{discriminator_forward.5} parent=31 // pred_check
        %p1857 = pneg %p100
      $region34: #{discriminator_forward.5} parent=31 // pred_check_branch
        %1859 = sbr.rel (%p1857) target = $region36
      $region35: #{discriminator_forward.5} parent=31 // pred_region
        %s1860 = smul.u32 50, %s14
      $region36: #{discriminator_forward.5} parent=31 // pred_fallthru
        _
    $region32: #{discriminator_forward.5} parent=5 // pred_fallthru
      _
    %p1861 = scmp.le.s32.totalorder 2, %s9
    // Predicated region
    $region37: #{discriminator_forward.5} parent=5 // pred_check
      %p1862 = pneg %p1861
    $region38: #{discriminator_forward.5} parent=5 // pred_check_branch
      %1864 = sbr.rel (%p1862) target = $region40
    $region39: #{discriminator_forward.5} parent=5 // pred_region
      %s1865 = ssub.s32 %s9, 2
      // Predicated region
      $region41: #{discriminator_forward.5} parent=39 // pred_check
        %p1866 = pneg %p106
      $region42: #{discriminator_forward.5} parent=39 // pred_check_branch
        %1868 = sbr.rel (%p1866) target = $region44
      $region43: #{discriminator_forward.5} parent=39 // pred_region
        %s1869 = smul.u32 50, %s15
        %p1870 = scmp.lt.s32.totalorder %s1869, 199
        %s1871 = scalar_select %p1870, %s1869, 199
        %s1872 = smul.addr %s1871, 4
        %s1873 = scalar_lea.vmem %s3, %s1872
      $region44: #{discriminator_forward.5} parent=39 // pred_fallthru
        _
    $region40: #{discriminator_forward.5} parent=5 // pred_fallthru
      _
  $region6: #{discriminator_forward.5} parent=0 // loop_footer
    %s13 = sadd.s32 1, %s9
  $region7: #{discriminator_forward.5} parent=0 // loop_footer_branch
    %8 = sbr.rel target = $region3
  $region8: #{discriminator_forward.5} parent=0 // loop_exit
    _

// kernel: discriminator_forward.6
$region0: #{discriminator_forward.6}
  #allocation0 [shape = 'u32[]', space=smem, size = 0x4, offset = 0x4, fixed_abs, tag = 'smem constant byte address 0x4 - core index']
  #allocation1 [shape = 'u32[144,128]{1,0:T(1,128)}', space=vmem, size = 0x12000, scoped, tag = 'internal scratch']
  %s0 = inlined_call_operand.vmem [shape: bf16[832,1600], index: 0, kind: input, shape index: {}]
  %s1 = inlined_call_operand.vmem [shape: bf16[1600,128], index: 1, kind: input, shape index: {}]
  %s2 = inlined_call_operand.vmem [shape: f32[1,128], index: 2, kind: input, shape index: {}]
  %s3 = inlined_call_operand.vmem [shape: bf16[832,128], index: 3, kind: output, shape index: {}]
  %s4 = sld [smem:[#allocation0]]
  $region45: #{discriminator_forward.6} parent=0
    _
  %s6 = ssub.s32 1, %s4
  %s7 = scalar_select 0, %s6, %s4
  loop: start=0, step=1, limit=6
  $region2: #{discriminator_forward.6} parent=0 // loop_pre_header
    _
  $region3: #{discriminator_forward.6} parent=0 // loop_header
    %s9 = sphi 0, %s13
    %p10 = scmp.ge.s32.totalorder %s9, 6
    %s19 = sphi 0, %s21
    %s22 = sphi 0, %s19
    %s23 = sphi 0, %s22
    %s39 = sphi 0, %s23
    %s43 = sphi 0, %s43
    %s45 = sphi 0, %s43
    %s46 = sphi 0, %s45
    %s60 = sphi 0, %s46
    %s64 = sphi 0, %s64
    %s66 = sphi 0, %s64
    %s67 = sphi 0, %s66
    %s81 = sphi 0, %s67
    %s87 = sphi 0, %s89
    %s90 = sphi 0, %s87
    %s91 = sphi 0, %s90
    %s107 = sphi 0, %s91
  $region4: #{discriminator_forward.6} parent=0 // loop_header_branch
    %12 = sbr.rel (%p10) target = $region8
  $region5: #{discriminator_forward.6} parent=0 // loop_body
    %s14 = ssub.s32 %s9, 1
    %s15 = ssub.s32 %s9, 2
    %s16 = sadd.s32 %s9, 1
    %s17 = ssub.s32 %s9, %s16
    %p18 = scmp.eq.s32.totalorder %s17, 0
    %s20 = sadd.s32 %s19, 1
    %s21 = scalar_select %p18, %s19, %s20
    %p24 = pneg %p18
    %p25 = scmp.eq.s32.totalorder %s9, 3
    %p26 = por %p24, %p25
    %p27 = scmp.ne.s32.totalorder %s19, %s22
    %p28 = scmp.eq.s32.totalorder %s9, 0
    %p29 = por %p27, %p28
    %p30 = scmp.ne.s32.totalorder %s19, %s22
    %p31 = scmp.eq.s32.totalorder %s14, 3
    %p32 = por %p30, %p31
    %p33 = scmp.ne.s32.totalorder %s22, %s23
    %p34 = scmp.eq.s32.totalorder %s14, 0
    %p35 = por %p33, %p34
    %p36 = scmp.ne.s32.totalorder %s22, %s23
    %p37 = scmp.eq.s32.totalorder %s15, 3
    %p38 = por %p36, %p37
    %p40 = scmp.ne.s32.totalorder %s23, %s39
    %p41 = scmp.eq.s32.totalorder %s15, 0
    %p42 = por %p40, %p41
    %s44 = sadd.s32 %s43, 1
    %p47 = scmp.eq.s32.totalorder %s9, 3
    %p48 = scmp.ne.s32.totalorder %s43, %s45
    %p49 = scmp.eq.s32.totalorder %s9, 0
    %p50 = por %p48, %p49
    %p51 = scmp.ne.s32.totalorder %s43, %s45
    %p52 = scmp.eq.s32.totalorder %s14, 3
    %p53 = por %p51, %p52
    %p54 = scmp.ne.s32.totalorder %s45, %s46
    %p55 = scmp.eq.s32.totalorder %s14, 0
    %p56 = por %p54, %p55
    %p57 = scmp.ne.s32.totalorder %s45, %s46
    %p58 = scmp.eq.s32.totalorder %s15, 3
    %p59 = por %p57, %p58
    %p61 = scmp.ne.s32.totalorder %s46, %s60
    %p62 = scmp.eq.s32.totalorder %s15, 0
    %p63 = por %p61, %p62
    %s65 = sadd.s32 %s64, 1
    %p68 = scmp.eq.s32.totalorder %s9, 3
    %p69 = scmp.ne.s32.totalorder %s64, %s66
    %p70 = scmp.eq.s32.totalorder %s9, 0
    %p71 = por %p69, %p70
    %p72 = scmp.ne.s32.totalorder %s64, %s66
    %p73 = scmp.eq.s32.totalorder %s14, 3
    %p74 = por %p72, %p73
    %p75 = scmp.ne.s32.totalorder %s66, %s67
    %p76 = scmp.eq.s32.totalorder %s14, 0
    %p77 = por %p75, %p76
    %p78 = scmp.ne.s32.totalorder %s66, %s67
    %p79 = scmp.eq.s32.totalorder %s15, 3
    %p80 = por %p78, %p79
    %p82 = scmp.ne.s32.totalorder %s67, %s81
    %p83 = scmp.eq.s32.totalorder %s15, 0
    %p84 = por %p82, %p83
    %s85 = ssub.s32 %s9, %s16
    %p86 = scmp.eq.s32.totalorder %s85, 0
    %s88 = sadd.s32 %s87, 1
    %s89 = scalar_select %p86, %s87, %s88
    %p92 = pneg %p86
    %p93 = scmp.eq.s32.totalorder %s9, 3
    %p94 = por %p92, %p93
    %p95 = scmp.ne.s32.totalorder %s87, %s90
    %p96 = scmp.eq.s32.totalorder %s9, 0
    %p97 = por %p95, %p96
    %p98 = scmp.ne.s32.totalorder %s87, %s90
    %p99 = scmp.eq.s32.totalorder %s14, 3
    %p100 = por %p98, %p99
    %p101 = scmp.ne.s32.totalorder %s90, %s91
    %p102 = scmp.eq.s32.totalorder %s14, 0
    %p103 = por %p101, %p102
    %p104 = scmp.ne.s32.totalorder %s90, %s91
    %p105 = scmp.eq.s32.totalorder %s15, 3
    %p106 = por %p104, %p105
    %p108 = scmp.ne.s32.totalorder %s91, %s107
    %p109 = scmp.eq.s32.totalorder %s15, 0
    %p110 = por %p108, %p109
    %p111 = scmp.le.s32.totalorder 1, %s9
    %p112 = scmp.lt.s32.totalorder %s9, 5
    %p113 = pnand %p111, %p112
    %p114 = pneg %p113
    // Predicated region
    $region9: #{discriminator_forward.6} parent=5 // pred_check
      _
    $region10: #{discriminator_forward.6} parent=5 // pred_check_branch
      %116 = sbr.rel (%p113) target = $region12
    $region11: #{discriminator_forward.6} parent=5 // pred_region
      %s117 = ssub.s32 %s9, 1
      // Predicated region
      $region13: #{discriminator_forward.6} parent=11 // pred_check
        %p118 = pneg %p56
      $region14: #{discriminator_forward.6} parent=11 // pred_check_branch
        %120 = sbr.rel (%p118) target = $region16
      $region15: #{discriminator_forward.6} parent=11 // pred_region
        _
      $region16: #{discriminator_forward.6} parent=11 // pred_fallthru
        _
      // Predicated region
      $region17: #{discriminator_forward.6} parent=11 // pred_check
        %p121 = pneg %p77
      $region18: #{discriminator_forward.6} parent=11 // pred_check_branch
        %123 = sbr.rel (%p121) target = $region20
      $region19: #{discriminator_forward.6} parent=11 // pred_region
        _
      $region20: #{discriminator_forward.6} parent=11 // pred_fallthru
        _
    $region12: #{discriminator_forward.6} parent=5 // pred_fallthru
      _
    %p124 = scmp.lt.s32.totalorder %s9, 4
    // Predicated region
    $region21: #{discriminator_forward.6} parent=5 // pred_check
      %p125 = pneg %p124
    $region22: #{discriminator_forward.6} parent=5 // pred_check_branch
      %127 = sbr.rel (%p125) target = $region24
    $region23: #{discriminator_forward.6} parent=5 // pred_region
      // Predicated region
      $region25: #{discriminator_forward.6} parent=23 // pred_check
        %p128 = pneg %p29
      $region26: #{discriminator_forward.6} parent=23 // pred_check_branch
        %130 = sbr.rel (%p128) target = $region28
      $region27: #{discriminator_forward.6} parent=23 // pred_region
        %s131 = smul.u32 26, %s9
        %p132 = scmp.lt.s32.totalorder %s131, 103
        %s133 = scalar_select %p132, %s131, 103
        %s134 = smul.addr %s133, 13
        %s135 = smul.addr %s134, 4
        %s136 = scalar_lea.vmem %s0, %s135
        %s137 = smul.u32 26, %s9
      $region28: #{discriminator_forward.6} parent=23 // pred_fallthru
        _
    $region24: #{discriminator_forward.6} parent=5 // pred_fallthru
      _
    %p138 = scmp.le.s32.totalorder 1, %s9
    %p139 = scmp.lt.s32.totalorder %s9, 5
    %p140 = pnand %p138, %p139
    %p141 = pneg %p140
    // Predicated region
    $region29: #{discriminator_forward.6} parent=5 // pred_check
      _
    $region30: #{discriminator_forward.6} parent=5 // pred_check_branch
      %143 = sbr.rel (%p140) target = $region32
    $region31: #{discriminator_forward.6} parent=5 // pred_region
      %s144 = ssub.s32 %s9, 1
      %s145 = smul.u32 26, %s14
      %p146 = scmp.lt.s32.totalorder %s145, 103
      %s147 = scalar_select %p146, %s145, 103
      %s148 = smul.addr %s147, 13
      %s149 = smul.addr %s148, 4
      %s150 = scalar_lea.vmem %s0, %s149
      %p151 = pneg %p35
      %p152 = pneg %p32
      %p153 = pneg %p56
      %p154 = pneg %p53
      %p155 = pneg %p77
      %p156 = pneg %p74
      %p157 = pneg %p103
      %p158 = pneg %p100
      %s159 = smul.u32 26, %s14
      %p160 = scmp.lt.s32.totalorder %s159, 103
      %s161 = scalar_select %p160, %s159, 103
      %s162 = smul.addr %s161, 4
      %s163 = scalar_lea.vmem %s3, %s162
      %s164 = smul.u32 26, %s14
      %p165 = scmp.lt.s32.totalorder %s164, 103
      %s166 = scalar_select %p165, %s164, 103
      %s167 = smul.addr %s166, 13
      %s168 = smul.addr %s167, 4
      %s169 = scalar_lea.vmem %s0, %s168
      %s170 = smul.u32 26, %s14
      %s171 = smul.u32 26, %s14
      %p172 = scmp.lt.s32.totalorder %s171, 103
      %s173 = scalar_select %p172, %s171, 103
      %s174 = smul.addr %s173, 4
      %s175 = scalar_lea.vmem %s3, %s174
      %s176 = smul.u32 26, %s14
      %v178 = vld [vmem:[%s169] sm:$0xff]
      %v179 = vld [vmem:[%s169 + $0x8] sm:$0xff]
      %v180 = vld [vmem:[%s169 + $0x10] sm:$0xff]
      %v181 = vld [vmem:[%s169 + $0x18] sm:$0xff]
      %v182 = vld [vmem:[%s169 + $0x20] sm:$0xff]
      %v183 = vld [vmem:[%s169 + $0x28] sm:$0xff]
      %v184 = vld [vmem:[%s169 + $0x30] sm:$0xf]
      %v185 = vld [vmem:[%s169 + $0x34] sm:$0xff]
      %v186 = vld [vmem:[%s169 + $0x3c] sm:$0xff]
      %v187 = vld [vmem:[%s169 + $0x44] sm:$0xff]
      %v188 = vld [vmem:[%s169 + $0x4c] sm:$0xff]
      %v189 = vld [vmem:[%s169 + $0x54] sm:$0xff]
      %v190 = vld [vmem:[%s169 + $0x5c] sm:$0xff]
      %v191 = vld [vmem:[%s169 + $0x64] sm:$0xf]
      %v192 = vld [vmem:[%s169 + $0x68] sm:$0xff]
      %v193 = vld [vmem:[%s169 + $0x70] sm:$0xff]
      %v194 = vld [vmem:[%s169 + $0x78] sm:$0xff]
      %v195 = vld [vmem:[%s169 + $0x80] sm:$0xff]
      %v196 = vld [vmem:[%s169 + $0x88] sm:$0xff]
      %v197 = vld [vmem:[%s169 + $0x90] sm:$0xff]
      %v198 = vld [vmem:[%s169 + $0x98] sm:$0xf]
      %v199 = vld [vmem:[%s169 + $0x9c] sm:$0xff]
      %v200 = vld [vmem:[%s169 + $0xa4] sm:$0xff]
      %v201 = vld [vmem:[%s169 + $0xac] sm:$0xff]
      %v202 = vld [vmem:[%s169 + $0xb4] sm:$0xff]
      %v203 = vld [vmem:[%s169 + $0xbc] sm:$0xff]
      %v204 = vld [vmem:[%s169 + $0xc4] sm:$0xff]
      %v205 = vld [vmem:[%s169 + $0xcc] sm:$0xf]
      %v206 = vld [vmem:[%s169 + $0xd0] sm:$0xff]
      %v207 = vld [vmem:[%s169 + $0xd8] sm:$0xff]
      %v208 = vld [vmem:[%s169 + $0xe0] sm:$0xff]
      %v209 = vld [vmem:[%s169 + $0xe8] sm:$0xff]
      %v210 = vld [vmem:[%s169 + $0xf0] sm:$0xff]
      %v211 = vld [vmem:[%s169 + $0xf8] sm:$0xff]
      %v212 = vld [vmem:[%s169 + $0x100] sm:$0xf]
      %v213 = vld [vmem:[%s169 + $0x104] sm:$0xff]
      %v214 = vld [vmem:[%s169 + $0x10c] sm:$0xff]
      %v215 = vld [vmem:[%s169 + $0x114] sm:$0xff]
      %v216 = vld [vmem:[%s169 + $0x11c] sm:$0xff]
      %v217 = vld [vmem:[%s169 + $0x124] sm:$0xff]
      %v218 = vld [vmem:[%s169 + $0x12c] sm:$0xff]
      %v219 = vld [vmem:[%s169 + $0x134] sm:$0xf]
      %v220 = vld [vmem:[%s169 + $0x138] sm:$0xff]
      %v221 = vld [vmem:[%s169 + $0x140] sm:$0xff]
      %v222 = vld [vmem:[%s169 + $0x148] sm:$0xff]
      %v223 = vld [vmem:[%s169 + $0x150] sm:$0xff]
      %v224 = vld [vmem:[%s169 + $0x158] sm:$0xff]
      %v225 = vld [vmem:[%s169 + $0x160] sm:$0xff]
      %v226 = vld [vmem:[%s169 + $0x168] sm:$0xf]
      %v227 = vld [vmem:[%s169 + $0x16c] sm:$0xff]
      %v228 = vld [vmem:[%s169 + $0x174] sm:$0xff]
      %v229 = vld [vmem:[%s169 + $0x17c] sm:$0xff]
      %v230 = vld [vmem:[%s169 + $0x184] sm:$0xff]
      %v231 = vld [vmem:[%s169 + $0x18c] sm:$0xff]
      %v232 = vld [vmem:[%s169 + $0x194] sm:$0xff]
      %v233 = vld [vmem:[%s169 + $0x19c] sm:$0xf]
      %v234 = vld [vmem:[%s169 + $0x1a0] sm:$0xff]
      %v235 = vld [vmem:[%s169 + $0x1a8] sm:$0xff]
      %v236 = vld [vmem:[%s169 + $0x1b0] sm:$0xff]
      %v237 = vld [vmem:[%s169 + $0x1b8] sm:$0xff]
      %v238 = vld [vmem:[%s169 + $0x1c0] sm:$0xff]
      %v239 = vld [vmem:[%s169 + $0x1c8] sm:$0xff]
      %v240 = vld [vmem:[%s169 + $0x1d0] sm:$0xf]
      %v241 = vld [vmem:[%s169 + $0x1d4] sm:$0xff]
      %v242 = vld [vmem:[%s169 + $0x1dc] sm:$0xff]
      %v243 = vld [vmem:[%s169 + $0x1e4] sm:$0xff]
      %v244 = vld [vmem:[%s169 + $0x1ec] sm:$0xff]
      %v245 = vld [vmem:[%s169 + $0x1f4] sm:$0xff]
      %v246 = vld [vmem:[%s169 + $0x1fc] sm:$0xff]
      %v247 = vld [vmem:[%s169 + $0x204] sm:$0xf]
      %v248 = vld [vmem:[%s169 + $0x208] sm:$0xff]
      %v249 = vld [vmem:[%s169 + $0x210] sm:$0xff]
      %v250 = vld [vmem:[%s169 + $0x218] sm:$0xff]
      %v251 = vld [vmem:[%s169 + $0x220] sm:$0xff]
      %v252 = vld [vmem:[%s169 + $0x228] sm:$0xff]
      %v253 = vld [vmem:[%s169 + $0x230] sm:$0xff]
      %v254 = vld [vmem:[%s169 + $0x238] sm:$0xf]
      %v255 = vld [vmem:[%s169 + $0x23c] sm:$0xff]
      %v256 = vld [vmem:[%s169 + $0x244] sm:$0xff]
      %v257 = vld [vmem:[%s169 + $0x24c] sm:$0xff]
      %v258 = vld [vmem:[%s169 + $0x254] sm:$0xff]
      %v259 = vld [vmem:[%s169 + $0x25c] sm:$0xff]
      %v260 = vld [vmem:[%s169 + $0x264] sm:$0xff]
      %v261 = vld [vmem:[%s169 + $0x26c] sm:$0xf]
      %v262 = vld [vmem:[%s169 + $0x270] sm:$0xff]
      %v263 = vld [vmem:[%s169 + $0x278] sm:$0xff]
      %v264 = vld [vmem:[%s169 + $0x280] sm:$0xff]
      %v265 = vld [vmem:[%s169 + $0x288] sm:$0xff]
      %v266 = vld [vmem:[%s169 + $0x290] sm:$0xff]
      %v267 = vld [vmem:[%s169 + $0x298] sm:$0xff]
      %v268 = vld [vmem:[%s169 + $0x2a0] sm:$0xf]
      %v269 = vld [vmem:[%s169 + $0x2a4] sm:$0xff]
      %v270 = vld [vmem:[%s169 + $0x2ac] sm:$0xff]
      %v271 = vld [vmem:[%s169 + $0x2b4] sm:$0xff]
      %v272 = vld [vmem:[%s169 + $0x2bc] sm:$0xff]
      %v273 = vld [vmem:[%s169 + $0x2c4] sm:$0xff]
      %v274 = vld [vmem:[%s169 + $0x2cc] sm:$0xff]
      %v275 = vld [vmem:[%s169 + $0x2d4] sm:$0xf]
      %v276 = vld [vmem:[%s169 + $0x2d8] sm:$0xff]
      %v277 = vld [vmem:[%s169 + $0x2e0] sm:$0xff]
      %v278 = vld [vmem:[%s169 + $0x2e8] sm:$0xff]
      %v279 = vld [vmem:[%s169 + $0x2f0] sm:$0xff]
      %v280 = vld [vmem:[%s169 + $0x2f8] sm:$0xff]
      %v281 = vld [vmem:[%s169 + $0x300] sm:$0xff]
      %v282 = vld [vmem:[%s169 + $0x308] sm:$0xf]
      %v283 = vld [vmem:[%s169 + $0x30c] sm:$0xff]
      %v284 = vld [vmem:[%s169 + $0x314] sm:$0xff]
      %v285 = vld [vmem:[%s169 + $0x31c] sm:$0xff]
      %v286 = vld [vmem:[%s169 + $0x324] sm:$0xff]
      %v287 = vld [vmem:[%s169 + $0x32c] sm:$0xff]
      %v288 = vld [vmem:[%s169 + $0x334] sm:$0xff]
      %v289 = vld [vmem:[%s169 + $0x33c] sm:$0xf]
      %v290 = vld [vmem:[%s169 + $0x340] sm:$0xff]
      %v291 = vld [vmem:[%s169 + $0x348] sm:$0xff]
      %v292 = vld [vmem:[%s169 + $0x350] sm:$0xff]
      %v293 = vld [vmem:[%s169 + $0x358] sm:$0xff]
      %v294 = vld [vmem:[%s169 + $0x360] sm:$0xff]
      %v295 = vld [vmem:[%s169 + $0x368] sm:$0xff]
      %v296 = vld [vmem:[%s169 + $0x370] sm:$0xf]
      %v297 = vld [vmem:[%s169 + $0x374] sm:$0xff]
      %v298 = vld [vmem:[%s169 + $0x37c] sm:$0xff]
      %v299 = vld [vmem:[%s169 + $0x384] sm:$0xff]
      %v300 = vld [vmem:[%s169 + $0x38c] sm:$0xff]
      %v301 = vld [vmem:[%s169 + $0x394] sm:$0xff]
      %v302 = vld [vmem:[%s169 + $0x39c] sm:$0xff]
      %v303 = vld [vmem:[%s169 + $0x3a4] sm:$0xf]
      %v304 = vld [vmem:[%s169 + $0x3a8] sm:$0xff]
      %v305 = vld [vmem:[%s169 + $0x3b0] sm:$0xff]
      %v306 = vld [vmem:[%s169 + $0x3b8] sm:$0xff]
      %v307 = vld [vmem:[%s169 + $0x3c0] sm:$0xff]
      %v308 = vld [vmem:[%s169 + $0x3c8] sm:$0xff]
      %v309 = vld [vmem:[%s169 + $0x3d0] sm:$0xff]
      %v310 = vld [vmem:[%s169 + $0x3d8] sm:$0xf]
      %v311 = vld [vmem:[%s169 + $0x3dc] sm:$0xff]
      %v312 = vld [vmem:[%s169 + $0x3e4] sm:$0xff]
      %v313 = vld [vmem:[%s169 + $0x3ec] sm:$0xff]
      %v314 = vld [vmem:[%s169 + $0x3f4] sm:$0xff]
      %v315 = vld [vmem:[%s169 + $0x3fc] sm:$0xff]
      %v316 = vld [vmem:[%s169 + $0x404] sm:$0xff]
      %v317 = vld [vmem:[%s169 + $0x40c] sm:$0xf]
      %v318 = vld [vmem:[%s169 + $0x410] sm:$0xff]
      %v319 = vld [vmem:[%s169 + $0x418] sm:$0xff]
      %v320 = vld [vmem:[%s169 + $0x420] sm:$0xff]
      %v321 = vld [vmem:[%s169 + $0x428] sm:$0xff]
      %v322 = vld [vmem:[%s169 + $0x430] sm:$0xff]
      %v323 = vld [vmem:[%s169 + $0x438] sm:$0xff]
      %v324 = vld [vmem:[%s169 + $0x440] sm:$0xf]
      %v325 = vld [vmem:[%s169 + $0x444] sm:$0xff]
      %v326 = vld [vmem:[%s169 + $0x44c] sm:$0xff]
      %v327 = vld [vmem:[%s169 + $0x454] sm:$0xff]
      %v328 = vld [vmem:[%s169 + $0x45c] sm:$0xff]
      %v329 = vld [vmem:[%s169 + $0x464] sm:$0xff]
      %v330 = vld [vmem:[%s169 + $0x46c] sm:$0xff]
      %v331 = vld [vmem:[%s169 + $0x474] sm:$0xf]
      %v332 = vld [vmem:[%s169 + $0x478] sm:$0xff]
      %v333 = vld [vmem:[%s169 + $0x480] sm:$0xff]
      %v334 = vld [vmem:[%s169 + $0x488] sm:$0xff]
      %v335 = vld [vmem:[%s169 + $0x490] sm:$0xff]
      %v336 = vld [vmem:[%s169 + $0x498] sm:$0xff]
      %v337 = vld [vmem:[%s169 + $0x4a0] sm:$0xff]
      %v338 = vld [vmem:[%s169 + $0x4a8] sm:$0xf]
      %v339 = vld [vmem:[%s169 + $0x4ac] sm:$0xff]
      %v340 = vld [vmem:[%s169 + $0x4b4] sm:$0xff]
      %v341 = vld [vmem:[%s169 + $0x4bc] sm:$0xff]
      %v342 = vld [vmem:[%s169 + $0x4c4] sm:$0xff]
      %v343 = vld [vmem:[%s169 + $0x4cc] sm:$0xff]
      %v344 = vld [vmem:[%s169 + $0x4d4] sm:$0xff]
      %v345 = vld [vmem:[%s169 + $0x4dc] sm:$0xf]
      %v346 = vld [vmem:[%s169 + $0x4e0] sm:$0xff]
      %v347 = vld [vmem:[%s169 + $0x4e8] sm:$0xff]
      %v348 = vld [vmem:[%s169 + $0x4f0] sm:$0xff]
      %v349 = vld [vmem:[%s169 + $0x4f8] sm:$0xff]
      %v350 = vld [vmem:[%s169 + $0x500] sm:$0xff]
      %v351 = vld [vmem:[%s169 + $0x508] sm:$0xff]
      %v352 = vld [vmem:[%s169 + $0x510] sm:$0xf]
      %v353 = vld [vmem:[%s169 + $0x514] sm:$0xff]
      %v354 = vld [vmem:[%s169 + $0x51c] sm:$0xff]
      %v355 = vld [vmem:[%s169 + $0x524] sm:$0xff]
      %v356 = vld [vmem:[%s169 + $0x52c] sm:$0xff]
      %v357 = vld [vmem:[%s169 + $0x534] sm:$0xff]
      %v358 = vld [vmem:[%s169 + $0x53c] sm:$0xff]
      %v359 = vld [vmem:[%s169 + $0x544] sm:$0xf]
      %v360 = vld [vmem:[%s1] sm:$0xf]
      %v361 = vld [vmem:[%s1 + $0x4] sm:$0xf]
      %v362 = vld [vmem:[%s1 + $0x8] sm:$0xf]
      %v363 = vld [vmem:[%s1 + $0xc] sm:$0xf]
      %v364 = vld [vmem:[%s1 + $0x10] sm:$0xf]
      %v365 = vld [vmem:[%s1 + $0x14] sm:$0xf]
      %v366 = vld [vmem:[%s1 + $0x18] sm:$0xf]
      %v367 = vld [vmem:[%s1 + $0x1c] sm:$0xf]
      %v368 = vld [vmem:[%s1 + $0x20] sm:$0xf]
      %v369 = vld [vmem:[%s1 + $0x24] sm:$0xf]
      %v370 = vld [vmem:[%s1 + $0x28] sm:$0xf]
      %v371 = vld [vmem:[%s1 + $0x2c] sm:$0xf]
      %v372 = vld [vmem:[%s1 + $0x30] sm:$0xf]
      %v373 = vld [vmem:[%s1 + $0x34] sm:$0xf]
      %v374 = vld [vmem:[%s1 + $0x38] sm:$0xf]
      %v375 = vld [vmem:[%s1 + $0x3c] sm:$0xf]
      %v376 = vld [vmem:[%s1 + $0x40] sm:$0xf]
      %v377 = vld [vmem:[%s1 + $0x44] sm:$0xf]
      %v378 = vld [vmem:[%s1 + $0x48] sm:$0xf]
      %v379 = vld [vmem:[%s1 + $0x4c] sm:$0xf]
      %v380 = vld [vmem:[%s1 + $0x50] sm:$0xf]
      %v381 = vld [vmem:[%s1 + $0x54] sm:$0xf]
      %v382 = vld [vmem:[%s1 + $0x58] sm:$0xf]
      %v383 = vld [vmem:[%s1 + $0x5c] sm:$0xf]
      %v384 = vld [vmem:[%s1 + $0x60] sm:$0xf]
      %v385 = vld [vmem:[%s1 + $0x64] sm:$0xf]
      %v386 = vld [vmem:[%s1 + $0x68] sm:$0xf]
      %v387 = vld [vmem:[%s1 + $0x6c] sm:$0xf]
      %v388 = vld [vmem:[%s1 + $0x70] sm:$0xf]
      %v389 = vld [vmem:[%s1 + $0x74] sm:$0xf]
      %v390 = vld [vmem:[%s1 + $0x78] sm:$0xf]
      %v391 = vld [vmem:[%s1 + $0x7c] sm:$0xf]
      %v392 = vld [vmem:[%s1 + $0x80] sm:$0xf]
      %v393 = vld [vmem:[%s1 + $0x84] sm:$0xf]
      %v394 = vld [vmem:[%s1 + $0x88] sm:$0xf]
      %v395 = vld [vmem:[%s1 + $0x8c] sm:$0xf]
      %v396 = vld [vmem:[%s1 + $0x90] sm:$0xf]
      %v397 = vld [vmem:[%s1 + $0x94] sm:$0xf]
      %v398 = vld [vmem:[%s1 + $0x98] sm:$0xf]
      %v399 = vld [vmem:[%s1 + $0x9c] sm:$0xf]
      %v400 = vld [vmem:[%s1 + $0xa0] sm:$0xf]
      %v401 = vld [vmem:[%s1 + $0xa4] sm:$0xf]
      %v402 = vld [vmem:[%s1 + $0xa8] sm:$0xf]
      %v403 = vld [vmem:[%s1 + $0xac] sm:$0xf]
      %v404 = vld [vmem:[%s1 + $0xb0] sm:$0xf]
      %v405 = vld [vmem:[%s1 + $0xb4] sm:$0xf]
      %v406 = vld [vmem:[%s1 + $0xb8] sm:$0xf]
      %v407 = vld [vmem:[%s1 + $0xbc] sm:$0xf]
      %v408 = vld [vmem:[%s1 + $0xc0] sm:$0xf]
      %v409 = vld [vmem:[%s1 + $0xc4] sm:$0xf]
      %v410 = vld [vmem:[%s1 + $0xc8] sm:$0xf]
      %v411 = vld [vmem:[%s1 + $0xcc] sm:$0xf]
      %v412 = vld [vmem:[%s1 + $0xd0] sm:$0xf]
      %v413 = vld [vmem:[%s1 + $0xd4] sm:$0xf]
      %v414 = vld [vmem:[%s1 + $0xd8] sm:$0xf]
      %v415 = vld [vmem:[%s1 + $0xdc] sm:$0xf]
      %v416 = vld [vmem:[%s1 + $0xe0] sm:$0xf]
      %v417 = vld [vmem:[%s1 + $0xe4] sm:$0xf]
      %v418 = vld [vmem:[%s1 + $0xe8] sm:$0xf]
      %v419 = vld [vmem:[%s1 + $0xec] sm:$0xf]
      %v420 = vld [vmem:[%s1 + $0xf0] sm:$0xf]
      %v421 = vld [vmem:[%s1 + $0xf4] sm:$0xf]
      %v422 = vld [vmem:[%s1 + $0xf8] sm:$0xf]
      %v423 = vld [vmem:[%s1 + $0xfc] sm:$0xf]
      %v424 = vld [vmem:[%s1 + $0x100] sm:$0xf]
      %v425 = vld [vmem:[%s1 + $0x104] sm:$0xf]
      %v426 = vld [vmem:[%s1 + $0x108] sm:$0xf]
      %v427 = vld [vmem:[%s1 + $0x10c] sm:$0xf]
      %v428 = vld [vmem:[%s1 + $0x110] sm:$0xf]
      %v429 = vld [vmem:[%s1 + $0x114] sm:$0xf]
      %v430 = vld [vmem:[%s1 + $0x118] sm:$0xf]
      %v431 = vld [vmem:[%s1 + $0x11c] sm:$0xf]
      %v432 = vld [vmem:[%s1 + $0x120] sm:$0xf]
      %v433 = vld [vmem:[%s1 + $0x124] sm:$0xf]
      %v434 = vld [vmem:[%s1 + $0x128] sm:$0xf]
      %v435 = vld [vmem:[%s1 + $0x12c] sm:$0xf]
      %v436 = vld [vmem:[%s1 + $0x130] sm:$0xf]
      %v437 = vld [vmem:[%s1 + $0x134] sm:$0xf]
      %v438 = vld [vmem:[%s1 + $0x138] sm:$0xf]
      %v439 = vld [vmem:[%s1 + $0x13c] sm:$0xf]
      %v440 = vld [vmem:[%s1 + $0x140] sm:$0xf]
      %v441 = vld [vmem:[%s1 + $0x144] sm:$0xf]
      %v442 = vld [vmem:[%s1 + $0x148] sm:$0xf]
      %v443 = vld [vmem:[%s1 + $0x14c] sm:$0xf]
      %v444 = vld [vmem:[%s1 + $0x150] sm:$0xf]
      %v445 = vld [vmem:[%s1 + $0x154] sm:$0xf]
      %v446 = vld [vmem:[%s1 + $0x158] sm:$0xf]
      %v447 = vld [vmem:[%s1 + $0x15c] sm:$0xf]
      %v448 = vld [vmem:[%s1 + $0x160] sm:$0xf]
      %v449 = vld [vmem:[%s1 + $0x164] sm:$0xf]
      %v450 = vld [vmem:[%s1 + $0x168] sm:$0xf]
      %v451 = vld [vmem:[%s1 + $0x16c] sm:$0xf]
      %v452 = vld [vmem:[%s1 + $0x170] sm:$0xf]
      %v453 = vld [vmem:[%s1 + $0x174] sm:$0xf]
      %v454 = vld [vmem:[%s1 + $0x178] sm:$0xf]
      %v455 = vld [vmem:[%s1 + $0x17c] sm:$0xf]
      %v456 = vld [vmem:[%s1 + $0x180] sm:$0xf]
      %v457 = vld [vmem:[%s1 + $0x184] sm:$0xf]
      %v458 = vld [vmem:[%s1 + $0x188] sm:$0xf]
      %v459 = vld [vmem:[%s1 + $0x18c] sm:$0xf]
      %v460 = vld [vmem:[%s1 + $0x190] sm:$0xf]
      %v461 = vld [vmem:[%s1 + $0x194] sm:$0xf]
      %v462 = vld [vmem:[%s1 + $0x198] sm:$0xf]
      %v463 = vld [vmem:[%s1 + $0x19c] sm:$0xf]
      %v464 = vld [vmem:[%s1 + $0x1a0] sm:$0xf]
      %v465 = vld [vmem:[%s1 + $0x1a4] sm:$0xf]
      %v466 = vld [vmem:[%s1 + $0x1a8] sm:$0xf]
      %v467 = vld [vmem:[%s1 + $0x1ac] sm:$0xf]
      %v468 = vld [vmem:[%s1 + $0x1b0] sm:$0xf]
      %v469 = vld [vmem:[%s1 + $0x1b4] sm:$0xf]
      %v470 = vld [vmem:[%s1 + $0x1b8] sm:$0xf]
      %v471 = vld [vmem:[%s1 + $0x1bc] sm:$0xf]
      %v472 = vld [vmem:[%s1 + $0x1c0] sm:$0xf]
      %v473 = vld [vmem:[%s1 + $0x1c4] sm:$0xf]
      %v474 = vld [vmem:[%s1 + $0x1c8] sm:$0xf]
      %v475 = vld [vmem:[%s1 + $0x1cc] sm:$0xf]
      %v476 = vld [vmem:[%s1 + $0x1d0] sm:$0xf]
      %v477 = vld [vmem:[%s1 + $0x1d4] sm:$0xf]
      %v478 = vld [vmem:[%s1 + $0x1d8] sm:$0xf]
      %v479 = vld [vmem:[%s1 + $0x1dc] sm:$0xf]
      %v480 = vld [vmem:[%s1 + $0x1e0] sm:$0xf]
      %v481 = vld [vmem:[%s1 + $0x1e4] sm:$0xf]
      %v482 = vld [vmem:[%s1 + $0x1e8] sm:$0xf]
      %v483 = vld [vmem:[%s1 + $0x1ec] sm:$0xf]
      %v484 = vld [vmem:[%s1 + $0x1f0] sm:$0xf]
      %v485 = vld [vmem:[%s1 + $0x1f4] sm:$0xf]
      %v486 = vld [vmem:[%s1 + $0x1f8] sm:$0xf]
      %v487 = vld [vmem:[%s1 + $0x1fc] sm:$0xf]
      %v488 = vld [vmem:[%s1 + $0x200] sm:$0xf]
      %v489 = vld [vmem:[%s1 + $0x204] sm:$0xf]
      %v490 = vld [vmem:[%s1 + $0x208] sm:$0xf]
      %v491 = vld [vmem:[%s1 + $0x20c] sm:$0xf]
      %v492 = vld [vmem:[%s1 + $0x210] sm:$0xf]
      %v493 = vld [vmem:[%s1 + $0x214] sm:$0xf]
      %v494 = vld [vmem:[%s1 + $0x218] sm:$0xf]
      %v495 = vld [vmem:[%s1 + $0x21c] sm:$0xf]
      %v496 = vld [vmem:[%s1 + $0x220] sm:$0xf]
      %v497 = vld [vmem:[%s1 + $0x224] sm:$0xf]
      %v498 = vld [vmem:[%s1 + $0x228] sm:$0xf]
      %v499 = vld [vmem:[%s1 + $0x22c] sm:$0xf]
      %v500 = vld [vmem:[%s1 + $0x230] sm:$0xf]
      %v501 = vld [vmem:[%s1 + $0x234] sm:$0xf]
      %v502 = vld [vmem:[%s1 + $0x238] sm:$0xf]
      %v503 = vld [vmem:[%s1 + $0x23c] sm:$0xf]
      %v504 = vld [vmem:[%s1 + $0x240] sm:$0xf]
      %v505 = vld [vmem:[%s1 + $0x244] sm:$0xf]
      %v506 = vld [vmem:[%s1 + $0x248] sm:$0xf]
      %v507 = vld [vmem:[%s1 + $0x24c] sm:$0xf]
      %v508 = vld [vmem:[%s1 + $0x250] sm:$0xf]
      %v509 = vld [vmem:[%s1 + $0x254] sm:$0xf]
      %v510 = vld [vmem:[%s1 + $0x258] sm:$0xf]
      %v511 = vld [vmem:[%s1 + $0x25c] sm:$0xf]
      %v512 = vld [vmem:[%s1 + $0x260] sm:$0xf]
      %v513 = vld [vmem:[%s1 + $0x264] sm:$0xf]
      %v514 = vld [vmem:[%s1 + $0x268] sm:$0xf]
      %v515 = vld [vmem:[%s1 + $0x26c] sm:$0xf]
      %v516 = vld [vmem:[%s1 + $0x270] sm:$0xf]
      %v517 = vld [vmem:[%s1 + $0x274] sm:$0xf]
      %v518 = vld [vmem:[%s1 + $0x278] sm:$0xf]
      %v519 = vld [vmem:[%s1 + $0x27c] sm:$0xf]
      %v520 = vld [vmem:[%s1 + $0x280] sm:$0xf]
      %v521 = vld [vmem:[%s1 + $0x284] sm:$0xf]
      %v522 = vld [vmem:[%s1 + $0x288] sm:$0xf]
      %v523 = vld [vmem:[%s1 + $0x28c] sm:$0xf]
      %v524 = vld [vmem:[%s1 + $0x290] sm:$0xf]
      %v525 = vld [vmem:[%s1 + $0x294] sm:$0xf]
      %v526 = vld [vmem:[%s1 + $0x298] sm:$0xf]
      %v527 = vld [vmem:[%s1 + $0x29c] sm:$0xf]
      %v528 = vld [vmem:[%s1 + $0x2a0] sm:$0xf]
      %v529 = vld [vmem:[%s1 + $0x2a4] sm:$0xf]
      %v530 = vld [vmem:[%s1 + $0x2a8] sm:$0xf]
      %v531 = vld [vmem:[%s1 + $0x2ac] sm:$0xf]
      %v532 = vld [vmem:[%s1 + $0x2b0] sm:$0xf]
      %v533 = vld [vmem:[%s1 + $0x2b4] sm:$0xf]
      %v534 = vld [vmem:[%s1 + $0x2b8] sm:$0xf]
      %v535 = vld [vmem:[%s1 + $0x2bc] sm:$0xf]
      %v536 = vld [vmem:[%s1 + $0x2c0] sm:$0xf]
      %v537 = vld [vmem:[%s1 + $0x2c4] sm:$0xf]
      %v538 = vld [vmem:[%s1 + $0x2c8] sm:$0xf]
      %v539 = vld [vmem:[%s1 + $0x2cc] sm:$0xf]
      %v540 = vld [vmem:[%s1 + $0x2d0] sm:$0xf]
      %v541 = vld [vmem:[%s1 + $0x2d4] sm:$0xf]
      %v542 = vld [vmem:[%s1 + $0x2d8] sm:$0xf]
      %v543 = vld [vmem:[%s1 + $0x2dc] sm:$0xf]
      %v544 = vld [vmem:[%s1 + $0x2e0] sm:$0xf]
      %v545 = vld [vmem:[%s1 + $0x2e4] sm:$0xf]
      %v546 = vld [vmem:[%s1 + $0x2e8] sm:$0xf]
      %v547 = vld [vmem:[%s1 + $0x2ec] sm:$0xf]
      %v548 = vld [vmem:[%s1 + $0x2f0] sm:$0xf]
      %v549 = vld [vmem:[%s1 + $0x2f4] sm:$0xf]
      %v550 = vld [vmem:[%s1 + $0x2f8] sm:$0xf]
      %v551 = vld [vmem:[%s1 + $0x2fc] sm:$0xf]
      %v552 = vld [vmem:[%s1 + $0x300] sm:$0xf]
      %v553 = vld [vmem:[%s1 + $0x304] sm:$0xf]
      %v554 = vld [vmem:[%s1 + $0x308] sm:$0xf]
      %v555 = vld [vmem:[%s1 + $0x30c] sm:$0xf]
      %v556 = vld [vmem:[%s1 + $0x310] sm:$0xf]
      %v557 = vld [vmem:[%s1 + $0x314] sm:$0xf]
      %v558 = vld [vmem:[%s1 + $0x318] sm:$0xf]
      %v559 = vld [vmem:[%s1 + $0x31c] sm:$0xf]
      %v560 = vld [vmem:[%s2] sm:$0x1]
      %v562 = vlaneseq
      %v563 = vshrl.u32 %v562, 7
      %v564 = vsub.s32 0, %v563
      %v565 = vrot.slane %v560, %v564
      %v749 = vunpack.c.l.b16 %v178
      %v750 = vunpack.c.h.b16 %v178
      %v751 = vunpack.c.l.b16 %v179
      %v752 = vunpack.c.h.b16 %v179
      %v753 = vunpack.c.l.b16 %v180
      %v754 = vunpack.c.h.b16 %v180
      %v755 = vunpack.c.l.b16 %v181
      %v756 = vunpack.c.h.b16 %v181
      %v757 = vunpack.c.l.b16 %v182
      %v758 = vunpack.c.h.b16 %v182
      %v759 = vunpack.c.l.b16 %v183
      %v760 = vunpack.c.h.b16 %v183
      %v761 = vunpack.c.l.b16 %v184
      %v762 = vunpack.c.l.b16 %v185
      %v763 = vunpack.c.h.b16 %v185
      %v764 = vunpack.c.l.b16 %v186
      %v765 = vunpack.c.h.b16 %v186
      %v766 = vunpack.c.l.b16 %v187
      %v767 = vunpack.c.h.b16 %v187
      %v768 = vunpack.c.l.b16 %v188
      %v769 = vunpack.c.h.b16 %v188
      %v770 = vunpack.c.l.b16 %v189
      %v771 = vunpack.c.h.b16 %v189
      %v772 = vunpack.c.l.b16 %v190
      %v773 = vunpack.c.h.b16 %v190
      %v774 = vunpack.c.l.b16 %v191
      %v775 = vunpack.c.l.b16 %v192
      %v776 = vunpack.c.h.b16 %v192
      %v777 = vunpack.c.l.b16 %v193
      %v778 = vunpack.c.h.b16 %v193
      %v779 = vunpack.c.l.b16 %v194
      %v780 = vunpack.c.h.b16 %v194
      %v781 = vunpack.c.l.b16 %v195
      %v782 = vunpack.c.h.b16 %v195
      %v783 = vunpack.c.l.b16 %v196
      %v784 = vunpack.c.h.b16 %v196
      %v785 = vunpack.c.l.b16 %v197
      %v786 = vunpack.c.h.b16 %v197
      %v787 = vunpack.c.l.b16 %v198
      %v788 = vunpack.c.l.b16 %v199
      %v789 = vunpack.c.h.b16 %v199
      %v790 = vunpack.c.l.b16 %v200
      %v791 = vunpack.c.h.b16 %v200
      %v792 = vunpack.c.l.b16 %v201
      %v793 = vunpack.c.h.b16 %v201
      %v794 = vunpack.c.l.b16 %v202
      %v795 = vunpack.c.h.b16 %v202
      %v796 = vunpack.c.l.b16 %v203
      %v797 = vunpack.c.h.b16 %v203
      %v798 = vunpack.c.l.b16 %v204
      %v799 = vunpack.c.h.b16 %v204
      %v800 = vunpack.c.l.b16 %v205
      %v801 = vunpack.c.l.b16 %v206
      %v802 = vunpack.c.h.b16 %v206
      %v803 = vunpack.c.l.b16 %v207
      %v804 = vunpack.c.h.b16 %v207
      %v805 = vunpack.c.l.b16 %v208
      %v806 = vunpack.c.h.b16 %v208
      %v807 = vunpack.c.l.b16 %v209
      %v808 = vunpack.c.h.b16 %v209
      %v809 = vunpack.c.l.b16 %v210
      %v810 = vunpack.c.h.b16 %v210
      %v811 = vunpack.c.l.b16 %v211
      %v812 = vunpack.c.h.b16 %v211
      %v813 = vunpack.c.l.b16 %v212
      %v814 = vunpack.c.l.b16 %v213
      %v815 = vunpack.c.h.b16 %v213
      %v816 = vunpack.c.l.b16 %v214
      %v817 = vunpack.c.h.b16 %v214
      %v818 = vunpack.c.l.b16 %v215
      %v819 = vunpack.c.h.b16 %v215
      %v820 = vunpack.c.l.b16 %v216
      %v821 = vunpack.c.h.b16 %v216
      %v822 = vunpack.c.l.b16 %v217
      %v823 = vunpack.c.h.b16 %v217
      %v824 = vunpack.c.l.b16 %v218
      %v825 = vunpack.c.h.b16 %v218
      %v826 = vunpack.c.l.b16 %v219
      %v827 = vunpack.c.l.b16 %v220
      %v828 = vunpack.c.h.b16 %v220
      %v829 = vunpack.c.l.b16 %v221
      %v830 = vunpack.c.h.b16 %v221
      %v831 = vunpack.c.l.b16 %v222
      %v832 = vunpack.c.h.b16 %v222
      %v833 = vunpack.c.l.b16 %v223
      %v834 = vunpack.c.h.b16 %v223
      %v835 = vunpack.c.l.b16 %v224
      %v836 = vunpack.c.h.b16 %v224
      %v837 = vunpack.c.l.b16 %v225
      %v838 = vunpack.c.h.b16 %v225
      %v839 = vunpack.c.l.b16 %v226
      %v840 = vunpack.c.l.b16 %v227
      %v841 = vunpack.c.h.b16 %v227
      %v842 = vunpack.c.l.b16 %v228
      %v843 = vunpack.c.h.b16 %v228
      %v844 = vunpack.c.l.b16 %v229
      %v845 = vunpack.c.h.b16 %v229
      %v846 = vunpack.c.l.b16 %v230
      %v847 = vunpack.c.h.b16 %v230
      %v848 = vunpack.c.l.b16 %v231
      %v849 = vunpack.c.h.b16 %v231
      %v850 = vunpack.c.l.b16 %v232
      %v851 = vunpack.c.h.b16 %v232
      %v852 = vunpack.c.l.b16 %v233
      %v853 = vunpack.c.l.b16 %v234
      %v854 = vunpack.c.h.b16 %v234
      %v855 = vunpack.c.l.b16 %v235
      %v856 = vunpack.c.h.b16 %v235
      %v857 = vunpack.c.l.b16 %v236
      %v858 = vunpack.c.h.b16 %v236
      %v859 = vunpack.c.l.b16 %v237
      %v860 = vunpack.c.h.b16 %v237
      %v861 = vunpack.c.l.b16 %v238
      %v862 = vunpack.c.h.b16 %v238
      %v863 = vunpack.c.l.b16 %v239
      %v864 = vunpack.c.h.b16 %v239
      %v865 = vunpack.c.l.b16 %v240
      %v866 = vunpack.c.l.b16 %v241
      %v867 = vunpack.c.h.b16 %v241
      %v868 = vunpack.c.l.b16 %v242
      %v869 = vunpack.c.h.b16 %v242
      %v870 = vunpack.c.l.b16 %v243
      %v871 = vunpack.c.h.b16 %v243
      %v872 = vunpack.c.l.b16 %v244
      %v873 = vunpack.c.h.b16 %v244
      %v874 = vunpack.c.l.b16 %v245
      %v875 = vunpack.c.h.b16 %v245
      %v876 = vunpack.c.l.b16 %v246
      %v877 = vunpack.c.h.b16 %v246
      %v878 = vunpack.c.l.b16 %v247
      %v879 = vunpack.c.l.b16 %v248
      %v880 = vunpack.c.h.b16 %v248
      %v881 = vunpack.c.l.b16 %v249
      %v882 = vunpack.c.h.b16 %v249
      %v883 = vunpack.c.l.b16 %v250
      %v884 = vunpack.c.h.b16 %v250
      %v885 = vunpack.c.l.b16 %v251
      %v886 = vunpack.c.h.b16 %v251
      %v887 = vunpack.c.l.b16 %v252
      %v888 = vunpack.c.h.b16 %v252
      %v889 = vunpack.c.l.b16 %v253
      %v890 = vunpack.c.h.b16 %v253
      %v891 = vunpack.c.l.b16 %v254
      %v892 = vunpack.c.l.b16 %v255
      %v893 = vunpack.c.h.b16 %v255
      %v894 = vunpack.c.l.b16 %v256
      %v895 = vunpack.c.h.b16 %v256
      %v896 = vunpack.c.l.b16 %v257
      %v897 = vunpack.c.h.b16 %v257
      %v898 = vunpack.c.l.b16 %v258
      %v899 = vunpack.c.h.b16 %v258
      %v900 = vunpack.c.l.b16 %v259
      %v901 = vunpack.c.h.b16 %v259
      %v902 = vunpack.c.l.b16 %v260
      %v903 = vunpack.c.h.b16 %v260
      %v904 = vunpack.c.l.b16 %v261
      %v905 = vunpack.c.l.b16 %v262
      %v906 = vunpack.c.h.b16 %v262
      %v907 = vunpack.c.l.b16 %v263
      %v908 = vunpack.c.h.b16 %v263
      %v909 = vunpack.c.l.b16 %v264
      %v910 = vunpack.c.h.b16 %v264
      %v911 = vunpack.c.l.b16 %v265
      %v912 = vunpack.c.h.b16 %v265
      %v913 = vunpack.c.l.b16 %v266
      %v914 = vunpack.c.h.b16 %v266
      %v915 = vunpack.c.l.b16 %v267
      %v916 = vunpack.c.h.b16 %v267
      %v917 = vunpack.c.l.b16 %v268
      %v918 = vunpack.c.l.b16 %v269
      %v919 = vunpack.c.h.b16 %v269
      %v920 = vunpack.c.l.b16 %v270
      %v921 = vunpack.c.h.b16 %v270
      %v922 = vunpack.c.l.b16 %v271
      %v923 = vunpack.c.h.b16 %v271
      %v924 = vunpack.c.l.b16 %v272
      %v925 = vunpack.c.h.b16 %v272
      %v926 = vunpack.c.l.b16 %v273
      %v927 = vunpack.c.h.b16 %v273
      %v928 = vunpack.c.l.b16 %v274
      %v929 = vunpack.c.h.b16 %v274
      %v930 = vunpack.c.l.b16 %v275
      %v931 = vunpack.c.l.b16 %v276
      %v932 = vunpack.c.h.b16 %v276
      %v933 = vunpack.c.l.b16 %v277
      %v934 = vunpack.c.h.b16 %v277
      %v935 = vunpack.c.l.b16 %v278
      %v936 = vunpack.c.h.b16 %v278
      %v937 = vunpack.c.l.b16 %v279
      %v938 = vunpack.c.h.b16 %v279
      %v939 = vunpack.c.l.b16 %v280
      %v940 = vunpack.c.h.b16 %v280
      %v941 = vunpack.c.l.b16 %v281
      %v942 = vunpack.c.h.b16 %v281
      %v943 = vunpack.c.l.b16 %v282
      %v944 = vunpack.c.l.b16 %v283
      %v945 = vunpack.c.h.b16 %v283
      %v946 = vunpack.c.l.b16 %v284
      %v947 = vunpack.c.h.b16 %v284
      %v948 = vunpack.c.l.b16 %v285
      %v949 = vunpack.c.h.b16 %v285
      %v950 = vunpack.c.l.b16 %v286
      %v951 = vunpack.c.h.b16 %v286
      %v952 = vunpack.c.l.b16 %v287
      %v953 = vunpack.c.h.b16 %v287
      %v954 = vunpack.c.l.b16 %v288
      %v955 = vunpack.c.h.b16 %v288
      %v956 = vunpack.c.l.b16 %v289
      %v957 = vunpack.c.l.b16 %v290
      %v958 = vunpack.c.h.b16 %v290
      %v959 = vunpack.c.l.b16 %v291
      %v960 = vunpack.c.h.b16 %v291
      %v961 = vunpack.c.l.b16 %v292
      %v962 = vunpack.c.h.b16 %v292
      %v963 = vunpack.c.l.b16 %v293
      %v964 = vunpack.c.h.b16 %v293
      %v965 = vunpack.c.l.b16 %v294
      %v966 = vunpack.c.h.b16 %v294
      %v967 = vunpack.c.l.b16 %v295
      %v968 = vunpack.c.h.b16 %v295
      %v969 = vunpack.c.l.b16 %v296
      %v970 = vunpack.c.l.b16 %v297
      %v971 = vunpack.c.h.b16 %v297
      %v972 = vunpack.c.l.b16 %v298
      %v973 = vunpack.c.h.b16 %v298
      %v974 = vunpack.c.l.b16 %v299
      %v975 = vunpack.c.h.b16 %v299
      %v976 = vunpack.c.l.b16 %v300
      %v977 = vunpack.c.h.b16 %v300
      %v978 = vunpack.c.l.b16 %v301
      %v979 = vunpack.c.h.b16 %v301
      %v980 = vunpack.c.l.b16 %v302
      %v981 = vunpack.c.h.b16 %v302
      %v982 = vunpack.c.l.b16 %v303
      %v983 = vunpack.c.l.b16 %v304
      %v984 = vunpack.c.h.b16 %v304
      %v985 = vunpack.c.l.b16 %v305
      %v986 = vunpack.c.h.b16 %v305
      %v987 = vunpack.c.l.b16 %v306
      %v988 = vunpack.c.h.b16 %v306
      %v989 = vunpack.c.l.b16 %v307
      %v990 = vunpack.c.h.b16 %v307
      %v991 = vunpack.c.l.b16 %v308
      %v992 = vunpack.c.h.b16 %v308
      %v993 = vunpack.c.l.b16 %v309
      %v994 = vunpack.c.h.b16 %v309
      %v995 = vunpack.c.l.b16 %v310
      %v996 = vunpack.c.l.b16 %v311
      %v997 = vunpack.c.h.b16 %v311
      %v998 = vunpack.c.l.b16 %v312
      %v999 = vunpack.c.h.b16 %v312
      %v1000 = vunpack.c.l.b16 %v313
      %v1001 = vunpack.c.h.b16 %v313
      %v1002 = vunpack.c.l.b16 %v314
      %v1003 = vunpack.c.h.b16 %v314
      %v1004 = vunpack.c.l.b16 %v315
      %v1005 = vunpack.c.h.b16 %v315
      %v1006 = vunpack.c.l.b16 %v316
      %v1007 = vunpack.c.h.b16 %v316
      %v1008 = vunpack.c.l.b16 %v317
      %v1009 = vunpack.c.l.b16 %v318
      %v1010 = vunpack.c.h.b16 %v318
      %v1011 = vunpack.c.l.b16 %v319
      %v1012 = vunpack.c.h.b16 %v319
      %v1013 = vunpack.c.l.b16 %v320
      %v1014 = vunpack.c.h.b16 %v320
      %v1015 = vunpack.c.l.b16 %v321
      %v1016 = vunpack.c.h.b16 %v321
      %v1017 = vunpack.c.l.b16 %v322
      %v1018 = vunpack.c.h.b16 %v322
      %v1019 = vunpack.c.l.b16 %v323
      %v1020 = vunpack.c.h.b16 %v323
      %v1021 = vunpack.c.l.b16 %v324
      %v1022 = vunpack.c.l.b16 %v325
      %v1023 = vunpack.c.h.b16 %v325
      %v1024 = vunpack.c.l.b16 %v326
      %v1025 = vunpack.c.h.b16 %v326
      %v1026 = vunpack.c.l.b16 %v327
      %v1027 = vunpack.c.h.b16 %v327
      %v1028 = vunpack.c.l.b16 %v328
      %v1029 = vunpack.c.h.b16 %v328
      %v1030 = vunpack.c.l.b16 %v329
      %v1031 = vunpack.c.h.b16 %v329
      %v1032 = vunpack.c.l.b16 %v330
      %v1033 = vunpack.c.h.b16 %v330
      %v1034 = vunpack.c.l.b16 %v331
      %v1035 = vunpack.c.l.b16 %v332
      %v1036 = vunpack.c.h.b16 %v332
      %v1037 = vunpack.c.l.b16 %v333
      %v1038 = vunpack.c.h.b16 %v333
      %v1039 = vunpack.c.l.b16 %v334
      %v1040 = vunpack.c.h.b16 %v334
      %v1041 = vunpack.c.l.b16 %v335
      %v1042 = vunpack.c.h.b16 %v335
      %v1043 = vunpack.c.l.b16 %v336
      %v1044 = vunpack.c.h.b16 %v336
      %v1045 = vunpack.c.l.b16 %v337
      %v1046 = vunpack.c.h.b16 %v337
      %v1047 = vunpack.c.l.b16 %v338
      %v1048 = vunpack.c.l.b16 %v339
      %v1049 = vunpack.c.h.b16 %v339
      %v1050 = vunpack.c.l.b16 %v340
      %v1051 = vunpack.c.h.b16 %v340
      %v1052 = vunpack.c.l.b16 %v341
      %v1053 = vunpack.c.h.b16 %v341
      %v1054 = vunpack.c.l.b16 %v342
      %v1055 = vunpack.c.h.b16 %v342
      %v1056 = vunpack.c.l.b16 %v343
      %v1057 = vunpack.c.h.b16 %v343
      %v1058 = vunpack.c.l.b16 %v344
      %v1059 = vunpack.c.h.b16 %v344
      %v1060 = vunpack.c.l.b16 %v345
      %v1061 = vunpack.c.l.b16 %v346
      %v1062 = vunpack.c.h.b16 %v346
      %v1063 = vunpack.c.l.b16 %v347
      %v1064 = vunpack.c.h.b16 %v347
      %v1065 = vunpack.c.l.b16 %v348
      %v1066 = vunpack.c.h.b16 %v348
      %v1067 = vunpack.c.l.b16 %v349
      %v1068 = vunpack.c.h.b16 %v349
      %v1069 = vunpack.c.l.b16 %v350
      %v1070 = vunpack.c.h.b16 %v350
      %v1071 = vunpack.c.l.b16 %v351
      %v1072 = vunpack.c.h.b16 %v351
      %v1073 = vunpack.c.l.b16 %v352
      %v1074 = vunpack.c.l.b16 %v353
      %v1075 = vunpack.c.h.b16 %v353
      %v1076 = vunpack.c.l.b16 %v354
      %v1077 = vunpack.c.h.b16 %v354
      %v1078 = vunpack.c.l.b16 %v355
      %v1079 = vunpack.c.h.b16 %v355
      %v1080 = vunpack.c.l.b16 %v356
      %v1081 = vunpack.c.h.b16 %v356
      %v1082 = vunpack.c.l.b16 %v357
      %v1083 = vunpack.c.h.b16 %v357
      %v1084 = vunpack.c.l.b16 %v358
      %v1085 = vunpack.c.h.b16 %v358
      %v1086 = vunpack.c.l.b16 %v359
      %v1087 = vpack.c.b16 %v762, %v749
      %v1088 = vpack.c.b16 %v763, %v750
      %v1089 = vpack.c.b16 %v764, %v751
      %v1090 = vpack.c.b16 %v765, %v752
      %v1091 = vpack.c.b16 %v766, %v753
      %v1092 = vpack.c.b16 %v767, %v754
      %v1093 = vpack.c.b16 %v768, %v755
      %v1094 = vpack.c.b16 %v769, %v756
      %v1095 = vpack.c.b16 %v770, %v757
      %v1096 = vpack.c.b16 %v771, %v758
      %v1097 = vpack.c.b16 %v772, %v759
      %v1098 = vpack.c.b16 %v773, %v760
      %v1099 = vpack.c.b16 %v774, %v761
      %v1100 = vpack.c.b16 %v788, %v775
      %v1101 = vpack.c.b16 %v789, %v776
      %v1102 = vpack.c.b16 %v790, %v777
      %v1103 = vpack.c.b16 %v791, %v778
      %v1104 = vpack.c.b16 %v792, %v779
      %v1105 = vpack.c.b16 %v793, %v780
      %v1106 = vpack.c.b16 %v794, %v781
      %v1107 = vpack.c.b16 %v795, %v782
      %v1108 = vpack.c.b16 %v796, %v783
      %v1109 = vpack.c.b16 %v797, %v784
      %v1110 = vpack.c.b16 %v798, %v785
      %v1111 = vpack.c.b16 %v799, %v786
      %v1112 = vpack.c.b16 %v800, %v787
      %v1113 = vpack.c.b16 %v814, %v801
      %v1114 = vpack.c.b16 %v815, %v802
      %v1115 = vpack.c.b16 %v816, %v803
      %v1116 = vpack.c.b16 %v817, %v804
      %v1117 = vpack.c.b16 %v818, %v805
      %v1118 = vpack.c.b16 %v819, %v806
      %v1119 = vpack.c.b16 %v820, %v807
      %v1120 = vpack.c.b16 %v821, %v808
      %v1121 = vpack.c.b16 %v822, %v809
      %v1122 = vpack.c.b16 %v823, %v810
      %v1123 = vpack.c.b16 %v824, %v811
      %v1124 = vpack.c.b16 %v825, %v812
      %v1125 = vpack.c.b16 %v826, %v813
      %v1126 = vpack.c.b16 %v840, %v827
      %v1127 = vpack.c.b16 %v841, %v828
      %v1128 = vpack.c.b16 %v842, %v829
      %v1129 = vpack.c.b16 %v843, %v830
      %v1130 = vpack.c.b16 %v844, %v831
      %v1131 = vpack.c.b16 %v845, %v832
      %v1132 = vpack.c.b16 %v846, %v833
      %v1133 = vpack.c.b16 %v847, %v834
      %v1134 = vpack.c.b16 %v848, %v835
      %v1135 = vpack.c.b16 %v849, %v836
      %v1136 = vpack.c.b16 %v850, %v837
      %v1137 = vpack.c.b16 %v851, %v838
      %v1138 = vpack.c.b16 %v852, %v839
      %v1139 = vpack.c.b16 %v866, %v853
      %v1140 = vpack.c.b16 %v867, %v854
      %v1141 = vpack.c.b16 %v868, %v855
      %v1142 = vpack.c.b16 %v869, %v856
      %v1143 = vpack.c.b16 %v870, %v857
      %v1144 = vpack.c.b16 %v871, %v858
      %v1145 = vpack.c.b16 %v872, %v859
      %v1146 = vpack.c.b16 %v873, %v860
      %v1147 = vpack.c.b16 %v874, %v861
      %v1148 = vpack.c.b16 %v875, %v862
      %v1149 = vpack.c.b16 %v876, %v863
      %v1150 = vpack.c.b16 %v877, %v864
      %v1151 = vpack.c.b16 %v878, %v865
      %v1152 = vpack.c.b16 %v892, %v879
      %v1153 = vpack.c.b16 %v893, %v880
      %v1154 = vpack.c.b16 %v894, %v881
      %v1155 = vpack.c.b16 %v895, %v882
      %v1156 = vpack.c.b16 %v896, %v883
      %v1157 = vpack.c.b16 %v897, %v884
      %v1158 = vpack.c.b16 %v898, %v885
      %v1159 = vpack.c.b16 %v899, %v886
      %v1160 = vpack.c.b16 %v900, %v887
      %v1161 = vpack.c.b16 %v901, %v888
      %v1162 = vpack.c.b16 %v902, %v889
      %v1163 = vpack.c.b16 %v903, %v890
      %v1164 = vpack.c.b16 %v904, %v891
      %v1165 = vpack.c.b16 %v918, %v905
      %v1166 = vpack.c.b16 %v919, %v906
      %v1167 = vpack.c.b16 %v920, %v907
      %v1168 = vpack.c.b16 %v921, %v908
      %v1169 = vpack.c.b16 %v922, %v909
      %v1170 = vpack.c.b16 %v923, %v910
      %v1171 = vpack.c.b16 %v924, %v911
      %v1172 = vpack.c.b16 %v925, %v912
      %v1173 = vpack.c.b16 %v926, %v913
      %v1174 = vpack.c.b16 %v927, %v914
      %v1175 = vpack.c.b16 %v928, %v915
      %v1176 = vpack.c.b16 %v929, %v916
      %v1177 = vpack.c.b16 %v930, %v917
      %v1178 = vpack.c.b16 %v944, %v931
      %v1179 = vpack.c.b16 %v945, %v932
      %v1180 = vpack.c.b16 %v946, %v933
      %v1181 = vpack.c.b16 %v947, %v934
      %v1182 = vpack.c.b16 %v948, %v935
      %v1183 = vpack.c.b16 %v949, %v936
      %v1184 = vpack.c.b16 %v950, %v937
      %v1185 = vpack.c.b16 %v951, %v938
      %v1186 = vpack.c.b16 %v952, %v939
      %v1187 = vpack.c.b16 %v953, %v940
      %v1188 = vpack.c.b16 %v954, %v941
      %v1189 = vpack.c.b16 %v955, %v942
      %v1190 = vpack.c.b16 %v956, %v943
      %v1191 = vpack.c.b16 %v970, %v957
      %v1192 = vpack.c.b16 %v971, %v958
      %v1193 = vpack.c.b16 %v972, %v959
      %v1194 = vpack.c.b16 %v973, %v960
      %v1195 = vpack.c.b16 %v974, %v961
      %v1196 = vpack.c.b16 %v975, %v962
      %v1197 = vpack.c.b16 %v976, %v963
      %v1198 = vpack.c.b16 %v977, %v964
      %v1199 = vpack.c.b16 %v978, %v965
      %v1200 = vpack.c.b16 %v979, %v966
      %v1201 = vpack.c.b16 %v980, %v967
      %v1202 = vpack.c.b16 %v981, %v968
      %v1203 = vpack.c.b16 %v982, %v969
      %v1204 = vpack.c.b16 %v996, %v983
      %v1205 = vpack.c.b16 %v997, %v984
      %v1206 = vpack.c.b16 %v998, %v985
      %v1207 = vpack.c.b16 %v999, %v986
      %v1208 = vpack.c.b16 %v1000, %v987
      %v1209 = vpack.c.b16 %v1001, %v988
      %v1210 = vpack.c.b16 %v1002, %v989
      %v1211 = vpack.c.b16 %v1003, %v990
      %v1212 = vpack.c.b16 %v1004, %v991
      %v1213 = vpack.c.b16 %v1005, %v992
      %v1214 = vpack.c.b16 %v1006, %v993
      %v1215 = vpack.c.b16 %v1007, %v994
      %v1216 = vpack.c.b16 %v1008, %v995
      %v1217 = vpack.c.b16 %v1022, %v1009
      %v1218 = vpack.c.b16 %v1023, %v1010
      %v1219 = vpack.c.b16 %v1024, %v1011
      %v1220 = vpack.c.b16 %v1025, %v1012
      %v1221 = vpack.c.b16 %v1026, %v1013
      %v1222 = vpack.c.b16 %v1027, %v1014
      %v1223 = vpack.c.b16 %v1028, %v1015
      %v1224 = vpack.c.b16 %v1029, %v1016
      %v1225 = vpack.c.b16 %v1030, %v1017
      %v1226 = vpack.c.b16 %v1031, %v1018
      %v1227 = vpack.c.b16 %v1032, %v1019
      %v1228 = vpack.c.b16 %v1033, %v1020
      %v1229 = vpack.c.b16 %v1034, %v1021
      %v1230 = vpack.c.b16 %v1048, %v1035
      %v1231 = vpack.c.b16 %v1049, %v1036
      %v1232 = vpack.c.b16 %v1050, %v1037
      %v1233 = vpack.c.b16 %v1051, %v1038
      %v1234 = vpack.c.b16 %v1052, %v1039
      %v1235 = vpack.c.b16 %v1053, %v1040
      %v1236 = vpack.c.b16 %v1054, %v1041
      %v1237 = vpack.c.b16 %v1055, %v1042
      %v1238 = vpack.c.b16 %v1056, %v1043
      %v1239 = vpack.c.b16 %v1057, %v1044
      %v1240 = vpack.c.b16 %v1058, %v1045
      %v1241 = vpack.c.b16 %v1059, %v1046
      %v1242 = vpack.c.b16 %v1060, %v1047
      %v1243 = vpack.c.b16 %v1074, %v1061
      %v1244 = vpack.c.b16 %v1075, %v1062
      %v1245 = vpack.c.b16 %v1076, %v1063
      %v1246 = vpack.c.b16 %v1077, %v1064
      %v1247 = vpack.c.b16 %v1078, %v1065
      %v1248 = vpack.c.b16 %v1079, %v1066
      %v1249 = vpack.c.b16 %v1080, %v1067
      %v1250 = vpack.c.b16 %v1081, %v1068
      %v1251 = vpack.c.b16 %v1082, %v1069
      %v1252 = vpack.c.b16 %v1083, %v1070
      %v1253 = vpack.c.b16 %v1084, %v1071
      %v1254 = vpack.c.b16 %v1085, %v1072
      %v1255 = vpack.c.b16 %v1086, %v1073
      %v1612 = vunpack.c.l.b16 %v360
      %v1613 = vunpack.c.l.b16 %v361
      %v1614 = vunpack.c.l.b16 %v362
      %v1615 = vunpack.c.l.b16 %v363
      %v1616 = vunpack.c.l.b16 %v364
      %v1617 = vunpack.c.l.b16 %v365
      %v1618 = vunpack.c.l.b16 %v366
      %v1619 = vunpack.c.l.b16 %v367
      %v1620 = vunpack.c.l.b16 %v368
      %v1621 = vunpack.c.l.b16 %v369
      %v1622 = vunpack.c.l.b16 %v370
      %v1623 = vunpack.c.l.b16 %v371
      %v1624 = vunpack.c.l.b16 %v372
      %v1625 = vunpack.c.l.b16 %v373
      %v1626 = vunpack.c.l.b16 %v374
      %v1627 = vunpack.c.l.b16 %v375
      %v1628 = vunpack.c.l.b16 %v376
      %v1629 = vunpack.c.l.b16 %v377
      %v1630 = vunpack.c.l.b16 %v378
      %v1631 = vunpack.c.l.b16 %v379
      %v1632 = vunpack.c.l.b16 %v380
      %v1633 = vunpack.c.l.b16 %v381
      %v1634 = vunpack.c.l.b16 %v382
      %v1635 = vunpack.c.l.b16 %v383
      %v1636 = vunpack.c.l.b16 %v384
      %v1637 = vunpack.c.l.b16 %v385
      %v1638 = vunpack.c.l.b16 %v386
      %v1639 = vunpack.c.l.b16 %v387
      %v1640 = vunpack.c.l.b16 %v388
      %v1641 = vunpack.c.l.b16 %v389
      %v1642 = vunpack.c.l.b16 %v390
      %v1643 = vunpack.c.l.b16 %v391
      %v1644 = vunpack.c.l.b16 %v392
      %v1645 = vunpack.c.l.b16 %v393
      %v1646 = vunpack.c.l.b16 %v394
      %v1647 = vunpack.c.l.b16 %v395
      %v1648 = vunpack.c.l.b16 %v396
      %v1649 = vunpack.c.l.b16 %v397
      %v1650 = vunpack.c.l.b16 %v398
      %v1651 = vunpack.c.l.b16 %v399
      %v1652 = vunpack.c.l.b16 %v400
      %v1653 = vunpack.c.l.b16 %v401
      %v1654 = vunpack.c.l.b16 %v402
      %v1655 = vunpack.c.l.b16 %v403
      %v1656 = vunpack.c.l.b16 %v404
      %v1657 = vunpack.c.l.b16 %v405
      %v1658 = vunpack.c.l.b16 %v406
      %v1659 = vunpack.c.l.b16 %v407
      %v1660 = vunpack.c.l.b16 %v408
      %v1661 = vunpack.c.l.b16 %v409
      %v1662 = vunpack.c.l.b16 %v410
      %v1663 = vunpack.c.l.b16 %v411
      %v1664 = vunpack.c.l.b16 %v412
      %v1665 = vunpack.c.l.b16 %v413
      %v1666 = vunpack.c.l.b16 %v414
      %v1667 = vunpack.c.l.b16 %v415
      %v1668 = vunpack.c.l.b16 %v416
      %v1669 = vunpack.c.l.b16 %v417
      %v1670 = vunpack.c.l.b16 %v418
      %v1671 = vunpack.c.l.b16 %v419
      %v1672 = vunpack.c.l.b16 %v420
      %v1673 = vunpack.c.l.b16 %v421
      %v1674 = vunpack.c.l.b16 %v422
      %v1675 = vunpack.c.l.b16 %v423
      %v1676 = vunpack.c.l.b16 %v424
      %v1677 = vunpack.c.l.b16 %v425
      %v1678 = vunpack.c.l.b16 %v426
      %v1679 = vunpack.c.l.b16 %v427
      %v1680 = vunpack.c.l.b16 %v428
      %v1681 = vunpack.c.l.b16 %v429
      %v1682 = vunpack.c.l.b16 %v430
      %v1683 = vunpack.c.l.b16 %v431
      %v1684 = vunpack.c.l.b16 %v432
      %v1685 = vunpack.c.l.b16 %v433
      %v1686 = vunpack.c.l.b16 %v434
      %v1687 = vunpack.c.l.b16 %v435
      %v1688 = vunpack.c.l.b16 %v436
      %v1689 = vunpack.c.l.b16 %v437
      %v1690 = vunpack.c.l.b16 %v438
      %v1691 = vunpack.c.l.b16 %v439
      %v1692 = vunpack.c.l.b16 %v440
      %v1693 = vunpack.c.l.b16 %v441
      %v1694 = vunpack.c.l.b16 %v442
      %v1695 = vunpack.c.l.b16 %v443
      %v1696 = vunpack.c.l.b16 %v444
      %v1697 = vunpack.c.l.b16 %v445
      %v1698 = vunpack.c.l.b16 %v446
      %v1699 = vunpack.c.l.b16 %v447
      %v1700 = vunpack.c.l.b16 %v448
      %v1701 = vunpack.c.l.b16 %v449
      %v1702 = vunpack.c.l.b16 %v450
      %v1703 = vunpack.c.l.b16 %v451
      %v1704 = vunpack.c.l.b16 %v452
      %v1705 = vunpack.c.l.b16 %v453
      %v1706 = vunpack.c.l.b16 %v454
      %v1707 = vunpack.c.l.b16 %v455
      %v1708 = vunpack.c.l.b16 %v456
      %v1709 = vunpack.c.l.b16 %v457
      %v1710 = vunpack.c.l.b16 %v458
      %v1711 = vunpack.c.l.b16 %v459
      %v1712 = vunpack.c.l.b16 %v460
      %v1713 = vunpack.c.l.b16 %v461
      %v1714 = vunpack.c.l.b16 %v462
      %v1715 = vunpack.c.l.b16 %v463
      %v1716 = vunpack.c.l.b16 %v464
      %v1717 = vunpack.c.l.b16 %v465
      %v1718 = vunpack.c.l.b16 %v466
      %v1719 = vunpack.c.l.b16 %v467
      %v1720 = vunpack.c.l.b16 %v468
      %v1721 = vunpack.c.l.b16 %v469
      %v1722 = vunpack.c.l.b16 %v470
      %v1723 = vunpack.c.l.b16 %v471
      %v1724 = vunpack.c.l.b16 %v472
      %v1725 = vunpack.c.l.b16 %v473
      %v1726 = vunpack.c.l.b16 %v474
      %v1727 = vunpack.c.l.b16 %v475
      %v1728 = vunpack.c.l.b16 %v476
      %v1729 = vunpack.c.l.b16 %v477
      %v1730 = vunpack.c.l.b16 %v478
      %v1731 = vunpack.c.l.b16 %v479
      %v1732 = vunpack.c.l.b16 %v480
      %v1733 = vunpack.c.l.b16 %v481
      %v1734 = vunpack.c.l.b16 %v482
      %v1735 = vunpack.c.l.b16 %v483
      %v1736 = vunpack.c.l.b16 %v484
      %v1737 = vunpack.c.l.b16 %v485
      %v1738 = vunpack.c.l.b16 %v486
      %v1739 = vunpack.c.l.b16 %v487
      %v1740 = vunpack.c.l.b16 %v488
      %v1741 = vunpack.c.l.b16 %v489
      %v1742 = vunpack.c.l.b16 %v490
      %v1743 = vunpack.c.l.b16 %v491
      %v1744 = vunpack.c.l.b16 %v492
      %v1745 = vunpack.c.l.b16 %v493
      %v1746 = vunpack.c.l.b16 %v494
      %v1747 = vunpack.c.l.b16 %v495
      %v1748 = vunpack.c.l.b16 %v496
      %v1749 = vunpack.c.l.b16 %v497
      %v1750 = vunpack.c.l.b16 %v498
      %v1751 = vunpack.c.l.b16 %v499
      %v1752 = vunpack.c.l.b16 %v500
      %v1753 = vunpack.c.l.b16 %v501
      %v1754 = vunpack.c.l.b16 %v502
      %v1755 = vunpack.c.l.b16 %v503
      %v1756 = vunpack.c.l.b16 %v504
      %v1757 = vunpack.c.l.b16 %v505
      %v1758 = vunpack.c.l.b16 %v506
      %v1759 = vunpack.c.l.b16 %v507
      %v1760 = vunpack.c.l.b16 %v508
      %v1761 = vunpack.c.l.b16 %v509
      %v1762 = vunpack.c.l.b16 %v510
      %v1763 = vunpack.c.l.b16 %v511
      %v1764 = vunpack.c.l.b16 %v512
      %v1765 = vunpack.c.l.b16 %v513
      %v1766 = vunpack.c.l.b16 %v514
      %v1767 = vunpack.c.l.b16 %v515
      %v1768 = vunpack.c.l.b16 %v516
      %v1769 = vunpack.c.l.b16 %v517
      %v1770 = vunpack.c.l.b16 %v518
      %v1771 = vunpack.c.l.b16 %v519
      %v1772 = vunpack.c.l.b16 %v520
      %v1773 = vunpack.c.l.b16 %v521
      %v1774 = vunpack.c.l.b16 %v522
      %v1775 = vunpack.c.l.b16 %v523
      %v1776 = vunpack.c.l.b16 %v524
      %v1777 = vunpack.c.l.b16 %v525
      %v1778 = vunpack.c.l.b16 %v526
      %v1779 = vunpack.c.l.b16 %v527
      %v1780 = vunpack.c.l.b16 %v528
      %v1781 = vunpack.c.l.b16 %v529
      %v1782 = vunpack.c.l.b16 %v530
      %v1783 = vunpack.c.l.b16 %v531
      %v1784 = vunpack.c.l.b16 %v532
      %v1785 = vunpack.c.l.b16 %v533
      %v1786 = vunpack.c.l.b16 %v534
      %v1787 = vunpack.c.l.b16 %v535
      %v1788 = vunpack.c.l.b16 %v536
      %v1789 = vunpack.c.l.b16 %v537
      %v1790 = vunpack.c.l.b16 %v538
      %v1791 = vunpack.c.l.b16 %v539
      %v1792 = vunpack.c.l.b16 %v540
      %v1793 = vunpack.c.l.b16 %v541
      %v1794 = vunpack.c.l.b16 %v542
      %v1795 = vunpack.c.l.b16 %v543
      %v1796 = vunpack.c.l.b16 %v544
      %v1797 = vunpack.c.l.b16 %v545
      %v1798 = vunpack.c.l.b16 %v546
      %v1799 = vunpack.c.l.b16 %v547
      %v1800 = vunpack.c.l.b16 %v548
      %v1801 = vunpack.c.l.b16 %v549
      %v1802 = vunpack.c.l.b16 %v550
      %v1803 = vunpack.c.l.b16 %v551
      %v1804 = vunpack.c.l.b16 %v552
      %v1805 = vunpack.c.l.b16 %v553
      %v1806 = vunpack.c.l.b16 %v554
      %v1807 = vunpack.c.l.b16 %v555
      %v1808 = vunpack.c.l.b16 %v556
      %v1809 = vunpack.c.l.b16 %v557
      %v1810 = vunpack.c.l.b16 %v558
      %v1811 = vunpack.c.l.b16 %v559
      %v1812 = vpack.c.b16 %v1613, %v1612
      %v1813 = vpack.c.b16 %v1615, %v1614
      %v1814 = vpack.c.b16 %v1617, %v1616
      %v1815 = vpack.c.b16 %v1619, %v1618
      %v1816 = vpack.c.b16 %v1621, %v1620
      %v1817 = vpack.c.b16 %v1623, %v1622
      %v1818 = vpack.c.b16 %v1625, %v1624
      %v1819 = vpack.c.b16 %v1627, %v1626
      %v1820 = vpack.c.b16 %v1629, %v1628
      %v1821 = vpack.c.b16 %v1631, %v1630
      %v1822 = vpack.c.b16 %v1633, %v1632
      %v1823 = vpack.c.b16 %v1635, %v1634
      %v1824 = vpack.c.b16 %v1637, %v1636
      %v1825 = vpack.c.b16 %v1639, %v1638
      %v1826 = vpack.c.b16 %v1641, %v1640
      %v1827 = vpack.c.b16 %v1643, %v1642
      %v1828 = vpack.c.b16 %v1645, %v1644
      %v1829 = vpack.c.b16 %v1647, %v1646
      %v1830 = vpack.c.b16 %v1649, %v1648
      %v1831 = vpack.c.b16 %v1651, %v1650
      %v1832 = vpack.c.b16 %v1653, %v1652
      %v1833 = vpack.c.b16 %v1655, %v1654
      %v1834 = vpack.c.b16 %v1657, %v1656
      %v1835 = vpack.c.b16 %v1659, %v1658
      %v1836 = vpack.c.b16 %v1661, %v1660
      %v1837 = vpack.c.b16 %v1663, %v1662
      %v1838 = vpack.c.b16 %v1665, %v1664
      %v1839 = vpack.c.b16 %v1667, %v1666
      %v1840 = vpack.c.b16 %v1669, %v1668
      %v1841 = vpack.c.b16 %v1671, %v1670
      %v1842 = vpack.c.b16 %v1673, %v1672
      %v1843 = vpack.c.b16 %v1675, %v1674
      %v1844 = vpack.c.b16 %v1677, %v1676
      %v1845 = vpack.c.b16 %v1679, %v1678
      %v1846 = vpack.c.b16 %v1681, %v1680
      %v1847 = vpack.c.b16 %v1683, %v1682
      %v1848 = vpack.c.b16 %v1685, %v1684
      %v1849 = vpack.c.b16 %v1687, %v1686
      %v1850 = vpack.c.b16 %v1689, %v1688
      %v1851 = vpack.c.b16 %v1691, %v1690
      %v1852 = vpack.c.b16 %v1693, %v1692
      %v1853 = vpack.c.b16 %v1695, %v1694
      %v1854 = vpack.c.b16 %v1697, %v1696
      %v1855 = vpack.c.b16 %v1699, %v1698
      %v1856 = vpack.c.b16 %v1701, %v1700
      %v1857 = vpack.c.b16 %v1703, %v1702
      %v1858 = vpack.c.b16 %v1705, %v1704
      %v1859 = vpack.c.b16 %v1707, %v1706
      %v1860 = vpack.c.b16 %v1709, %v1708
      %v1861 = vpack.c.b16 %v1711, %v1710
      %v1862 = vpack.c.b16 %v1713, %v1712
      %v1863 = vpack.c.b16 %v1715, %v1714
      %v1864 = vpack.c.b16 %v1717, %v1716
      %v1865 = vpack.c.b16 %v1719, %v1718
      %v1866 = vpack.c.b16 %v1721, %v1720
      %v1867 = vpack.c.b16 %v1723, %v1722
      %v1868 = vpack.c.b16 %v1725, %v1724
      %v1869 = vpack.c.b16 %v1727, %v1726
      %v1870 = vpack.c.b16 %v1729, %v1728
      %v1871 = vpack.c.b16 %v1731, %v1730
      %v1872 = vpack.c.b16 %v1733, %v1732
      %v1873 = vpack.c.b16 %v1735, %v1734
      %v1874 = vpack.c.b16 %v1737, %v1736
      %v1875 = vpack.c.b16 %v1739, %v1738
      %v1876 = vpack.c.b16 %v1741, %v1740
      %v1877 = vpack.c.b16 %v1743, %v1742
      %v1878 = vpack.c.b16 %v1745, %v1744
      %v1879 = vpack.c.b16 %v1747, %v1746
      %v1880 = vpack.c.b16 %v1749, %v1748
      %v1881 = vpack.c.b16 %v1751, %v1750
      %v1882 = vpack.c.b16 %v1753, %v1752
      %v1883 = vpack.c.b16 %v1755, %v1754
      %v1884 = vpack.c.b16 %v1757, %v1756
      %v1885 = vpack.c.b16 %v1759, %v1758
      %v1886 = vpack.c.b16 %v1761, %v1760
      %v1887 = vpack.c.b16 %v1763, %v1762
      %v1888 = vpack.c.b16 %v1765, %v1764
      %v1889 = vpack.c.b16 %v1767, %v1766
      %v1890 = vpack.c.b16 %v1769, %v1768
      %v1891 = vpack.c.b16 %v1771, %v1770
      %v1892 = vpack.c.b16 %v1773, %v1772
      %v1893 = vpack.c.b16 %v1775, %v1774
      %v1894 = vpack.c.b16 %v1777, %v1776
      %v1895 = vpack.c.b16 %v1779, %v1778
      %v1896 = vpack.c.b16 %v1781, %v1780
      %v1897 = vpack.c.b16 %v1783, %v1782
      %v1898 = vpack.c.b16 %v1785, %v1784
      %v1899 = vpack.c.b16 %v1787, %v1786
      %v1900 = vpack.c.b16 %v1789, %v1788
      %v1901 = vpack.c.b16 %v1791, %v1790
      %v1902 = vpack.c.b16 %v1793, %v1792
      %v1903 = vpack.c.b16 %v1795, %v1794
      %v1904 = vpack.c.b16 %v1797, %v1796
      %v1905 = vpack.c.b16 %v1799, %v1798
      %v1906 = vpack.c.b16 %v1801, %v1800
      %v1907 = vpack.c.b16 %v1803, %v1802
      %v1908 = vpack.c.b16 %v1805, %v1804
      %v1909 = vpack.c.b16 %v1807, %v1806
      %v1910 = vpack.c.b16 %v1809, %v1808
      %v1911 = vpack.c.b16 %v1811, %v1810
      %vm2012 = vcmask 523264
      %v2014 = vsel %vm2012, %v1099, 0
      %v2017 = vsel %vm2012, %v1112, 0
      %v2020 = vsel %vm2012, %v1125, 0
      %v2023 = vsel %vm2012, %v1138, 0
      %v2026 = vsel %vm2012, %v1151, 0
      %v2029 = vsel %vm2012, %v1164, 0
      %v2032 = vsel %vm2012, %v1177, 0
      %v2035 = vsel %vm2012, %v1190, 0
      %v2038 = vsel %vm2012, %v1203, 0
      %v2041 = vsel %vm2012, %v1216, 0
      %v2044 = vsel %vm2012, %v1229, 0
      %v2047 = vsel %vm2012, %v1242, 0
      %v2050 = vsel %vm2012, %v1255, 0
      %2052 = vmatprep.subr.bf16.mxu0 0
      %2053 = vmatpush1.bf16.msra.mxu0 %v1812
      %2054 = vmatprep.subr.bf16.mxu0 0
      %2055 = vmatpush1.bf16.msra.mxu0 %v1813
      %2056 = vmatprep.subr.bf16.mxu0 0
      %2057 = vmatpush1.bf16.msra.mxu0 %v1814
      %2058 = vmatprep.subr.bf16.mxu0 0
      %2059 = vmatpush1.bf16.msra.mxu0 %v1815
      %2060 = vmatprep.subr.bf16.mxu0 0
      %2061 = vmatpush1.bf16.msra.mxu0 %v1816
      %2062 = vmatprep.subr.bf16.mxu0 0
      %2063 = vmatpush1.bf16.msra.mxu0 %v1817
      %2064 = vmatprep.subr.bf16.mxu0 0
      %2065 = vmatpush1.bf16.msra.mxu0 %v1818
      %2066 = vmatprep.subr.bf16.mxu0 0
      %2067 = vmatpush1.bf16.msra.mxu0 %v1819
      %2068 = vmatprep.subr.bf16.mxu0 0
      %2069 = vmatpush1.bf16.msra.mxu0 %v1820
      %2070 = vmatprep.subr.bf16.mxu0 0
      %2071 = vmatpush1.bf16.msra.mxu0 %v1821
      %2072 = vmatprep.subr.bf16.mxu0 0
      %2073 = vmatpush1.bf16.msra.mxu0 %v1822
      %2074 = vmatprep.subr.bf16.mxu0 0
      %2075 = vmatpush1.bf16.msra.mxu0 %v1823
      %2076 = vmatprep.subr.bf16.mxu0 0
      %2077 = vmatpush1.bf16.msra.mxu0 %v1824
      %2078 = vmatprep.subr.bf16.mxu0 0
      %2079 = vmatpush1.bf16.msra.mxu0 %v1825
      %2080 = vmatprep.subr.bf16.mxu0 0
      %2081 = vmatpush1.bf16.msra.mxu0 %v1826
      %2082 = vmatprep.subr.bf16.mxu0 0
      %2083 = vmatpush1.bf16.msra.mxu0 %v1827
      %2084 = vmatprep.mubr.bf16.mxu0 %v1088
      %2085 = vmatmul.mubr.bf16.gmra.mrb[0].mxu0 %v1087
      %v2086 = vpop.f32.mrb[0].mxu0
      %v2087 = vadd.f32 %v565, %v2086
      %v2088 = vpop.f32.mrb[0].mxu0
      %v2089 = vpop.f32.mrb[0].mxu0
      %v2090 = vadd.f32 %v565, %v2089
      %v2091 = vpop.f32.mrb[0].mxu0
      %2092 = vmatprep.mubr.bf16.mxu0 %v1101
      %2093 = vmatmul.mubr.bf16.gmra.mrb[0].mxu0 %v1100
      %v2094 = vpop.f32.mrb[0].mxu0
      %v2095 = vadd.f32 %v565, %v2094
      %v2096 = vpop.f32.mrb[0].mxu0
      %v2097 = vpop.f32.mrb[0].mxu0
      %v2098 = vadd.f32 %v565, %v2097
      %v2099 = vpop.f32.mrb[0].mxu0
      %2100 = vmatprep.mubr.bf16.mxu0 %v1114
      %2101 = vmatmul.mubr.bf16.gmra.mrb[0].mxu0 %v1113
      %v2102 = vpop.f32.mrb[0].mxu0
      %v2103 = vadd.f32 %v565, %v2102
      %v2104 = vpop.f32.mrb[0].mxu0
      %v2105 = vpop.f32.mrb[0].mxu0
      %v2106 = vadd.f32 %v565, %v2105
      %v2107 = vpop.f32.mrb[0].mxu0
      %2108 = vmatprep.mubr.bf16.mxu0 %v1127
      %2109 = vmatmul.mubr.bf16.gmra.mrb[0].mxu0 %v1126
      %v2110 = vpop.f32.mrb[0].mxu0
      %v2111 = vadd.f32 %v565, %v2110
      %v2112 = vpop.f32.mrb[0].mxu0
      %v2113 = vpop.f32.mrb[0].mxu0
      %v2114 = vadd.f32 %v565, %v2113
      %v2115 = vpop.f32.mrb[0].mxu0
      %2116 = vmatprep.mubr.bf16.mxu0 %v1140
      %2117 = vmatmul.mubr.bf16.gmra.mrb[0].mxu0 %v1139
      %v2118 = vpop.f32.mrb[0].mxu0
      %v2119 = vadd.f32 %v565, %v2118
      %v2120 = vpop.f32.mrb[0].mxu0
      %v2121 = vpop.f32.mrb[0].mxu0
      %v2122 = vadd.f32 %v565, %v2121
      %v2123 = vpop.f32.mrb[0].mxu0
      %2124 = vmatprep.mubr.bf16.mxu0 %v1153
      %2125 = vmatmul.mubr.bf16.gmra.mrb[0].mxu0 %v1152
      %v2126 = vpop.f32.mrb[0].mxu0
      %v2127 = vadd.f32 %v565, %v2126
      %v2128 = vpop.f32.mrb[0].mxu0
      %v2129 = vpop.f32.mrb[0].mxu0
      %v2130 = vadd.f32 %v565, %v2129
      %v2131 = vpop.f32.mrb[0].mxu0
      %2132 = vmatprep.mubr.bf16.mxu0 %v1166
      %2133 = vmatmul.mubr.bf16.gmra.mrb[0].mxu0 %v1165
      %v2134 = vpop.f32.mrb[0].mxu0
      %v2135 = vadd.f32 %v565, %v2134
      %v2136 = vpop.f32.mrb[0].mxu0
      %v2137 = vpop.f32.mrb[0].mxu0
      %v2138 = vadd.f32 %v565, %v2137
      %v2139 = vpop.f32.mrb[0].mxu0
      %2140 = vmatprep.mubr.bf16.mxu0 %v1179
      %2141 = vmatmul.mubr.bf16.gmra.mrb[0].mxu0 %v1178
      %v2142 = vpop.f32.mrb[0].mxu0
      %v2143 = vadd.f32 %v565, %v2142
      %v2144 = vpop.f32.mrb[0].mxu0
      %v2145 = vpop.f32.mrb[0].mxu0
      %v2146 = vadd.f32 %v565, %v2145
      %v2147 = vpop.f32.mrb[0].mxu0
      %2148 = vmatprep.mubr.bf16.mxu0 %v1192
      %2149 = vmatmul.mubr.bf16.gmra.mrb[0].mxu0 %v1191
      %v2150 = vpop.f32.mrb[0].mxu0
      %v2151 = vadd.f32 %v565, %v2150
      %v2152 = vpop.f32.mrb[0].mxu0
      %v2153 = vpop.f32.mrb[0].mxu0
      %v2154 = vadd.f32 %v565, %v2153
      %v2155 = vpop.f32.mrb[0].mxu0
      %2156 = vmatprep.mubr.bf16.mxu0 %v1205
      %2157 = vmatmul.mubr.bf16.gmra.mrb[0].mxu0 %v1204
      %v2158 = vpop.f32.mrb[0].mxu0
      %v2159 = vadd.f32 %v565, %v2158
      %v2160 = vpop.f32.mrb[0].mxu0
      %v2161 = vpop.f32.mrb[0].mxu0
      %v2162 = vadd.f32 %v565, %v2161
      %v2163 = vpop.f32.mrb[0].mxu0
      %2164 = vmatprep.mubr.bf16.mxu0 %v1218
      %2165 = vmatmul.mubr.bf16.gmra.mrb[0].mxu0 %v1217
      %v2166 = vpop.f32.mrb[0].mxu0
      %v2167 = vadd.f32 %v565, %v2166
      %v2168 = vpop.f32.mrb[0].mxu0
      %v2169 = vpop.f32.mrb[0].mxu0
      %v2170 = vadd.f32 %v565, %v2169
      %v2171 = vpop.f32.mrb[0].mxu0
      %2172 = vmatprep.mubr.bf16.mxu0 %v1231
      %2173 = vmatmul.mubr.bf16.gmra.mrb[0].mxu0 %v1230
      %v2174 = vpop.f32.mrb[0].mxu0
      %v2175 = vadd.f32 %v565, %v2174
      %v2176 = vpop.f32.mrb[0].mxu0
      %v2177 = vpop.f32.mrb[0].mxu0
      %v2178 = vadd.f32 %v565, %v2177
      %v2179 = vpop.f32.mrb[0].mxu0
      %2180 = vmatprep.mubr.bf16.mxu0 %v1244
      %2181 = vmatmul.mubr.bf16.gmra.mrb[0].mxu0 %v1243
      %v2182 = vpop.f32.mrb[0].mxu0
      %v2183 = vadd.f32 %v565, %v2182
      %v2184 = vpop.f32.mrb[0].mxu0
      %v2185 = vpop.f32.mrb[0].mxu0
      %v2186 = vadd.f32 %v565, %v2185
      %v2187 = vpop.f32.mrb[0].mxu0
      %2188 = vdwg.mxu0
      %2189 = vmatprep.subr.bf16.mxu0 0
      %2190 = vmatpush1.bf16.msra.mxu0 %v1828
      %2191 = vmatprep.subr.bf16.mxu0 0
      %2192 = vmatpush1.bf16.msra.mxu0 %v1829
      %2193 = vmatprep.subr.bf16.mxu0 0
      %2194 = vmatpush1.bf16.msra.mxu0 %v1830
      %2195 = vmatprep.subr.bf16.mxu0 0
      %2196 = vmatpush1.bf16.msra.mxu0 %v1831
      %2197 = vmatprep.subr.bf16.mxu0 0
      %2198 = vmatpush1.bf16.msra.mxu0 %v1832
      %2199 = vmatprep.subr.bf16.mxu0 0
      %2200 = vmatpush1.bf16.msra.mxu0 %v1833
      %2201 = vmatprep.subr.bf16.mxu0 0
      %2202 = vmatpush1.bf16.msra.mxu0 %v1834
      %2203 = vmatprep.subr.bf16.mxu0 0
      %2204 = vmatpush1.bf16.msra.mxu0 %v1835
      %2205 = vmatprep.subr.bf16.mxu0 0
      %2206 = vmatpush1.bf16.msra.mxu0 %v1836
      %2207 = vmatprep.subr.bf16.mxu0 0
      %2208 = vmatpush1.bf16.msra.mxu0 %v1837
      %2209 = vmatprep.subr.bf16.mxu0 0
      %2210 = vmatpush1.bf16.msra.mxu0 %v1838
      %2211 = vmatprep.subr.bf16.mxu0 0
      %2212 = vmatpush1.bf16.msra.mxu0 %v1839
      %2213 = vmatprep.subr.bf16.mxu0 0
      %2214 = vmatpush1.bf16.msra.mxu0 %v1840
      %2215 = vmatprep.subr.bf16.mxu0 0
      %2216 = vmatpush1.bf16.msra.mxu0 %v1841
      %2217 = vmatprep.subr.bf16.mxu0 0
      %2218 = vmatpush1.bf16.msra.mxu0 %v1842
      %2219 = vmatprep.subr.bf16.mxu0 0
      %2220 = vmatpush1.bf16.msra.mxu0 %v1843
      %2221 = vmatprep.mubr.bf16.mxu0 %v1090
      %2222 = vmatmul.mubr.bf16.gmra.mrb[0].mxu0 %v1089
      %v2223 = vpop.f32.mrb[0].mxu0
      %v2224 = vadd.f32 %v2087, %v2223
      %v2225 = vpop.f32.mrb[0].mxu0
      %v2226 = vpop.f32.mrb[0].mxu0
      %v2227 = vadd.f32 %v2090, %v2226
      %v2228 = vpop.f32.mrb[0].mxu0
      %2229 = vmatprep.mubr.bf16.mxu0 %v1103
      %2230 = vmatmul.mubr.bf16.gmra.mrb[0].mxu0 %v1102
      %v2231 = vpop.f32.mrb[0].mxu0
      %v2232 = vadd.f32 %v2095, %v2231
      %v2233 = vpop.f32.mrb[0].mxu0
      %v2234 = vpop.f32.mrb[0].mxu0
      %v2235 = vadd.f32 %v2098, %v2234
      %v2236 = vpop.f32.mrb[0].mxu0
      %2237 = vmatprep.mubr.bf16.mxu0 %v1116
      %2238 = vmatmul.mubr.bf16.gmra.mrb[0].mxu0 %v1115
      %v2239 = vpop.f32.mrb[0].mxu0
      %v2240 = vadd.f32 %v2103, %v2239
      %v2241 = vpop.f32.mrb[0].mxu0
      %v2242 = vpop.f32.mrb[0].mxu0
      %v2243 = vadd.f32 %v2106, %v2242
      %v2244 = vpop.f32.mrb[0].mxu0
      %2245 = vmatprep.mubr.bf16.mxu0 %v1129
      %2246 = vmatmul.mubr.bf16.gmra.mrb[0].mxu0 %v1128
      %v2247 = vpop.f32.mrb[0].mxu0
      %v2248 = vadd.f32 %v2111, %v2247
      %v2249 = vpop.f32.mrb[0].mxu0
      %v2250 = vpop.f32.mrb[0].mxu0
      %v2251 = vadd.f32 %v2114, %v2250
      %v2252 = vpop.f32.mrb[0].mxu0
      %2253 = vmatprep.mubr.bf16.mxu0 %v1142
      %2254 = vmatmul.mubr.bf16.gmra.mrb[0].mxu0 %v1141
      %v2255 = vpop.f32.mrb[0].mxu0
      %v2256 = vadd.f32 %v2119, %v2255
      %v2257 = vpop.f32.mrb[0].mxu0
      %v2258 = vpop.f32.mrb[0].mxu0
      %v2259 = vadd.f32 %v2122, %v2258
      %v2260 = vpop.f32.mrb[0].mxu0
      %2261 = vmatprep.mubr.bf16.mxu0 %v1155
      %2262 = vmatmul.mubr.bf16.gmra.mrb[0].mxu0 %v1154
      %v2263 = vpop.f32.mrb[0].mxu0
      %v2264 = vadd.f32 %v2127, %v2263
      %v2265 = vpop.f32.mrb[0].mxu0
      %v2266 = vpop.f32.mrb[0].mxu0
      %v2267 = vadd.f32 %v2130, %v2266
      %v2268 = vpop.f32.mrb[0].mxu0
      %2269 = vmatprep.mubr.bf16.mxu0 %v1168
      %2270 = vmatmul.mubr.bf16.gmra.mrb[0].mxu0 %v1167
      %v2271 = vpop.f32.mrb[0].mxu0
      %v2272 = vadd.f32 %v2135, %v2271
      %v2273 = vpop.f32.mrb[0].mxu0
      %v2274 = vpop.f32.mrb[0].mxu0
      %v2275 = vadd.f32 %v2138, %v2274
      %v2276 = vpop.f32.mrb[0].mxu0
      %2277 = vmatprep.mubr.bf16.mxu0 %v1181
      %2278 = vmatmul.mubr.bf16.gmra.mrb[0].mxu0 %v1180
      %v2279 = vpop.f32.mrb[0].mxu0
      %v2280 = vadd.f32 %v2143, %v2279
      %v2281 = vpop.f32.mrb[0].mxu0
      %v2282 = vpop.f32.mrb[0].mxu0
      %v2283 = vadd.f32 %v2146, %v2282
      %v2284 = vpop.f32.mrb[0].mxu0
      %2285 = vmatprep.mubr.bf16.mxu0 %v1194
      %2286 = vmatmul.mubr.bf16.gmra.mrb[0].mxu0 %v1193
      %v2287 = vpop.f32.mrb[0].mxu0
      %v2288 = vadd.f32 %v2151, %v2287
      %v2289 = vpop.f32.mrb[0].mxu0
      %v2290 = vpop.f32.mrb[0].mxu0
      %v2291 = vadd.f32 %v2154, %v2290
      %v2292 = vpop.f32.mrb[0].mxu0
      %2293 = vmatprep.mubr.bf16.mxu0 %v1207
      %2294 = vmatmul.mubr.bf16.gmra.mrb[0].mxu0 %v1206
      %v2295 = vpop.f32.mrb[0].mxu0
      %v2296 = vadd.f32 %v2159, %v2295
      %v2297 = vpop.f32.mrb[0].mxu0
      %v2298 = vpop.f32.mrb[0].mxu0
      %v2299 = vadd.f32 %v2162, %v2298
      %v2300 = vpop.f32.mrb[0].mxu0
      %2301 = vmatprep.mubr.bf16.mxu0 %v1220
      %2302 = vmatmul.mubr.bf16.gmra.mrb[0].mxu0 %v1219
      %v2303 = vpop.f32.mrb[0].mxu0
      %v2304 = vadd.f32 %v2167, %v2303
      %v2305 = vpop.f32.mrb[0].mxu0
      %v2306 = vpop.f32.mrb[0].mxu0
      %v2307 = vadd.f32 %v2170, %v2306
      %v2308 = vpop.f32.mrb[0].mxu0
      %2309 = vmatprep.mubr.bf16.mxu0 %v1233
      %2310 = vmatmul.mubr.bf16.gmra.mrb[0].mxu0 %v1232
      %v2311 = vpop.f32.mrb[0].mxu0
      %v2312 = vadd.f32 %v2175, %v2311
      %v2313 = vpop.f32.mrb[0].mxu0
      %v2314 = vpop.f32.mrb[0].mxu0
      %v2315 = vadd.f32 %v2178, %v2314
      %v2316 = vpop.f32.mrb[0].mxu0
      %2317 = vmatprep.mubr.bf16.mxu0 %v1246
      %2318 = vmatmul.mubr.bf16.gmra.mrb[0].mxu0 %v1245
      %v2319 = vpop.f32.mrb[0].mxu0
      %v2320 = vadd.f32 %v2183, %v2319
      %v2321 = vpop.f32.mrb[0].mxu0
      %v2322 = vpop.f32.mrb[0].mxu0
      %v2323 = vadd.f32 %v2186, %v2322
      %v2324 = vpop.f32.mrb[0].mxu0
      %2325 = vdwg.mxu0
      %2326 = vmatprep.subr.bf16.mxu0 0
      %2327 = vmatpush1.bf16.msra.mxu0 %v1844
      %2328 = vmatprep.subr.bf16.mxu0 0
      %2329 = vmatpush1.bf16.msra.mxu0 %v1845
      %2330 = vmatprep.subr.bf16.mxu0 0
      %2331 = vmatpush1.bf16.msra.mxu0 %v1846
      %2332 = vmatprep.subr.bf16.mxu0 0
      %2333 = vmatpush1.bf16.msra.mxu0 %v1847
      %2334 = vmatprep.subr.bf16.mxu0 0
      %2335 = vmatpush1.bf16.msra.mxu0 %v1848
      %2336 = vmatprep.subr.bf16.mxu0 0
      %2337 = vmatpush1.bf16.msra.mxu0 %v1849
      %2338 = vmatprep.subr.bf16.mxu0 0
      %2339 = vmatpush1.bf16.msra.mxu0 %v1850
      %2340 = vmatprep.subr.bf16.mxu0 0
      %2341 = vmatpush1.bf16.msra.mxu0 %v1851
      %2342 = vmatprep.subr.bf16.mxu0 0
      %2343 = vmatpush1.bf16.msra.mxu0 %v1852
      %2344 = vmatprep.subr.bf16.mxu0 0
      %2345 = vmatpush1.bf16.msra.mxu0 %v1853
      %2346 = vmatprep.subr.bf16.mxu0 0
      %2347 = vmatpush1.bf16.msra.mxu0 %v1854
      %2348 = vmatprep.subr.bf16.mxu0 0
      %2349 = vmatpush1.bf16.msra.mxu0 %v1855
      %2350 = vmatprep.subr.bf16.mxu0 0
      %2351 = vmatpush1.bf16.msra.mxu0 %v1856
      %2352 = vmatprep.subr.bf16.mxu0 0
      %2353 = vmatpush1.bf16.msra.mxu0 %v1857
      %2354 = vmatprep.subr.bf16.mxu0 0
      %2355 = vmatpush1.bf16.msra.mxu0 %v1858
      %2356 = vmatprep.subr.bf16.mxu0 0
      %2357 = vmatpush1.bf16.msra.mxu0 %v1859
      %2358 = vmatprep.mubr.bf16.mxu0 %v1092
      %2359 = vmatmul.mubr.bf16.gmra.mrb[0].mxu0 %v1091
      %v2360 = vpop.f32.mrb[0].mxu0
      %v2361 = vadd.f32 %v2224, %v2360
      %v2362 = vpop.f32.mrb[0].mxu0
      %v2363 = vpop.f32.mrb[0].mxu0
      %v2364 = vadd.f32 %v2227, %v2363
      %v2365 = vpop.f32.mrb[0].mxu0
      %2366 = vmatprep.mubr.bf16.mxu0 %v1105
      %2367 = vmatmul.mubr.bf16.gmra.mrb[0].mxu0 %v1104
      %v2368 = vpop.f32.mrb[0].mxu0
      %v2369 = vadd.f32 %v2232, %v2368
      %v2370 = vpop.f32.mrb[0].mxu0
      %v2371 = vpop.f32.mrb[0].mxu0
      %v2372 = vadd.f32 %v2235, %v2371
      %v2373 = vpop.f32.mrb[0].mxu0
      %2374 = vmatprep.mubr.bf16.mxu0 %v1118
      %2375 = vmatmul.mubr.bf16.gmra.mrb[0].mxu0 %v1117
      %v2376 = vpop.f32.mrb[0].mxu0
      %v2377 = vadd.f32 %v2240, %v2376
      %v2378 = vpop.f32.mrb[0].mxu0
      %v2379 = vpop.f32.mrb[0].mxu0
      %v2380 = vadd.f32 %v2243, %v2379
      %v2381 = vpop.f32.mrb[0].mxu0
      %2382 = vmatprep.mubr.bf16.mxu0 %v1131
      %2383 = vmatmul.mubr.bf16.gmra.mrb[0].mxu0 %v1130
      %v2384 = vpop.f32.mrb[0].mxu0
      %v2385 = vadd.f32 %v2248, %v2384
      %v2386 = vpop.f32.mrb[0].mxu0
      %v2387 = vpop.f32.mrb[0].mxu0
      %v2388 = vadd.f32 %v2251, %v2387
      %v2389 = vpop.f32.mrb[0].mxu0
      %2390 = vmatprep.mubr.bf16.mxu0 %v1144
      %2391 = vmatmul.mubr.bf16.gmra.mrb[0].mxu0 %v1143
      %v2392 = vpop.f32.mrb[0].mxu0
      %v2393 = vadd.f32 %v2256, %v2392
      %v2394 = vpop.f32.mrb[0].mxu0
      %v2395 = vpop.f32.mrb[0].mxu0
      %v2396 = vadd.f32 %v2259, %v2395
      %v2397 = vpop.f32.mrb[0].mxu0
      %2398 = vmatprep.mubr.bf16.mxu0 %v1157
      %2399 = vmatmul.mubr.bf16.gmra.mrb[0].mxu0 %v1156
      %v2400 = vpop.f32.mrb[0].mxu0
      %v2401 = vadd.f32 %v2264, %v2400
      %v2402 = vpop.f32.mrb[0].mxu0
      %v2403 = vpop.f32.mrb[0].mxu0
      %v2404 = vadd.f32 %v2267, %v2403
      %v2405 = vpop.f32.mrb[0].mxu0
      %2406 = vmatprep.mubr.bf16.mxu0 %v1170
      %2407 = vmatmul.mubr.bf16.gmra.mrb[0].mxu0 %v1169
      %v2408 = vpop.f32.mrb[0].mxu0
      %v2409 = vadd.f32 %v2272, %v2408
      %v2410 = vpop.f32.mrb[0].mxu0
      %v2411 = vpop.f32.mrb[0].mxu0
      %v2412 = vadd.f32 %v2275, %v2411
      %v2413 = vpop.f32.mrb[0].mxu0
      %2414 = vmatprep.mubr.bf16.mxu0 %v1183
      %2415 = vmatmul.mubr.bf16.gmra.mrb[0].mxu0 %v1182
      %v2416 = vpop.f32.mrb[0].mxu0
      %v2417 = vadd.f32 %v2280, %v2416
      %v2418 = vpop.f32.mrb[0].mxu0
      %v2419 = vpop.f32.mrb[0].mxu0
      %v2420 = vadd.f32 %v2283, %v2419
      %v2421 = vpop.f32.mrb[0].mxu0
      %2422 = vmatprep.mubr.bf16.mxu0 %v1196
      %2423 = vmatmul.mubr.bf16.gmra.mrb[0].mxu0 %v1195
      %v2424 = vpop.f32.mrb[0].mxu0
      %v2425 = vadd.f32 %v2288, %v2424
      %v2426 = vpop.f32.mrb[0].mxu0
      %v2427 = vpop.f32.mrb[0].mxu0
      %v2428 = vadd.f32 %v2291, %v2427
      %v2429 = vpop.f32.mrb[0].mxu0
      %2430 = vmatprep.mubr.bf16.mxu0 %v1209
      %2431 = vmatmul.mubr.bf16.gmra.mrb[0].mxu0 %v1208
      %v2432 = vpop.f32.mrb[0].mxu0
      %v2433 = vadd.f32 %v2296, %v2432
      %v2434 = vpop.f32.mrb[0].mxu0
      %v2435 = vpop.f32.mrb[0].mxu0
      %v2436 = vadd.f32 %v2299, %v2435
      %v2437 = vpop.f32.mrb[0].mxu0
      %2438 = vmatprep.mubr.bf16.mxu0 %v1222
      %2439 = vmatmul.mubr.bf16.gmra.mrb[0].mxu0 %v1221
      %v2440 = vpop.f32.mrb[0].mxu0
      %v2441 = vadd.f32 %v2304, %v2440
      %v2442 = vpop.f32.mrb[0].mxu0
      %v2443 = vpop.f32.mrb[0].mxu0
      %v2444 = vadd.f32 %v2307, %v2443
      %v2445 = vpop.f32.mrb[0].mxu0
      %2446 = vmatprep.mubr.bf16.mxu0 %v1235
      %2447 = vmatmul.mubr.bf16.gmra.mrb[0].mxu0 %v1234
      %v2448 = vpop.f32.mrb[0].mxu0
      %v2449 = vadd.f32 %v2312, %v2448
      %v2450 = vpop.f32.mrb[0].mxu0
      %v2451 = vpop.f32.mrb[0].mxu0
      %v2452 = vadd.f32 %v2315, %v2451
      %v2453 = vpop.f32.mrb[0].mxu0
      %2454 = vmatprep.mubr.bf16.mxu0 %v1248
      %2455 = vmatmul.mubr.bf16.gmra.mrb[0].mxu0 %v1247
      %v2456 = vpop.f32.mrb[0].mxu0
      %v2457 = vadd.f32 %v2320, %v2456
      %v2458 = vpop.f32.mrb[0].mxu0
      %v2459 = vpop.f32.mrb[0].mxu0
      %v2460 = vadd.f32 %v2323, %v2459
      %v2461 = vpop.f32.mrb[0].mxu0
      %2462 = vdwg.mxu0
      %2463 = vmatprep.subr.bf16.mxu0 0
      %2464 = vmatpush1.bf16.msra.mxu0 %v1860
      %2465 = vmatprep.subr.bf16.mxu0 0
      %2466 = vmatpush1.bf16.msra.mxu0 %v1861
      %2467 = vmatprep.subr.bf16.mxu0 0
      %2468 = vmatpush1.bf16.msra.mxu0 %v1862
      %2469 = vmatprep.subr.bf16.mxu0 0
      %2470 = vmatpush1.bf16.msra.mxu0 %v1863
      %2471 = vmatprep.subr.bf16.mxu0 0
      %2472 = vmatpush1.bf16.msra.mxu0 %v1864
      %2473 = vmatprep.subr.bf16.mxu0 0
      %2474 = vmatpush1.bf16.msra.mxu0 %v1865
      %2475 = vmatprep.subr.bf16.mxu0 0
      %2476 = vmatpush1.bf16.msra.mxu0 %v1866
      %2477 = vmatprep.subr.bf16.mxu0 0
      %2478 = vmatpush1.bf16.msra.mxu0 %v1867
      %2479 = vmatprep.subr.bf16.mxu0 0
      %2480 = vmatpush1.bf16.msra.mxu0 %v1868
      %2481 = vmatprep.subr.bf16.mxu0 0
      %2482 = vmatpush1.bf16.msra.mxu0 %v1869
      %2483 = vmatprep.subr.bf16.mxu0 0
      %2484 = vmatpush1.bf16.msra.mxu0 %v1870
      %2485 = vmatprep.subr.bf16.mxu0 0
      %2486 = vmatpush1.bf16.msra.mxu0 %v1871
      %2487 = vmatprep.subr.bf16.mxu0 0
      %2488 = vmatpush1.bf16.msra.mxu0 %v1872
      %2489 = vmatprep.subr.bf16.mxu0 0
      %2490 = vmatpush1.bf16.msra.mxu0 %v1873
      %2491 = vmatprep.subr.bf16.mxu0 0
      %2492 = vmatpush1.bf16.msra.mxu0 %v1874
      %2493 = vmatprep.subr.bf16.mxu0 0
      %2494 = vmatpush1.bf16.msra.mxu0 %v1875
      %2495 = vmatprep.mubr.bf16.mxu0 %v1094
      %2496 = vmatmul.mubr.bf16.gmra.mrb[0].mxu0 %v1093
      %v2497 = vpop.f32.mrb[0].mxu0
      %v2498 = vadd.f32 %v2361, %v2497
      %v2499 = vpop.f32.mrb[0].mxu0
      %v2500 = vpop.f32.mrb[0].mxu0
      %v2501 = vadd.f32 %v2364, %v2500
      %v2502 = vpop.f32.mrb[0].mxu0
      %2503 = vmatprep.mubr.bf16.mxu0 %v1107
      %2504 = vmatmul.mubr.bf16.gmra.mrb[0].mxu0 %v1106
      %v2505 = vpop.f32.mrb[0].mxu0
      %v2506 = vadd.f32 %v2369, %v2505
      %v2507 = vpop.f32.mrb[0].mxu0
      %v2508 = vpop.f32.mrb[0].mxu0
      %v2509 = vadd.f32 %v2372, %v2508
      %v2510 = vpop.f32.mrb[0].mxu0
      %2511 = vmatprep.mubr.bf16.mxu0 %v1120
      %2512 = vmatmul.mubr.bf16.gmra.mrb[0].mxu0 %v1119
      %v2513 = vpop.f32.mrb[0].mxu0
      %v2514 = vadd.f32 %v2377, %v2513
      %v2515 = vpop.f32.mrb[0].mxu0
      %v2516 = vpop.f32.mrb[0].mxu0
      %v2517 = vadd.f32 %v2380, %v2516
      %v2518 = vpop.f32.mrb[0].mxu0
      %2519 = vmatprep.mubr.bf16.mxu0 %v1133
      %2520 = vmatmul.mubr.bf16.gmra.mrb[0].mxu0 %v1132
      %v2521 = vpop.f32.mrb[0].mxu0
      %v2522 = vadd.f32 %v2385, %v2521
      %v2523 = vpop.f32.mrb[0].mxu0
      %v2524 = vpop.f32.mrb[0].mxu0
      %v2525 = vadd.f32 %v2388, %v2524
      %v2526 = vpop.f32.mrb[0].mxu0
      %2527 = vmatprep.mubr.bf16.mxu0 %v1146
      %2528 = vmatmul.mubr.bf16.gmra.mrb[0].mxu0 %v1145
      %v2529 = vpop.f32.mrb[0].mxu0
      %v2530 = vadd.f32 %v2393, %v2529
      %v2531 = vpop.f32.mrb[0].mxu0
      %v2532 = vpop.f32.mrb[0].mxu0
      %v2533 = vadd.f32 %v2396, %v2532
      %v2534 = vpop.f32.mrb[0].mxu0
      %2535 = vmatprep.mubr.bf16.mxu0 %v1159
      %2536 = vmatmul.mubr.bf16.gmra.mrb[0].mxu0 %v1158
      %v2537 = vpop.f32.mrb[0].mxu0
      %v2538 = vadd.f32 %v2401, %v2537
      %v2539 = vpop.f32.mrb[0].mxu0
      %v2540 = vpop.f32.mrb[0].mxu0
      %v2541 = vadd.f32 %v2404, %v2540
      %v2542 = vpop.f32.mrb[0].mxu0
      %2543 = vmatprep.mubr.bf16.mxu0 %v1172
      %2544 = vmatmul.mubr.bf16.gmra.mrb[0].mxu0 %v1171
      %v2545 = vpop.f32.mrb[0].mxu0
      %v2546 = vadd.f32 %v2409, %v2545
      %v2547 = vpop.f32.mrb[0].mxu0
      %v2548 = vpop.f32.mrb[0].mxu0
      %v2549 = vadd.f32 %v2412, %v2548
      %v2550 = vpop.f32.mrb[0].mxu0
      %2551 = vmatprep.mubr.bf16.mxu0 %v1185
      %2552 = vmatmul.mubr.bf16.gmra.mrb[0].mxu0 %v1184
      %v2553 = vpop.f32.mrb[0].mxu0
      %v2554 = vadd.f32 %v2417, %v2553
      %v2555 = vpop.f32.mrb[0].mxu0
      %v2556 = vpop.f32.mrb[0].mxu0
      %v2557 = vadd.f32 %v2420, %v2556
      %v2558 = vpop.f32.mrb[0].mxu0
      %2559 = vmatprep.mubr.bf16.mxu0 %v1198
      %2560 = vmatmul.mubr.bf16.gmra.mrb[0].mxu0 %v1197
      %v2561 = vpop.f32.mrb[0].mxu0
      %v2562 = vadd.f32 %v2425, %v2561
      %v2563 = vpop.f32.mrb[0].mxu0
      %v2564 = vpop.f32.mrb[0].mxu0
      %v2565 = vadd.f32 %v2428, %v2564
      %v2566 = vpop.f32.mrb[0].mxu0
      %2567 = vmatprep.mubr.bf16.mxu0 %v1211
      %2568 = vmatmul.mubr.bf16.gmra.mrb[0].mxu0 %v1210
      %v2569 = vpop.f32.mrb[0].mxu0
      %v2570 = vadd.f32 %v2433, %v2569
      %v2571 = vpop.f32.mrb[0].mxu0
      %v2572 = vpop.f32.mrb[0].mxu0
      %v2573 = vadd.f32 %v2436, %v2572
      %v2574 = vpop.f32.mrb[0].mxu0
      %2575 = vmatprep.mubr.bf16.mxu0 %v1224
      %2576 = vmatmul.mubr.bf16.gmra.mrb[0].mxu0 %v1223
      %v2577 = vpop.f32.mrb[0].mxu0
      %v2578 = vadd.f32 %v2441, %v2577
      %v2579 = vpop.f32.mrb[0].mxu0
      %v2580 = vpop.f32.mrb[0].mxu0
      %v2581 = vadd.f32 %v2444, %v2580
      %v2582 = vpop.f32.mrb[0].mxu0
      %2583 = vmatprep.mubr.bf16.mxu0 %v1237
      %2584 = vmatmul.mubr.bf16.gmra.mrb[0].mxu0 %v1236
      %v2585 = vpop.f32.mrb[0].mxu0
      %v2586 = vadd.f32 %v2449, %v2585
      %v2587 = vpop.f32.mrb[0].mxu0
      %v2588 = vpop.f32.mrb[0].mxu0
      %v2589 = vadd.f32 %v2452, %v2588
      %v2590 = vpop.f32.mrb[0].mxu0
      %2591 = vmatprep.mubr.bf16.mxu0 %v1250
      %2592 = vmatmul.mubr.bf16.gmra.mrb[0].mxu0 %v1249
      %v2593 = vpop.f32.mrb[0].mxu0
      %v2594 = vadd.f32 %v2457, %v2593
      %v2595 = vpop.f32.mrb[0].mxu0
      %v2596 = vpop.f32.mrb[0].mxu0
      %v2597 = vadd.f32 %v2460, %v2596
      %v2598 = vpop.f32.mrb[0].mxu0
      %2599 = vdwg.mxu0
      %2600 = vmatprep.subr.bf16.mxu0 0
      %2601 = vmatpush1.bf16.msra.mxu0 %v1876
      %2602 = vmatprep.subr.bf16.mxu0 0
      %2603 = vmatpush1.bf16.msra.mxu0 %v1877
      %2604 = vmatprep.subr.bf16.mxu0 0
      %2605 = vmatpush1.bf16.msra.mxu0 %v1878
      %2606 = vmatprep.subr.bf16.mxu0 0
      %2607 = vmatpush1.bf16.msra.mxu0 %v1879
      %2608 = vmatprep.subr.bf16.mxu0 0
      %2609 = vmatpush1.bf16.msra.mxu0 %v1880
      %2610 = vmatprep.subr.bf16.mxu0 0
      %2611 = vmatpush1.bf16.msra.mxu0 %v1881
      %2612 = vmatprep.subr.bf16.mxu0 0
      %2613 = vmatpush1.bf16.msra.mxu0 %v1882
      %2614 = vmatprep.subr.bf16.mxu0 0
      %2615 = vmatpush1.bf16.msra.mxu0 %v1883
      %2616 = vmatprep.subr.bf16.mxu0 0
      %2617 = vmatpush1.bf16.msra.mxu0 %v1884
      %2618 = vmatprep.subr.bf16.mxu0 0
      %2619 = vmatpush1.bf16.msra.mxu0 %v1885
      %2620 = vmatprep.subr.bf16.mxu0 0
      %2621 = vmatpush1.bf16.msra.mxu0 %v1886
      %2622 = vmatprep.subr.bf16.mxu0 0
      %2623 = vmatpush1.bf16.msra.mxu0 %v1887
      %2624 = vmatprep.subr.bf16.mxu0 0
      %2625 = vmatpush1.bf16.msra.mxu0 %v1888
      %2626 = vmatprep.subr.bf16.mxu0 0
      %2627 = vmatpush1.bf16.msra.mxu0 %v1889
      %2628 = vmatprep.subr.bf16.mxu0 0
      %2629 = vmatpush1.bf16.msra.mxu0 %v1890
      %2630 = vmatprep.subr.bf16.mxu0 0
      %2631 = vmatpush1.bf16.msra.mxu0 %v1891
      %2632 = vmatprep.mubr.bf16.mxu0 %v1096
      %2633 = vmatmul.mubr.bf16.gmra.mrb[0].mxu0 %v1095
      %v2634 = vpop.f32.mrb[0].mxu0
      %v2635 = vadd.f32 %v2498, %v2634
      %v2636 = vpop.f32.mrb[0].mxu0
      %v2637 = vpop.f32.mrb[0].mxu0
      %v2638 = vadd.f32 %v2501, %v2637
      %v2639 = vpop.f32.mrb[0].mxu0
      %2640 = vmatprep.mubr.bf16.mxu0 %v1109
      %2641 = vmatmul.mubr.bf16.gmra.mrb[0].mxu0 %v1108
      %v2642 = vpop.f32.mrb[0].mxu0
      %v2643 = vadd.f32 %v2506, %v2642
      %v2644 = vpop.f32.mrb[0].mxu0
      %v2645 = vpop.f32.mrb[0].mxu0
      %v2646 = vadd.f32 %v2509, %v2645
      %v2647 = vpop.f32.mrb[0].mxu0
      %2648 = vmatprep.mubr.bf16.mxu0 %v1122
      %2649 = vmatmul.mubr.bf16.gmra.mrb[0].mxu0 %v1121
      %v2650 = vpop.f32.mrb[0].mxu0
      %v2651 = vadd.f32 %v2514, %v2650
      %v2652 = vpop.f32.mrb[0].mxu0
      %v2653 = vpop.f32.mrb[0].mxu0
      %v2654 = vadd.f32 %v2517, %v2653
      %v2655 = vpop.f32.mrb[0].mxu0
      %2656 = vmatprep.mubr.bf16.mxu0 %v1135
      %2657 = vmatmul.mubr.bf16.gmra.mrb[0].mxu0 %v1134
      %v2658 = vpop.f32.mrb[0].mxu0
      %v2659 = vadd.f32 %v2522, %v2658
      %v2660 = vpop.f32.mrb[0].mxu0
      %v2661 = vpop.f32.mrb[0].mxu0
      %v2662 = vadd.f32 %v2525, %v2661
      %v2663 = vpop.f32.mrb[0].mxu0
      %2664 = vmatprep.mubr.bf16.mxu0 %v1148
      %2665 = vmatmul.mubr.bf16.gmra.mrb[0].mxu0 %v1147
      %v2666 = vpop.f32.mrb[0].mxu0
      %v2667 = vadd.f32 %v2530, %v2666
      %v2668 = vpop.f32.mrb[0].mxu0
      %v2669 = vpop.f32.mrb[0].mxu0
      %v2670 = vadd.f32 %v2533, %v2669
      %v2671 = vpop.f32.mrb[0].mxu0
      %2672 = vmatprep.mubr.bf16.mxu0 %v1161
      %2673 = vmatmul.mubr.bf16.gmra.mrb[0].mxu0 %v1160
      %v2674 = vpop.f32.mrb[0].mxu0
      %v2675 = vadd.f32 %v2538, %v2674
      %v2676 = vpop.f32.mrb[0].mxu0
      %v2677 = vpop.f32.mrb[0].mxu0
      %v2678 = vadd.f32 %v2541, %v2677
      %v2679 = vpop.f32.mrb[0].mxu0
      %2680 = vmatprep.mubr.bf16.mxu0 %v1174
      %2681 = vmatmul.mubr.bf16.gmra.mrb[0].mxu0 %v1173
      %v2682 = vpop.f32.mrb[0].mxu0
      %v2683 = vadd.f32 %v2546, %v2682
      %v2684 = vpop.f32.mrb[0].mxu0
      %v2685 = vpop.f32.mrb[0].mxu0
      %v2686 = vadd.f32 %v2549, %v2685
      %v2687 = vpop.f32.mrb[0].mxu0
      %2688 = vmatprep.mubr.bf16.mxu0 %v1187
      %2689 = vmatmul.mubr.bf16.gmra.mrb[0].mxu0 %v1186
      %v2690 = vpop.f32.mrb[0].mxu0
      %v2691 = vadd.f32 %v2554, %v2690
      %v2692 = vpop.f32.mrb[0].mxu0
      %v2693 = vpop.f32.mrb[0].mxu0
      %v2694 = vadd.f32 %v2557, %v2693
      %v2695 = vpop.f32.mrb[0].mxu0
      %2696 = vmatprep.mubr.bf16.mxu0 %v1200
      %2697 = vmatmul.mubr.bf16.gmra.mrb[0].mxu0 %v1199
      %v2698 = vpop.f32.mrb[0].mxu0
      %v2699 = vadd.f32 %v2562, %v2698
      %v2700 = vpop.f32.mrb[0].mxu0
      %v2701 = vpop.f32.mrb[0].mxu0
      %v2702 = vadd.f32 %v2565, %v2701
      %v2703 = vpop.f32.mrb[0].mxu0
      %2704 = vmatprep.mubr.bf16.mxu0 %v1213
      %2705 = vmatmul.mubr.bf16.gmra.mrb[0].mxu0 %v1212
      %v2706 = vpop.f32.mrb[0].mxu0
      %v2707 = vadd.f32 %v2570, %v2706
      %v2708 = vpop.f32.mrb[0].mxu0
      %v2709 = vpop.f32.mrb[0].mxu0
      %v2710 = vadd.f32 %v2573, %v2709
      %v2711 = vpop.f32.mrb[0].mxu0
      %2712 = vmatprep.mubr.bf16.mxu0 %v1226
      %2713 = vmatmul.mubr.bf16.gmra.mrb[0].mxu0 %v1225
      %v2714 = vpop.f32.mrb[0].mxu0
      %v2715 = vadd.f32 %v2578, %v2714
      %v2716 = vpop.f32.mrb[0].mxu0
      %v2717 = vpop.f32.mrb[0].mxu0
      %v2718 = vadd.f32 %v2581, %v2717
      %v2719 = vpop.f32.mrb[0].mxu0
      %2720 = vmatprep.mubr.bf16.mxu0 %v1239
      %2721 = vmatmul.mubr.bf16.gmra.mrb[0].mxu0 %v1238
      %v2722 = vpop.f32.mrb[0].mxu0
      %v2723 = vadd.f32 %v2586, %v2722
      %v2724 = vpop.f32.mrb[0].mxu0
      %v2725 = vpop.f32.mrb[0].mxu0
      %v2726 = vadd.f32 %v2589, %v2725
      %v2727 = vpop.f32.mrb[0].mxu0
      %2728 = vmatprep.mubr.bf16.mxu0 %v1252
      %2729 = vmatmul.mubr.bf16.gmra.mrb[0].mxu0 %v1251
      %v2730 = vpop.f32.mrb[0].mxu0
      %v2731 = vadd.f32 %v2594, %v2730
      %v2732 = vpop.f32.mrb[0].mxu0
      %v2733 = vpop.f32.mrb[0].mxu0
      %v2734 = vadd.f32 %v2597, %v2733
      %v2735 = vpop.f32.mrb[0].mxu0
      %2736 = vdwg.mxu0
      %2737 = vmatprep.subr.bf16.mxu0 0
      %2738 = vmatpush1.bf16.msra.mxu0 %v1892
      %2739 = vmatprep.subr.bf16.mxu0 0
      %2740 = vmatpush1.bf16.msra.mxu0 %v1893
      %2741 = vmatprep.subr.bf16.mxu0 0
      %2742 = vmatpush1.bf16.msra.mxu0 %v1894
      %2743 = vmatprep.subr.bf16.mxu0 0
      %2744 = vmatpush1.bf16.msra.mxu0 %v1895
      %2745 = vmatprep.subr.bf16.mxu0 0
      %2746 = vmatpush1.bf16.msra.mxu0 %v1896
      %2747 = vmatprep.subr.bf16.mxu0 0
      %2748 = vmatpush1.bf16.msra.mxu0 %v1897
      %2749 = vmatprep.subr.bf16.mxu0 0
      %2750 = vmatpush1.bf16.msra.mxu0 %v1898
      %2751 = vmatprep.subr.bf16.mxu0 0
      %2752 = vmatpush1.bf16.msra.mxu0 %v1899
      %2753 = vmatprep.subr.bf16.mxu0 0
      %2754 = vmatpush1.bf16.msra.mxu0 %v1900
      %2755 = vmatprep.subr.bf16.mxu0 0
      %2756 = vmatpush1.bf16.msra.mxu0 %v1901
      %2757 = vmatprep.subr.bf16.mxu0 0
      %2758 = vmatpush1.bf16.msra.mxu0 %v1902
      %2759 = vmatprep.subr.bf16.mxu0 0
      %2760 = vmatpush1.bf16.msra.mxu0 %v1903
      %2761 = vmatprep.subr.bf16.mxu0 0
      %2762 = vmatpush1.bf16.msra.mxu0 %v1904
      %2763 = vmatprep.subr.bf16.mxu0 0
      %2764 = vmatpush1.bf16.msra.mxu0 %v1905
      %2765 = vmatprep.subr.bf16.mxu0 0
      %2766 = vmatpush1.bf16.msra.mxu0 %v1906
      %2767 = vmatprep.subr.bf16.mxu0 0
      %2768 = vmatpush1.bf16.msra.mxu0 %v1907
      %2769 = vmatprep.mubr.bf16.mxu0 %v1098
      %2770 = vmatmul.mubr.bf16.gmra.mrb[0].mxu0 %v1097
      %v2771 = vpop.f32.mrb[0].mxu0
      %v2772 = vadd.f32 %v2635, %v2771
      %v2773 = vpop.f32.mrb[0].mxu0
      %v2774 = vpop.f32.mrb[0].mxu0
      %v2775 = vadd.f32 %v2638, %v2774
      %v2776 = vpop.f32.mrb[0].mxu0
      %2777 = vmatprep.mubr.bf16.mxu0 %v1111
      %2778 = vmatmul.mubr.bf16.gmra.mrb[0].mxu0 %v1110
      %v2779 = vpop.f32.mrb[0].mxu0
      %v2780 = vadd.f32 %v2643, %v2779
      %v2781 = vpop.f32.mrb[0].mxu0
      %v2782 = vpop.f32.mrb[0].mxu0
      %v2783 = vadd.f32 %v2646, %v2782
      %v2784 = vpop.f32.mrb[0].mxu0
      %2785 = vmatprep.mubr.bf16.mxu0 %v1124
      %2786 = vmatmul.mubr.bf16.gmra.mrb[0].mxu0 %v1123
      %v2787 = vpop.f32.mrb[0].mxu0
      %v2788 = vadd.f32 %v2651, %v2787
      %v2789 = vpop.f32.mrb[0].mxu0
      %v2790 = vpop.f32.mrb[0].mxu0
      %v2791 = vadd.f32 %v2654, %v2790
      %v2792 = vpop.f32.mrb[0].mxu0
      %2793 = vmatprep.mubr.bf16.mxu0 %v1137
      %2794 = vmatmul.mubr.bf16.gmra.mrb[0].mxu0 %v1136
      %v2795 = vpop.f32.mrb[0].mxu0
      %v2796 = vadd.f32 %v2659, %v2795
      %v2797 = vpop.f32.mrb[0].mxu0
      %v2798 = vpop.f32.mrb[0].mxu0
      %v2799 = vadd.f32 %v2662, %v2798
      %v2800 = vpop.f32.mrb[0].mxu0
      %2801 = vmatprep.mubr.bf16.mxu0 %v1150
      %2802 = vmatmul.mubr.bf16.gmra.mrb[0].mxu0 %v1149
      %v2803 = vpop.f32.mrb[0].mxu0
      %v2804 = vadd.f32 %v2667, %v2803
      %v2805 = vpop.f32.mrb[0].mxu0
      %v2806 = vpop.f32.mrb[0].mxu0
      %v2807 = vadd.f32 %v2670, %v2806
      %v2808 = vpop.f32.mrb[0].mxu0
      %2809 = vmatprep.mubr.bf16.mxu0 %v1163
      %2810 = vmatmul.mubr.bf16.gmra.mrb[0].mxu0 %v1162
      %v2811 = vpop.f32.mrb[0].mxu0
      %v2812 = vadd.f32 %v2675, %v2811
      %v2813 = vpop.f32.mrb[0].mxu0
      %v2814 = vpop.f32.mrb[0].mxu0
      %v2815 = vadd.f32 %v2678, %v2814
      %v2816 = vpop.f32.mrb[0].mxu0
      %2817 = vmatprep.mubr.bf16.mxu0 %v1176
      %2818 = vmatmul.mubr.bf16.gmra.mrb[0].mxu0 %v1175
      %v2819 = vpop.f32.mrb[0].mxu0
      %v2820 = vadd.f32 %v2683, %v2819
      %v2821 = vpop.f32.mrb[0].mxu0
      %v2822 = vpop.f32.mrb[0].mxu0
      %v2823 = vadd.f32 %v2686, %v2822
      %v2824 = vpop.f32.mrb[0].mxu0
      %2825 = vmatprep.mubr.bf16.mxu0 %v1189
      %2826 = vmatmul.mubr.bf16.gmra.mrb[0].mxu0 %v1188
      %v2827 = vpop.f32.mrb[0].mxu0
      %v2828 = vadd.f32 %v2691, %v2827
      %v2829 = vpop.f32.mrb[0].mxu0
      %v2830 = vpop.f32.mrb[0].mxu0
      %v2831 = vadd.f32 %v2694, %v2830
      %v2832 = vpop.f32.mrb[0].mxu0
      %2833 = vmatprep.mubr.bf16.mxu0 %v1202
      %2834 = vmatmul.mubr.bf16.gmra.mrb[0].mxu0 %v1201
      %v2835 = vpop.f32.mrb[0].mxu0
      %v2836 = vadd.f32 %v2699, %v2835
      %v2837 = vpop.f32.mrb[0].mxu0
      %v2838 = vpop.f32.mrb[0].mxu0
      %v2839 = vadd.f32 %v2702, %v2838
      %v2840 = vpop.f32.mrb[0].mxu0
      %2841 = vmatprep.mubr.bf16.mxu0 %v1215
      %2842 = vmatmul.mubr.bf16.gmra.mrb[0].mxu0 %v1214
      %v2843 = vpop.f32.mrb[0].mxu0
      %v2844 = vadd.f32 %v2707, %v2843
      %v2845 = vpop.f32.mrb[0].mxu0
      %v2846 = vpop.f32.mrb[0].mxu0
      %v2847 = vadd.f32 %v2710, %v2846
      %v2848 = vpop.f32.mrb[0].mxu0
      %2849 = vmatprep.mubr.bf16.mxu0 %v1228
      %2850 = vmatmul.mubr.bf16.gmra.mrb[0].mxu0 %v1227
      %v2851 = vpop.f32.mrb[0].mxu0
      %v2852 = vadd.f32 %v2715, %v2851
      %v2853 = vpop.f32.mrb[0].mxu0
      %v2854 = vpop.f32.mrb[0].mxu0
      %v2855 = vadd.f32 %v2718, %v2854
      %v2856 = vpop.f32.mrb[0].mxu0
      %2857 = vmatprep.mubr.bf16.mxu0 %v1241
      %2858 = vmatmul.mubr.bf16.gmra.mrb[0].mxu0 %v1240
      %v2859 = vpop.f32.mrb[0].mxu0
      %v2860 = vadd.f32 %v2723, %v2859
      %v2861 = vpop.f32.mrb[0].mxu0
      %v2862 = vpop.f32.mrb[0].mxu0
      %v2863 = vadd.f32 %v2726, %v2862
      %v2864 = vpop.f32.mrb[0].mxu0
      %2865 = vmatprep.mubr.bf16.mxu0 %v1254
      %2866 = vmatmul.mubr.bf16.gmra.mrb[0].mxu0 %v1253
      %v2867 = vpop.f32.mrb[0].mxu0
      %v2868 = vadd.f32 %v2731, %v2867
      %v2869 = vpop.f32.mrb[0].mxu0
      %v2870 = vpop.f32.mrb[0].mxu0
      %v2871 = vadd.f32 %v2734, %v2870
      %v2872 = vpop.f32.mrb[0].mxu0
      %2873 = vdwg.mxu0
      %2874 = vmatprep.subr.bf16.mxu0 0
      %2875 = vmatpush1.bf16.msra.mxu0 %v1908
      %2876 = vmatprep.subr.bf16.mxu0 0
      %2877 = vmatpush1.bf16.msra.mxu0 %v1909
      %2878 = vmatprep.subr.bf16.mxu0 0
      %2879 = vmatpush1.bf16.msra.mxu0 %v1910
      %2880 = vmatprep.subr.bf16.mxu0 0
      %2881 = vmatpush1.bf16.msra.mxu0 %v1911
      %2882 = vmatprep.subr.bf16.mxu0 0
      %2883 = vmatpush1.bf16.msra.mxu0 0
      %2884 = vmatprep.subr.bf16.mxu0 0
      %2885 = vmatpush1.bf16.msra.mxu0 0
      %2886 = vmatprep.subr.bf16.mxu0 0
      %2887 = vmatpush1.bf16.msra.mxu0 0
      %2888 = vmatprep.subr.bf16.mxu0 0
      %2889 = vmatpush1.bf16.msra.mxu0 0
      %2890 = vmatprep.subr.bf16.mxu0 0
      %2891 = vmatpush1.bf16.msra.mxu0 0
      %2892 = vmatprep.subr.bf16.mxu0 0
      %2893 = vmatpush1.bf16.msra.mxu0 0
      %2894 = vmatprep.subr.bf16.mxu0 0
      %2895 = vmatpush1.bf16.msra.mxu0 0
      %2896 = vmatprep.subr.bf16.mxu0 0
      %2897 = vmatpush1.bf16.msra.mxu0 0
      %2898 = vmatprep.subr.bf16.mxu0 0
      %2899 = vmatpush1.bf16.msra.mxu0 0
      %2900 = vmatprep.subr.bf16.mxu0 0
      %2901 = vmatpush1.bf16.msra.mxu0 0
      %2902 = vmatprep.subr.bf16.mxu0 0
      %2903 = vmatpush1.bf16.msra.mxu0 0
      %2904 = vmatprep.subr.bf16.mxu0 0
      %2905 = vmatpush1.bf16.msra.mxu0 0
      %2906 = vmatprep.mubr.bf16.mxu0 0
      %2907 = vmatmul.mubr.bf16.gmra.mrb[0].mxu0 %v2014
      %v2908 = vpop.f32.mrb[0].mxu0
      %v2909 = vadd.f32 %v2772, %v2908
      %v2910 = vpop.f32.mrb[0].mxu0
      %v2911 = vpop.f32.mrb[0].mxu0
      %v2912 = vadd.f32 %v2775, %v2911
      %v2913 = vpop.f32.mrb[0].mxu0
      %2914 = vmatprep.mubr.bf16.mxu0 0
      %2915 = vmatmul.mubr.bf16.gmra.mrb[0].mxu0 %v2017
      %v2916 = vpop.f32.mrb[0].mxu0
      %v2917 = vadd.f32 %v2780, %v2916
      %v2918 = vpop.f32.mrb[0].mxu0
      %v2919 = vpop.f32.mrb[0].mxu0
      %v2920 = vadd.f32 %v2783, %v2919
      %v2921 = vpop.f32.mrb[0].mxu0
      %2922 = vmatprep.mubr.bf16.mxu0 0
      %2923 = vmatmul.mubr.bf16.gmra.mrb[0].mxu0 %v2020
      %v2924 = vpop.f32.mrb[0].mxu0
      %v2925 = vadd.f32 %v2788, %v2924
      %v2926 = vpop.f32.mrb[0].mxu0
      %v2927 = vpop.f32.mrb[0].mxu0
      %v2928 = vadd.f32 %v2791, %v2927
      %v2929 = vpop.f32.mrb[0].mxu0
      %2930 = vmatprep.mubr.bf16.mxu0 0
      %2931 = vmatmul.mubr.bf16.gmra.mrb[0].mxu0 %v2023
      %v2932 = vpop.f32.mrb[0].mxu0
      %v2933 = vadd.f32 %v2796, %v2932
      %v2934 = vpop.f32.mrb[0].mxu0
      %v2935 = vpop.f32.mrb[0].mxu0
      %v2936 = vadd.f32 %v2799, %v2935
      %v2937 = vpop.f32.mrb[0].mxu0
      %2938 = vmatprep.mubr.bf16.mxu0 0
      %2939 = vmatmul.mubr.bf16.gmra.mrb[0].mxu0 %v2026
      %v2940 = vpop.f32.mrb[0].mxu0
      %v2941 = vadd.f32 %v2804, %v2940
      %v2942 = vpop.f32.mrb[0].mxu0
      %v2943 = vpop.f32.mrb[0].mxu0
      %v2944 = vadd.f32 %v2807, %v2943
      %v2945 = vpop.f32.mrb[0].mxu0
      %2946 = vmatprep.mubr.bf16.mxu0 0
      %2947 = vmatmul.mubr.bf16.gmra.mrb[0].mxu0 %v2029
      %v2948 = vpop.f32.mrb[0].mxu0
      %v2949 = vadd.f32 %v2812, %v2948
      %v2950 = vpop.f32.mrb[0].mxu0
      %v2951 = vpop.f32.mrb[0].mxu0
      %v2952 = vadd.f32 %v2815, %v2951
      %v2953 = vpop.f32.mrb[0].mxu0
      %2954 = vmatprep.mubr.bf16.mxu0 0
      %2955 = vmatmul.mubr.bf16.gmra.mrb[0].mxu0 %v2032
      %v2956 = vpop.f32.mrb[0].mxu0
      %v2957 = vadd.f32 %v2820, %v2956
      %v2958 = vpop.f32.mrb[0].mxu0
      %v2959 = vpop.f32.mrb[0].mxu0
      %v2960 = vadd.f32 %v2823, %v2959
      %v2961 = vpop.f32.mrb[0].mxu0
      %2962 = vmatprep.mubr.bf16.mxu0 0
      %2963 = vmatmul.mubr.bf16.gmra.mrb[0].mxu0 %v2035
      %v2964 = vpop.f32.mrb[0].mxu0
      %v2965 = vadd.f32 %v2828, %v2964
      %v2966 = vpop.f32.mrb[0].mxu0
      %v2967 = vpop.f32.mrb[0].mxu0
      %v2968 = vadd.f32 %v2831, %v2967
      %v2969 = vpop.f32.mrb[0].mxu0
      %2970 = vmatprep.mubr.bf16.mxu0 0
      %2971 = vmatmul.mubr.bf16.gmra.mrb[0].mxu0 %v2038
      %v2972 = vpop.f32.mrb[0].mxu0
      %v2973 = vadd.f32 %v2836, %v2972
      %v2974 = vpop.f32.mrb[0].mxu0
      %v2975 = vpop.f32.mrb[0].mxu0
      %v2976 = vadd.f32 %v2839, %v2975
      %v2977 = vpop.f32.mrb[0].mxu0
      %2978 = vmatprep.mubr.bf16.mxu0 0
      %2979 = vmatmul.mubr.bf16.gmra.mrb[0].mxu0 %v2041
      %v2980 = vpop.f32.mrb[0].mxu0
      %v2981 = vadd.f32 %v2844, %v2980
      %v2982 = vpop.f32.mrb[0].mxu0
      %v2983 = vpop.f32.mrb[0].mxu0
      %v2984 = vadd.f32 %v2847, %v2983
      %v2985 = vpop.f32.mrb[0].mxu0
      %2986 = vmatprep.mubr.bf16.mxu0 0
      %2987 = vmatmul.mubr.bf16.gmra.mrb[0].mxu0 %v2044
      %v2988 = vpop.f32.mrb[0].mxu0
      %v2989 = vadd.f32 %v2852, %v2988
      %v2990 = vpop.f32.mrb[0].mxu0
      %v2991 = vpop.f32.mrb[0].mxu0
      %v2992 = vadd.f32 %v2855, %v2991
      %v2993 = vpop.f32.mrb[0].mxu0
      %2994 = vmatprep.mubr.bf16.mxu0 0
      %2995 = vmatmul.mubr.bf16.gmra.mrb[0].mxu0 %v2047
      %v2996 = vpop.f32.mrb[0].mxu0
      %v2997 = vadd.f32 %v2860, %v2996
      %v2998 = vpop.f32.mrb[0].mxu0
      %v2999 = vpop.f32.mrb[0].mxu0
      %v3000 = vadd.f32 %v2863, %v2999
      %v3001 = vpop.f32.mrb[0].mxu0
      %3002 = vmatprep.mubr.bf16.mxu0 0
      %3003 = vmatmul.mubr.bf16.gmra.mrb[0].mxu0 %v2050
      %v3004 = vpop.f32.mrb[0].mxu0
      %v3005 = vadd.f32 %v2868, %v3004
      %v3006 = vpop.f32.mrb[0].mxu0
      %v3007 = vpop.f32.mrb[0].mxu0
      %v3008 = vadd.f32 %v2871, %v3007
      %v3009 = vpop.f32.mrb[0].mxu0
      %3010 = vdwg.mxu0
      %v3011 = vmul.f32 %v2909, 0.2
      %v3012 = vmul.f32 %v2912, 0.2
      %v3013 = vmul.f32 %v2917, 0.2
      %v3014 = vmul.f32 %v2920, 0.2
      %v3015 = vmul.f32 %v2925, 0.2
      %v3016 = vmul.f32 %v2928, 0.2
      %v3017 = vmul.f32 %v2933, 0.2
      %v3018 = vmul.f32 %v2936, 0.2
      %v3019 = vmul.f32 %v2941, 0.2
      %v3020 = vmul.f32 %v2944, 0.2
      %v3021 = vmul.f32 %v2949, 0.2
      %v3022 = vmul.f32 %v2952, 0.2
      %v3023 = vmul.f32 %v2957, 0.2
      %v3024 = vmul.f32 %v2960, 0.2
      %v3025 = vmul.f32 %v2965, 0.2
      %v3026 = vmul.f32 %v2968, 0.2
      %v3027 = vmul.f32 %v2973, 0.2
      %v3028 = vmul.f32 %v2976, 0.2
      %v3029 = vmul.f32 %v2981, 0.2
      %v3030 = vmul.f32 %v2984, 0.2
      %v3031 = vmul.f32 %v2989, 0.2
      %v3032 = vmul.f32 %v2992, 0.2
      %v3033 = vmul.f32 %v2997, 0.2
      %v3034 = vmul.f32 %v3000, 0.2
      %v3035 = vmul.f32 %v3005, 0.2
      %v3036 = vmul.f32 %v3008, 0.2
      %v3037 = vmax.f32 %v2909, %v3011
      %v3038 = vmax.f32 %v2912, %v3012
      %v3039 = vmax.f32 %v2917, %v3013
      %v3040 = vmax.f32 %v2920, %v3014
      %v3041 = vmax.f32 %v2925, %v3015
      %v3042 = vmax.f32 %v2928, %v3016
      %v3043 = vmax.f32 %v2933, %v3017
      %v3044 = vmax.f32 %v2936, %v3018
      %v3045 = vmax.f32 %v2941, %v3019
      %v3046 = vmax.f32 %v2944, %v3020
      %v3047 = vmax.f32 %v2949, %v3021
      %v3048 = vmax.f32 %v2952, %v3022
      %v3049 = vmax.f32 %v2957, %v3023
      %v3050 = vmax.f32 %v2960, %v3024
      %v3051 = vmax.f32 %v2965, %v3025
      %v3052 = vmax.f32 %v2968, %v3026
      %v3053 = vmax.f32 %v2973, %v3027
      %v3054 = vmax.f32 %v2976, %v3028
      %v3055 = vmax.f32 %v2981, %v3029
      %v3056 = vmax.f32 %v2984, %v3030
      %v3057 = vmax.f32 %v2989, %v3031
      %v3058 = vmax.f32 %v2992, %v3032
      %v3059 = vmax.f32 %v2997, %v3033
      %v3060 = vmax.f32 %v3000, %v3034
      %v3061 = vmax.f32 %v3005, %v3035
      %v3062 = vmax.f32 %v3008, %v3036
      %v3063 = vpack.c.bf16 %v3038, %v3037
      %v3064 = vpack.c.bf16 %v3040, %v3039
      %v3065 = vpack.c.bf16 %v3042, %v3041
      %v3066 = vpack.c.bf16 %v3044, %v3043
      %v3067 = vpack.c.bf16 %v3046, %v3045
      %v3068 = vpack.c.bf16 %v3048, %v3047
      %v3069 = vpack.c.bf16 %v3050, %v3049
      %v3070 = vpack.c.bf16 %v3052, %v3051
      %v3071 = vpack.c.bf16 %v3054, %v3053
      %v3072 = vpack.c.bf16 %v3056, %v3055
      %v3073 = vpack.c.bf16 %v3058, %v3057
      %v3074 = vpack.c.bf16 %v3060, %v3059
      %v3075 = vpack.c.bf16 %v3062, %v3061
      %v3089 = vunpack.c.l.b16 %v3063
      %v3090 = vunpack.c.h.b16 %v3063
      %v3091 = vunpack.c.l.b16 %v3064
      %v3092 = vunpack.c.h.b16 %v3064
      %v3093 = vunpack.c.l.b16 %v3065
      %v3094 = vunpack.c.h.b16 %v3065
      %v3095 = vunpack.c.l.b16 %v3066
      %v3096 = vunpack.c.h.b16 %v3066
      %v3097 = vunpack.c.l.b16 %v3067
      %v3098 = vunpack.c.h.b16 %v3067
      %v3099 = vunpack.c.l.b16 %v3068
      %v3100 = vunpack.c.h.b16 %v3068
      %v3101 = vunpack.c.l.b16 %v3069
      %v3102 = vunpack.c.h.b16 %v3069
      %v3103 = vunpack.c.l.b16 %v3070
      %v3104 = vunpack.c.h.b16 %v3070
      %v3105 = vunpack.c.l.b16 %v3071
      %v3106 = vunpack.c.h.b16 %v3071
      %v3107 = vunpack.c.l.b16 %v3072
      %v3108 = vunpack.c.h.b16 %v3072
      %v3109 = vunpack.c.l.b16 %v3073
      %v3110 = vunpack.c.h.b16 %v3073
      %v3111 = vunpack.c.l.b16 %v3074
      %v3112 = vunpack.c.h.b16 %v3074
      %v3113 = vunpack.c.l.b16 %v3075
      %v3114 = vunpack.c.h.b16 %v3075
      %v3115 = vpack.c.b16 %v3089, %v3089
      %v3116 = vpack.c.b16 %v3090, %v3090
      %v3117 = vpack.c.b16 %v3091, %v3091
      %v3118 = vpack.c.b16 %v3092, %v3092
      %v3119 = vpack.c.b16 %v3093, %v3093
      %v3120 = vpack.c.b16 %v3094, %v3094
      %v3121 = vpack.c.b16 %v3095, %v3095
      %v3122 = vpack.c.b16 %v3096, %v3096
      %v3123 = vpack.c.b16 %v3097, %v3097
      %v3124 = vpack.c.b16 %v3098, %v3098
      %v3125 = vpack.c.b16 %v3099, %v3099
      %v3126 = vpack.c.b16 %v3100, %v3100
      %v3127 = vpack.c.b16 %v3101, %v3101
      %v3128 = vpack.c.b16 %v3102, %v3102
      %v3129 = vpack.c.b16 %v3103, %v3103
      %v3130 = vpack.c.b16 %v3104, %v3104
      %v3131 = vpack.c.b16 %v3105, %v3105
      %v3132 = vpack.c.b16 %v3106, %v3106
      %v3133 = vpack.c.b16 %v3107, %v3107
      %v3134 = vpack.c.b16 %v3108, %v3108
      %v3135 = vpack.c.b16 %v3109, %v3109
      %v3136 = vpack.c.b16 %v3110, %v3110
      %v3137 = vpack.c.b16 %v3111, %v3111
      %v3138 = vpack.c.b16 %v3112, %v3112
      %v3139 = vpack.c.b16 %v3113, %v3113
      %v3140 = vpack.c.b16 %v3114, %v3114
      %3167 = vst [vmem:[%s175] sm:$0xf] %v3115
      %3168 = vst [vmem:[%s175 + $0x4] sm:$0xf] %v3116
      %3169 = vst [vmem:[%s175 + $0x8] sm:$0xf] %v3117
      %3170 = vst [vmem:[%s175 + $0xc] sm:$0xf] %v3118
      %3171 = vst [vmem:[%s175 + $0x10] sm:$0xf] %v3119
      %3172 = vst [vmem:[%s175 + $0x14] sm:$0xf] %v3120
      %3173 = vst [vmem:[%s175 + $0x18] sm:$0xf] %v3121
      %3174 = vst [vmem:[%s175 + $0x1c] sm:$0xf] %v3122
      %3175 = vst [vmem:[%s175 + $0x20] sm:$0xf] %v3123
      %3176 = vst [vmem:[%s175 + $0x24] sm:$0xf] %v3124
      %3177 = vst [vmem:[%s175 + $0x28] sm:$0xf] %v3125
      %3178 = vst [vmem:[%s175 + $0x2c] sm:$0xf] %v3126
      %3179 = vst [vmem:[%s175 + $0x30] sm:$0xf] %v3127
      %3180 = vst [vmem:[%s175 + $0x34] sm:$0xf] %v3128
      %3181 = vst [vmem:[%s175 + $0x38] sm:$0xf] %v3129
      %3182 = vst [vmem:[%s175 + $0x3c] sm:$0xf] %v3130
      %3183 = vst [vmem:[%s175 + $0x40] sm:$0xf] %v3131
      %3184 = vst [vmem:[%s175 + $0x44] sm:$0xf] %v3132
      %3185 = vst [vmem:[%s175 + $0x48] sm:$0xf] %v3133
      %3186 = vst [vmem:[%s175 + $0x4c] sm:$0xf] %v3134
      %3187 = vst [vmem:[%s175 + $0x50] sm:$0xf] %v3135
      %3188 = vst [vmem:[%s175 + $0x54] sm:$0xf] %v3136
      %3189 = vst [vmem:[%s175 + $0x58] sm:$0xf] %v3137
      %3190 = vst [vmem:[%s175 + $0x5c] sm:$0xf] %v3138
      %3191 = vst [vmem:[%s175 + $0x60] sm:$0xf] %v3139
      %3192 = vst [vmem:[%s175 + $0x64] sm:$0xf] %v3140
      %s3193 = smul.u32 26, %s14
      %p3194 = scmp.lt.s32.totalorder %s3193, 103
      %s3195 = scalar_select %p3194, %s3193, 103
      %s3196 = smul.addr %s3195, 4
      %s3197 = scalar_lea.vmem %s3, %s3196
      // Predicated region
      $region33: #{discriminator_forward.6} parent=31 // pred_check
        %p3198 = pneg %p100
      $region34: #{discriminator_forward.6} parent=31 // pred_check_branch
        %3200 = sbr.rel (%p3198) target = $region36
      $region35: #{discriminator_forward.6} parent=31 // pred_region
        %s3201 = smul.u32 26, %s14
      $region36: #{discriminator_forward.6} parent=31 // pred_fallthru
        _
    $region32: #{discriminator_forward.6} parent=5 // pred_fallthru
      _
    %p3202 = scmp.le.s32.totalorder 2, %s9
    // Predicated region
    $region37: #{discriminator_forward.6} parent=5 // pred_check
      %p3203 = pneg %p3202
    $region38: #{discriminator_forward.6} parent=5 // pred_check_branch
      %3205 = sbr.rel (%p3203) target = $region40
    $region39: #{discriminator_forward.6} parent=5 // pred_region
      %s3206 = ssub.s32 %s9, 2
      // Predicated region
      $region41: #{discriminator_forward.6} parent=39 // pred_check
        %p3207 = pneg %p106
      $region42: #{discriminator_forward.6} parent=39 // pred_check_branch
        %3209 = sbr.rel (%p3207) target = $region44
      $region43: #{discriminator_forward.6} parent=39 // pred_region
        %s3210 = smul.u32 26, %s15
        %p3211 = scmp.lt.s32.totalorder %s3210, 103
        %s3212 = scalar_select %p3211, %s3210, 103
        %s3213 = smul.addr %s3212, 4
        %s3214 = scalar_lea.vmem %s3, %s3213
      $region44: #{discriminator_forward.6} parent=39 // pred_fallthru
        _
    $region40: #{discriminator_forward.6} parent=5 // pred_fallthru
      _
  $region6: #{discriminator_forward.6} parent=0 // loop_footer
    %s13 = sadd.s32 1, %s9
  $region7: #{discriminator_forward.6} parent=0 // loop_footer_branch
    %8 = sbr.rel target = $region3
  $region8: #{discriminator_forward.6} parent=0 // loop_exit
    _

// kernel: discriminator_forward.7
$region0: #{discriminator_forward.7}
  #allocation0 [shape = 'u32[]', space=smem, size = 0x4, offset = 0x4, fixed_abs, tag = 'smem constant byte address 0x4 - core index']
  #allocation1 [shape = 'u32[144,128]{1,0:T(1,128)}', space=vmem, size = 0x12000, scoped, tag = 'internal scratch']
  %s0 = inlined_call_operand.vmem [shape: bf16[448,1600], index: 0, kind: input, shape index: {}]
  %s1 = inlined_call_operand.vmem [shape: bf16[1600,128], index: 1, kind: input, shape index: {}]
  %s2 = inlined_call_operand.vmem [shape: f32[1,128], index: 2, kind: input, shape index: {}]
  %s3 = inlined_call_operand.vmem [shape: bf16[448,128], index: 3, kind: output, shape index: {}]
  %s4 = sld [smem:[#allocation0]]
  $region45: #{discriminator_forward.7} parent=0
    _
  %s6 = ssub.s32 1, %s4
  %s7 = scalar_select 0, %s6, %s4
  loop: start=0, step=1, limit=6
  $region2: #{discriminator_forward.7} parent=0 // loop_pre_header
    _
  $region3: #{discriminator_forward.7} parent=0 // loop_header
    %s9 = sphi 0, %s13
    %p10 = scmp.ge.s32.totalorder %s9, 6
    %s19 = sphi 0, %s21
    %s22 = sphi 0, %s19
    %s23 = sphi 0, %s22
    %s39 = sphi 0, %s23
    %s43 = sphi 0, %s43
    %s45 = sphi 0, %s43
    %s46 = sphi 0, %s45
    %s60 = sphi 0, %s46
    %s64 = sphi 0, %s64
    %s66 = sphi 0, %s64
    %s67 = sphi 0, %s66
    %s81 = sphi 0, %s67
    %s87 = sphi 0, %s89
    %s90 = sphi 0, %s87
    %s91 = sphi 0, %s90
    %s107 = sphi 0, %s91
  $region4: #{discriminator_forward.7} parent=0 // loop_header_branch
    %12 = sbr.rel (%p10) target = $region8
  $region5: #{discriminator_forward.7} parent=0 // loop_body
    %s14 = ssub.s32 %s9, 1
    %s15 = ssub.s32 %s9, 2
    %s16 = sadd.s32 %s9, 1
    %s17 = ssub.s32 %s9, %s16
    %p18 = scmp.eq.s32.totalorder %s17, 0
    %s20 = sadd.s32 %s19, 1
    %s21 = scalar_select %p18, %s19, %s20
    %p24 = pneg %p18
    %p25 = scmp.eq.s32.totalorder %s9, 3
    %p26 = por %p24, %p25
    %p27 = scmp.ne.s32.totalorder %s19, %s22
    %p28 = scmp.eq.s32.totalorder %s9, 0
    %p29 = por %p27, %p28
    %p30 = scmp.ne.s32.totalorder %s19, %s22
    %p31 = scmp.eq.s32.totalorder %s14, 3
    %p32 = por %p30, %p31
    %p33 = scmp.ne.s32.totalorder %s22, %s23
    %p34 = scmp.eq.s32.totalorder %s14, 0
    %p35 = por %p33, %p34
    %p36 = scmp.ne.s32.totalorder %s22, %s23
    %p37 = scmp.eq.s32.totalorder %s15, 3
    %p38 = por %p36, %p37
    %p40 = scmp.ne.s32.totalorder %s23, %s39
    %p41 = scmp.eq.s32.totalorder %s15, 0
    %p42 = por %p40, %p41
    %s44 = sadd.s32 %s43, 1
    %p47 = scmp.eq.s32.totalorder %s9, 3
    %p48 = scmp.ne.s32.totalorder %s43, %s45
    %p49 = scmp.eq.s32.totalorder %s9, 0
    %p50 = por %p48, %p49
    %p51 = scmp.ne.s32.totalorder %s43, %s45
    %p52 = scmp.eq.s32.totalorder %s14, 3
    %p53 = por %p51, %p52
    %p54 = scmp.ne.s32.totalorder %s45, %s46
    %p55 = scmp.eq.s32.totalorder %s14, 0
    %p56 = por %p54, %p55
    %p57 = scmp.ne.s32.totalorder %s45, %s46
    %p58 = scmp.eq.s32.totalorder %s15, 3
    %p59 = por %p57, %p58
    %p61 = scmp.ne.s32.totalorder %s46, %s60
    %p62 = scmp.eq.s32.totalorder %s15, 0
    %p63 = por %p61, %p62
    %s65 = sadd.s32 %s64, 1
    %p68 = scmp.eq.s32.totalorder %s9, 3
    %p69 = scmp.ne.s32.totalorder %s64, %s66
    %p70 = scmp.eq.s32.totalorder %s9, 0
    %p71 = por %p69, %p70
    %p72 = scmp.ne.s32.totalorder %s64, %s66
    %p73 = scmp.eq.s32.totalorder %s14, 3
    %p74 = por %p72, %p73
    %p75 = scmp.ne.s32.totalorder %s66, %s67
    %p76 = scmp.eq.s32.totalorder %s14, 0
    %p77 = por %p75, %p76
    %p78 = scmp.ne.s32.totalorder %s66, %s67
    %p79 = scmp.eq.s32.totalorder %s15, 3
    %p80 = por %p78, %p79
    %p82 = scmp.ne.s32.totalorder %s67, %s81
    %p83 = scmp.eq.s32.totalorder %s15, 0
    %p84 = por %p82, %p83
    %s85 = ssub.s32 %s9, %s16
    %p86 = scmp.eq.s32.totalorder %s85, 0
    %s88 = sadd.s32 %s87, 1
    %s89 = scalar_select %p86, %s87, %s88
    %p92 = pneg %p86
    %p93 = scmp.eq.s32.totalorder %s9, 3
    %p94 = por %p92, %p93
    %p95 = scmp.ne.s32.totalorder %s87, %s90
    %p96 = scmp.eq.s32.totalorder %s9, 0
    %p97 = por %p95, %p96
    %p98 = scmp.ne.s32.totalorder %s87, %s90
    %p99 = scmp.eq.s32.totalorder %s14, 3
    %p100 = por %p98, %p99
    %p101 = scmp.ne.s32.totalorder %s90, %s91
    %p102 = scmp.eq.s32.totalorder %s14, 0
    %p103 = por %p101, %p102
    %p104 = scmp.ne.s32.totalorder %s90, %s91
    %p105 = scmp.eq.s32.totalorder %s15, 3
    %p106 = por %p104, %p105
    %p108 = scmp.ne.s32.totalorder %s91, %s107
    %p109 = scmp.eq.s32.totalorder %s15, 0
    %p110 = por %p108, %p109
    %p111 = scmp.le.s32.totalorder 1, %s9
    %p112 = scmp.lt.s32.totalorder %s9, 5
    %p113 = pnand %p111, %p112
    %p114 = pneg %p113
    // Predicated region
    $region9: #{discriminator_forward.7} parent=5 // pred_check
      _
    $region10: #{discriminator_forward.7} parent=5 // pred_check_branch
      %116 = sbr.rel (%p113) target = $region12
    $region11: #{discriminator_forward.7} parent=5 // pred_region
      %s117 = ssub.s32 %s9, 1
      // Predicated region
      $region13: #{discriminator_forward.7} parent=11 // pred_check
        %p118 = pneg %p56
      $region14: #{discriminator_forward.7} parent=11 // pred_check_branch
        %120 = sbr.rel (%p118) target = $region16
      $region15: #{discriminator_forward.7} parent=11 // pred_region
        _
      $region16: #{discriminator_forward.7} parent=11 // pred_fallthru
        _
      // Predicated region
      $region17: #{discriminator_forward.7} parent=11 // pred_check
        %p121 = pneg %p77
      $region18: #{discriminator_forward.7} parent=11 // pred_check_branch
        %123 = sbr.rel (%p121) target = $region20
      $region19: #{discriminator_forward.7} parent=11 // pred_region
        _
      $region20: #{discriminator_forward.7} parent=11 // pred_fallthru
        _
    $region12: #{discriminator_forward.7} parent=5 // pred_fallthru
      _
    %p124 = scmp.lt.s32.totalorder %s9, 4
    // Predicated region
    $region21: #{discriminator_forward.7} parent=5 // pred_check
      %p125 = pneg %p124
    $region22: #{discriminator_forward.7} parent=5 // pred_check_branch
      %127 = sbr.rel (%p125) target = $region24
    $region23: #{discriminator_forward.7} parent=5 // pred_region
      // Predicated region
      $region25: #{discriminator_forward.7} parent=23 // pred_check
        %p128 = pneg %p29
      $region26: #{discriminator_forward.7} parent=23 // pred_check_branch
        %130 = sbr.rel (%p128) target = $region28
      $region27: #{discriminator_forward.7} parent=23 // pred_region
        %s131 = smul.u32 14, %s9
        %p132 = scmp.lt.s32.totalorder %s131, 55
        %s133 = scalar_select %p132, %s131, 55
        %s134 = smul.addr %s133, 13
        %s135 = smul.addr %s134, 4
        %s136 = scalar_lea.vmem %s0, %s135
        %s137 = smul.u32 14, %s9
      $region28: #{discriminator_forward.7} parent=23 // pred_fallthru
        _
    $region24: #{discriminator_forward.7} parent=5 // pred_fallthru
      _
    %p138 = scmp.le.s32.totalorder 1, %s9
    %p139 = scmp.lt.s32.totalorder %s9, 5
    %p140 = pnand %p138, %p139
    %p141 = pneg %p140
    // Predicated region
    $region29: #{discriminator_forward.7} parent=5 // pred_check
      _
    $region30: #{discriminator_forward.7} parent=5 // pred_check_branch
      %143 = sbr.rel (%p140) target = $region32
    $region31: #{discriminator_forward.7} parent=5 // pred_region
      %s144 = ssub.s32 %s9, 1
      %s145 = smul.u32 14, %s14
      %p146 = scmp.lt.s32.totalorder %s145, 55
      %s147 = scalar_select %p146, %s145, 55
      %s148 = smul.addr %s147, 13
      %s149 = smul.addr %s148, 4
      %s150 = scalar_lea.vmem %s0, %s149
      %p151 = pneg %p35
      %p152 = pneg %p32
      %p153 = pneg %p56
      %p154 = pneg %p53
      %p155 = pneg %p77
      %p156 = pneg %p74
      %p157 = pneg %p103
      %p158 = pneg %p100
      %s159 = smul.u32 14, %s14
      %p160 = scmp.lt.s32.totalorder %s159, 55
      %s161 = scalar_select %p160, %s159, 55
      %s162 = smul.addr %s161, 4
      %s163 = scalar_lea.vmem %s3, %s162
      %s164 = smul.u32 14, %s14
      %p165 = scmp.lt.s32.totalorder %s164, 55
      %s166 = scalar_select %p165, %s164, 55
      %s167 = smul.addr %s166, 13
      %s168 = smul.addr %s167, 4
      %s169 = scalar_lea.vmem %s0, %s168
      %s170 = smul.u32 14, %s14
      %s171 = smul.u32 14, %s14
      %p172 = scmp.lt.s32.totalorder %s171, 55
      %s173 = scalar_select %p172, %s171, 55
      %s174 = smul.addr %s173, 4
      %s175 = scalar_lea.vmem %s3, %s174
      %s176 = smul.u32 14, %s14
      %v178 = vld [vmem:[%s169] sm:$0xff]
      %v179 = vld [vmem:[%s169 + $0x8] sm:$0xff]
      %v180 = vld [vmem:[%s169 + $0x10] sm:$0xff]
      %v181 = vld [vmem:[%s169 + $0x18] sm:$0xff]
      %v182 = vld [vmem:[%s169 + $0x20] sm:$0xff]
      %v183 = vld [vmem:[%s169 + $0x28] sm:$0xff]
      %v184 = vld [vmem:[%s169 + $0x30] sm:$0xf]
      %v185 = vld [vmem:[%s169 + $0x34] sm:$0xff]
      %v186 = vld [vmem:[%s169 + $0x3c] sm:$0xff]
      %v187 = vld [vmem:[%s169 + $0x44] sm:$0xff]
      %v188 = vld [vmem:[%s169 + $0x4c] sm:$0xff]
      %v189 = vld [vmem:[%s169 + $0x54] sm:$0xff]
      %v190 = vld [vmem:[%s169 + $0x5c] sm:$0xff]
      %v191 = vld [vmem:[%s169 + $0x64] sm:$0xf]
      %v192 = vld [vmem:[%s169 + $0x68] sm:$0xff]
      %v193 = vld [vmem:[%s169 + $0x70] sm:$0xff]
      %v194 = vld [vmem:[%s169 + $0x78] sm:$0xff]
      %v195 = vld [vmem:[%s169 + $0x80] sm:$0xff]
      %v196 = vld [vmem:[%s169 + $0x88] sm:$0xff]
      %v197 = vld [vmem:[%s169 + $0x90] sm:$0xff]
      %v198 = vld [vmem:[%s169 + $0x98] sm:$0xf]
      %v199 = vld [vmem:[%s169 + $0x9c] sm:$0xff]
      %v200 = vld [vmem:[%s169 + $0xa4] sm:$0xff]
      %v201 = vld [vmem:[%s169 + $0xac] sm:$0xff]
      %v202 = vld [vmem:[%s169 + $0xb4] sm:$0xff]
      %v203 = vld [vmem:[%s169 + $0xbc] sm:$0xff]
      %v204 = vld [vmem:[%s169 + $0xc4] sm:$0xff]
      %v205 = vld [vmem:[%s169 + $0xcc] sm:$0xf]
      %v206 = vld [vmem:[%s169 + $0xd0] sm:$0xff]
      %v207 = vld [vmem:[%s169 + $0xd8] sm:$0xff]
      %v208 = vld [vmem:[%s169 + $0xe0] sm:$0xff]
      %v209 = vld [vmem:[%s169 + $0xe8] sm:$0xff]
      %v210 = vld [vmem:[%s169 + $0xf0] sm:$0xff]
      %v211 = vld [vmem:[%s169 + $0xf8] sm:$0xff]
      %v212 = vld [vmem:[%s169 + $0x100] sm:$0xf]
      %v213 = vld [vmem:[%s169 + $0x104] sm:$0xff]
      %v214 = vld [vmem:[%s169 + $0x10c] sm:$0xff]
      %v215 = vld [vmem:[%s169 + $0x114] sm:$0xff]
      %v216 = vld [vmem:[%s169 + $0x11c] sm:$0xff]
      %v217 = vld [vmem:[%s169 + $0x124] sm:$0xff]
      %v218 = vld [vmem:[%s169 + $0x12c] sm:$0xff]
      %v219 = vld [vmem:[%s169 + $0x134] sm:$0xf]
      %v220 = vld [vmem:[%s169 + $0x138] sm:$0xff]
      %v221 = vld [vmem:[%s169 + $0x140] sm:$0xff]
      %v222 = vld [vmem:[%s169 + $0x148] sm:$0xff]
      %v223 = vld [vmem:[%s169 + $0x150] sm:$0xff]
      %v224 = vld [vmem:[%s169 + $0x158] sm:$0xff]
      %v225 = vld [vmem:[%s169 + $0x160] sm:$0xff]
      %v226 = vld [vmem:[%s169 + $0x168] sm:$0xf]
      %v227 = vld [vmem:[%s169 + $0x16c] sm:$0xff]
      %v228 = vld [vmem:[%s169 + $0x174] sm:$0xff]
      %v229 = vld [vmem:[%s169 + $0x17c] sm:$0xff]
      %v230 = vld [vmem:[%s169 + $0x184] sm:$0xff]
      %v231 = vld [vmem:[%s169 + $0x18c] sm:$0xff]
      %v232 = vld [vmem:[%s169 + $0x194] sm:$0xff]
      %v233 = vld [vmem:[%s169 + $0x19c] sm:$0xf]
      %v234 = vld [vmem:[%s169 + $0x1a0] sm:$0xff]
      %v235 = vld [vmem:[%s169 + $0x1a8] sm:$0xff]
      %v236 = vld [vmem:[%s169 + $0x1b0] sm:$0xff]
      %v237 = vld [vmem:[%s169 + $0x1b8] sm:$0xff]
      %v238 = vld [vmem:[%s169 + $0x1c0] sm:$0xff]
      %v239 = vld [vmem:[%s169 + $0x1c8] sm:$0xff]
      %v240 = vld [vmem:[%s169 + $0x1d0] sm:$0xf]
      %v241 = vld [vmem:[%s169 + $0x1d4] sm:$0xff]
      %v242 = vld [vmem:[%s169 + $0x1dc] sm:$0xff]
      %v243 = vld [vmem:[%s169 + $0x1e4] sm:$0xff]
      %v244 = vld [vmem:[%s169 + $0x1ec] sm:$0xff]
      %v245 = vld [vmem:[%s169 + $0x1f4] sm:$0xff]
      %v246 = vld [vmem:[%s169 + $0x1fc] sm:$0xff]
      %v247 = vld [vmem:[%s169 + $0x204] sm:$0xf]
      %v248 = vld [vmem:[%s169 + $0x208] sm:$0xff]
      %v249 = vld [vmem:[%s169 + $0x210] sm:$0xff]
      %v250 = vld [vmem:[%s169 + $0x218] sm:$0xff]
      %v251 = vld [vmem:[%s169 + $0x220] sm:$0xff]
      %v252 = vld [vmem:[%s169 + $0x228] sm:$0xff]
      %v253 = vld [vmem:[%s169 + $0x230] sm:$0xff]
      %v254 = vld [vmem:[%s169 + $0x238] sm:$0xf]
      %v255 = vld [vmem:[%s169 + $0x23c] sm:$0xff]
      %v256 = vld [vmem:[%s169 + $0x244] sm:$0xff]
      %v257 = vld [vmem:[%s169 + $0x24c] sm:$0xff]
      %v258 = vld [vmem:[%s169 + $0x254] sm:$0xff]
      %v259 = vld [vmem:[%s169 + $0x25c] sm:$0xff]
      %v260 = vld [vmem:[%s169 + $0x264] sm:$0xff]
      %v261 = vld [vmem:[%s169 + $0x26c] sm:$0xf]
      %v262 = vld [vmem:[%s169 + $0x270] sm:$0xff]
      %v263 = vld [vmem:[%s169 + $0x278] sm:$0xff]
      %v264 = vld [vmem:[%s169 + $0x280] sm:$0xff]
      %v265 = vld [vmem:[%s169 + $0x288] sm:$0xff]
      %v266 = vld [vmem:[%s169 + $0x290] sm:$0xff]
      %v267 = vld [vmem:[%s169 + $0x298] sm:$0xff]
      %v268 = vld [vmem:[%s169 + $0x2a0] sm:$0xf]
      %v269 = vld [vmem:[%s169 + $0x2a4] sm:$0xff]
      %v270 = vld [vmem:[%s169 + $0x2ac] sm:$0xff]
      %v271 = vld [vmem:[%s169 + $0x2b4] sm:$0xff]
      %v272 = vld [vmem:[%s169 + $0x2bc] sm:$0xff]
      %v273 = vld [vmem:[%s169 + $0x2c4] sm:$0xff]
      %v274 = vld [vmem:[%s169 + $0x2cc] sm:$0xff]
      %v275 = vld [vmem:[%s169 + $0x2d4] sm:$0xf]
      %v276 = vld [vmem:[%s1] sm:$0xf]
      %v277 = vld [vmem:[%s1 + $0x4] sm:$0xf]
      %v278 = vld [vmem:[%s1 + $0x8] sm:$0xf]
      %v279 = vld [vmem:[%s1 + $0xc] sm:$0xf]
      %v280 = vld [vmem:[%s1 + $0x10] sm:$0xf]
      %v281 = vld [vmem:[%s1 + $0x14] sm:$0xf]
      %v282 = vld [vmem:[%s1 + $0x18] sm:$0xf]
      %v283 = vld [vmem:[%s1 + $0x1c] sm:$0xf]
      %v284 = vld [vmem:[%s1 + $0x20] sm:$0xf]
      %v285 = vld [vmem:[%s1 + $0x24] sm:$0xf]
      %v286 = vld [vmem:[%s1 + $0x28] sm:$0xf]
      %v287 = vld [vmem:[%s1 + $0x2c] sm:$0xf]
      %v288 = vld [vmem:[%s1 + $0x30] sm:$0xf]
      %v289 = vld [vmem:[%s1 + $0x34] sm:$0xf]
      %v290 = vld [vmem:[%s1 + $0x38] sm:$0xf]
      %v291 = vld [vmem:[%s1 + $0x3c] sm:$0xf]
      %v292 = vld [vmem:[%s1 + $0x40] sm:$0xf]
      %v293 = vld [vmem:[%s1 + $0x44] sm:$0xf]
      %v294 = vld [vmem:[%s1 + $0x48] sm:$0xf]
      %v295 = vld [vmem:[%s1 + $0x4c] sm:$0xf]
      %v296 = vld [vmem:[%s1 + $0x50] sm:$0xf]
      %v297 = vld [vmem:[%s1 + $0x54] sm:$0xf]
      %v298 = vld [vmem:[%s1 + $0x58] sm:$0xf]
      %v299 = vld [vmem:[%s1 + $0x5c] sm:$0xf]
      %v300 = vld [vmem:[%s1 + $0x60] sm:$0xf]
      %v301 = vld [vmem:[%s1 + $0x64] sm:$0xf]
      %v302 = vld [vmem:[%s1 + $0x68] sm:$0xf]
      %v303 = vld [vmem:[%s1 + $0x6c] sm:$0xf]
      %v304 = vld [vmem:[%s1 + $0x70] sm:$0xf]
      %v305 = vld [vmem:[%s1 + $0x74] sm:$0xf]
      %v306 = vld [vmem:[%s1 + $0x78] sm:$0xf]
      %v307 = vld [vmem:[%s1 + $0x7c] sm:$0xf]
      %v308 = vld [vmem:[%s1 + $0x80] sm:$0xf]
      %v309 = vld [vmem:[%s1 + $0x84] sm:$0xf]
      %v310 = vld [vmem:[%s1 + $0x88] sm:$0xf]
      %v311 = vld [vmem:[%s1 + $0x8c] sm:$0xf]
      %v312 = vld [vmem:[%s1 + $0x90] sm:$0xf]
      %v313 = vld [vmem:[%s1 + $0x94] sm:$0xf]
      %v314 = vld [vmem:[%s1 + $0x98] sm:$0xf]
      %v315 = vld [vmem:[%s1 + $0x9c] sm:$0xf]
      %v316 = vld [vmem:[%s1 + $0xa0] sm:$0xf]
      %v317 = vld [vmem:[%s1 + $0xa4] sm:$0xf]
      %v318 = vld [vmem:[%s1 + $0xa8] sm:$0xf]
      %v319 = vld [vmem:[%s1 + $0xac] sm:$0xf]
      %v320 = vld [vmem:[%s1 + $0xb0] sm:$0xf]
      %v321 = vld [vmem:[%s1 + $0xb4] sm:$0xf]
      %v322 = vld [vmem:[%s1 + $0xb8] sm:$0xf]
      %v323 = vld [vmem:[%s1 + $0xbc] sm:$0xf]
      %v324 = vld [vmem:[%s1 + $0xc0] sm:$0xf]
      %v325 = vld [vmem:[%s1 + $0xc4] sm:$0xf]
      %v326 = vld [vmem:[%s1 + $0xc8] sm:$0xf]
      %v327 = vld [vmem:[%s1 + $0xcc] sm:$0xf]
      %v328 = vld [vmem:[%s1 + $0xd0] sm:$0xf]
      %v329 = vld [vmem:[%s1 + $0xd4] sm:$0xf]
      %v330 = vld [vmem:[%s1 + $0xd8] sm:$0xf]
      %v331 = vld [vmem:[%s1 + $0xdc] sm:$0xf]
      %v332 = vld [vmem:[%s1 + $0xe0] sm:$0xf]
      %v333 = vld [vmem:[%s1 + $0xe4] sm:$0xf]
      %v334 = vld [vmem:[%s1 + $0xe8] sm:$0xf]
      %v335 = vld [vmem:[%s1 + $0xec] sm:$0xf]
      %v336 = vld [vmem:[%s1 + $0xf0] sm:$0xf]
      %v337 = vld [vmem:[%s1 + $0xf4] sm:$0xf]
      %v338 = vld [vmem:[%s1 + $0xf8] sm:$0xf]
      %v339 = vld [vmem:[%s1 + $0xfc] sm:$0xf]
      %v340 = vld [vmem:[%s1 + $0x100] sm:$0xf]
      %v341 = vld [vmem:[%s1 + $0x104] sm:$0xf]
      %v342 = vld [vmem:[%s1 + $0x108] sm:$0xf]
      %v343 = vld [vmem:[%s1 + $0x10c] sm:$0xf]
      %v344 = vld [vmem:[%s1 + $0x110] sm:$0xf]
      %v345 = vld [vmem:[%s1 + $0x114] sm:$0xf]
      %v346 = vld [vmem:[%s1 + $0x118] sm:$0xf]
      %v347 = vld [vmem:[%s1 + $0x11c] sm:$0xf]
      %v348 = vld [vmem:[%s1 + $0x120] sm:$0xf]
      %v349 = vld [vmem:[%s1 + $0x124] sm:$0xf]
      %v350 = vld [vmem:[%s1 + $0x128] sm:$0xf]
      %v351 = vld [vmem:[%s1 + $0x12c] sm:$0xf]
      %v352 = vld [vmem:[%s1 + $0x130] sm:$0xf]
      %v353 = vld [vmem:[%s1 + $0x134] sm:$0xf]
      %v354 = vld [vmem:[%s1 + $0x138] sm:$0xf]
      %v355 = vld [vmem:[%s1 + $0x13c] sm:$0xf]
      %v356 = vld [vmem:[%s1 + $0x140] sm:$0xf]
      %v357 = vld [vmem:[%s1 + $0x144] sm:$0xf]
      %v358 = vld [vmem:[%s1 + $0x148] sm:$0xf]
      %v359 = vld [vmem:[%s1 + $0x14c] sm:$0xf]
      %v360 = vld [vmem:[%s1 + $0x150] sm:$0xf]
      %v361 = vld [vmem:[%s1 + $0x154] sm:$0xf]
      %v362 = vld [vmem:[%s1 + $0x158] sm:$0xf]
      %v363 = vld [vmem:[%s1 + $0x15c] sm:$0xf]
      %v364 = vld [vmem:[%s1 + $0x160] sm:$0xf]
      %v365 = vld [vmem:[%s1 + $0x164] sm:$0xf]
      %v366 = vld [vmem:[%s1 + $0x168] sm:$0xf]
      %v367 = vld [vmem:[%s1 + $0x16c] sm:$0xf]
      %v368 = vld [vmem:[%s1 + $0x170] sm:$0xf]
      %v369 = vld [vmem:[%s1 + $0x174] sm:$0xf]
      %v370 = vld [vmem:[%s1 + $0x178] sm:$0xf]
      %v371 = vld [vmem:[%s1 + $0x17c] sm:$0xf]
      %v372 = vld [vmem:[%s1 + $0x180] sm:$0xf]
      %v373 = vld [vmem:[%s1 + $0x184] sm:$0xf]
      %v374 = vld [vmem:[%s1 + $0x188] sm:$0xf]
      %v375 = vld [vmem:[%s1 + $0x18c] sm:$0xf]
      %v376 = vld [vmem:[%s1 + $0x190] sm:$0xf]
      %v377 = vld [vmem:[%s1 + $0x194] sm:$0xf]
      %v378 = vld [vmem:[%s1 + $0x198] sm:$0xf]
      %v379 = vld [vmem:[%s1 + $0x19c] sm:$0xf]
      %v380 = vld [vmem:[%s1 + $0x1a0] sm:$0xf]
      %v381 = vld [vmem:[%s1 + $0x1a4] sm:$0xf]
      %v382 = vld [vmem:[%s1 + $0x1a8] sm:$0xf]
      %v383 = vld [vmem:[%s1 + $0x1ac] sm:$0xf]
      %v384 = vld [vmem:[%s1 + $0x1b0] sm:$0xf]
      %v385 = vld [vmem:[%s1 + $0x1b4] sm:$0xf]
      %v386 = vld [vmem:[%s1 + $0x1b8] sm:$0xf]
      %v387 = vld [vmem:[%s1 + $0x1bc] sm:$0xf]
      %v388 = vld [vmem:[%s1 + $0x1c0] sm:$0xf]
      %v389 = vld [vmem:[%s1 + $0x1c4] sm:$0xf]
      %v390 = vld [vmem:[%s1 + $0x1c8] sm:$0xf]
      %v391 = vld [vmem:[%s1 + $0x1cc] sm:$0xf]
      %v392 = vld [vmem:[%s1 + $0x1d0] sm:$0xf]
      %v393 = vld [vmem:[%s1 + $0x1d4] sm:$0xf]
      %v394 = vld [vmem:[%s1 + $0x1d8] sm:$0xf]
      %v395 = vld [vmem:[%s1 + $0x1dc] sm:$0xf]
      %v396 = vld [vmem:[%s1 + $0x1e0] sm:$0xf]
      %v397 = vld [vmem:[%s1 + $0x1e4] sm:$0xf]
      %v398 = vld [vmem:[%s1 + $0x1e8] sm:$0xf]
      %v399 = vld [vmem:[%s1 + $0x1ec] sm:$0xf]
      %v400 = vld [vmem:[%s1 + $0x1f0] sm:$0xf]
      %v401 = vld [vmem:[%s1 + $0x1f4] sm:$0xf]
      %v402 = vld [vmem:[%s1 + $0x1f8] sm:$0xf]
      %v403 = vld [vmem:[%s1 + $0x1fc] sm:$0xf]
      %v404 = vld [vmem:[%s1 + $0x200] sm:$0xf]
      %v405 = vld [vmem:[%s1 + $0x204] sm:$0xf]
      %v406 = vld [vmem:[%s1 + $0x208] sm:$0xf]
      %v407 = vld [vmem:[%s1 + $0x20c] sm:$0xf]
      %v408 = vld [vmem:[%s1 + $0x210] sm:$0xf]
      %v409 = vld [vmem:[%s1 + $0x214] sm:$0xf]
      %v410 = vld [vmem:[%s1 + $0x218] sm:$0xf]
      %v411 = vld [vmem:[%s1 + $0x21c] sm:$0xf]
      %v412 = vld [vmem:[%s1 + $0x220] sm:$0xf]
      %v413 = vld [vmem:[%s1 + $0x224] sm:$0xf]
      %v414 = vld [vmem:[%s1 + $0x228] sm:$0xf]
      %v415 = vld [vmem:[%s1 + $0x22c] sm:$0xf]
      %v416 = vld [vmem:[%s1 + $0x230] sm:$0xf]
      %v417 = vld [vmem:[%s1 + $0x234] sm:$0xf]
      %v418 = vld [vmem:[%s1 + $0x238] sm:$0xf]
      %v419 = vld [vmem:[%s1 + $0x23c] sm:$0xf]
      %v420 = vld [vmem:[%s1 + $0x240] sm:$0xf]
      %v421 = vld [vmem:[%s1 + $0x244] sm:$0xf]
      %v422 = vld [vmem:[%s1 + $0x248] sm:$0xf]
      %v423 = vld [vmem:[%s1 + $0x24c] sm:$0xf]
      %v424 = vld [vmem:[%s1 + $0x250] sm:$0xf]
      %v425 = vld [vmem:[%s1 + $0x254] sm:$0xf]
      %v426 = vld [vmem:[%s1 + $0x258] sm:$0xf]
      %v427 = vld [vmem:[%s1 + $0x25c] sm:$0xf]
      %v428 = vld [vmem:[%s1 + $0x260] sm:$0xf]
      %v429 = vld [vmem:[%s1 + $0x264] sm:$0xf]
      %v430 = vld [vmem:[%s1 + $0x268] sm:$0xf]
      %v431 = vld [vmem:[%s1 + $0x26c] sm:$0xf]
      %v432 = vld [vmem:[%s1 + $0x270] sm:$0xf]
      %v433 = vld [vmem:[%s1 + $0x274] sm:$0xf]
      %v434 = vld [vmem:[%s1 + $0x278] sm:$0xf]
      %v435 = vld [vmem:[%s1 + $0x27c] sm:$0xf]
      %v436 = vld [vmem:[%s1 + $0x280] sm:$0xf]
      %v437 = vld [vmem:[%s1 + $0x284] sm:$0xf]
      %v438 = vld [vmem:[%s1 + $0x288] sm:$0xf]
      %v439 = vld [vmem:[%s1 + $0x28c] sm:$0xf]
      %v440 = vld [vmem:[%s1 + $0x290] sm:$0xf]
      %v441 = vld [vmem:[%s1 + $0x294] sm:$0xf]
      %v442 = vld [vmem:[%s1 + $0x298] sm:$0xf]
      %v443 = vld [vmem:[%s1 + $0x29c] sm:$0xf]
      %v444 = vld [vmem:[%s1 + $0x2a0] sm:$0xf]
      %v445 = vld [vmem:[%s1 + $0x2a4] sm:$0xf]
      %v446 = vld [vmem:[%s1 + $0x2a8] sm:$0xf]
      %v447 = vld [vmem:[%s1 + $0x2ac] sm:$0xf]
      %v448 = vld [vmem:[%s1 + $0x2b0] sm:$0xf]
      %v449 = vld [vmem:[%s1 + $0x2b4] sm:$0xf]
      %v450 = vld [vmem:[%s1 + $0x2b8] sm:$0xf]
      %v451 = vld [vmem:[%s1 + $0x2bc] sm:$0xf]
      %v452 = vld [vmem:[%s1 + $0x2c0] sm:$0xf]
      %v453 = vld [vmem:[%s1 + $0x2c4] sm:$0xf]
      %v454 = vld [vmem:[%s1 + $0x2c8] sm:$0xf]
      %v455 = vld [vmem:[%s1 + $0x2cc] sm:$0xf]
      %v456 = vld [vmem:[%s1 + $0x2d0] sm:$0xf]
      %v457 = vld [vmem:[%s1 + $0x2d4] sm:$0xf]
      %v458 = vld [vmem:[%s1 + $0x2d8] sm:$0xf]
      %v459 = vld [vmem:[%s1 + $0x2dc] sm:$0xf]
      %v460 = vld [vmem:[%s1 + $0x2e0] sm:$0xf]
      %v461 = vld [vmem:[%s1 + $0x2e4] sm:$0xf]
      %v462 = vld [vmem:[%s1 + $0x2e8] sm:$0xf]
      %v463 = vld [vmem:[%s1 + $0x2ec] sm:$0xf]
      %v464 = vld [vmem:[%s1 + $0x2f0] sm:$0xf]
      %v465 = vld [vmem:[%s1 + $0x2f4] sm:$0xf]
      %v466 = vld [vmem:[%s1 + $0x2f8] sm:$0xf]
      %v467 = vld [vmem:[%s1 + $0x2fc] sm:$0xf]
      %v468 = vld [vmem:[%s1 + $0x300] sm:$0xf]
      %v469 = vld [vmem:[%s1 + $0x304] sm:$0xf]
      %v470 = vld [vmem:[%s1 + $0x308] sm:$0xf]
      %v471 = vld [vmem:[%s1 + $0x30c] sm:$0xf]
      %v472 = vld [vmem:[%s1 + $0x310] sm:$0xf]
      %v473 = vld [vmem:[%s1 + $0x314] sm:$0xf]
      %v474 = vld [vmem:[%s1 + $0x318] sm:$0xf]
      %v475 = vld [vmem:[%s1 + $0x31c] sm:$0xf]
      %v476 = vld [vmem:[%s2] sm:$0x1]
      %v478 = vlaneseq
      %v479 = vshrl.u32 %v478, 7
      %v480 = vsub.s32 0, %v479
      %v481 = vrot.slane %v476, %v480
      %v581 = vunpack.c.l.b16 %v178
      %v582 = vunpack.c.h.b16 %v178
      %v583 = vunpack.c.l.b16 %v179
      %v584 = vunpack.c.h.b16 %v179
      %v585 = vunpack.c.l.b16 %v180
      %v586 = vunpack.c.h.b16 %v180
      %v587 = vunpack.c.l.b16 %v181
      %v588 = vunpack.c.h.b16 %v181
      %v589 = vunpack.c.l.b16 %v182
      %v590 = vunpack.c.h.b16 %v182
      %v591 = vunpack.c.l.b16 %v183
      %v592 = vunpack.c.h.b16 %v183
      %v593 = vunpack.c.l.b16 %v184
      %v594 = vunpack.c.l.b16 %v185
      %v595 = vunpack.c.h.b16 %v185
      %v596 = vunpack.c.l.b16 %v186
      %v597 = vunpack.c.h.b16 %v186
      %v598 = vunpack.c.l.b16 %v187
      %v599 = vunpack.c.h.b16 %v187
      %v600 = vunpack.c.l.b16 %v188
      %v601 = vunpack.c.h.b16 %v188
      %v602 = vunpack.c.l.b16 %v189
      %v603 = vunpack.c.h.b16 %v189
      %v604 = vunpack.c.l.b16 %v190
      %v605 = vunpack.c.h.b16 %v190
      %v606 = vunpack.c.l.b16 %v191
      %v607 = vunpack.c.l.b16 %v192
      %v608 = vunpack.c.h.b16 %v192
      %v609 = vunpack.c.l.b16 %v193
      %v610 = vunpack.c.h.b16 %v193
      %v611 = vunpack.c.l.b16 %v194
      %v612 = vunpack.c.h.b16 %v194
      %v613 = vunpack.c.l.b16 %v195
      %v614 = vunpack.c.h.b16 %v195
      %v615 = vunpack.c.l.b16 %v196
      %v616 = vunpack.c.h.b16 %v196
      %v617 = vunpack.c.l.b16 %v197
      %v618 = vunpack.c.h.b16 %v197
      %v619 = vunpack.c.l.b16 %v198
      %v620 = vunpack.c.l.b16 %v199
      %v621 = vunpack.c.h.b16 %v199
      %v622 = vunpack.c.l.b16 %v200
      %v623 = vunpack.c.h.b16 %v200
      %v624 = vunpack.c.l.b16 %v201
      %v625 = vunpack.c.h.b16 %v201
      %v626 = vunpack.c.l.b16 %v202
      %v627 = vunpack.c.h.b16 %v202
      %v628 = vunpack.c.l.b16 %v203
      %v629 = vunpack.c.h.b16 %v203
      %v630 = vunpack.c.l.b16 %v204
      %v631 = vunpack.c.h.b16 %v204
      %v632 = vunpack.c.l.b16 %v205
      %v633 = vunpack.c.l.b16 %v206
      %v634 = vunpack.c.h.b16 %v206
      %v635 = vunpack.c.l.b16 %v207
      %v636 = vunpack.c.h.b16 %v207
      %v637 = vunpack.c.l.b16 %v208
      %v638 = vunpack.c.h.b16 %v208
      %v639 = vunpack.c.l.b16 %v209
      %v640 = vunpack.c.h.b16 %v209
      %v641 = vunpack.c.l.b16 %v210
      %v642 = vunpack.c.h.b16 %v210
      %v643 = vunpack.c.l.b16 %v211
      %v644 = vunpack.c.h.b16 %v211
      %v645 = vunpack.c.l.b16 %v212
      %v646 = vunpack.c.l.b16 %v213
      %v647 = vunpack.c.h.b16 %v213
      %v648 = vunpack.c.l.b16 %v214
      %v649 = vunpack.c.h.b16 %v214
      %v650 = vunpack.c.l.b16 %v215
      %v651 = vunpack.c.h.b16 %v215
      %v652 = vunpack.c.l.b16 %v216
      %v653 = vunpack.c.h.b16 %v216
      %v654 = vunpack.c.l.b16 %v217
      %v655 = vunpack.c.h.b16 %v217
      %v656 = vunpack.c.l.b16 %v218
      %v657 = vunpack.c.h.b16 %v218
      %v658 = vunpack.c.l.b16 %v219
      %v659 = vunpack.c.l.b16 %v220
      %v660 = vunpack.c.h.b16 %v220
      %v661 = vunpack.c.l.b16 %v221
      %v662 = vunpack.c.h.b16 %v221
      %v663 = vunpack.c.l.b16 %v222
      %v664 = vunpack.c.h.b16 %v222
      %v665 = vunpack.c.l.b16 %v223
      %v666 = vunpack.c.h.b16 %v223
      %v667 = vunpack.c.l.b16 %v224
      %v668 = vunpack.c.h.b16 %v224
      %v669 = vunpack.c.l.b16 %v225
      %v670 = vunpack.c.h.b16 %v225
      %v671 = vunpack.c.l.b16 %v226
      %v672 = vunpack.c.l.b16 %v227
      %v673 = vunpack.c.h.b16 %v227
      %v674 = vunpack.c.l.b16 %v228
      %v675 = vunpack.c.h.b16 %v228
      %v676 = vunpack.c.l.b16 %v229
      %v677 = vunpack.c.h.b16 %v229
      %v678 = vunpack.c.l.b16 %v230
      %v679 = vunpack.c.h.b16 %v230
      %v680 = vunpack.c.l.b16 %v231
      %v681 = vunpack.c.h.b16 %v231
      %v682 = vunpack.c.l.b16 %v232
      %v683 = vunpack.c.h.b16 %v232
      %v684 = vunpack.c.l.b16 %v233
      %v685 = vunpack.c.l.b16 %v234
      %v686 = vunpack.c.h.b16 %v234
      %v687 = vunpack.c.l.b16 %v235
      %v688 = vunpack.c.h.b16 %v235
      %v689 = vunpack.c.l.b16 %v236
      %v690 = vunpack.c.h.b16 %v236
      %v691 = vunpack.c.l.b16 %v237
      %v692 = vunpack.c.h.b16 %v237
      %v693 = vunpack.c.l.b16 %v238
      %v694 = vunpack.c.h.b16 %v238
      %v695 = vunpack.c.l.b16 %v239
      %v696 = vunpack.c.h.b16 %v239
      %v697 = vunpack.c.l.b16 %v240
      %v698 = vunpack.c.l.b16 %v241
      %v699 = vunpack.c.h.b16 %v241
      %v700 = vunpack.c.l.b16 %v242
      %v701 = vunpack.c.h.b16 %v242
      %v702 = vunpack.c.l.b16 %v243
      %v703 = vunpack.c.h.b16 %v243
      %v704 = vunpack.c.l.b16 %v244
      %v705 = vunpack.c.h.b16 %v244
      %v706 = vunpack.c.l.b16 %v245
      %v707 = vunpack.c.h.b16 %v245
      %v708 = vunpack.c.l.b16 %v246
      %v709 = vunpack.c.h.b16 %v246
      %v710 = vunpack.c.l.b16 %v247
      %v711 = vunpack.c.l.b16 %v248
      %v712 = vunpack.c.h.b16 %v248
      %v713 = vunpack.c.l.b16 %v249
      %v714 = vunpack.c.h.b16 %v249
      %v715 = vunpack.c.l.b16 %v250
      %v716 = vunpack.c.h.b16 %v250
      %v717 = vunpack.c.l.b16 %v251
      %v718 = vunpack.c.h.b16 %v251
      %v719 = vunpack.c.l.b16 %v252
      %v720 = vunpack.c.h.b16 %v252
      %v721 = vunpack.c.l.b16 %v253
      %v722 = vunpack.c.h.b16 %v253
      %v723 = vunpack.c.l.b16 %v254
      %v724 = vunpack.c.l.b16 %v255
      %v725 = vunpack.c.h.b16 %v255
      %v726 = vunpack.c.l.b16 %v256
      %v727 = vunpack.c.h.b16 %v256
      %v728 = vunpack.c.l.b16 %v257
      %v729 = vunpack.c.h.b16 %v257
      %v730 = vunpack.c.l.b16 %v258
      %v731 = vunpack.c.h.b16 %v258
      %v732 = vunpack.c.l.b16 %v259
      %v733 = vunpack.c.h.b16 %v259
      %v734 = vunpack.c.l.b16 %v260
      %v735 = vunpack.c.h.b16 %v260
      %v736 = vunpack.c.l.b16 %v261
      %v737 = vunpack.c.l.b16 %v262
      %v738 = vunpack.c.h.b16 %v262
      %v739 = vunpack.c.l.b16 %v263
      %v740 = vunpack.c.h.b16 %v263
      %v741 = vunpack.c.l.b16 %v264
      %v742 = vunpack.c.h.b16 %v264
      %v743 = vunpack.c.l.b16 %v265
      %v744 = vunpack.c.h.b16 %v265
      %v745 = vunpack.c.l.b16 %v266
      %v746 = vunpack.c.h.b16 %v266
      %v747 = vunpack.c.l.b16 %v267
      %v748 = vunpack.c.h.b16 %v267
      %v749 = vunpack.c.l.b16 %v268
      %v750 = vunpack.c.l.b16 %v269
      %v751 = vunpack.c.h.b16 %v269
      %v752 = vunpack.c.l.b16 %v270
      %v753 = vunpack.c.h.b16 %v270
      %v754 = vunpack.c.l.b16 %v271
      %v755 = vunpack.c.h.b16 %v271
      %v756 = vunpack.c.l.b16 %v272
      %v757 = vunpack.c.h.b16 %v272
      %v758 = vunpack.c.l.b16 %v273
      %v759 = vunpack.c.h.b16 %v273
      %v760 = vunpack.c.l.b16 %v274
      %v761 = vunpack.c.h.b16 %v274
      %v762 = vunpack.c.l.b16 %v275
      %v763 = vpack.c.b16 %v594, %v581
      %v764 = vpack.c.b16 %v595, %v582
      %v765 = vpack.c.b16 %v596, %v583
      %v766 = vpack.c.b16 %v597, %v584
      %v767 = vpack.c.b16 %v598, %v585
      %v768 = vpack.c.b16 %v599, %v586
      %v769 = vpack.c.b16 %v600, %v587
      %v770 = vpack.c.b16 %v601, %v588
      %v771 = vpack.c.b16 %v602, %v589
      %v772 = vpack.c.b16 %v603, %v590
      %v773 = vpack.c.b16 %v604, %v591
      %v774 = vpack.c.b16 %v605, %v592
      %v775 = vpack.c.b16 %v606, %v593
      %v776 = vpack.c.b16 %v620, %v607
      %v777 = vpack.c.b16 %v621, %v608
      %v778 = vpack.c.b16 %v622, %v609
      %v779 = vpack.c.b16 %v623, %v610
      %v780 = vpack.c.b16 %v624, %v611
      %v781 = vpack.c.b16 %v625, %v612
      %v782 = vpack.c.b16 %v626, %v613
      %v783 = vpack.c.b16 %v627, %v614
      %v784 = vpack.c.b16 %v628, %v615
      %v785 = vpack.c.b16 %v629, %v616
      %v786 = vpack.c.b16 %v630, %v617
      %v787 = vpack.c.b16 %v631, %v618
      %v788 = vpack.c.b16 %v632, %v619
      %v789 = vpack.c.b16 %v646, %v633
      %v790 = vpack.c.b16 %v647, %v634
      %v791 = vpack.c.b16 %v648, %v635
      %v792 = vpack.c.b16 %v649, %v636
      %v793 = vpack.c.b16 %v650, %v637
      %v794 = vpack.c.b16 %v651, %v638
      %v795 = vpack.c.b16 %v652, %v639
      %v796 = vpack.c.b16 %v653, %v640
      %v797 = vpack.c.b16 %v654, %v641
      %v798 = vpack.c.b16 %v655, %v642
      %v799 = vpack.c.b16 %v656, %v643
      %v800 = vpack.c.b16 %v657, %v644
      %v801 = vpack.c.b16 %v658, %v645
      %v802 = vpack.c.b16 %v672, %v659
      %v803 = vpack.c.b16 %v673, %v660
      %v804 = vpack.c.b16 %v674, %v661
      %v805 = vpack.c.b16 %v675, %v662
      %v806 = vpack.c.b16 %v676, %v663
      %v807 = vpack.c.b16 %v677, %v664
      %v808 = vpack.c.b16 %v678, %v665
      %v809 = vpack.c.b16 %v679, %v666
      %v810 = vpack.c.b16 %v680, %v667
      %v811 = vpack.c.b16 %v681, %v668
      %v812 = vpack.c.b16 %v682, %v669
      %v813 = vpack.c.b16 %v683, %v670
      %v814 = vpack.c.b16 %v684, %v671
      %v815 = vpack.c.b16 %v698, %v685
      %v816 = vpack.c.b16 %v699, %v686
      %v817 = vpack.c.b16 %v700, %v687
      %v818 = vpack.c.b16 %v701, %v688
      %v819 = vpack.c.b16 %v702, %v689
      %v820 = vpack.c.b16 %v703, %v690
      %v821 = vpack.c.b16 %v704, %v691
      %v822 = vpack.c.b16 %v705, %v692
      %v823 = vpack.c.b16 %v706, %v693
      %v824 = vpack.c.b16 %v707, %v694
      %v825 = vpack.c.b16 %v708, %v695
      %v826 = vpack.c.b16 %v709, %v696
      %v827 = vpack.c.b16 %v710, %v697
      %v828 = vpack.c.b16 %v724, %v711
      %v829 = vpack.c.b16 %v725, %v712
      %v830 = vpack.c.b16 %v726, %v713
      %v831 = vpack.c.b16 %v727, %v714
      %v832 = vpack.c.b16 %v728, %v715
      %v833 = vpack.c.b16 %v729, %v716
      %v834 = vpack.c.b16 %v730, %v717
      %v835 = vpack.c.b16 %v731, %v718
      %v836 = vpack.c.b16 %v732, %v719
      %v837 = vpack.c.b16 %v733, %v720
      %v838 = vpack.c.b16 %v734, %v721
      %v839 = vpack.c.b16 %v735, %v722
      %v840 = vpack.c.b16 %v736, %v723
      %v841 = vpack.c.b16 %v750, %v737
      %v842 = vpack.c.b16 %v751, %v738
      %v843 = vpack.c.b16 %v752, %v739
      %v844 = vpack.c.b16 %v753, %v740
      %v845 = vpack.c.b16 %v754, %v741
      %v846 = vpack.c.b16 %v755, %v742
      %v847 = vpack.c.b16 %v756, %v743
      %v848 = vpack.c.b16 %v757, %v744
      %v849 = vpack.c.b16 %v758, %v745
      %v850 = vpack.c.b16 %v759, %v746
      %v851 = vpack.c.b16 %v760, %v747
      %v852 = vpack.c.b16 %v761, %v748
      %v853 = vpack.c.b16 %v762, %v749
      %v1138 = vunpack.c.l.b16 %v276
      %v1139 = vunpack.c.l.b16 %v277
      %v1140 = vunpack.c.l.b16 %v278
      %v1141 = vunpack.c.l.b16 %v279
      %v1142 = vunpack.c.l.b16 %v280
      %v1143 = vunpack.c.l.b16 %v281
      %v1144 = vunpack.c.l.b16 %v282
      %v1145 = vunpack.c.l.b16 %v283
      %v1146 = vunpack.c.l.b16 %v284
      %v1147 = vunpack.c.l.b16 %v285
      %v1148 = vunpack.c.l.b16 %v286
      %v1149 = vunpack.c.l.b16 %v287
      %v1150 = vunpack.c.l.b16 %v288
      %v1151 = vunpack.c.l.b16 %v289
      %v1152 = vunpack.c.l.b16 %v290
      %v1153 = vunpack.c.l.b16 %v291
      %v1154 = vunpack.c.l.b16 %v292
      %v1155 = vunpack.c.l.b16 %v293
      %v1156 = vunpack.c.l.b16 %v294
      %v1157 = vunpack.c.l.b16 %v295
      %v1158 = vunpack.c.l.b16 %v296
      %v1159 = vunpack.c.l.b16 %v297
      %v1160 = vunpack.c.l.b16 %v298
      %v1161 = vunpack.c.l.b16 %v299
      %v1162 = vunpack.c.l.b16 %v300
      %v1163 = vunpack.c.l.b16 %v301
      %v1164 = vunpack.c.l.b16 %v302
      %v1165 = vunpack.c.l.b16 %v303
      %v1166 = vunpack.c.l.b16 %v304
      %v1167 = vunpack.c.l.b16 %v305
      %v1168 = vunpack.c.l.b16 %v306
      %v1169 = vunpack.c.l.b16 %v307
      %v1170 = vunpack.c.l.b16 %v308
      %v1171 = vunpack.c.l.b16 %v309
      %v1172 = vunpack.c.l.b16 %v310
      %v1173 = vunpack.c.l.b16 %v311
      %v1174 = vunpack.c.l.b16 %v312
      %v1175 = vunpack.c.l.b16 %v313
      %v1176 = vunpack.c.l.b16 %v314
      %v1177 = vunpack.c.l.b16 %v315
      %v1178 = vunpack.c.l.b16 %v316
      %v1179 = vunpack.c.l.b16 %v317
      %v1180 = vunpack.c.l.b16 %v318
      %v1181 = vunpack.c.l.b16 %v319
      %v1182 = vunpack.c.l.b16 %v320
      %v1183 = vunpack.c.l.b16 %v321
      %v1184 = vunpack.c.l.b16 %v322
      %v1185 = vunpack.c.l.b16 %v323
      %v1186 = vunpack.c.l.b16 %v324
      %v1187 = vunpack.c.l.b16 %v325
      %v1188 = vunpack.c.l.b16 %v326
      %v1189 = vunpack.c.l.b16 %v327
      %v1190 = vunpack.c.l.b16 %v328
      %v1191 = vunpack.c.l.b16 %v329
      %v1192 = vunpack.c.l.b16 %v330
      %v1193 = vunpack.c.l.b16 %v331
      %v1194 = vunpack.c.l.b16 %v332
      %v1195 = vunpack.c.l.b16 %v333
      %v1196 = vunpack.c.l.b16 %v334
      %v1197 = vunpack.c.l.b16 %v335
      %v1198 = vunpack.c.l.b16 %v336
      %v1199 = vunpack.c.l.b16 %v337
      %v1200 = vunpack.c.l.b16 %v338
      %v1201 = vunpack.c.l.b16 %v339
      %v1202 = vunpack.c.l.b16 %v340
      %v1203 = vunpack.c.l.b16 %v341
      %v1204 = vunpack.c.l.b16 %v342
      %v1205 = vunpack.c.l.b16 %v343
      %v1206 = vunpack.c.l.b16 %v344
      %v1207 = vunpack.c.l.b16 %v345
      %v1208 = vunpack.c.l.b16 %v346
      %v1209 = vunpack.c.l.b16 %v347
      %v1210 = vunpack.c.l.b16 %v348
      %v1211 = vunpack.c.l.b16 %v349
      %v1212 = vunpack.c.l.b16 %v350
      %v1213 = vunpack.c.l.b16 %v351
      %v1214 = vunpack.c.l.b16 %v352
      %v1215 = vunpack.c.l.b16 %v353
      %v1216 = vunpack.c.l.b16 %v354
      %v1217 = vunpack.c.l.b16 %v355
      %v1218 = vunpack.c.l.b16 %v356
      %v1219 = vunpack.c.l.b16 %v357
      %v1220 = vunpack.c.l.b16 %v358
      %v1221 = vunpack.c.l.b16 %v359
      %v1222 = vunpack.c.l.b16 %v360
      %v1223 = vunpack.c.l.b16 %v361
      %v1224 = vunpack.c.l.b16 %v362
      %v1225 = vunpack.c.l.b16 %v363
      %v1226 = vunpack.c.l.b16 %v364
      %v1227 = vunpack.c.l.b16 %v365
      %v1228 = vunpack.c.l.b16 %v366
      %v1229 = vunpack.c.l.b16 %v367
      %v1230 = vunpack.c.l.b16 %v368
      %v1231 = vunpack.c.l.b16 %v369
      %v1232 = vunpack.c.l.b16 %v370
      %v1233 = vunpack.c.l.b16 %v371
      %v1234 = vunpack.c.l.b16 %v372
      %v1235 = vunpack.c.l.b16 %v373
      %v1236 = vunpack.c.l.b16 %v374
      %v1237 = vunpack.c.l.b16 %v375
      %v1238 = vunpack.c.l.b16 %v376
      %v1239 = vunpack.c.l.b16 %v377
      %v1240 = vunpack.c.l.b16 %v378
      %v1241 = vunpack.c.l.b16 %v379
      %v1242 = vunpack.c.l.b16 %v380
      %v1243 = vunpack.c.l.b16 %v381
      %v1244 = vunpack.c.l.b16 %v382
      %v1245 = vunpack.c.l.b16 %v383
      %v1246 = vunpack.c.l.b16 %v384
      %v1247 = vunpack.c.l.b16 %v385
      %v1248 = vunpack.c.l.b16 %v386
      %v1249 = vunpack.c.l.b16 %v387
      %v1250 = vunpack.c.l.b16 %v388
      %v1251 = vunpack.c.l.b16 %v389
      %v1252 = vunpack.c.l.b16 %v390
      %v1253 = vunpack.c.l.b16 %v391
      %v1254 = vunpack.c.l.b16 %v392
      %v1255 = vunpack.c.l.b16 %v393
      %v1256 = vunpack.c.l.b16 %v394
      %v1257 = vunpack.c.l.b16 %v395
      %v1258 = vunpack.c.l.b16 %v396
      %v1259 = vunpack.c.l.b16 %v397
      %v1260 = vunpack.c.l.b16 %v398
      %v1261 = vunpack.c.l.b16 %v399
      %v1262 = vunpack.c.l.b16 %v400
      %v1263 = vunpack.c.l.b16 %v401
      %v1264 = vunpack.c.l.b16 %v402
      %v1265 = vunpack.c.l.b16 %v403
      %v1266 = vunpack.c.l.b16 %v404
      %v1267 = vunpack.c.l.b16 %v405
      %v1268 = vunpack.c.l.b16 %v406
      %v1269 = vunpack.c.l.b16 %v407
      %v1270 = vunpack.c.l.b16 %v408
      %v1271 = vunpack.c.l.b16 %v409
      %v1272 = vunpack.c.l.b16 %v410
      %v1273 = vunpack.c.l.b16 %v411
      %v1274 = vunpack.c.l.b16 %v412
      %v1275 = vunpack.c.l.b16 %v413
      %v1276 = vunpack.c.l.b16 %v414
      %v1277 = vunpack.c.l.b16 %v415
      %v1278 = vunpack.c.l.b16 %v416
      %v1279 = vunpack.c.l.b16 %v417
      %v1280 = vunpack.c.l.b16 %v418
      %v1281 = vunpack.c.l.b16 %v419
      %v1282 = vunpack.c.l.b16 %v420
      %v1283 = vunpack.c.l.b16 %v421
      %v1284 = vunpack.c.l.b16 %v422
      %v1285 = vunpack.c.l.b16 %v423
      %v1286 = vunpack.c.l.b16 %v424
      %v1287 = vunpack.c.l.b16 %v425
      %v1288 = vunpack.c.l.b16 %v426
      %v1289 = vunpack.c.l.b16 %v427
      %v1290 = vunpack.c.l.b16 %v428
      %v1291 = vunpack.c.l.b16 %v429
      %v1292 = vunpack.c.l.b16 %v430
      %v1293 = vunpack.c.l.b16 %v431
      %v1294 = vunpack.c.l.b16 %v432
      %v1295 = vunpack.c.l.b16 %v433
      %v1296 = vunpack.c.l.b16 %v434
      %v1297 = vunpack.c.l.b16 %v435
      %v1298 = vunpack.c.l.b16 %v436
      %v1299 = vunpack.c.l.b16 %v437
      %v1300 = vunpack.c.l.b16 %v438
      %v1301 = vunpack.c.l.b16 %v439
      %v1302 = vunpack.c.l.b16 %v440
      %v1303 = vunpack.c.l.b16 %v441
      %v1304 = vunpack.c.l.b16 %v442
      %v1305 = vunpack.c.l.b16 %v443
      %v1306 = vunpack.c.l.b16 %v444
      %v1307 = vunpack.c.l.b16 %v445
      %v1308 = vunpack.c.l.b16 %v446
      %v1309 = vunpack.c.l.b16 %v447
      %v1310 = vunpack.c.l.b16 %v448
      %v1311 = vunpack.c.l.b16 %v449
      %v1312 = vunpack.c.l.b16 %v450
      %v1313 = vunpack.c.l.b16 %v451
      %v1314 = vunpack.c.l.b16 %v452
      %v1315 = vunpack.c.l.b16 %v453
      %v1316 = vunpack.c.l.b16 %v454
      %v1317 = vunpack.c.l.b16 %v455
      %v1318 = vunpack.c.l.b16 %v456
      %v1319 = vunpack.c.l.b16 %v457
      %v1320 = vunpack.c.l.b16 %v458
      %v1321 = vunpack.c.l.b16 %v459
      %v1322 = vunpack.c.l.b16 %v460
      %v1323 = vunpack.c.l.b16 %v461
      %v1324 = vunpack.c.l.b16 %v462
      %v1325 = vunpack.c.l.b16 %v463
      %v1326 = vunpack.c.l.b16 %v464
      %v1327 = vunpack.c.l.b16 %v465
      %v1328 = vunpack.c.l.b16 %v466
      %v1329 = vunpack.c.l.b16 %v467
      %v1330 = vunpack.c.l.b16 %v468
      %v1331 = vunpack.c.l.b16 %v469
      %v1332 = vunpack.c.l.b16 %v470
      %v1333 = vunpack.c.l.b16 %v471
      %v1334 = vunpack.c.l.b16 %v472
      %v1335 = vunpack.c.l.b16 %v473
      %v1336 = vunpack.c.l.b16 %v474
      %v1337 = vunpack.c.l.b16 %v475
      %v1338 = vpack.c.b16 %v1139, %v1138
      %v1339 = vpack.c.b16 %v1141, %v1140
      %v1340 = vpack.c.b16 %v1143, %v1142
      %v1341 = vpack.c.b16 %v1145, %v1144
      %v1342 = vpack.c.b16 %v1147, %v1146
      %v1343 = vpack.c.b16 %v1149, %v1148
      %v1344 = vpack.c.b16 %v1151, %v1150
      %v1345 = vpack.c.b16 %v1153, %v1152
      %v1346 = vpack.c.b16 %v1155, %v1154
      %v1347 = vpack.c.b16 %v1157, %v1156
      %v1348 = vpack.c.b16 %v1159, %v1158
      %v1349 = vpack.c.b16 %v1161, %v1160
      %v1350 = vpack.c.b16 %v1163, %v1162
      %v1351 = vpack.c.b16 %v1165, %v1164
      %v1352 = vpack.c.b16 %v1167, %v1166
      %v1353 = vpack.c.b16 %v1169, %v1168
      %v1354 = vpack.c.b16 %v1171, %v1170
      %v1355 = vpack.c.b16 %v1173, %v1172
      %v1356 = vpack.c.b16 %v1175, %v1174
      %v1357 = vpack.c.b16 %v1177, %v1176
      %v1358 = vpack.c.b16 %v1179, %v1178
      %v1359 = vpack.c.b16 %v1181, %v1180
      %v1360 = vpack.c.b16 %v1183, %v1182
      %v1361 = vpack.c.b16 %v1185, %v1184
      %v1362 = vpack.c.b16 %v1187, %v1186
      %v1363 = vpack.c.b16 %v1189, %v1188
      %v1364 = vpack.c.b16 %v1191, %v1190
      %v1365 = vpack.c.b16 %v1193, %v1192
      %v1366 = vpack.c.b16 %v1195, %v1194
      %v1367 = vpack.c.b16 %v1197, %v1196
      %v1368 = vpack.c.b16 %v1199, %v1198
      %v1369 = vpack.c.b16 %v1201, %v1200
      %v1370 = vpack.c.b16 %v1203, %v1202
      %v1371 = vpack.c.b16 %v1205, %v1204
      %v1372 = vpack.c.b16 %v1207, %v1206
      %v1373 = vpack.c.b16 %v1209, %v1208
      %v1374 = vpack.c.b16 %v1211, %v1210
      %v1375 = vpack.c.b16 %v1213, %v1212
      %v1376 = vpack.c.b16 %v1215, %v1214
      %v1377 = vpack.c.b16 %v1217, %v1216
      %v1378 = vpack.c.b16 %v1219, %v1218
      %v1379 = vpack.c.b16 %v1221, %v1220
      %v1380 = vpack.c.b16 %v1223, %v1222
      %v1381 = vpack.c.b16 %v1225, %v1224
      %v1382 = vpack.c.b16 %v1227, %v1226
      %v1383 = vpack.c.b16 %v1229, %v1228
      %v1384 = vpack.c.b16 %v1231, %v1230
      %v1385 = vpack.c.b16 %v1233, %v1232
      %v1386 = vpack.c.b16 %v1235, %v1234
      %v1387 = vpack.c.b16 %v1237, %v1236
      %v1388 = vpack.c.b16 %v1239, %v1238
      %v1389 = vpack.c.b16 %v1241, %v1240
      %v1390 = vpack.c.b16 %v1243, %v1242
      %v1391 = vpack.c.b16 %v1245, %v1244
      %v1392 = vpack.c.b16 %v1247, %v1246
      %v1393 = vpack.c.b16 %v1249, %v1248
      %v1394 = vpack.c.b16 %v1251, %v1250
      %v1395 = vpack.c.b16 %v1253, %v1252
      %v1396 = vpack.c.b16 %v1255, %v1254
      %v1397 = vpack.c.b16 %v1257, %v1256
      %v1398 = vpack.c.b16 %v1259, %v1258
      %v1399 = vpack.c.b16 %v1261, %v1260
      %v1400 = vpack.c.b16 %v1263, %v1262
      %v1401 = vpack.c.b16 %v1265, %v1264
      %v1402 = vpack.c.b16 %v1267, %v1266
      %v1403 = vpack.c.b16 %v1269, %v1268
      %v1404 = vpack.c.b16 %v1271, %v1270
      %v1405 = vpack.c.b16 %v1273, %v1272
      %v1406 = vpack.c.b16 %v1275, %v1274
      %v1407 = vpack.c.b16 %v1277, %v1276
      %v1408 = vpack.c.b16 %v1279, %v1278
      %v1409 = vpack.c.b16 %v1281, %v1280
      %v1410 = vpack.c.b16 %v1283, %v1282
      %v1411 = vpack.c.b16 %v1285, %v1284
      %v1412 = vpack.c.b16 %v1287, %v1286
      %v1413 = vpack.c.b16 %v1289, %v1288
      %v1414 = vpack.c.b16 %v1291, %v1290
      %v1415 = vpack.c.b16 %v1293, %v1292
      %v1416 = vpack.c.b16 %v1295, %v1294
      %v1417 = vpack.c.b16 %v1297, %v1296
      %v1418 = vpack.c.b16 %v1299, %v1298
      %v1419 = vpack.c.b16 %v1301, %v1300
      %v1420 = vpack.c.b16 %v1303, %v1302
      %v1421 = vpack.c.b16 %v1305, %v1304
      %v1422 = vpack.c.b16 %v1307, %v1306
      %v1423 = vpack.c.b16 %v1309, %v1308
      %v1424 = vpack.c.b16 %v1311, %v1310
      %v1425 = vpack.c.b16 %v1313, %v1312
      %v1426 = vpack.c.b16 %v1315, %v1314
      %v1427 = vpack.c.b16 %v1317, %v1316
      %v1428 = vpack.c.b16 %v1319, %v1318
      %v1429 = vpack.c.b16 %v1321, %v1320
      %v1430 = vpack.c.b16 %v1323, %v1322
      %v1431 = vpack.c.b16 %v1325, %v1324
      %v1432 = vpack.c.b16 %v1327, %v1326
      %v1433 = vpack.c.b16 %v1329, %v1328
      %v1434 = vpack.c.b16 %v1331, %v1330
      %v1435 = vpack.c.b16 %v1333, %v1332
      %v1436 = vpack.c.b16 %v1335, %v1334
      %v1437 = vpack.c.b16 %v1337, %v1336
      %vm1538 = vcmask 523264
      %v1540 = vsel %vm1538, %v775, 0
      %v1543 = vsel %vm1538, %v788, 0
      %v1546 = vsel %vm1538, %v801, 0
      %v1549 = vsel %vm1538, %v814, 0
      %v1552 = vsel %vm1538, %v827, 0
      %v1555 = vsel %vm1538, %v840, 0
      %v1558 = vsel %vm1538, %v853, 0
      %1560 = vmatprep.subr.bf16.mxu0 0
      %1561 = vmatpush1.bf16.msra.mxu0 %v1338
      %1562 = vmatprep.subr.bf16.mxu0 0
      %1563 = vmatpush1.bf16.msra.mxu0 %v1339
      %1564 = vmatprep.subr.bf16.mxu0 0
      %1565 = vmatpush1.bf16.msra.mxu0 %v1340
      %1566 = vmatprep.subr.bf16.mxu0 0
      %1567 = vmatpush1.bf16.msra.mxu0 %v1341
      %1568 = vmatprep.subr.bf16.mxu0 0
      %1569 = vmatpush1.bf16.msra.mxu0 %v1342
      %1570 = vmatprep.subr.bf16.mxu0 0
      %1571 = vmatpush1.bf16.msra.mxu0 %v1343
      %1572 = vmatprep.subr.bf16.mxu0 0
      %1573 = vmatpush1.bf16.msra.mxu0 %v1344
      %1574 = vmatprep.subr.bf16.mxu0 0
      %1575 = vmatpush1.bf16.msra.mxu0 %v1345
      %1576 = vmatprep.subr.bf16.mxu0 0
      %1577 = vmatpush1.bf16.msra.mxu0 %v1346
      %1578 = vmatprep.subr.bf16.mxu0 0
      %1579 = vmatpush1.bf16.msra.mxu0 %v1347
      %1580 = vmatprep.subr.bf16.mxu0 0
      %1581 = vmatpush1.bf16.msra.mxu0 %v1348
      %1582 = vmatprep.subr.bf16.mxu0 0
      %1583 = vmatpush1.bf16.msra.mxu0 %v1349
      %1584 = vmatprep.subr.bf16.mxu0 0
      %1585 = vmatpush1.bf16.msra.mxu0 %v1350
      %1586 = vmatprep.subr.bf16.mxu0 0
      %1587 = vmatpush1.bf16.msra.mxu0 %v1351
      %1588 = vmatprep.subr.bf16.mxu0 0
      %1589 = vmatpush1.bf16.msra.mxu0 %v1352
      %1590 = vmatprep.subr.bf16.mxu0 0
      %1591 = vmatpush1.bf16.msra.mxu0 %v1353
      %1592 = vmatprep.mubr.bf16.mxu0 %v764
      %1593 = vmatmul.mubr.bf16.gmra.mrb[0].mxu0 %v763
      %v1594 = vpop.f32.mrb[0].mxu0
      %v1595 = vadd.f32 %v481, %v1594
      %v1596 = vpop.f32.mrb[0].mxu0
      %v1597 = vpop.f32.mrb[0].mxu0
      %v1598 = vadd.f32 %v481, %v1597
      %v1599 = vpop.f32.mrb[0].mxu0
      %1600 = vmatprep.mubr.bf16.mxu0 %v777
      %1601 = vmatmul.mubr.bf16.gmra.mrb[0].mxu0 %v776
      %v1602 = vpop.f32.mrb[0].mxu0
      %v1603 = vadd.f32 %v481, %v1602
      %v1604 = vpop.f32.mrb[0].mxu0
      %v1605 = vpop.f32.mrb[0].mxu0
      %v1606 = vadd.f32 %v481, %v1605
      %v1607 = vpop.f32.mrb[0].mxu0
      %1608 = vmatprep.mubr.bf16.mxu0 %v790
      %1609 = vmatmul.mubr.bf16.gmra.mrb[0].mxu0 %v789
      %v1610 = vpop.f32.mrb[0].mxu0
      %v1611 = vadd.f32 %v481, %v1610
      %v1612 = vpop.f32.mrb[0].mxu0
      %v1613 = vpop.f32.mrb[0].mxu0
      %v1614 = vadd.f32 %v481, %v1613
      %v1615 = vpop.f32.mrb[0].mxu0
      %1616 = vmatprep.mubr.bf16.mxu0 %v803
      %1617 = vmatmul.mubr.bf16.gmra.mrb[0].mxu0 %v802
      %v1618 = vpop.f32.mrb[0].mxu0
      %v1619 = vadd.f32 %v481, %v1618
      %v1620 = vpop.f32.mrb[0].mxu0
      %v1621 = vpop.f32.mrb[0].mxu0
      %v1622 = vadd.f32 %v481, %v1621
      %v1623 = vpop.f32.mrb[0].mxu0
      %1624 = vmatprep.mubr.bf16.mxu0 %v816
      %1625 = vmatmul.mubr.bf16.gmra.mrb[0].mxu0 %v815
      %v1626 = vpop.f32.mrb[0].mxu0
      %v1627 = vadd.f32 %v481, %v1626
      %v1628 = vpop.f32.mrb[0].mxu0
      %v1629 = vpop.f32.mrb[0].mxu0
      %v1630 = vadd.f32 %v481, %v1629
      %v1631 = vpop.f32.mrb[0].mxu0
      %1632 = vmatprep.mubr.bf16.mxu0 %v829
      %1633 = vmatmul.mubr.bf16.gmra.mrb[0].mxu0 %v828
      %v1634 = vpop.f32.mrb[0].mxu0
      %v1635 = vadd.f32 %v481, %v1634
      %v1636 = vpop.f32.mrb[0].mxu0
      %v1637 = vpop.f32.mrb[0].mxu0
      %v1638 = vadd.f32 %v481, %v1637
      %v1639 = vpop.f32.mrb[0].mxu0
      %1640 = vmatprep.mubr.bf16.mxu0 %v842
      %1641 = vmatmul.mubr.bf16.gmra.mrb[0].mxu0 %v841
      %v1642 = vpop.f32.mrb[0].mxu0
      %v1643 = vadd.f32 %v481, %v1642
      %v1644 = vpop.f32.mrb[0].mxu0
      %v1645 = vpop.f32.mrb[0].mxu0
      %v1646 = vadd.f32 %v481, %v1645
      %v1647 = vpop.f32.mrb[0].mxu0
      %1648 = vdwg.mxu0
      %1649 = vmatprep.subr.bf16.mxu0 0
      %1650 = vmatpush1.bf16.msra.mxu0 %v1354
      %1651 = vmatprep.subr.bf16.mxu0 0
      %1652 = vmatpush1.bf16.msra.mxu0 %v1355
      %1653 = vmatprep.subr.bf16.mxu0 0
      %1654 = vmatpush1.bf16.msra.mxu0 %v1356
      %1655 = vmatprep.subr.bf16.mxu0 0
      %1656 = vmatpush1.bf16.msra.mxu0 %v1357
      %1657 = vmatprep.subr.bf16.mxu0 0
      %1658 = vmatpush1.bf16.msra.mxu0 %v1358
      %1659 = vmatprep.subr.bf16.mxu0 0
      %1660 = vmatpush1.bf16.msra.mxu0 %v1359
      %1661 = vmatprep.subr.bf16.mxu0 0
      %1662 = vmatpush1.bf16.msra.mxu0 %v1360
      %1663 = vmatprep.subr.bf16.mxu0 0
      %1664 = vmatpush1.bf16.msra.mxu0 %v1361
      %1665 = vmatprep.subr.bf16.mxu0 0
      %1666 = vmatpush1.bf16.msra.mxu0 %v1362
      %1667 = vmatprep.subr.bf16.mxu0 0
      %1668 = vmatpush1.bf16.msra.mxu0 %v1363
      %1669 = vmatprep.subr.bf16.mxu0 0
      %1670 = vmatpush1.bf16.msra.mxu0 %v1364
      %1671 = vmatprep.subr.bf16.mxu0 0
      %1672 = vmatpush1.bf16.msra.mxu0 %v1365
      %1673 = vmatprep.subr.bf16.mxu0 0
      %1674 = vmatpush1.bf16.msra.mxu0 %v1366
      %1675 = vmatprep.subr.bf16.mxu0 0
      %1676 = vmatpush1.bf16.msra.mxu0 %v1367
      %1677 = vmatprep.subr.bf16.mxu0 0
      %1678 = vmatpush1.bf16.msra.mxu0 %v1368
      %1679 = vmatprep.subr.bf16.mxu0 0
      %1680 = vmatpush1.bf16.msra.mxu0 %v1369
      %1681 = vmatprep.mubr.bf16.mxu0 %v766
      %1682 = vmatmul.mubr.bf16.gmra.mrb[0].mxu0 %v765
      %v1683 = vpop.f32.mrb[0].mxu0
      %v1684 = vadd.f32 %v1595, %v1683
      %v1685 = vpop.f32.mrb[0].mxu0
      %v1686 = vpop.f32.mrb[0].mxu0
      %v1687 = vadd.f32 %v1598, %v1686
      %v1688 = vpop.f32.mrb[0].mxu0
      %1689 = vmatprep.mubr.bf16.mxu0 %v779
      %1690 = vmatmul.mubr.bf16.gmra.mrb[0].mxu0 %v778
      %v1691 = vpop.f32.mrb[0].mxu0
      %v1692 = vadd.f32 %v1603, %v1691
      %v1693 = vpop.f32.mrb[0].mxu0
      %v1694 = vpop.f32.mrb[0].mxu0
      %v1695 = vadd.f32 %v1606, %v1694
      %v1696 = vpop.f32.mrb[0].mxu0
      %1697 = vmatprep.mubr.bf16.mxu0 %v792
      %1698 = vmatmul.mubr.bf16.gmra.mrb[0].mxu0 %v791
      %v1699 = vpop.f32.mrb[0].mxu0
      %v1700 = vadd.f32 %v1611, %v1699
      %v1701 = vpop.f32.mrb[0].mxu0
      %v1702 = vpop.f32.mrb[0].mxu0
      %v1703 = vadd.f32 %v1614, %v1702
      %v1704 = vpop.f32.mrb[0].mxu0
      %1705 = vmatprep.mubr.bf16.mxu0 %v805
      %1706 = vmatmul.mubr.bf16.gmra.mrb[0].mxu0 %v804
      %v1707 = vpop.f32.mrb[0].mxu0
      %v1708 = vadd.f32 %v1619, %v1707
      %v1709 = vpop.f32.mrb[0].mxu0
      %v1710 = vpop.f32.mrb[0].mxu0
      %v1711 = vadd.f32 %v1622, %v1710
      %v1712 = vpop.f32.mrb[0].mxu0
      %1713 = vmatprep.mubr.bf16.mxu0 %v818
      %1714 = vmatmul.mubr.bf16.gmra.mrb[0].mxu0 %v817
      %v1715 = vpop.f32.mrb[0].mxu0
      %v1716 = vadd.f32 %v1627, %v1715
      %v1717 = vpop.f32.mrb[0].mxu0
      %v1718 = vpop.f32.mrb[0].mxu0
      %v1719 = vadd.f32 %v1630, %v1718
      %v1720 = vpop.f32.mrb[0].mxu0
      %1721 = vmatprep.mubr.bf16.mxu0 %v831
      %1722 = vmatmul.mubr.bf16.gmra.mrb[0].mxu0 %v830
      %v1723 = vpop.f32.mrb[0].mxu0
      %v1724 = vadd.f32 %v1635, %v1723
      %v1725 = vpop.f32.mrb[0].mxu0
      %v1726 = vpop.f32.mrb[0].mxu0
      %v1727 = vadd.f32 %v1638, %v1726
      %v1728 = vpop.f32.mrb[0].mxu0
      %1729 = vmatprep.mubr.bf16.mxu0 %v844
      %1730 = vmatmul.mubr.bf16.gmra.mrb[0].mxu0 %v843
      %v1731 = vpop.f32.mrb[0].mxu0
      %v1732 = vadd.f32 %v1643, %v1731
      %v1733 = vpop.f32.mrb[0].mxu0
      %v1734 = vpop.f32.mrb[0].mxu0
      %v1735 = vadd.f32 %v1646, %v1734
      %v1736 = vpop.f32.mrb[0].mxu0
      %1737 = vdwg.mxu0
      %1738 = vmatprep.subr.bf16.mxu0 0
      %1739 = vmatpush1.bf16.msra.mxu0 %v1370
      %1740 = vmatprep.subr.bf16.mxu0 0
      %1741 = vmatpush1.bf16.msra.mxu0 %v1371
      %1742 = vmatprep.subr.bf16.mxu0 0
      %1743 = vmatpush1.bf16.msra.mxu0 %v1372
      %1744 = vmatprep.subr.bf16.mxu0 0
      %1745 = vmatpush1.bf16.msra.mxu0 %v1373
      %1746 = vmatprep.subr.bf16.mxu0 0
      %1747 = vmatpush1.bf16.msra.mxu0 %v1374
      %1748 = vmatprep.subr.bf16.mxu0 0
      %1749 = vmatpush1.bf16.msra.mxu0 %v1375
      %1750 = vmatprep.subr.bf16.mxu0 0
      %1751 = vmatpush1.bf16.msra.mxu0 %v1376
      %1752 = vmatprep.subr.bf16.mxu0 0
      %1753 = vmatpush1.bf16.msra.mxu0 %v1377
      %1754 = vmatprep.subr.bf16.mxu0 0
      %1755 = vmatpush1.bf16.msra.mxu0 %v1378
      %1756 = vmatprep.subr.bf16.mxu0 0
      %1757 = vmatpush1.bf16.msra.mxu0 %v1379
      %1758 = vmatprep.subr.bf16.mxu0 0
      %1759 = vmatpush1.bf16.msra.mxu0 %v1380
      %1760 = vmatprep.subr.bf16.mxu0 0
      %1761 = vmatpush1.bf16.msra.mxu0 %v1381
      %1762 = vmatprep.subr.bf16.mxu0 0
      %1763 = vmatpush1.bf16.msra.mxu0 %v1382
      %1764 = vmatprep.subr.bf16.mxu0 0
      %1765 = vmatpush1.bf16.msra.mxu0 %v1383
      %1766 = vmatprep.subr.bf16.mxu0 0
      %1767 = vmatpush1.bf16.msra.mxu0 %v1384
      %1768 = vmatprep.subr.bf16.mxu0 0
      %1769 = vmatpush1.bf16.msra.mxu0 %v1385
      %1770 = vmatprep.mubr.bf16.mxu0 %v768
      %1771 = vmatmul.mubr.bf16.gmra.mrb[0].mxu0 %v767
      %v1772 = vpop.f32.mrb[0].mxu0
      %v1773 = vadd.f32 %v1684, %v1772
      %v1774 = vpop.f32.mrb[0].mxu0
      %v1775 = vpop.f32.mrb[0].mxu0
      %v1776 = vadd.f32 %v1687, %v1775
      %v1777 = vpop.f32.mrb[0].mxu0
      %1778 = vmatprep.mubr.bf16.mxu0 %v781
      %1779 = vmatmul.mubr.bf16.gmra.mrb[0].mxu0 %v780
      %v1780 = vpop.f32.mrb[0].mxu0
      %v1781 = vadd.f32 %v1692, %v1780
      %v1782 = vpop.f32.mrb[0].mxu0
      %v1783 = vpop.f32.mrb[0].mxu0
      %v1784 = vadd.f32 %v1695, %v1783
      %v1785 = vpop.f32.mrb[0].mxu0
      %1786 = vmatprep.mubr.bf16.mxu0 %v794
      %1787 = vmatmul.mubr.bf16.gmra.mrb[0].mxu0 %v793
      %v1788 = vpop.f32.mrb[0].mxu0
      %v1789 = vadd.f32 %v1700, %v1788
      %v1790 = vpop.f32.mrb[0].mxu0
      %v1791 = vpop.f32.mrb[0].mxu0
      %v1792 = vadd.f32 %v1703, %v1791
      %v1793 = vpop.f32.mrb[0].mxu0
      %1794 = vmatprep.mubr.bf16.mxu0 %v807
      %1795 = vmatmul.mubr.bf16.gmra.mrb[0].mxu0 %v806
      %v1796 = vpop.f32.mrb[0].mxu0
      %v1797 = vadd.f32 %v1708, %v1796
      %v1798 = vpop.f32.mrb[0].mxu0
      %v1799 = vpop.f32.mrb[0].mxu0
      %v1800 = vadd.f32 %v1711, %v1799
      %v1801 = vpop.f32.mrb[0].mxu0
      %1802 = vmatprep.mubr.bf16.mxu0 %v820
      %1803 = vmatmul.mubr.bf16.gmra.mrb[0].mxu0 %v819
      %v1804 = vpop.f32.mrb[0].mxu0
      %v1805 = vadd.f32 %v1716, %v1804
      %v1806 = vpop.f32.mrb[0].mxu0
      %v1807 = vpop.f32.mrb[0].mxu0
      %v1808 = vadd.f32 %v1719, %v1807
      %v1809 = vpop.f32.mrb[0].mxu0
      %1810 = vmatprep.mubr.bf16.mxu0 %v833
      %1811 = vmatmul.mubr.bf16.gmra.mrb[0].mxu0 %v832
      %v1812 = vpop.f32.mrb[0].mxu0
      %v1813 = vadd.f32 %v1724, %v1812
      %v1814 = vpop.f32.mrb[0].mxu0
      %v1815 = vpop.f32.mrb[0].mxu0
      %v1816 = vadd.f32 %v1727, %v1815
      %v1817 = vpop.f32.mrb[0].mxu0
      %1818 = vmatprep.mubr.bf16.mxu0 %v846
      %1819 = vmatmul.mubr.bf16.gmra.mrb[0].mxu0 %v845
      %v1820 = vpop.f32.mrb[0].mxu0
      %v1821 = vadd.f32 %v1732, %v1820
      %v1822 = vpop.f32.mrb[0].mxu0
      %v1823 = vpop.f32.mrb[0].mxu0
      %v1824 = vadd.f32 %v1735, %v1823
      %v1825 = vpop.f32.mrb[0].mxu0
      %1826 = vdwg.mxu0
      %1827 = vmatprep.subr.bf16.mxu0 0
      %1828 = vmatpush1.bf16.msra.mxu0 %v1386
      %1829 = vmatprep.subr.bf16.mxu0 0
      %1830 = vmatpush1.bf16.msra.mxu0 %v1387
      %1831 = vmatprep.subr.bf16.mxu0 0
      %1832 = vmatpush1.bf16.msra.mxu0 %v1388
      %1833 = vmatprep.subr.bf16.mxu0 0
      %1834 = vmatpush1.bf16.msra.mxu0 %v1389
      %1835 = vmatprep.subr.bf16.mxu0 0
      %1836 = vmatpush1.bf16.msra.mxu0 %v1390
      %1837 = vmatprep.subr.bf16.mxu0 0
      %1838 = vmatpush1.bf16.msra.mxu0 %v1391
      %1839 = vmatprep.subr.bf16.mxu0 0
      %1840 = vmatpush1.bf16.msra.mxu0 %v1392
      %1841 = vmatprep.subr.bf16.mxu0 0
      %1842 = vmatpush1.bf16.msra.mxu0 %v1393
      %1843 = vmatprep.subr.bf16.mxu0 0
      %1844 = vmatpush1.bf16.msra.mxu0 %v1394
      %1845 = vmatprep.subr.bf16.mxu0 0
      %1846 = vmatpush1.bf16.msra.mxu0 %v1395
      %1847 = vmatprep.subr.bf16.mxu0 0
      %1848 = vmatpush1.bf16.msra.mxu0 %v1396
      %1849 = vmatprep.subr.bf16.mxu0 0
      %1850 = vmatpush1.bf16.msra.mxu0 %v1397
      %1851 = vmatprep.subr.bf16.mxu0 0
      %1852 = vmatpush1.bf16.msra.mxu0 %v1398
      %1853 = vmatprep.subr.bf16.mxu0 0
      %1854 = vmatpush1.bf16.msra.mxu0 %v1399
      %1855 = vmatprep.subr.bf16.mxu0 0
      %1856 = vmatpush1.bf16.msra.mxu0 %v1400
      %1857 = vmatprep.subr.bf16.mxu0 0
      %1858 = vmatpush1.bf16.msra.mxu0 %v1401
      %1859 = vmatprep.mubr.bf16.mxu0 %v770
      %1860 = vmatmul.mubr.bf16.gmra.mrb[0].mxu0 %v769
      %v1861 = vpop.f32.mrb[0].mxu0
      %v1862 = vadd.f32 %v1773, %v1861
      %v1863 = vpop.f32.mrb[0].mxu0
      %v1864 = vpop.f32.mrb[0].mxu0
      %v1865 = vadd.f32 %v1776, %v1864
      %v1866 = vpop.f32.mrb[0].mxu0
      %1867 = vmatprep.mubr.bf16.mxu0 %v783
      %1868 = vmatmul.mubr.bf16.gmra.mrb[0].mxu0 %v782
      %v1869 = vpop.f32.mrb[0].mxu0
      %v1870 = vadd.f32 %v1781, %v1869
      %v1871 = vpop.f32.mrb[0].mxu0
      %v1872 = vpop.f32.mrb[0].mxu0
      %v1873 = vadd.f32 %v1784, %v1872
      %v1874 = vpop.f32.mrb[0].mxu0
      %1875 = vmatprep.mubr.bf16.mxu0 %v796
      %1876 = vmatmul.mubr.bf16.gmra.mrb[0].mxu0 %v795
      %v1877 = vpop.f32.mrb[0].mxu0
      %v1878 = vadd.f32 %v1789, %v1877
      %v1879 = vpop.f32.mrb[0].mxu0
      %v1880 = vpop.f32.mrb[0].mxu0
      %v1881 = vadd.f32 %v1792, %v1880
      %v1882 = vpop.f32.mrb[0].mxu0
      %1883 = vmatprep.mubr.bf16.mxu0 %v809
      %1884 = vmatmul.mubr.bf16.gmra.mrb[0].mxu0 %v808
      %v1885 = vpop.f32.mrb[0].mxu0
      %v1886 = vadd.f32 %v1797, %v1885
      %v1887 = vpop.f32.mrb[0].mxu0
      %v1888 = vpop.f32.mrb[0].mxu0
      %v1889 = vadd.f32 %v1800, %v1888
      %v1890 = vpop.f32.mrb[0].mxu0
      %1891 = vmatprep.mubr.bf16.mxu0 %v822
      %1892 = vmatmul.mubr.bf16.gmra.mrb[0].mxu0 %v821
      %v1893 = vpop.f32.mrb[0].mxu0
      %v1894 = vadd.f32 %v1805, %v1893
      %v1895 = vpop.f32.mrb[0].mxu0
      %v1896 = vpop.f32.mrb[0].mxu0
      %v1897 = vadd.f32 %v1808, %v1896
      %v1898 = vpop.f32.mrb[0].mxu0
      %1899 = vmatprep.mubr.bf16.mxu0 %v835
      %1900 = vmatmul.mubr.bf16.gmra.mrb[0].mxu0 %v834
      %v1901 = vpop.f32.mrb[0].mxu0
      %v1902 = vadd.f32 %v1813, %v1901
      %v1903 = vpop.f32.mrb[0].mxu0
      %v1904 = vpop.f32.mrb[0].mxu0
      %v1905 = vadd.f32 %v1816, %v1904
      %v1906 = vpop.f32.mrb[0].mxu0
      %1907 = vmatprep.mubr.bf16.mxu0 %v848
      %1908 = vmatmul.mubr.bf16.gmra.mrb[0].mxu0 %v847
      %v1909 = vpop.f32.mrb[0].mxu0
      %v1910 = vadd.f32 %v1821, %v1909
      %v1911 = vpop.f32.mrb[0].mxu0
      %v1912 = vpop.f32.mrb[0].mxu0
      %v1913 = vadd.f32 %v1824, %v1912
      %v1914 = vpop.f32.mrb[0].mxu0
      %1915 = vdwg.mxu0
      %1916 = vmatprep.subr.bf16.mxu0 0
      %1917 = vmatpush1.bf16.msra.mxu0 %v1402
      %1918 = vmatprep.subr.bf16.mxu0 0
      %1919 = vmatpush1.bf16.msra.mxu0 %v1403
      %1920 = vmatprep.subr.bf16.mxu0 0
      %1921 = vmatpush1.bf16.msra.mxu0 %v1404
      %1922 = vmatprep.subr.bf16.mxu0 0
      %1923 = vmatpush1.bf16.msra.mxu0 %v1405
      %1924 = vmatprep.subr.bf16.mxu0 0
      %1925 = vmatpush1.bf16.msra.mxu0 %v1406
      %1926 = vmatprep.subr.bf16.mxu0 0
      %1927 = vmatpush1.bf16.msra.mxu0 %v1407
      %1928 = vmatprep.subr.bf16.mxu0 0
      %1929 = vmatpush1.bf16.msra.mxu0 %v1408
      %1930 = vmatprep.subr.bf16.mxu0 0
      %1931 = vmatpush1.bf16.msra.mxu0 %v1409
      %1932 = vmatprep.subr.bf16.mxu0 0
      %1933 = vmatpush1.bf16.msra.mxu0 %v1410
      %1934 = vmatprep.subr.bf16.mxu0 0
      %1935 = vmatpush1.bf16.msra.mxu0 %v1411
      %1936 = vmatprep.subr.bf16.mxu0 0
      %1937 = vmatpush1.bf16.msra.mxu0 %v1412
      %1938 = vmatprep.subr.bf16.mxu0 0
      %1939 = vmatpush1.bf16.msra.mxu0 %v1413
      %1940 = vmatprep.subr.bf16.mxu0 0
      %1941 = vmatpush1.bf16.msra.mxu0 %v1414
      %1942 = vmatprep.subr.bf16.mxu0 0
      %1943 = vmatpush1.bf16.msra.mxu0 %v1415
      %1944 = vmatprep.subr.bf16.mxu0 0
      %1945 = vmatpush1.bf16.msra.mxu0 %v1416
      %1946 = vmatprep.subr.bf16.mxu0 0
      %1947 = vmatpush1.bf16.msra.mxu0 %v1417
      %1948 = vmatprep.mubr.bf16.mxu0 %v772
      %1949 = vmatmul.mubr.bf16.gmra.mrb[0].mxu0 %v771
      %v1950 = vpop.f32.mrb[0].mxu0
      %v1951 = vadd.f32 %v1862, %v1950
      %v1952 = vpop.f32.mrb[0].mxu0
      %v1953 = vpop.f32.mrb[0].mxu0
      %v1954 = vadd.f32 %v1865, %v1953
      %v1955 = vpop.f32.mrb[0].mxu0
      %1956 = vmatprep.mubr.bf16.mxu0 %v785
      %1957 = vmatmul.mubr.bf16.gmra.mrb[0].mxu0 %v784
      %v1958 = vpop.f32.mrb[0].mxu0
      %v1959 = vadd.f32 %v1870, %v1958
      %v1960 = vpop.f32.mrb[0].mxu0
      %v1961 = vpop.f32.mrb[0].mxu0
      %v1962 = vadd.f32 %v1873, %v1961
      %v1963 = vpop.f32.mrb[0].mxu0
      %1964 = vmatprep.mubr.bf16.mxu0 %v798
      %1965 = vmatmul.mubr.bf16.gmra.mrb[0].mxu0 %v797
      %v1966 = vpop.f32.mrb[0].mxu0
      %v1967 = vadd.f32 %v1878, %v1966
      %v1968 = vpop.f32.mrb[0].mxu0
      %v1969 = vpop.f32.mrb[0].mxu0
      %v1970 = vadd.f32 %v1881, %v1969
      %v1971 = vpop.f32.mrb[0].mxu0
      %1972 = vmatprep.mubr.bf16.mxu0 %v811
      %1973 = vmatmul.mubr.bf16.gmra.mrb[0].mxu0 %v810
      %v1974 = vpop.f32.mrb[0].mxu0
      %v1975 = vadd.f32 %v1886, %v1974
      %v1976 = vpop.f32.mrb[0].mxu0
      %v1977 = vpop.f32.mrb[0].mxu0
      %v1978 = vadd.f32 %v1889, %v1977
      %v1979 = vpop.f32.mrb[0].mxu0
      %1980 = vmatprep.mubr.bf16.mxu0 %v824
      %1981 = vmatmul.mubr.bf16.gmra.mrb[0].mxu0 %v823
      %v1982 = vpop.f32.mrb[0].mxu0
      %v1983 = vadd.f32 %v1894, %v1982
      %v1984 = vpop.f32.mrb[0].mxu0
      %v1985 = vpop.f32.mrb[0].mxu0
      %v1986 = vadd.f32 %v1897, %v1985
      %v1987 = vpop.f32.mrb[0].mxu0
      %1988 = vmatprep.mubr.bf16.mxu0 %v837
      %1989 = vmatmul.mubr.bf16.gmra.mrb[0].mxu0 %v836
      %v1990 = vpop.f32.mrb[0].mxu0
      %v1991 = vadd.f32 %v1902, %v1990
      %v1992 = vpop.f32.mrb[0].mxu0
      %v1993 = vpop.f32.mrb[0].mxu0
      %v1994 = vadd.f32 %v1905, %v1993
      %v1995 = vpop.f32.mrb[0].mxu0
      %1996 = vmatprep.mubr.bf16.mxu0 %v850
      %1997 = vmatmul.mubr.bf16.gmra.mrb[0].mxu0 %v849
      %v1998 = vpop.f32.mrb[0].mxu0
      %v1999 = vadd.f32 %v1910, %v1998
      %v2000 = vpop.f32.mrb[0].mxu0
      %v2001 = vpop.f32.mrb[0].mxu0
      %v2002 = vadd.f32 %v1913, %v2001
      %v2003 = vpop.f32.mrb[0].mxu0
      %2004 = vdwg.mxu0
      %2005 = vmatprep.subr.bf16.mxu0 0
      %2006 = vmatpush1.bf16.msra.mxu0 %v1418
      %2007 = vmatprep.subr.bf16.mxu0 0
      %2008 = vmatpush1.bf16.msra.mxu0 %v1419
      %2009 = vmatprep.subr.bf16.mxu0 0
      %2010 = vmatpush1.bf16.msra.mxu0 %v1420
      %2011 = vmatprep.subr.bf16.mxu0 0
      %2012 = vmatpush1.bf16.msra.mxu0 %v1421
      %2013 = vmatprep.subr.bf16.mxu0 0
      %2014 = vmatpush1.bf16.msra.mxu0 %v1422
      %2015 = vmatprep.subr.bf16.mxu0 0
      %2016 = vmatpush1.bf16.msra.mxu0 %v1423
      %2017 = vmatprep.subr.bf16.mxu0 0
      %2018 = vmatpush1.bf16.msra.mxu0 %v1424
      %2019 = vmatprep.subr.bf16.mxu0 0
      %2020 = vmatpush1.bf16.msra.mxu0 %v1425
      %2021 = vmatprep.subr.bf16.mxu0 0
      %2022 = vmatpush1.bf16.msra.mxu0 %v1426
      %2023 = vmatprep.subr.bf16.mxu0 0
      %2024 = vmatpush1.bf16.msra.mxu0 %v1427
      %2025 = vmatprep.subr.bf16.mxu0 0
      %2026 = vmatpush1.bf16.msra.mxu0 %v1428
      %2027 = vmatprep.subr.bf16.mxu0 0
      %2028 = vmatpush1.bf16.msra.mxu0 %v1429
      %2029 = vmatprep.subr.bf16.mxu0 0
      %2030 = vmatpush1.bf16.msra.mxu0 %v1430
      %2031 = vmatprep.subr.bf16.mxu0 0
      %2032 = vmatpush1.bf16.msra.mxu0 %v1431
      %2033 = vmatprep.subr.bf16.mxu0 0
      %2034 = vmatpush1.bf16.msra.mxu0 %v1432
      %2035 = vmatprep.subr.bf16.mxu0 0
      %2036 = vmatpush1.bf16.msra.mxu0 %v1433
      %2037 = vmatprep.mubr.bf16.mxu0 %v774
      %2038 = vmatmul.mubr.bf16.gmra.mrb[0].mxu0 %v773
      %v2039 = vpop.f32.mrb[0].mxu0
      %v2040 = vadd.f32 %v1951, %v2039
      %v2041 = vpop.f32.mrb[0].mxu0
      %v2042 = vpop.f32.mrb[0].mxu0
      %v2043 = vadd.f32 %v1954, %v2042
      %v2044 = vpop.f32.mrb[0].mxu0
      %2045 = vmatprep.mubr.bf16.mxu0 %v787
      %2046 = vmatmul.mubr.bf16.gmra.mrb[0].mxu0 %v786
      %v2047 = vpop.f32.mrb[0].mxu0
      %v2048 = vadd.f32 %v1959, %v2047
      %v2049 = vpop.f32.mrb[0].mxu0
      %v2050 = vpop.f32.mrb[0].mxu0
      %v2051 = vadd.f32 %v1962, %v2050
      %v2052 = vpop.f32.mrb[0].mxu0
      %2053 = vmatprep.mubr.bf16.mxu0 %v800
      %2054 = vmatmul.mubr.bf16.gmra.mrb[0].mxu0 %v799
      %v2055 = vpop.f32.mrb[0].mxu0
      %v2056 = vadd.f32 %v1967, %v2055
      %v2057 = vpop.f32.mrb[0].mxu0
      %v2058 = vpop.f32.mrb[0].mxu0
      %v2059 = vadd.f32 %v1970, %v2058
      %v2060 = vpop.f32.mrb[0].mxu0
      %2061 = vmatprep.mubr.bf16.mxu0 %v813
      %2062 = vmatmul.mubr.bf16.gmra.mrb[0].mxu0 %v812
      %v2063 = vpop.f32.mrb[0].mxu0
      %v2064 = vadd.f32 %v1975, %v2063
      %v2065 = vpop.f32.mrb[0].mxu0
      %v2066 = vpop.f32.mrb[0].mxu0
      %v2067 = vadd.f32 %v1978, %v2066
      %v2068 = vpop.f32.mrb[0].mxu0
      %2069 = vmatprep.mubr.bf16.mxu0 %v826
      %2070 = vmatmul.mubr.bf16.gmra.mrb[0].mxu0 %v825
      %v2071 = vpop.f32.mrb[0].mxu0
      %v2072 = vadd.f32 %v1983, %v2071
      %v2073 = vpop.f32.mrb[0].mxu0
      %v2074 = vpop.f32.mrb[0].mxu0
      %v2075 = vadd.f32 %v1986, %v2074
      %v2076 = vpop.f32.mrb[0].mxu0
      %2077 = vmatprep.mubr.bf16.mxu0 %v839
      %2078 = vmatmul.mubr.bf16.gmra.mrb[0].mxu0 %v838
      %v2079 = vpop.f32.mrb[0].mxu0
      %v2080 = vadd.f32 %v1991, %v2079
      %v2081 = vpop.f32.mrb[0].mxu0
      %v2082 = vpop.f32.mrb[0].mxu0
      %v2083 = vadd.f32 %v1994, %v2082
      %v2084 = vpop.f32.mrb[0].mxu0
      %2085 = vmatprep.mubr.bf16.mxu0 %v852
      %2086 = vmatmul.mubr.bf16.gmra.mrb[0].mxu0 %v851
      %v2087 = vpop.f32.mrb[0].mxu0
      %v2088 = vadd.f32 %v1999, %v2087
      %v2089 = vpop.f32.mrb[0].mxu0
      %v2090 = vpop.f32.mrb[0].mxu0
      %v2091 = vadd.f32 %v2002, %v2090
      %v2092 = vpop.f32.mrb[0].mxu0
      %2093 = vdwg.mxu0
      %2094 = vmatprep.subr.bf16.mxu0 0
      %2095 = vmatpush1.bf16.msra.mxu0 %v1434
      %2096 = vmatprep.subr.bf16.mxu0 0
      %2097 = vmatpush1.bf16.msra.mxu0 %v1435
      %2098 = vmatprep.subr.bf16.mxu0 0
      %2099 = vmatpush1.bf16.msra.mxu0 %v1436
      %2100 = vmatprep.subr.bf16.mxu0 0
      %2101 = vmatpush1.bf16.msra.mxu0 %v1437
      %2102 = vmatprep.subr.bf16.mxu0 0
      %2103 = vmatpush1.bf16.msra.mxu0 0
      %2104 = vmatprep.subr.bf16.mxu0 0
      %2105 = vmatpush1.bf16.msra.mxu0 0
      %2106 = vmatprep.subr.bf16.mxu0 0
      %2107 = vmatpush1.bf16.msra.mxu0 0
      %2108 = vmatprep.subr.bf16.mxu0 0
      %2109 = vmatpush1.bf16.msra.mxu0 0
      %2110 = vmatprep.subr.bf16.mxu0 0
      %2111 = vmatpush1.bf16.msra.mxu0 0
      %2112 = vmatprep.subr.bf16.mxu0 0
      %2113 = vmatpush1.bf16.msra.mxu0 0
      %2114 = vmatprep.subr.bf16.mxu0 0
      %2115 = vmatpush1.bf16.msra.mxu0 0
      %2116 = vmatprep.subr.bf16.mxu0 0
      %2117 = vmatpush1.bf16.msra.mxu0 0
      %2118 = vmatprep.subr.bf16.mxu0 0
      %2119 = vmatpush1.bf16.msra.mxu0 0
      %2120 = vmatprep.subr.bf16.mxu0 0
      %2121 = vmatpush1.bf16.msra.mxu0 0
      %2122 = vmatprep.subr.bf16.mxu0 0
      %2123 = vmatpush1.bf16.msra.mxu0 0
      %2124 = vmatprep.subr.bf16.mxu0 0
      %2125 = vmatpush1.bf16.msra.mxu0 0
      %2126 = vmatprep.mubr.bf16.mxu0 0
      %2127 = vmatmul.mubr.bf16.gmra.mrb[0].mxu0 %v1540
      %v2128 = vpop.f32.mrb[0].mxu0
      %v2129 = vadd.f32 %v2040, %v2128
      %v2130 = vpop.f32.mrb[0].mxu0
      %v2131 = vpop.f32.mrb[0].mxu0
      %v2132 = vadd.f32 %v2043, %v2131
      %v2133 = vpop.f32.mrb[0].mxu0
      %2134 = vmatprep.mubr.bf16.mxu0 0
      %2135 = vmatmul.mubr.bf16.gmra.mrb[0].mxu0 %v1543
      %v2136 = vpop.f32.mrb[0].mxu0
      %v2137 = vadd.f32 %v2048, %v2136
      %v2138 = vpop.f32.mrb[0].mxu0
      %v2139 = vpop.f32.mrb[0].mxu0
      %v2140 = vadd.f32 %v2051, %v2139
      %v2141 = vpop.f32.mrb[0].mxu0
      %2142 = vmatprep.mubr.bf16.mxu0 0
      %2143 = vmatmul.mubr.bf16.gmra.mrb[0].mxu0 %v1546
      %v2144 = vpop.f32.mrb[0].mxu0
      %v2145 = vadd.f32 %v2056, %v2144
      %v2146 = vpop.f32.mrb[0].mxu0
      %v2147 = vpop.f32.mrb[0].mxu0
      %v2148 = vadd.f32 %v2059, %v2147
      %v2149 = vpop.f32.mrb[0].mxu0
      %2150 = vmatprep.mubr.bf16.mxu0 0
      %2151 = vmatmul.mubr.bf16.gmra.mrb[0].mxu0 %v1549
      %v2152 = vpop.f32.mrb[0].mxu0
      %v2153 = vadd.f32 %v2064, %v2152
      %v2154 = vpop.f32.mrb[0].mxu0
      %v2155 = vpop.f32.mrb[0].mxu0
      %v2156 = vadd.f32 %v2067, %v2155
      %v2157 = vpop.f32.mrb[0].mxu0
      %2158 = vmatprep.mubr.bf16.mxu0 0
      %2159 = vmatmul.mubr.bf16.gmra.mrb[0].mxu0 %v1552
      %v2160 = vpop.f32.mrb[0].mxu0
      %v2161 = vadd.f32 %v2072, %v2160
      %v2162 = vpop.f32.mrb[0].mxu0
      %v2163 = vpop.f32.mrb[0].mxu0
      %v2164 = vadd.f32 %v2075, %v2163
      %v2165 = vpop.f32.mrb[0].mxu0
      %2166 = vmatprep.mubr.bf16.mxu0 0
      %2167 = vmatmul.mubr.bf16.gmra.mrb[0].mxu0 %v1555
      %v2168 = vpop.f32.mrb[0].mxu0
      %v2169 = vadd.f32 %v2080, %v2168
      %v2170 = vpop.f32.mrb[0].mxu0
      %v2171 = vpop.f32.mrb[0].mxu0
      %v2172 = vadd.f32 %v2083, %v2171
      %v2173 = vpop.f32.mrb[0].mxu0
      %2174 = vmatprep.mubr.bf16.mxu0 0
      %2175 = vmatmul.mubr.bf16.gmra.mrb[0].mxu0 %v1558
      %v2176 = vpop.f32.mrb[0].mxu0
      %v2177 = vadd.f32 %v2088, %v2176
      %v2178 = vpop.f32.mrb[0].mxu0
      %v2179 = vpop.f32.mrb[0].mxu0
      %v2180 = vadd.f32 %v2091, %v2179
      %v2181 = vpop.f32.mrb[0].mxu0
      %2182 = vdwg.mxu0
      %v2183 = vmul.f32 %v2129, 0.2
      %v2184 = vmul.f32 %v2132, 0.2
      %v2185 = vmul.f32 %v2137, 0.2
      %v2186 = vmul.f32 %v2140, 0.2
      %v2187 = vmul.f32 %v2145, 0.2
      %v2188 = vmul.f32 %v2148, 0.2
      %v2189 = vmul.f32 %v2153, 0.2
      %v2190 = vmul.f32 %v2156, 0.2
      %v2191 = vmul.f32 %v2161, 0.2
      %v2192 = vmul.f32 %v2164, 0.2
      %v2193 = vmul.f32 %v2169, 0.2
      %v2194 = vmul.f32 %v2172, 0.2
      %v2195 = vmul.f32 %v2177, 0.2
      %v2196 = vmul.f32 %v2180, 0.2
      %v2197 = vmax.f32 %v2129, %v2183
      %v2198 = vmax.f32 %v2132, %v2184
      %v2199 = vmax.f32 %v2137, %v2185
      %v2200 = vmax.f32 %v2140, %v2186
      %v2201 = vmax.f32 %v2145, %v2187
      %v2202 = vmax.f32 %v2148, %v2188
      %v2203 = vmax.f32 %v2153, %v2189
      %v2204 = vmax.f32 %v2156, %v2190
      %v2205 = vmax.f32 %v2161, %v2191
      %v2206 = vmax.f32 %v2164, %v2192
      %v2207 = vmax.f32 %v2169, %v2193
      %v2208 = vmax.f32 %v2172, %v2194
      %v2209 = vmax.f32 %v2177, %v2195
      %v2210 = vmax.f32 %v2180, %v2196
      %v2211 = vpack.c.bf16 %v2198, %v2197
      %v2212 = vpack.c.bf16 %v2200, %v2199
      %v2213 = vpack.c.bf16 %v2202, %v2201
      %v2214 = vpack.c.bf16 %v2204, %v2203
      %v2215 = vpack.c.bf16 %v2206, %v2205
      %v2216 = vpack.c.bf16 %v2208, %v2207
      %v2217 = vpack.c.bf16 %v2210, %v2209
      %v2225 = vunpack.c.l.b16 %v2211
      %v2226 = vunpack.c.h.b16 %v2211
      %v2227 = vunpack.c.l.b16 %v2212
      %v2228 = vunpack.c.h.b16 %v2212
      %v2229 = vunpack.c.l.b16 %v2213
      %v2230 = vunpack.c.h.b16 %v2213
      %v2231 = vunpack.c.l.b16 %v2214
      %v2232 = vunpack.c.h.b16 %v2214
      %v2233 = vunpack.c.l.b16 %v2215
      %v2234 = vunpack.c.h.b16 %v2215
      %v2235 = vunpack.c.l.b16 %v2216
      %v2236 = vunpack.c.h.b16 %v2216
      %v2237 = vunpack.c.l.b16 %v2217
      %v2238 = vunpack.c.h.b16 %v2217
      %v2239 = vpack.c.b16 %v2225, %v2225
      %v2240 = vpack.c.b16 %v2226, %v2226
      %v2241 = vpack.c.b16 %v2227, %v2227
      %v2242 = vpack.c.b16 %v2228, %v2228
      %v2243 = vpack.c.b16 %v2229, %v2229
      %v2244 = vpack.c.b16 %v2230, %v2230
      %v2245 = vpack.c.b16 %v2231, %v2231
      %v2246 = vpack.c.b16 %v2232, %v2232
      %v2247 = vpack.c.b16 %v2233, %v2233
      %v2248 = vpack.c.b16 %v2234, %v2234
      %v2249 = vpack.c.b16 %v2235, %v2235
      %v2250 = vpack.c.b16 %v2236, %v2236
      %v2251 = vpack.c.b16 %v2237, %v2237
      %v2252 = vpack.c.b16 %v2238, %v2238
      %2267 = vst [vmem:[%s175] sm:$0xf] %v2239
      %2268 = vst [vmem:[%s175 + $0x4] sm:$0xf] %v2240
      %2269 = vst [vmem:[%s175 + $0x8] sm:$0xf] %v2241
      %2270 = vst [vmem:[%s175 + $0xc] sm:$0xf] %v2242
      %2271 = vst [vmem:[%s175 + $0x10] sm:$0xf] %v2243
      %2272 = vst [vmem:[%s175 + $0x14] sm:$0xf] %v2244
      %2273 = vst [vmem:[%s175 + $0x18] sm:$0xf] %v2245
      %2274 = vst [vmem:[%s175 + $0x1c] sm:$0xf] %v2246
      %2275 = vst [vmem:[%s175 + $0x20] sm:$0xf] %v2247
      %2276 = vst [vmem:[%s175 + $0x24] sm:$0xf] %v2248
      %2277 = vst [vmem:[%s175 + $0x28] sm:$0xf] %v2249
      %2278 = vst [vmem:[%s175 + $0x2c] sm:$0xf] %v2250
      %2279 = vst [vmem:[%s175 + $0x30] sm:$0xf] %v2251
      %2280 = vst [vmem:[%s175 + $0x34] sm:$0xf] %v2252
      %s2281 = smul.u32 14, %s14
      %p2282 = scmp.lt.s32.totalorder %s2281, 55
      %s2283 = scalar_select %p2282, %s2281, 55
      %s2284 = smul.addr %s2283, 4
      %s2285 = scalar_lea.vmem %s3, %s2284
      // Predicated region
      $region33: #{discriminator_forward.7} parent=31 // pred_check
        %p2286 = pneg %p100
      $region34: #{discriminator_forward.7} parent=31 // pred_check_branch
        %2288 = sbr.rel (%p2286) target = $region36
      $region35: #{discriminator_forward.7} parent=31 // pred_region
        %s2289 = smul.u32 14, %s14
      $region36: #{discriminator_forward.7} parent=31 // pred_fallthru
        _
    $region32: #{discriminator_forward.7} parent=5 // pred_fallthru
      _
    %p2290 = scmp.le.s32.totalorder 2, %s9
    // Predicated region
    $region37: #{discriminator_forward.7} parent=5 // pred_check
      %p2291 = pneg %p2290
    $region38: #{discriminator_forward.7} parent=5 // pred_check_branch
      %2293 = sbr.rel (%p2291) target = $region40
    $region39: #{discriminator_forward.7} parent=5 // pred_region
      %s2294 = ssub.s32 %s9, 2
      // Predicated region
      $region41: #{discriminator_forward.7} parent=39 // pred_check
        %p2295 = pneg %p106
      $region42: #{discriminator_forward.7} parent=39 // pred_check_branch
        %2297 = sbr.rel (%p2295) target = $region44
      $region43: #{discriminator_forward.7} parent=39 // pred_region
        %s2298 = smul.u32 14, %s15
        %p2299 = scmp.lt.s32.totalorder %s2298, 55
        %s2300 = scalar_select %p2299, %s2298, 55
        %s2301 = smul.addr %s2300, 4
        %s2302 = scalar_lea.vmem %s3, %s2301
      $region44: #{discriminator_forward.7} parent=39 // pred_fallthru
        _
    $region40: #{discriminator_forward.7} parent=5 // pred_fallthru
      _
  $region6: #{discriminator_forward.7} parent=0 // loop_footer
    %s13 = sadd.s32 1, %s9
  $region7: #{discriminator_forward.7} parent=0 // loop_footer_branch
    %8 = sbr.rel target = $region3
  $region8: #{discriminator_forward.7} parent=0 // loop_exit
    _

// kernel: discriminator_forward.8
$region0: #{discriminator_forward.8}
  #allocation0 [shape = 'u32[]', space=smem, size = 0x4, offset = 0x4, fixed_abs, tag = 'smem constant byte address 0x4 - core index']
  #allocation1 [shape = 'u32[144,128]{1,0:T(1,128)}', space=vmem, size = 0x12000, scoped, tag = 'internal scratch']
  %s0 = inlined_call_operand.vmem [shape: bf16[256,1600], index: 0, kind: input, shape index: {}]
  %s1 = inlined_call_operand.vmem [shape: bf16[1600,128], index: 1, kind: input, shape index: {}]
  %s2 = inlined_call_operand.vmem [shape: f32[1,128], index: 2, kind: input, shape index: {}]
  %s3 = inlined_call_operand.vmem [shape: bf16[256,128], index: 3, kind: output, shape index: {}]
  %s4 = sld [smem:[#allocation0]]
  $region45: #{discriminator_forward.8} parent=0
    _
  %s6 = ssub.s32 1, %s4
  %s7 = scalar_select 0, %s6, %s4
  loop: start=0, step=1, limit=6
  $region2: #{discriminator_forward.8} parent=0 // loop_pre_header
    _
  $region3: #{discriminator_forward.8} parent=0 // loop_header
    %s9 = sphi 0, %s13
    %p10 = scmp.ge.s32.totalorder %s9, 6
    %s19 = sphi 0, %s21
    %s22 = sphi 0, %s19
    %s23 = sphi 0, %s22
    %s39 = sphi 0, %s23
    %s43 = sphi 0, %s43
    %s45 = sphi 0, %s43
    %s46 = sphi 0, %s45
    %s60 = sphi 0, %s46
    %s64 = sphi 0, %s64
    %s66 = sphi 0, %s64
    %s67 = sphi 0, %s66
    %s81 = sphi 0, %s67
    %s87 = sphi 0, %s89
    %s90 = sphi 0, %s87
    %s91 = sphi 0, %s90
    %s107 = sphi 0, %s91
  $region4: #{discriminator_forward.8} parent=0 // loop_header_branch
    %12 = sbr.rel (%p10) target = $region8
  $region5: #{discriminator_forward.8} parent=0 // loop_body
    %s14 = ssub.s32 %s9, 1
    %s15 = ssub.s32 %s9, 2
    %s16 = sadd.s32 %s9, 1
    %s17 = ssub.s32 %s9, %s16
    %p18 = scmp.eq.s32.totalorder %s17, 0
    %s20 = sadd.s32 %s19, 1
    %s21 = scalar_select %p18, %s19, %s20
    %p24 = pneg %p18
    %p25 = scmp.eq.s32.totalorder %s9, 3
    %p26 = por %p24, %p25
    %p27 = scmp.ne.s32.totalorder %s19, %s22
    %p28 = scmp.eq.s32.totalorder %s9, 0
    %p29 = por %p27, %p28
    %p30 = scmp.ne.s32.totalorder %s19, %s22
    %p31 = scmp.eq.s32.totalorder %s14, 3
    %p32 = por %p30, %p31
    %p33 = scmp.ne.s32.totalorder %s22, %s23
    %p34 = scmp.eq.s32.totalorder %s14, 0
    %p35 = por %p33, %p34
    %p36 = scmp.ne.s32.totalorder %s22, %s23
    %p37 = scmp.eq.s32.totalorder %s15, 3
    %p38 = por %p36, %p37
    %p40 = scmp.ne.s32.totalorder %s23, %s39
    %p41 = scmp.eq.s32.totalorder %s15, 0
    %p42 = por %p40, %p41
    %s44 = sadd.s32 %s43, 1
    %p47 = scmp.eq.s32.totalorder %s9, 3
    %p48 = scmp.ne.s32.totalorder %s43, %s45
    %p49 = scmp.eq.s32.totalorder %s9, 0
    %p50 = por %p48, %p49
    %p51 = scmp.ne.s32.totalorder %s43, %s45
    %p52 = scmp.eq.s32.totalorder %s14, 3
    %p53 = por %p51, %p52
    %p54 = scmp.ne.s32.totalorder %s45, %s46
    %p55 = scmp.eq.s32.totalorder %s14, 0
    %p56 = por %p54, %p55
    %p57 = scmp.ne.s32.totalorder %s45, %s46
    %p58 = scmp.eq.s32.totalorder %s15, 3
    %p59 = por %p57, %p58
    %p61 = scmp.ne.s32.totalorder %s46, %s60
    %p62 = scmp.eq.s32.totalorder %s15, 0
    %p63 = por %p61, %p62
    %s65 = sadd.s32 %s64, 1
    %p68 = scmp.eq.s32.totalorder %s9, 3
    %p69 = scmp.ne.s32.totalorder %s64, %s66
    %p70 = scmp.eq.s32.totalorder %s9, 0
    %p71 = por %p69, %p70
    %p72 = scmp.ne.s32.totalorder %s64, %s66
    %p73 = scmp.eq.s32.totalorder %s14, 3
    %p74 = por %p72, %p73
    %p75 = scmp.ne.s32.totalorder %s66, %s67
    %p76 = scmp.eq.s32.totalorder %s14, 0
    %p77 = por %p75, %p76
    %p78 = scmp.ne.s32.totalorder %s66, %s67
    %p79 = scmp.eq.s32.totalorder %s15, 3
    %p80 = por %p78, %p79
    %p82 = scmp.ne.s32.totalorder %s67, %s81
    %p83 = scmp.eq.s32.totalorder %s15, 0
    %p84 = por %p82, %p83
    %s85 = ssub.s32 %s9, %s16
    %p86 = scmp.eq.s32.totalorder %s85, 0
    %s88 = sadd.s32 %s87, 1
    %s89 = scalar_select %p86, %s87, %s88
    %p92 = pneg %p86
    %p93 = scmp.eq.s32.totalorder %s9, 3
    %p94 = por %p92, %p93
    %p95 = scmp.ne.s32.totalorder %s87, %s90
    %p96 = scmp.eq.s32.totalorder %s9, 0
    %p97 = por %p95, %p96
    %p98 = scmp.ne.s32.totalorder %s87, %s90
    %p99 = scmp.eq.s32.totalorder %s14, 3
    %p100 = por %p98, %p99
    %p101 = scmp.ne.s32.totalorder %s90, %s91
    %p102 = scmp.eq.s32.totalorder %s14, 0
    %p103 = por %p101, %p102
    %p104 = scmp.ne.s32.totalorder %s90, %s91
    %p105 = scmp.eq.s32.totalorder %s15, 3
    %p106 = por %p104, %p105
    %p108 = scmp.ne.s32.totalorder %s91, %s107
    %p109 = scmp.eq.s32.totalorder %s15, 0
    %p110 = por %p108, %p109
    %p111 = scmp.le.s32.totalorder 1, %s9
    %p112 = scmp.lt.s32.totalorder %s9, 5
    %p113 = pnand %p111, %p112
    %p114 = pneg %p113
    // Predicated region
    $region9: #{discriminator_forward.8} parent=5 // pred_check
      _
    $region10: #{discriminator_forward.8} parent=5 // pred_check_branch
      %116 = sbr.rel (%p113) target = $region12
    $region11: #{discriminator_forward.8} parent=5 // pred_region
      %s117 = ssub.s32 %s9, 1
      // Predicated region
      $region13: #{discriminator_forward.8} parent=11 // pred_check
        %p118 = pneg %p56
      $region14: #{discriminator_forward.8} parent=11 // pred_check_branch
        %120 = sbr.rel (%p118) target = $region16
      $region15: #{discriminator_forward.8} parent=11 // pred_region
        _
      $region16: #{discriminator_forward.8} parent=11 // pred_fallthru
        _
      // Predicated region
      $region17: #{discriminator_forward.8} parent=11 // pred_check
        %p121 = pneg %p77
      $region18: #{discriminator_forward.8} parent=11 // pred_check_branch
        %123 = sbr.rel (%p121) target = $region20
      $region19: #{discriminator_forward.8} parent=11 // pred_region
        _
      $region20: #{discriminator_forward.8} parent=11 // pred_fallthru
        _
    $region12: #{discriminator_forward.8} parent=5 // pred_fallthru
      _
    %p124 = scmp.lt.s32.totalorder %s9, 4
    // Predicated region
    $region21: #{discriminator_forward.8} parent=5 // pred_check
      %p125 = pneg %p124
    $region22: #{discriminator_forward.8} parent=5 // pred_check_branch
      %127 = sbr.rel (%p125) target = $region24
    $region23: #{discriminator_forward.8} parent=5 // pred_region
      // Predicated region
      $region25: #{discriminator_forward.8} parent=23 // pred_check
        %p128 = pneg %p29
      $region26: #{discriminator_forward.8} parent=23 // pred_check_branch
        %130 = sbr.rel (%p128) target = $region28
      $region27: #{discriminator_forward.8} parent=23 // pred_region
        %s131 = smul.u32 8, %s9
        %p132 = scmp.lt.s32.totalorder %s131, 31
        %s133 = scalar_select %p132, %s131, 31
        %s134 = smul.addr %s133, 13
        %s135 = smul.addr %s134, 4
        %s136 = scalar_lea.vmem %s0, %s135
        %s137 = smul.u32 8, %s9
      $region28: #{discriminator_forward.8} parent=23 // pred_fallthru
        _
    $region24: #{discriminator_forward.8} parent=5 // pred_fallthru
      _
    %p138 = scmp.le.s32.totalorder 1, %s9
    %p139 = scmp.lt.s32.totalorder %s9, 5
    %p140 = pnand %p138, %p139
    %p141 = pneg %p140
    // Predicated region
    $region29: #{discriminator_forward.8} parent=5 // pred_check
      _
    $region30: #{discriminator_forward.8} parent=5 // pred_check_branch
      %143 = sbr.rel (%p140) target = $region32
    $region31: #{discriminator_forward.8} parent=5 // pred_region
      %s144 = ssub.s32 %s9, 1
      %s145 = smul.u32 8, %s14
      %p146 = scmp.lt.s32.totalorder %s145, 31
      %s147 = scalar_select %p146, %s145, 31
      %s148 = smul.addr %s147, 13
      %s149 = smul.addr %s148, 4
      %s150 = scalar_lea.vmem %s0, %s149
      %p151 = pneg %p35
      %p152 = pneg %p32
      %p153 = pneg %p56
      %p154 = pneg %p53
      %p155 = pneg %p77
      %p156 = pneg %p74
      %p157 = pneg %p103
      %p158 = pneg %p100
      %s159 = smul.u32 8, %s14
      %p160 = scmp.lt.s32.totalorder %s159, 31
      %s161 = scalar_select %p160, %s159, 31
      %s162 = smul.addr %s161, 4
      %s163 = scalar_lea.vmem %s3, %s162
      %s164 = smul.u32 8, %s14
      %p165 = scmp.lt.s32.totalorder %s164, 31
      %s166 = scalar_select %p165, %s164, 31
      %s167 = smul.addr %s166, 13
      %s168 = smul.addr %s167, 4
      %s169 = scalar_lea.vmem %s0, %s168
      %s170 = smul.u32 8, %s14
      %s171 = smul.u32 8, %s14
      %p172 = scmp.lt.s32.totalorder %s171, 31
      %s173 = scalar_select %p172, %s171, 31
      %s174 = smul.addr %s173, 4
      %s175 = scalar_lea.vmem %s3, %s174
      %s176 = smul.u32 8, %s14
      %v178 = vld [vmem:[%s169] sm:$0xff]
      %v179 = vld [vmem:[%s169 + $0x8] sm:$0xff]
      %v180 = vld [vmem:[%s169 + $0x10] sm:$0xff]
      %v181 = vld [vmem:[%s169 + $0x18] sm:$0xff]
      %v182 = vld [vmem:[%s169 + $0x20] sm:$0xff]
      %v183 = vld [vmem:[%s169 + $0x28] sm:$0xff]
      %v184 = vld [vmem:[%s169 + $0x30] sm:$0xf]
      %v185 = vld [vmem:[%s169 + $0x34] sm:$0xff]
      %v186 = vld [vmem:[%s169 + $0x3c] sm:$0xff]
      %v187 = vld [vmem:[%s169 + $0x44] sm:$0xff]
      %v188 = vld [vmem:[%s169 + $0x4c] sm:$0xff]
      %v189 = vld [vmem:[%s169 + $0x54] sm:$0xff]
      %v190 = vld [vmem:[%s169 + $0x5c] sm:$0xff]
      %v191 = vld [vmem:[%s169 + $0x64] sm:$0xf]
      %v192 = vld [vmem:[%s169 + $0x68] sm:$0xff]
      %v193 = vld [vmem:[%s169 + $0x70] sm:$0xff]
      %v194 = vld [vmem:[%s169 + $0x78] sm:$0xff]
      %v195 = vld [vmem:[%s169 + $0x80] sm:$0xff]
      %v196 = vld [vmem:[%s169 + $0x88] sm:$0xff]
      %v197 = vld [vmem:[%s169 + $0x90] sm:$0xff]
      %v198 = vld [vmem:[%s169 + $0x98] sm:$0xf]
      %v199 = vld [vmem:[%s169 + $0x9c] sm:$0xff]
      %v200 = vld [vmem:[%s169 + $0xa4] sm:$0xff]
      %v201 = vld [vmem:[%s169 + $0xac] sm:$0xff]
      %v202 = vld [vmem:[%s169 + $0xb4] sm:$0xff]
      %v203 = vld [vmem:[%s169 + $0xbc] sm:$0xff]
      %v204 = vld [vmem:[%s169 + $0xc4] sm:$0xff]
      %v205 = vld [vmem:[%s169 + $0xcc] sm:$0xf]
      %v206 = vld [vmem:[%s169 + $0xd0] sm:$0xff]
      %v207 = vld [vmem:[%s169 + $0xd8] sm:$0xff]
      %v208 = vld [vmem:[%s169 + $0xe0] sm:$0xff]
      %v209 = vld [vmem:[%s169 + $0xe8] sm:$0xff]
      %v210 = vld [vmem:[%s169 + $0xf0] sm:$0xff]
      %v211 = vld [vmem:[%s169 + $0xf8] sm:$0xff]
      %v212 = vld [vmem:[%s169 + $0x100] sm:$0xf]
      %v213 = vld [vmem:[%s169 + $0x104] sm:$0xff]
      %v214 = vld [vmem:[%s169 + $0x10c] sm:$0xff]
      %v215 = vld [vmem:[%s169 + $0x114] sm:$0xff]
      %v216 = vld [vmem:[%s169 + $0x11c] sm:$0xff]
      %v217 = vld [vmem:[%s169 + $0x124] sm:$0xff]
      %v218 = vld [vmem:[%s169 + $0x12c] sm:$0xff]
      %v219 = vld [vmem:[%s169 + $0x134] sm:$0xf]
      %v220 = vld [vmem:[%s169 + $0x138] sm:$0xff]
      %v221 = vld [vmem:[%s169 + $0x140] sm:$0xff]
      %v222 = vld [vmem:[%s169 + $0x148] sm:$0xff]
      %v223 = vld [vmem:[%s169 + $0x150] sm:$0xff]
      %v224 = vld [vmem:[%s169 + $0x158] sm:$0xff]
      %v225 = vld [vmem:[%s169 + $0x160] sm:$0xff]
      %v226 = vld [vmem:[%s169 + $0x168] sm:$0xf]
      %v227 = vld [vmem:[%s169 + $0x16c] sm:$0xff]
      %v228 = vld [vmem:[%s169 + $0x174] sm:$0xff]
      %v229 = vld [vmem:[%s169 + $0x17c] sm:$0xff]
      %v230 = vld [vmem:[%s169 + $0x184] sm:$0xff]
      %v231 = vld [vmem:[%s169 + $0x18c] sm:$0xff]
      %v232 = vld [vmem:[%s169 + $0x194] sm:$0xff]
      %v233 = vld [vmem:[%s169 + $0x19c] sm:$0xf]
      %v234 = vld [vmem:[%s1] sm:$0xf]
      %v235 = vld [vmem:[%s1 + $0x4] sm:$0xf]
      %v236 = vld [vmem:[%s1 + $0x8] sm:$0xf]
      %v237 = vld [vmem:[%s1 + $0xc] sm:$0xf]
      %v238 = vld [vmem:[%s1 + $0x10] sm:$0xf]
      %v239 = vld [vmem:[%s1 + $0x14] sm:$0xf]
      %v240 = vld [vmem:[%s1 + $0x18] sm:$0xf]
      %v241 = vld [vmem:[%s1 + $0x1c] sm:$0xf]
      %v242 = vld [vmem:[%s1 + $0x20] sm:$0xf]
      %v243 = vld [vmem:[%s1 + $0x24] sm:$0xf]
      %v244 = vld [vmem:[%s1 + $0x28] sm:$0xf]
      %v245 = vld [vmem:[%s1 + $0x2c] sm:$0xf]
      %v246 = vld [vmem:[%s1 + $0x30] sm:$0xf]
      %v247 = vld [vmem:[%s1 + $0x34] sm:$0xf]
      %v248 = vld [vmem:[%s1 + $0x38] sm:$0xf]
      %v249 = vld [vmem:[%s1 + $0x3c] sm:$0xf]
      %v250 = vld [vmem:[%s1 + $0x40] sm:$0xf]
      %v251 = vld [vmem:[%s1 + $0x44] sm:$0xf]
      %v252 = vld [vmem:[%s1 + $0x48] sm:$0xf]
      %v253 = vld [vmem:[%s1 + $0x4c] sm:$0xf]
      %v254 = vld [vmem:[%s1 + $0x50] sm:$0xf]
      %v255 = vld [vmem:[%s1 + $0x54] sm:$0xf]
      %v256 = vld [vmem:[%s1 + $0x58] sm:$0xf]
      %v257 = vld [vmem:[%s1 + $0x5c] sm:$0xf]
      %v258 = vld [vmem:[%s1 + $0x60] sm:$0xf]
      %v259 = vld [vmem:[%s1 + $0x64] sm:$0xf]
      %v260 = vld [vmem:[%s1 + $0x68] sm:$0xf]
      %v261 = vld [vmem:[%s1 + $0x6c] sm:$0xf]
      %v262 = vld [vmem:[%s1 + $0x70] sm:$0xf]
      %v263 = vld [vmem:[%s1 + $0x74] sm:$0xf]
      %v264 = vld [vmem:[%s1 + $0x78] sm:$0xf]
      %v265 = vld [vmem:[%s1 + $0x7c] sm:$0xf]
      %v266 = vld [vmem:[%s1 + $0x80] sm:$0xf]
      %v267 = vld [vmem:[%s1 + $0x84] sm:$0xf]
      %v268 = vld [vmem:[%s1 + $0x88] sm:$0xf]
      %v269 = vld [vmem:[%s1 + $0x8c] sm:$0xf]
      %v270 = vld [vmem:[%s1 + $0x90] sm:$0xf]
      %v271 = vld [vmem:[%s1 + $0x94] sm:$0xf]
      %v272 = vld [vmem:[%s1 + $0x98] sm:$0xf]
      %v273 = vld [vmem:[%s1 + $0x9c] sm:$0xf]
      %v274 = vld [vmem:[%s1 + $0xa0] sm:$0xf]
      %v275 = vld [vmem:[%s1 + $0xa4] sm:$0xf]
      %v276 = vld [vmem:[%s1 + $0xa8] sm:$0xf]
      %v277 = vld [vmem:[%s1 + $0xac] sm:$0xf]
      %v278 = vld [vmem:[%s1 + $0xb0] sm:$0xf]
      %v279 = vld [vmem:[%s1 + $0xb4] sm:$0xf]
      %v280 = vld [vmem:[%s1 + $0xb8] sm:$0xf]
      %v281 = vld [vmem:[%s1 + $0xbc] sm:$0xf]
      %v282 = vld [vmem:[%s1 + $0xc0] sm:$0xf]
      %v283 = vld [vmem:[%s1 + $0xc4] sm:$0xf]
      %v284 = vld [vmem:[%s1 + $0xc8] sm:$0xf]
      %v285 = vld [vmem:[%s1 + $0xcc] sm:$0xf]
      %v286 = vld [vmem:[%s1 + $0xd0] sm:$0xf]
      %v287 = vld [vmem:[%s1 + $0xd4] sm:$0xf]
      %v288 = vld [vmem:[%s1 + $0xd8] sm:$0xf]
      %v289 = vld [vmem:[%s1 + $0xdc] sm:$0xf]
      %v290 = vld [vmem:[%s1 + $0xe0] sm:$0xf]
      %v291 = vld [vmem:[%s1 + $0xe4] sm:$0xf]
      %v292 = vld [vmem:[%s1 + $0xe8] sm:$0xf]
      %v293 = vld [vmem:[%s1 + $0xec] sm:$0xf]
      %v294 = vld [vmem:[%s1 + $0xf0] sm:$0xf]
      %v295 = vld [vmem:[%s1 + $0xf4] sm:$0xf]
      %v296 = vld [vmem:[%s1 + $0xf8] sm:$0xf]
      %v297 = vld [vmem:[%s1 + $0xfc] sm:$0xf]
      %v298 = vld [vmem:[%s1 + $0x100] sm:$0xf]
      %v299 = vld [vmem:[%s1 + $0x104] sm:$0xf]
      %v300 = vld [vmem:[%s1 + $0x108] sm:$0xf]
      %v301 = vld [vmem:[%s1 + $0x10c] sm:$0xf]
      %v302 = vld [vmem:[%s1 + $0x110] sm:$0xf]
      %v303 = vld [vmem:[%s1 + $0x114] sm:$0xf]
      %v304 = vld [vmem:[%s1 + $0x118] sm:$0xf]
      %v305 = vld [vmem:[%s1 + $0x11c] sm:$0xf]
      %v306 = vld [vmem:[%s1 + $0x120] sm:$0xf]
      %v307 = vld [vmem:[%s1 + $0x124] sm:$0xf]
      %v308 = vld [vmem:[%s1 + $0x128] sm:$0xf]
      %v309 = vld [vmem:[%s1 + $0x12c] sm:$0xf]
      %v310 = vld [vmem:[%s1 + $0x130] sm:$0xf]
      %v311 = vld [vmem:[%s1 + $0x134] sm:$0xf]
      %v312 = vld [vmem:[%s1 + $0x138] sm:$0xf]
      %v313 = vld [vmem:[%s1 + $0x13c] sm:$0xf]
      %v314 = vld [vmem:[%s1 + $0x140] sm:$0xf]
      %v315 = vld [vmem:[%s1 + $0x144] sm:$0xf]
      %v316 = vld [vmem:[%s1 + $0x148] sm:$0xf]
      %v317 = vld [vmem:[%s1 + $0x14c] sm:$0xf]
      %v318 = vld [vmem:[%s1 + $0x150] sm:$0xf]
      %v319 = vld [vmem:[%s1 + $0x154] sm:$0xf]
      %v320 = vld [vmem:[%s1 + $0x158] sm:$0xf]
      %v321 = vld [vmem:[%s1 + $0x15c] sm:$0xf]
      %v322 = vld [vmem:[%s1 + $0x160] sm:$0xf]
      %v323 = vld [vmem:[%s1 + $0x164] sm:$0xf]
      %v324 = vld [vmem:[%s1 + $0x168] sm:$0xf]
      %v325 = vld [vmem:[%s1 + $0x16c] sm:$0xf]
      %v326 = vld [vmem:[%s1 + $0x170] sm:$0xf]
      %v327 = vld [vmem:[%s1 + $0x174] sm:$0xf]
      %v328 = vld [vmem:[%s1 + $0x178] sm:$0xf]
      %v329 = vld [vmem:[%s1 + $0x17c] sm:$0xf]
      %v330 = vld [vmem:[%s1 + $0x180] sm:$0xf]
      %v331 = vld [vmem:[%s1 + $0x184] sm:$0xf]
      %v332 = vld [vmem:[%s1 + $0x188] sm:$0xf]
      %v333 = vld [vmem:[%s1 + $0x18c] sm:$0xf]
      %v334 = vld [vmem:[%s1 + $0x190] sm:$0xf]
      %v335 = vld [vmem:[%s1 + $0x194] sm:$0xf]
      %v336 = vld [vmem:[%s1 + $0x198] sm:$0xf]
      %v337 = vld [vmem:[%s1 + $0x19c] sm:$0xf]
      %v338 = vld [vmem:[%s1 + $0x1a0] sm:$0xf]
      %v339 = vld [vmem:[%s1 + $0x1a4] sm:$0xf]
      %v340 = vld [vmem:[%s1 + $0x1a8] sm:$0xf]
      %v341 = vld [vmem:[%s1 + $0x1ac] sm:$0xf]
      %v342 = vld [vmem:[%s1 + $0x1b0] sm:$0xf]
      %v343 = vld [vmem:[%s1 + $0x1b4] sm:$0xf]
      %v344 = vld [vmem:[%s1 + $0x1b8] sm:$0xf]
      %v345 = vld [vmem:[%s1 + $0x1bc] sm:$0xf]
      %v346 = vld [vmem:[%s1 + $0x1c0] sm:$0xf]
      %v347 = vld [vmem:[%s1 + $0x1c4] sm:$0xf]
      %v348 = vld [vmem:[%s1 + $0x1c8] sm:$0xf]
      %v349 = vld [vmem:[%s1 + $0x1cc] sm:$0xf]
      %v350 = vld [vmem:[%s1 + $0x1d0] sm:$0xf]
      %v351 = vld [vmem:[%s1 + $0x1d4] sm:$0xf]
      %v352 = vld [vmem:[%s1 + $0x1d8] sm:$0xf]
      %v353 = vld [vmem:[%s1 + $0x1dc] sm:$0xf]
      %v354 = vld [vmem:[%s1 + $0x1e0] sm:$0xf]
      %v355 = vld [vmem:[%s1 + $0x1e4] sm:$0xf]
      %v356 = vld [vmem:[%s1 + $0x1e8] sm:$0xf]
      %v357 = vld [vmem:[%s1 + $0x1ec] sm:$0xf]
      %v358 = vld [vmem:[%s1 + $0x1f0] sm:$0xf]
      %v359 = vld [vmem:[%s1 + $0x1f4] sm:$0xf]
      %v360 = vld [vmem:[%s1 + $0x1f8] sm:$0xf]
      %v361 = vld [vmem:[%s1 + $0x1fc] sm:$0xf]
      %v362 = vld [vmem:[%s1 + $0x200] sm:$0xf]
      %v363 = vld [vmem:[%s1 + $0x204] sm:$0xf]
      %v364 = vld [vmem:[%s1 + $0x208] sm:$0xf]
      %v365 = vld [vmem:[%s1 + $0x20c] sm:$0xf]
      %v366 = vld [vmem:[%s1 + $0x210] sm:$0xf]
      %v367 = vld [vmem:[%s1 + $0x214] sm:$0xf]
      %v368 = vld [vmem:[%s1 + $0x218] sm:$0xf]
      %v369 = vld [vmem:[%s1 + $0x21c] sm:$0xf]
      %v370 = vld [vmem:[%s1 + $0x220] sm:$0xf]
      %v371 = vld [vmem:[%s1 + $0x224] sm:$0xf]
      %v372 = vld [vmem:[%s1 + $0x228] sm:$0xf]
      %v373 = vld [vmem:[%s1 + $0x22c] sm:$0xf]
      %v374 = vld [vmem:[%s1 + $0x230] sm:$0xf]
      %v375 = vld [vmem:[%s1 + $0x234] sm:$0xf]
      %v376 = vld [vmem:[%s1 + $0x238] sm:$0xf]
      %v377 = vld [vmem:[%s1 + $0x23c] sm:$0xf]
      %v378 = vld [vmem:[%s1 + $0x240] sm:$0xf]
      %v379 = vld [vmem:[%s1 + $0x244] sm:$0xf]
      %v380 = vld [vmem:[%s1 + $0x248] sm:$0xf]
      %v381 = vld [vmem:[%s1 + $0x24c] sm:$0xf]
      %v382 = vld [vmem:[%s1 + $0x250] sm:$0xf]
      %v383 = vld [vmem:[%s1 + $0x254] sm:$0xf]
      %v384 = vld [vmem:[%s1 + $0x258] sm:$0xf]
      %v385 = vld [vmem:[%s1 + $0x25c] sm:$0xf]
      %v386 = vld [vmem:[%s1 + $0x260] sm:$0xf]
      %v387 = vld [vmem:[%s1 + $0x264] sm:$0xf]
      %v388 = vld [vmem:[%s1 + $0x268] sm:$0xf]
      %v389 = vld [vmem:[%s1 + $0x26c] sm:$0xf]
      %v390 = vld [vmem:[%s1 + $0x270] sm:$0xf]
      %v391 = vld [vmem:[%s1 + $0x274] sm:$0xf]
      %v392 = vld [vmem:[%s1 + $0x278] sm:$0xf]
      %v393 = vld [vmem:[%s1 + $0x27c] sm:$0xf]
      %v394 = vld [vmem:[%s1 + $0x280] sm:$0xf]
      %v395 = vld [vmem:[%s1 + $0x284] sm:$0xf]
      %v396 = vld [vmem:[%s1 + $0x288] sm:$0xf]
      %v397 = vld [vmem:[%s1 + $0x28c] sm:$0xf]
      %v398 = vld [vmem:[%s1 + $0x290] sm:$0xf]
      %v399 = vld [vmem:[%s1 + $0x294] sm:$0xf]
      %v400 = vld [vmem:[%s1 + $0x298] sm:$0xf]
      %v401 = vld [vmem:[%s1 + $0x29c] sm:$0xf]
      %v402 = vld [vmem:[%s1 + $0x2a0] sm:$0xf]
      %v403 = vld [vmem:[%s1 + $0x2a4] sm:$0xf]
      %v404 = vld [vmem:[%s1 + $0x2a8] sm:$0xf]
      %v405 = vld [vmem:[%s1 + $0x2ac] sm:$0xf]
      %v406 = vld [vmem:[%s1 + $0x2b0] sm:$0xf]
      %v407 = vld [vmem:[%s1 + $0x2b4] sm:$0xf]
      %v408 = vld [vmem:[%s1 + $0x2b8] sm:$0xf]
      %v409 = vld [vmem:[%s1 + $0x2bc] sm:$0xf]
      %v410 = vld [vmem:[%s1 + $0x2c0] sm:$0xf]
      %v411 = vld [vmem:[%s1 + $0x2c4] sm:$0xf]
      %v412 = vld [vmem:[%s1 + $0x2c8] sm:$0xf]
      %v413 = vld [vmem:[%s1 + $0x2cc] sm:$0xf]
      %v414 = vld [vmem:[%s1 + $0x2d0] sm:$0xf]
      %v415 = vld [vmem:[%s1 + $0x2d4] sm:$0xf]
      %v416 = vld [vmem:[%s1 + $0x2d8] sm:$0xf]
      %v417 = vld [vmem:[%s1 + $0x2dc] sm:$0xf]
      %v418 = vld [vmem:[%s1 + $0x2e0] sm:$0xf]
      %v419 = vld [vmem:[%s1 + $0x2e4] sm:$0xf]
      %v420 = vld [vmem:[%s1 + $0x2e8] sm:$0xf]
      %v421 = vld [vmem:[%s1 + $0x2ec] sm:$0xf]
      %v422 = vld [vmem:[%s1 + $0x2f0] sm:$0xf]
      %v423 = vld [vmem:[%s1 + $0x2f4] sm:$0xf]
      %v424 = vld [vmem:[%s1 + $0x2f8] sm:$0xf]
      %v425 = vld [vmem:[%s1 + $0x2fc] sm:$0xf]
      %v426 = vld [vmem:[%s1 + $0x300] sm:$0xf]
      %v427 = vld [vmem:[%s1 + $0x304] sm:$0xf]
      %v428 = vld [vmem:[%s1 + $0x308] sm:$0xf]
      %v429 = vld [vmem:[%s1 + $0x30c] sm:$0xf]
      %v430 = vld [vmem:[%s1 + $0x310] sm:$0xf]
      %v431 = vld [vmem:[%s1 + $0x314] sm:$0xf]
      %v432 = vld [vmem:[%s1 + $0x318] sm:$0xf]
      %v433 = vld [vmem:[%s1 + $0x31c] sm:$0xf]
      %v434 = vld [vmem:[%s2] sm:$0x1]
      %v436 = vlaneseq
      %v437 = vshrl.u32 %v436, 7
      %v438 = vsub.s32 0, %v437
      %v439 = vrot.slane %v434, %v438
      %v497 = vunpack.c.l.b16 %v178
      %v498 = vunpack.c.h.b16 %v178
      %v499 = vunpack.c.l.b16 %v179
      %v500 = vunpack.c.h.b16 %v179
      %v501 = vunpack.c.l.b16 %v180
      %v502 = vunpack.c.h.b16 %v180
      %v503 = vunpack.c.l.b16 %v181
      %v504 = vunpack.c.h.b16 %v181
      %v505 = vunpack.c.l.b16 %v182
      %v506 = vunpack.c.h.b16 %v182
      %v507 = vunpack.c.l.b16 %v183
      %v508 = vunpack.c.h.b16 %v183
      %v509 = vunpack.c.l.b16 %v184
      %v510 = vunpack.c.l.b16 %v185
      %v511 = vunpack.c.h.b16 %v185
      %v512 = vunpack.c.l.b16 %v186
      %v513 = vunpack.c.h.b16 %v186
      %v514 = vunpack.c.l.b16 %v187
      %v515 = vunpack.c.h.b16 %v187
      %v516 = vunpack.c.l.b16 %v188
      %v517 = vunpack.c.h.b16 %v188
      %v518 = vunpack.c.l.b16 %v189
      %v519 = vunpack.c.h.b16 %v189
      %v520 = vunpack.c.l.b16 %v190
      %v521 = vunpack.c.h.b16 %v190
      %v522 = vunpack.c.l.b16 %v191
      %v523 = vunpack.c.l.b16 %v192
      %v524 = vunpack.c.h.b16 %v192
      %v525 = vunpack.c.l.b16 %v193
      %v526 = vunpack.c.h.b16 %v193
      %v527 = vunpack.c.l.b16 %v194
      %v528 = vunpack.c.h.b16 %v194
      %v529 = vunpack.c.l.b16 %v195
      %v530 = vunpack.c.h.b16 %v195
      %v531 = vunpack.c.l.b16 %v196
      %v532 = vunpack.c.h.b16 %v196
      %v533 = vunpack.c.l.b16 %v197
      %v534 = vunpack.c.h.b16 %v197
      %v535 = vunpack.c.l.b16 %v198
      %v536 = vunpack.c.l.b16 %v199
      %v537 = vunpack.c.h.b16 %v199
      %v538 = vunpack.c.l.b16 %v200
      %v539 = vunpack.c.h.b16 %v200
      %v540 = vunpack.c.l.b16 %v201
      %v541 = vunpack.c.h.b16 %v201
      %v542 = vunpack.c.l.b16 %v202
      %v543 = vunpack.c.h.b16 %v202
      %v544 = vunpack.c.l.b16 %v203
      %v545 = vunpack.c.h.b16 %v203
      %v546 = vunpack.c.l.b16 %v204
      %v547 = vunpack.c.h.b16 %v204
      %v548 = vunpack.c.l.b16 %v205
      %v549 = vunpack.c.l.b16 %v206
      %v550 = vunpack.c.h.b16 %v206
      %v551 = vunpack.c.l.b16 %v207
      %v552 = vunpack.c.h.b16 %v207
      %v553 = vunpack.c.l.b16 %v208
      %v554 = vunpack.c.h.b16 %v208
      %v555 = vunpack.c.l.b16 %v209
      %v556 = vunpack.c.h.b16 %v209
      %v557 = vunpack.c.l.b16 %v210
      %v558 = vunpack.c.h.b16 %v210
      %v559 = vunpack.c.l.b16 %v211
      %v560 = vunpack.c.h.b16 %v211
      %v561 = vunpack.c.l.b16 %v212
      %v562 = vunpack.c.l.b16 %v213
      %v563 = vunpack.c.h.b16 %v213
      %v564 = vunpack.c.l.b16 %v214
      %v565 = vunpack.c.h.b16 %v214
      %v566 = vunpack.c.l.b16 %v215
      %v567 = vunpack.c.h.b16 %v215
      %v568 = vunpack.c.l.b16 %v216
      %v569 = vunpack.c.h.b16 %v216
      %v570 = vunpack.c.l.b16 %v217
      %v571 = vunpack.c.h.b16 %v217
      %v572 = vunpack.c.l.b16 %v218
      %v573 = vunpack.c.h.b16 %v218
      %v574 = vunpack.c.l.b16 %v219
      %v575 = vunpack.c.l.b16 %v220
      %v576 = vunpack.c.h.b16 %v220
      %v577 = vunpack.c.l.b16 %v221
      %v578 = vunpack.c.h.b16 %v221
      %v579 = vunpack.c.l.b16 %v222
      %v580 = vunpack.c.h.b16 %v222
      %v581 = vunpack.c.l.b16 %v223
      %v582 = vunpack.c.h.b16 %v223
      %v583 = vunpack.c.l.b16 %v224
      %v584 = vunpack.c.h.b16 %v224
      %v585 = vunpack.c.l.b16 %v225
      %v586 = vunpack.c.h.b16 %v225
      %v587 = vunpack.c.l.b16 %v226
      %v588 = vunpack.c.l.b16 %v227
      %v589 = vunpack.c.h.b16 %v227
      %v590 = vunpack.c.l.b16 %v228
      %v591 = vunpack.c.h.b16 %v228
      %v592 = vunpack.c.l.b16 %v229
      %v593 = vunpack.c.h.b16 %v229
      %v594 = vunpack.c.l.b16 %v230
      %v595 = vunpack.c.h.b16 %v230
      %v596 = vunpack.c.l.b16 %v231
      %v597 = vunpack.c.h.b16 %v231
      %v598 = vunpack.c.l.b16 %v232
      %v599 = vunpack.c.h.b16 %v232
      %v600 = vunpack.c.l.b16 %v233
      %v601 = vpack.c.b16 %v510, %v497
      %v602 = vpack.c.b16 %v511, %v498
      %v603 = vpack.c.b16 %v512, %v499
      %v604 = vpack.c.b16 %v513, %v500
      %v605 = vpack.c.b16 %v514, %v501
      %v606 = vpack.c.b16 %v515, %v502
      %v607 = vpack.c.b16 %v516, %v503
      %v608 = vpack.c.b16 %v517, %v504
      %v609 = vpack.c.b16 %v518, %v505
      %v610 = vpack.c.b16 %v519, %v506
      %v611 = vpack.c.b16 %v520, %v507
      %v612 = vpack.c.b16 %v521, %v508
      %v613 = vpack.c.b16 %v522, %v509
      %v614 = vpack.c.b16 %v536, %v523
      %v615 = vpack.c.b16 %v537, %v524
      %v616 = vpack.c.b16 %v538, %v525
      %v617 = vpack.c.b16 %v539, %v526
      %v618 = vpack.c.b16 %v540, %v527
      %v619 = vpack.c.b16 %v541, %v528
      %v620 = vpack.c.b16 %v542, %v529
      %v621 = vpack.c.b16 %v543, %v530
      %v622 = vpack.c.b16 %v544, %v531
      %v623 = vpack.c.b16 %v545, %v532
      %v624 = vpack.c.b16 %v546, %v533
      %v625 = vpack.c.b16 %v547, %v534
      %v626 = vpack.c.b16 %v548, %v535
      %v627 = vpack.c.b16 %v562, %v549
      %v628 = vpack.c.b16 %v563, %v550
      %v629 = vpack.c.b16 %v564, %v551
      %v630 = vpack.c.b16 %v565, %v552
      %v631 = vpack.c.b16 %v566, %v553
      %v632 = vpack.c.b16 %v567, %v554
      %v633 = vpack.c.b16 %v568, %v555
      %v634 = vpack.c.b16 %v569, %v556
      %v635 = vpack.c.b16 %v570, %v557
      %v636 = vpack.c.b16 %v571, %v558
      %v637 = vpack.c.b16 %v572, %v559
      %v638 = vpack.c.b16 %v573, %v560
      %v639 = vpack.c.b16 %v574, %v561
      %v640 = vpack.c.b16 %v588, %v575
      %v641 = vpack.c.b16 %v589, %v576
      %v642 = vpack.c.b16 %v590, %v577
      %v643 = vpack.c.b16 %v591, %v578
      %v644 = vpack.c.b16 %v592, %v579
      %v645 = vpack.c.b16 %v593, %v580
      %v646 = vpack.c.b16 %v594, %v581
      %v647 = vpack.c.b16 %v595, %v582
      %v648 = vpack.c.b16 %v596, %v583
      %v649 = vpack.c.b16 %v597, %v584
      %v650 = vpack.c.b16 %v598, %v585
      %v651 = vpack.c.b16 %v599, %v586
      %v652 = vpack.c.b16 %v600, %v587
      %v901 = vunpack.c.l.b16 %v234
      %v902 = vunpack.c.l.b16 %v235
      %v903 = vunpack.c.l.b16 %v236
      %v904 = vunpack.c.l.b16 %v237
      %v905 = vunpack.c.l.b16 %v238
      %v906 = vunpack.c.l.b16 %v239
      %v907 = vunpack.c.l.b16 %v240
      %v908 = vunpack.c.l.b16 %v241
      %v909 = vunpack.c.l.b16 %v242
      %v910 = vunpack.c.l.b16 %v243
      %v911 = vunpack.c.l.b16 %v244
      %v912 = vunpack.c.l.b16 %v245
      %v913 = vunpack.c.l.b16 %v246
      %v914 = vunpack.c.l.b16 %v247
      %v915 = vunpack.c.l.b16 %v248
      %v916 = vunpack.c.l.b16 %v249
      %v917 = vunpack.c.l.b16 %v250
      %v918 = vunpack.c.l.b16 %v251
      %v919 = vunpack.c.l.b16 %v252
      %v920 = vunpack.c.l.b16 %v253
      %v921 = vunpack.c.l.b16 %v254
      %v922 = vunpack.c.l.b16 %v255
      %v923 = vunpack.c.l.b16 %v256
      %v924 = vunpack.c.l.b16 %v257
      %v925 = vunpack.c.l.b16 %v258
      %v926 = vunpack.c.l.b16 %v259
      %v927 = vunpack.c.l.b16 %v260
      %v928 = vunpack.c.l.b16 %v261
      %v929 = vunpack.c.l.b16 %v262
      %v930 = vunpack.c.l.b16 %v263
      %v931 = vunpack.c.l.b16 %v264
      %v932 = vunpack.c.l.b16 %v265
      %v933 = vunpack.c.l.b16 %v266
      %v934 = vunpack.c.l.b16 %v267
      %v935 = vunpack.c.l.b16 %v268
      %v936 = vunpack.c.l.b16 %v269
      %v937 = vunpack.c.l.b16 %v270
      %v938 = vunpack.c.l.b16 %v271
      %v939 = vunpack.c.l.b16 %v272
      %v940 = vunpack.c.l.b16 %v273
      %v941 = vunpack.c.l.b16 %v274
      %v942 = vunpack.c.l.b16 %v275
      %v943 = vunpack.c.l.b16 %v276
      %v944 = vunpack.c.l.b16 %v277
      %v945 = vunpack.c.l.b16 %v278
      %v946 = vunpack.c.l.b16 %v279
      %v947 = vunpack.c.l.b16 %v280
      %v948 = vunpack.c.l.b16 %v281
      %v949 = vunpack.c.l.b16 %v282
      %v950 = vunpack.c.l.b16 %v283
      %v951 = vunpack.c.l.b16 %v284
      %v952 = vunpack.c.l.b16 %v285
      %v953 = vunpack.c.l.b16 %v286
      %v954 = vunpack.c.l.b16 %v287
      %v955 = vunpack.c.l.b16 %v288
      %v956 = vunpack.c.l.b16 %v289
      %v957 = vunpack.c.l.b16 %v290
      %v958 = vunpack.c.l.b16 %v291
      %v959 = vunpack.c.l.b16 %v292
      %v960 = vunpack.c.l.b16 %v293
      %v961 = vunpack.c.l.b16 %v294
      %v962 = vunpack.c.l.b16 %v295
      %v963 = vunpack.c.l.b16 %v296
      %v964 = vunpack.c.l.b16 %v297
      %v965 = vunpack.c.l.b16 %v298
      %v966 = vunpack.c.l.b16 %v299
      %v967 = vunpack.c.l.b16 %v300
      %v968 = vunpack.c.l.b16 %v301
      %v969 = vunpack.c.l.b16 %v302
      %v970 = vunpack.c.l.b16 %v303
      %v971 = vunpack.c.l.b16 %v304
      %v972 = vunpack.c.l.b16 %v305
      %v973 = vunpack.c.l.b16 %v306
      %v974 = vunpack.c.l.b16 %v307
      %v975 = vunpack.c.l.b16 %v308
      %v976 = vunpack.c.l.b16 %v309
      %v977 = vunpack.c.l.b16 %v310
      %v978 = vunpack.c.l.b16 %v311
      %v979 = vunpack.c.l.b16 %v312
      %v980 = vunpack.c.l.b16 %v313
      %v981 = vunpack.c.l.b16 %v314
      %v982 = vunpack.c.l.b16 %v315
      %v983 = vunpack.c.l.b16 %v316
      %v984 = vunpack.c.l.b16 %v317
      %v985 = vunpack.c.l.b16 %v318
      %v986 = vunpack.c.l.b16 %v319
      %v987 = vunpack.c.l.b16 %v320
      %v988 = vunpack.c.l.b16 %v321
      %v989 = vunpack.c.l.b16 %v322
      %v990 = vunpack.c.l.b16 %v323
      %v991 = vunpack.c.l.b16 %v324
      %v992 = vunpack.c.l.b16 %v325
      %v993 = vunpack.c.l.b16 %v326
      %v994 = vunpack.c.l.b16 %v327
      %v995 = vunpack.c.l.b16 %v328
      %v996 = vunpack.c.l.b16 %v329
      %v997 = vunpack.c.l.b16 %v330
      %v998 = vunpack.c.l.b16 %v331
      %v999 = vunpack.c.l.b16 %v332
      %v1000 = vunpack.c.l.b16 %v333
      %v1001 = vunpack.c.l.b16 %v334
      %v1002 = vunpack.c.l.b16 %v335
      %v1003 = vunpack.c.l.b16 %v336
      %v1004 = vunpack.c.l.b16 %v337
      %v1005 = vunpack.c.l.b16 %v338
      %v1006 = vunpack.c.l.b16 %v339
      %v1007 = vunpack.c.l.b16 %v340
      %v1008 = vunpack.c.l.b16 %v341
      %v1009 = vunpack.c.l.b16 %v342
      %v1010 = vunpack.c.l.b16 %v343
      %v1011 = vunpack.c.l.b16 %v344
      %v1012 = vunpack.c.l.b16 %v345
      %v1013 = vunpack.c.l.b16 %v346
      %v1014 = vunpack.c.l.b16 %v347
      %v1015 = vunpack.c.l.b16 %v348
      %v1016 = vunpack.c.l.b16 %v349
      %v1017 = vunpack.c.l.b16 %v350
      %v1018 = vunpack.c.l.b16 %v351
      %v1019 = vunpack.c.l.b16 %v352
      %v1020 = vunpack.c.l.b16 %v353
      %v1021 = vunpack.c.l.b16 %v354
      %v1022 = vunpack.c.l.b16 %v355
      %v1023 = vunpack.c.l.b16 %v356
      %v1024 = vunpack.c.l.b16 %v357
      %v1025 = vunpack.c.l.b16 %v358
      %v1026 = vunpack.c.l.b16 %v359
      %v1027 = vunpack.c.l.b16 %v360
      %v1028 = vunpack.c.l.b16 %v361
      %v1029 = vunpack.c.l.b16 %v362
      %v1030 = vunpack.c.l.b16 %v363
      %v1031 = vunpack.c.l.b16 %v364
      %v1032 = vunpack.c.l.b16 %v365
      %v1033 = vunpack.c.l.b16 %v366
      %v1034 = vunpack.c.l.b16 %v367
      %v1035 = vunpack.c.l.b16 %v368
      %v1036 = vunpack.c.l.b16 %v369
      %v1037 = vunpack.c.l.b16 %v370
      %v1038 = vunpack.c.l.b16 %v371
      %v1039 = vunpack.c.l.b16 %v372
      %v1040 = vunpack.c.l.b16 %v373
      %v1041 = vunpack.c.l.b16 %v374
      %v1042 = vunpack.c.l.b16 %v375
      %v1043 = vunpack.c.l.b16 %v376
      %v1044 = vunpack.c.l.b16 %v377
      %v1045 = vunpack.c.l.b16 %v378
      %v1046 = vunpack.c.l.b16 %v379
      %v1047 = vunpack.c.l.b16 %v380
      %v1048 = vunpack.c.l.b16 %v381
      %v1049 = vunpack.c.l.b16 %v382
      %v1050 = vunpack.c.l.b16 %v383
      %v1051 = vunpack.c.l.b16 %v384
      %v1052 = vunpack.c.l.b16 %v385
      %v1053 = vunpack.c.l.b16 %v386
      %v1054 = vunpack.c.l.b16 %v387
      %v1055 = vunpack.c.l.b16 %v388
      %v1056 = vunpack.c.l.b16 %v389
      %v1057 = vunpack.c.l.b16 %v390
      %v1058 = vunpack.c.l.b16 %v391
      %v1059 = vunpack.c.l.b16 %v392
      %v1060 = vunpack.c.l.b16 %v393
      %v1061 = vunpack.c.l.b16 %v394
      %v1062 = vunpack.c.l.b16 %v395
      %v1063 = vunpack.c.l.b16 %v396
      %v1064 = vunpack.c.l.b16 %v397
      %v1065 = vunpack.c.l.b16 %v398
      %v1066 = vunpack.c.l.b16 %v399
      %v1067 = vunpack.c.l.b16 %v400
      %v1068 = vunpack.c.l.b16 %v401
      %v1069 = vunpack.c.l.b16 %v402
      %v1070 = vunpack.c.l.b16 %v403
      %v1071 = vunpack.c.l.b16 %v404
      %v1072 = vunpack.c.l.b16 %v405
      %v1073 = vunpack.c.l.b16 %v406
      %v1074 = vunpack.c.l.b16 %v407
      %v1075 = vunpack.c.l.b16 %v408
      %v1076 = vunpack.c.l.b16 %v409
      %v1077 = vunpack.c.l.b16 %v410
      %v1078 = vunpack.c.l.b16 %v411
      %v1079 = vunpack.c.l.b16 %v412
      %v1080 = vunpack.c.l.b16 %v413
      %v1081 = vunpack.c.l.b16 %v414
      %v1082 = vunpack.c.l.b16 %v415
      %v1083 = vunpack.c.l.b16 %v416
      %v1084 = vunpack.c.l.b16 %v417
      %v1085 = vunpack.c.l.b16 %v418
      %v1086 = vunpack.c.l.b16 %v419
      %v1087 = vunpack.c.l.b16 %v420
      %v1088 = vunpack.c.l.b16 %v421
      %v1089 = vunpack.c.l.b16 %v422
      %v1090 = vunpack.c.l.b16 %v423
      %v1091 = vunpack.c.l.b16 %v424
      %v1092 = vunpack.c.l.b16 %v425
      %v1093 = vunpack.c.l.b16 %v426
      %v1094 = vunpack.c.l.b16 %v427
      %v1095 = vunpack.c.l.b16 %v428
      %v1096 = vunpack.c.l.b16 %v429
      %v1097 = vunpack.c.l.b16 %v430
      %v1098 = vunpack.c.l.b16 %v431
      %v1099 = vunpack.c.l.b16 %v432
      %v1100 = vunpack.c.l.b16 %v433
      %v1101 = vpack.c.b16 %v902, %v901
      %v1102 = vpack.c.b16 %v904, %v903
      %v1103 = vpack.c.b16 %v906, %v905
      %v1104 = vpack.c.b16 %v908, %v907
      %v1105 = vpack.c.b16 %v910, %v909
      %v1106 = vpack.c.b16 %v912, %v911
      %v1107 = vpack.c.b16 %v914, %v913
      %v1108 = vpack.c.b16 %v916, %v915
      %v1109 = vpack.c.b16 %v918, %v917
      %v1110 = vpack.c.b16 %v920, %v919
      %v1111 = vpack.c.b16 %v922, %v921
      %v1112 = vpack.c.b16 %v924, %v923
      %v1113 = vpack.c.b16 %v926, %v925
      %v1114 = vpack.c.b16 %v928, %v927
      %v1115 = vpack.c.b16 %v930, %v929
      %v1116 = vpack.c.b16 %v932, %v931
      %v1117 = vpack.c.b16 %v934, %v933
      %v1118 = vpack.c.b16 %v936, %v935
      %v1119 = vpack.c.b16 %v938, %v937
      %v1120 = vpack.c.b16 %v940, %v939
      %v1121 = vpack.c.b16 %v942, %v941
      %v1122 = vpack.c.b16 %v944, %v943
      %v1123 = vpack.c.b16 %v946, %v945
      %v1124 = vpack.c.b16 %v948, %v947
      %v1125 = vpack.c.b16 %v950, %v949
      %v1126 = vpack.c.b16 %v952, %v951
      %v1127 = vpack.c.b16 %v954, %v953
      %v1128 = vpack.c.b16 %v956, %v955
      %v1129 = vpack.c.b16 %v958, %v957
      %v1130 = vpack.c.b16 %v960, %v959
      %v1131 = vpack.c.b16 %v962, %v961
      %v1132 = vpack.c.b16 %v964, %v963
      %v1133 = vpack.c.b16 %v966, %v965
      %v1134 = vpack.c.b16 %v968, %v967
      %v1135 = vpack.c.b16 %v970, %v969
      %v1136 = vpack.c.b16 %v972, %v971
      %v1137 = vpack.c.b16 %v974, %v973
      %v1138 = vpack.c.b16 %v976, %v975
      %v1139 = vpack.c.b16 %v978, %v977
      %v1140 = vpack.c.b16 %v980, %v979
      %v1141 = vpack.c.b16 %v982, %v981
      %v1142 = vpack.c.b16 %v984, %v983
      %v1143 = vpack.c.b16 %v986, %v985
      %v1144 = vpack.c.b16 %v988, %v987
      %v1145 = vpack.c.b16 %v990, %v989
      %v1146 = vpack.c.b16 %v992, %v991
      %v1147 = vpack.c.b16 %v994, %v993
      %v1148 = vpack.c.b16 %v996, %v995
      %v1149 = vpack.c.b16 %v998, %v997
      %v1150 = vpack.c.b16 %v1000, %v999
      %v1151 = vpack.c.b16 %v1002, %v1001
      %v1152 = vpack.c.b16 %v1004, %v1003
      %v1153 = vpack.c.b16 %v1006, %v1005
      %v1154 = vpack.c.b16 %v1008, %v1007
      %v1155 = vpack.c.b16 %v1010, %v1009
      %v1156 = vpack.c.b16 %v1012, %v1011
      %v1157 = vpack.c.b16 %v1014, %v1013
      %v1158 = vpack.c.b16 %v1016, %v1015
      %v1159 = vpack.c.b16 %v1018, %v1017
      %v1160 = vpack.c.b16 %v1020, %v1019
      %v1161 = vpack.c.b16 %v1022, %v1021
      %v1162 = vpack.c.b16 %v1024, %v1023
      %v1163 = vpack.c.b16 %v1026, %v1025
      %v1164 = vpack.c.b16 %v1028, %v1027
      %v1165 = vpack.c.b16 %v1030, %v1029
      %v1166 = vpack.c.b16 %v1032, %v1031
      %v1167 = vpack.c.b16 %v1034, %v1033
      %v1168 = vpack.c.b16 %v1036, %v1035
      %v1169 = vpack.c.b16 %v1038, %v1037
      %v1170 = vpack.c.b16 %v1040, %v1039
      %v1171 = vpack.c.b16 %v1042, %v1041
      %v1172 = vpack.c.b16 %v1044, %v1043
      %v1173 = vpack.c.b16 %v1046, %v1045
      %v1174 = vpack.c.b16 %v1048, %v1047
      %v1175 = vpack.c.b16 %v1050, %v1049
      %v1176 = vpack.c.b16 %v1052, %v1051
      %v1177 = vpack.c.b16 %v1054, %v1053
      %v1178 = vpack.c.b16 %v1056, %v1055
      %v1179 = vpack.c.b16 %v1058, %v1057
      %v1180 = vpack.c.b16 %v1060, %v1059
      %v1181 = vpack.c.b16 %v1062, %v1061
      %v1182 = vpack.c.b16 %v1064, %v1063
      %v1183 = vpack.c.b16 %v1066, %v1065
      %v1184 = vpack.c.b16 %v1068, %v1067
      %v1185 = vpack.c.b16 %v1070, %v1069
      %v1186 = vpack.c.b16 %v1072, %v1071
      %v1187 = vpack.c.b16 %v1074, %v1073
      %v1188 = vpack.c.b16 %v1076, %v1075
      %v1189 = vpack.c.b16 %v1078, %v1077
      %v1190 = vpack.c.b16 %v1080, %v1079
      %v1191 = vpack.c.b16 %v1082, %v1081
      %v1192 = vpack.c.b16 %v1084, %v1083
      %v1193 = vpack.c.b16 %v1086, %v1085
      %v1194 = vpack.c.b16 %v1088, %v1087
      %v1195 = vpack.c.b16 %v1090, %v1089
      %v1196 = vpack.c.b16 %v1092, %v1091
      %v1197 = vpack.c.b16 %v1094, %v1093
      %v1198 = vpack.c.b16 %v1096, %v1095
      %v1199 = vpack.c.b16 %v1098, %v1097
      %v1200 = vpack.c.b16 %v1100, %v1099
      %vm1301 = vcmask 523264
      %v1303 = vsel %vm1301, %v613, 0
      %v1306 = vsel %vm1301, %v626, 0
      %v1309 = vsel %vm1301, %v639, 0
      %v1312 = vsel %vm1301, %v652, 0
      %1314 = vmatprep.subr.bf16.mxu0 0
      %1315 = vmatpush1.bf16.msra.mxu0 %v1101
      %1316 = vmatprep.subr.bf16.mxu0 0
      %1317 = vmatpush1.bf16.msra.mxu0 %v1102
      %1318 = vmatprep.subr.bf16.mxu0 0
      %1319 = vmatpush1.bf16.msra.mxu0 %v1103
      %1320 = vmatprep.subr.bf16.mxu0 0
      %1321 = vmatpush1.bf16.msra.mxu0 %v1104
      %1322 = vmatprep.subr.bf16.mxu0 0
      %1323 = vmatpush1.bf16.msra.mxu0 %v1105
      %1324 = vmatprep.subr.bf16.mxu0 0
      %1325 = vmatpush1.bf16.msra.mxu0 %v1106
      %1326 = vmatprep.subr.bf16.mxu0 0
      %1327 = vmatpush1.bf16.msra.mxu0 %v1107
      %1328 = vmatprep.subr.bf16.mxu0 0
      %1329 = vmatpush1.bf16.msra.mxu0 %v1108
      %1330 = vmatprep.subr.bf16.mxu0 0
      %1331 = vmatpush1.bf16.msra.mxu0 %v1109
      %1332 = vmatprep.subr.bf16.mxu0 0
      %1333 = vmatpush1.bf16.msra.mxu0 %v1110
      %1334 = vmatprep.subr.bf16.mxu0 0
      %1335 = vmatpush1.bf16.msra.mxu0 %v1111
      %1336 = vmatprep.subr.bf16.mxu0 0
      %1337 = vmatpush1.bf16.msra.mxu0 %v1112
      %1338 = vmatprep.subr.bf16.mxu0 0
      %1339 = vmatpush1.bf16.msra.mxu0 %v1113
      %1340 = vmatprep.subr.bf16.mxu0 0
      %1341 = vmatpush1.bf16.msra.mxu0 %v1114
      %1342 = vmatprep.subr.bf16.mxu0 0
      %1343 = vmatpush1.bf16.msra.mxu0 %v1115
      %1344 = vmatprep.subr.bf16.mxu0 0
      %1345 = vmatpush1.bf16.msra.mxu0 %v1116
      %1346 = vmatprep.mubr.bf16.mxu0 %v602
      %1347 = vmatmul.mubr.bf16.gmra.mrb[0].mxu0 %v601
      %v1348 = vpop.f32.mrb[0].mxu0
      %v1349 = vadd.f32 %v439, %v1348
      %v1350 = vpop.f32.mrb[0].mxu0
      %v1351 = vpop.f32.mrb[0].mxu0
      %v1352 = vadd.f32 %v439, %v1351
      %v1353 = vpop.f32.mrb[0].mxu0
      %1354 = vmatprep.mubr.bf16.mxu0 %v615
      %1355 = vmatmul.mubr.bf16.gmra.mrb[0].mxu0 %v614
      %v1356 = vpop.f32.mrb[0].mxu0
      %v1357 = vadd.f32 %v439, %v1356
      %v1358 = vpop.f32.mrb[0].mxu0
      %v1359 = vpop.f32.mrb[0].mxu0
      %v1360 = vadd.f32 %v439, %v1359
      %v1361 = vpop.f32.mrb[0].mxu0
      %1362 = vmatprep.mubr.bf16.mxu0 %v628
      %1363 = vmatmul.mubr.bf16.gmra.mrb[0].mxu0 %v627
      %v1364 = vpop.f32.mrb[0].mxu0
      %v1365 = vadd.f32 %v439, %v1364
      %v1366 = vpop.f32.mrb[0].mxu0
      %v1367 = vpop.f32.mrb[0].mxu0
      %v1368 = vadd.f32 %v439, %v1367
      %v1369 = vpop.f32.mrb[0].mxu0
      %1370 = vmatprep.mubr.bf16.mxu0 %v641
      %1371 = vmatmul.mubr.bf16.gmra.mrb[0].mxu0 %v640
      %v1372 = vpop.f32.mrb[0].mxu0
      %v1373 = vadd.f32 %v439, %v1372
      %v1374 = vpop.f32.mrb[0].mxu0
      %v1375 = vpop.f32.mrb[0].mxu0
      %v1376 = vadd.f32 %v439, %v1375
      %v1377 = vpop.f32.mrb[0].mxu0
      %1378 = vdwg.mxu0
      %1379 = vmatprep.subr.bf16.mxu0 0
      %1380 = vmatpush1.bf16.msra.mxu0 %v1117
      %1381 = vmatprep.subr.bf16.mxu0 0
      %1382 = vmatpush1.bf16.msra.mxu0 %v1118
      %1383 = vmatprep.subr.bf16.mxu0 0
      %1384 = vmatpush1.bf16.msra.mxu0 %v1119
      %1385 = vmatprep.subr.bf16.mxu0 0
      %1386 = vmatpush1.bf16.msra.mxu0 %v1120
      %1387 = vmatprep.subr.bf16.mxu0 0
      %1388 = vmatpush1.bf16.msra.mxu0 %v1121
      %1389 = vmatprep.subr.bf16.mxu0 0
      %1390 = vmatpush1.bf16.msra.mxu0 %v1122
      %1391 = vmatprep.subr.bf16.mxu0 0
      %1392 = vmatpush1.bf16.msra.mxu0 %v1123
      %1393 = vmatprep.subr.bf16.mxu0 0
      %1394 = vmatpush1.bf16.msra.mxu0 %v1124
      %1395 = vmatprep.subr.bf16.mxu0 0
      %1396 = vmatpush1.bf16.msra.mxu0 %v1125
      %1397 = vmatprep.subr.bf16.mxu0 0
      %1398 = vmatpush1.bf16.msra.mxu0 %v1126
      %1399 = vmatprep.subr.bf16.mxu0 0
      %1400 = vmatpush1.bf16.msra.mxu0 %v1127
      %1401 = vmatprep.subr.bf16.mxu0 0
      %1402 = vmatpush1.bf16.msra.mxu0 %v1128
      %1403 = vmatprep.subr.bf16.mxu0 0
      %1404 = vmatpush1.bf16.msra.mxu0 %v1129
      %1405 = vmatprep.subr.bf16.mxu0 0
      %1406 = vmatpush1.bf16.msra.mxu0 %v1130
      %1407 = vmatprep.subr.bf16.mxu0 0
      %1408 = vmatpush1.bf16.msra.mxu0 %v1131
      %1409 = vmatprep.subr.bf16.mxu0 0
      %1410 = vmatpush1.bf16.msra.mxu0 %v1132
      %1411 = vmatprep.mubr.bf16.mxu0 %v604
      %1412 = vmatmul.mubr.bf16.gmra.mrb[0].mxu0 %v603
      %v1413 = vpop.f32.mrb[0].mxu0
      %v1414 = vadd.f32 %v1349, %v1413
      %v1415 = vpop.f32.mrb[0].mxu0
      %v1416 = vpop.f32.mrb[0].mxu0
      %v1417 = vadd.f32 %v1352, %v1416
      %v1418 = vpop.f32.mrb[0].mxu0
      %1419 = vmatprep.mubr.bf16.mxu0 %v617
      %1420 = vmatmul.mubr.bf16.gmra.mrb[0].mxu0 %v616
      %v1421 = vpop.f32.mrb[0].mxu0
      %v1422 = vadd.f32 %v1357, %v1421
      %v1423 = vpop.f32.mrb[0].mxu0
      %v1424 = vpop.f32.mrb[0].mxu0
      %v1425 = vadd.f32 %v1360, %v1424
      %v1426 = vpop.f32.mrb[0].mxu0
      %1427 = vmatprep.mubr.bf16.mxu0 %v630
      %1428 = vmatmul.mubr.bf16.gmra.mrb[0].mxu0 %v629
      %v1429 = vpop.f32.mrb[0].mxu0
      %v1430 = vadd.f32 %v1365, %v1429
      %v1431 = vpop.f32.mrb[0].mxu0
      %v1432 = vpop.f32.mrb[0].mxu0
      %v1433 = vadd.f32 %v1368, %v1432
      %v1434 = vpop.f32.mrb[0].mxu0
      %1435 = vmatprep.mubr.bf16.mxu0 %v643
      %1436 = vmatmul.mubr.bf16.gmra.mrb[0].mxu0 %v642
      %v1437 = vpop.f32.mrb[0].mxu0
      %v1438 = vadd.f32 %v1373, %v1437
      %v1439 = vpop.f32.mrb[0].mxu0
      %v1440 = vpop.f32.mrb[0].mxu0
      %v1441 = vadd.f32 %v1376, %v1440
      %v1442 = vpop.f32.mrb[0].mxu0
      %1443 = vdwg.mxu0
      %1444 = vmatprep.subr.bf16.mxu0 0
      %1445 = vmatpush1.bf16.msra.mxu0 %v1133
      %1446 = vmatprep.subr.bf16.mxu0 0
      %1447 = vmatpush1.bf16.msra.mxu0 %v1134
      %1448 = vmatprep.subr.bf16.mxu0 0
      %1449 = vmatpush1.bf16.msra.mxu0 %v1135
      %1450 = vmatprep.subr.bf16.mxu0 0
      %1451 = vmatpush1.bf16.msra.mxu0 %v1136
      %1452 = vmatprep.subr.bf16.mxu0 0
      %1453 = vmatpush1.bf16.msra.mxu0 %v1137
      %1454 = vmatprep.subr.bf16.mxu0 0
      %1455 = vmatpush1.bf16.msra.mxu0 %v1138
      %1456 = vmatprep.subr.bf16.mxu0 0
      %1457 = vmatpush1.bf16.msra.mxu0 %v1139
      %1458 = vmatprep.subr.bf16.mxu0 0
      %1459 = vmatpush1.bf16.msra.mxu0 %v1140
      %1460 = vmatprep.subr.bf16.mxu0 0
      %1461 = vmatpush1.bf16.msra.mxu0 %v1141
      %1462 = vmatprep.subr.bf16.mxu0 0
      %1463 = vmatpush1.bf16.msra.mxu0 %v1142
      %1464 = vmatprep.subr.bf16.mxu0 0
      %1465 = vmatpush1.bf16.msra.mxu0 %v1143
      %1466 = vmatprep.subr.bf16.mxu0 0
      %1467 = vmatpush1.bf16.msra.mxu0 %v1144
      %1468 = vmatprep.subr.bf16.mxu0 0
      %1469 = vmatpush1.bf16.msra.mxu0 %v1145
      %1470 = vmatprep.subr.bf16.mxu0 0
      %1471 = vmatpush1.bf16.msra.mxu0 %v1146
      %1472 = vmatprep.subr.bf16.mxu0 0
      %1473 = vmatpush1.bf16.msra.mxu0 %v1147
      %1474 = vmatprep.subr.bf16.mxu0 0
      %1475 = vmatpush1.bf16.msra.mxu0 %v1148
      %1476 = vmatprep.mubr.bf16.mxu0 %v606
      %1477 = vmatmul.mubr.bf16.gmra.mrb[0].mxu0 %v605
      %v1478 = vpop.f32.mrb[0].mxu0
      %v1479 = vadd.f32 %v1414, %v1478
      %v1480 = vpop.f32.mrb[0].mxu0
      %v1481 = vpop.f32.mrb[0].mxu0
      %v1482 = vadd.f32 %v1417, %v1481
      %v1483 = vpop.f32.mrb[0].mxu0
      %1484 = vmatprep.mubr.bf16.mxu0 %v619
      %1485 = vmatmul.mubr.bf16.gmra.mrb[0].mxu0 %v618
      %v1486 = vpop.f32.mrb[0].mxu0
      %v1487 = vadd.f32 %v1422, %v1486
      %v1488 = vpop.f32.mrb[0].mxu0
      %v1489 = vpop.f32.mrb[0].mxu0
      %v1490 = vadd.f32 %v1425, %v1489
      %v1491 = vpop.f32.mrb[0].mxu0
      %1492 = vmatprep.mubr.bf16.mxu0 %v632
      %1493 = vmatmul.mubr.bf16.gmra.mrb[0].mxu0 %v631
      %v1494 = vpop.f32.mrb[0].mxu0
      %v1495 = vadd.f32 %v1430, %v1494
      %v1496 = vpop.f32.mrb[0].mxu0
      %v1497 = vpop.f32.mrb[0].mxu0
      %v1498 = vadd.f32 %v1433, %v1497
      %v1499 = vpop.f32.mrb[0].mxu0
      %1500 = vmatprep.mubr.bf16.mxu0 %v645
      %1501 = vmatmul.mubr.bf16.gmra.mrb[0].mxu0 %v644
      %v1502 = vpop.f32.mrb[0].mxu0
      %v1503 = vadd.f32 %v1438, %v1502
      %v1504 = vpop.f32.mrb[0].mxu0
      %v1505 = vpop.f32.mrb[0].mxu0
      %v1506 = vadd.f32 %v1441, %v1505
      %v1507 = vpop.f32.mrb[0].mxu0
      %1508 = vdwg.mxu0
      %1509 = vmatprep.subr.bf16.mxu0 0
      %1510 = vmatpush1.bf16.msra.mxu0 %v1149
      %1511 = vmatprep.subr.bf16.mxu0 0
      %1512 = vmatpush1.bf16.msra.mxu0 %v1150
      %1513 = vmatprep.subr.bf16.mxu0 0
      %1514 = vmatpush1.bf16.msra.mxu0 %v1151
      %1515 = vmatprep.subr.bf16.mxu0 0
      %1516 = vmatpush1.bf16.msra.mxu0 %v1152
      %1517 = vmatprep.subr.bf16.mxu0 0
      %1518 = vmatpush1.bf16.msra.mxu0 %v1153
      %1519 = vmatprep.subr.bf16.mxu0 0
      %1520 = vmatpush1.bf16.msra.mxu0 %v1154
      %1521 = vmatprep.subr.bf16.mxu0 0
      %1522 = vmatpush1.bf16.msra.mxu0 %v1155
      %1523 = vmatprep.subr.bf16.mxu0 0
      %1524 = vmatpush1.bf16.msra.mxu0 %v1156
      %1525 = vmatprep.subr.bf16.mxu0 0
      %1526 = vmatpush1.bf16.msra.mxu0 %v1157
      %1527 = vmatprep.subr.bf16.mxu0 0
      %1528 = vmatpush1.bf16.msra.mxu0 %v1158
      %1529 = vmatprep.subr.bf16.mxu0 0
      %1530 = vmatpush1.bf16.msra.mxu0 %v1159
      %1531 = vmatprep.subr.bf16.mxu0 0
      %1532 = vmatpush1.bf16.msra.mxu0 %v1160
      %1533 = vmatprep.subr.bf16.mxu0 0
      %1534 = vmatpush1.bf16.msra.mxu0 %v1161
      %1535 = vmatprep.subr.bf16.mxu0 0
      %1536 = vmatpush1.bf16.msra.mxu0 %v1162
      %1537 = vmatprep.subr.bf16.mxu0 0
      %1538 = vmatpush1.bf16.msra.mxu0 %v1163
      %1539 = vmatprep.subr.bf16.mxu0 0
      %1540 = vmatpush1.bf16.msra.mxu0 %v1164
      %1541 = vmatprep.mubr.bf16.mxu0 %v608
      %1542 = vmatmul.mubr.bf16.gmra.mrb[0].mxu0 %v607
      %v1543 = vpop.f32.mrb[0].mxu0
      %v1544 = vadd.f32 %v1479, %v1543
      %v1545 = vpop.f32.mrb[0].mxu0
      %v1546 = vpop.f32.mrb[0].mxu0
      %v1547 = vadd.f32 %v1482, %v1546
      %v1548 = vpop.f32.mrb[0].mxu0
      %1549 = vmatprep.mubr.bf16.mxu0 %v621
      %1550 = vmatmul.mubr.bf16.gmra.mrb[0].mxu0 %v620
      %v1551 = vpop.f32.mrb[0].mxu0
      %v1552 = vadd.f32 %v1487, %v1551
      %v1553 = vpop.f32.mrb[0].mxu0
      %v1554 = vpop.f32.mrb[0].mxu0
      %v1555 = vadd.f32 %v1490, %v1554
      %v1556 = vpop.f32.mrb[0].mxu0
      %1557 = vmatprep.mubr.bf16.mxu0 %v634
      %1558 = vmatmul.mubr.bf16.gmra.mrb[0].mxu0 %v633
      %v1559 = vpop.f32.mrb[0].mxu0
      %v1560 = vadd.f32 %v1495, %v1559
      %v1561 = vpop.f32.mrb[0].mxu0
      %v1562 = vpop.f32.mrb[0].mxu0
      %v1563 = vadd.f32 %v1498, %v1562
      %v1564 = vpop.f32.mrb[0].mxu0
      %1565 = vmatprep.mubr.bf16.mxu0 %v647
      %1566 = vmatmul.mubr.bf16.gmra.mrb[0].mxu0 %v646
      %v1567 = vpop.f32.mrb[0].mxu0
      %v1568 = vadd.f32 %v1503, %v1567
      %v1569 = vpop.f32.mrb[0].mxu0
      %v1570 = vpop.f32.mrb[0].mxu0
      %v1571 = vadd.f32 %v1506, %v1570
      %v1572 = vpop.f32.mrb[0].mxu0
      %1573 = vdwg.mxu0
      %1574 = vmatprep.subr.bf16.mxu0 0
      %1575 = vmatpush1.bf16.msra.mxu0 %v1165
      %1576 = vmatprep.subr.bf16.mxu0 0
      %1577 = vmatpush1.bf16.msra.mxu0 %v1166
      %1578 = vmatprep.subr.bf16.mxu0 0
      %1579 = vmatpush1.bf16.msra.mxu0 %v1167
      %1580 = vmatprep.subr.bf16.mxu0 0
      %1581 = vmatpush1.bf16.msra.mxu0 %v1168
      %1582 = vmatprep.subr.bf16.mxu0 0
      %1583 = vmatpush1.bf16.msra.mxu0 %v1169
      %1584 = vmatprep.subr.bf16.mxu0 0
      %1585 = vmatpush1.bf16.msra.mxu0 %v1170
      %1586 = vmatprep.subr.bf16.mxu0 0
      %1587 = vmatpush1.bf16.msra.mxu0 %v1171
      %1588 = vmatprep.subr.bf16.mxu0 0
      %1589 = vmatpush1.bf16.msra.mxu0 %v1172
      %1590 = vmatprep.subr.bf16.mxu0 0
      %1591 = vmatpush1.bf16.msra.mxu0 %v1173
      %1592 = vmatprep.subr.bf16.mxu0 0
      %1593 = vmatpush1.bf16.msra.mxu0 %v1174
      %1594 = vmatprep.subr.bf16.mxu0 0
      %1595 = vmatpush1.bf16.msra.mxu0 %v1175
      %1596 = vmatprep.subr.bf16.mxu0 0
      %1597 = vmatpush1.bf16.msra.mxu0 %v1176
      %1598 = vmatprep.subr.bf16.mxu0 0
      %1599 = vmatpush1.bf16.msra.mxu0 %v1177
      %1600 = vmatprep.subr.bf16.mxu0 0
      %1601 = vmatpush1.bf16.msra.mxu0 %v1178
      %1602 = vmatprep.subr.bf16.mxu0 0
      %1603 = vmatpush1.bf16.msra.mxu0 %v1179
      %1604 = vmatprep.subr.bf16.mxu0 0
      %1605 = vmatpush1.bf16.msra.mxu0 %v1180
      %1606 = vmatprep.mubr.bf16.mxu0 %v610
      %1607 = vmatmul.mubr.bf16.gmra.mrb[0].mxu0 %v609
      %v1608 = vpop.f32.mrb[0].mxu0
      %v1609 = vadd.f32 %v1544, %v1608
      %v1610 = vpop.f32.mrb[0].mxu0
      %v1611 = vpop.f32.mrb[0].mxu0
      %v1612 = vadd.f32 %v1547, %v1611
      %v1613 = vpop.f32.mrb[0].mxu0
      %1614 = vmatprep.mubr.bf16.mxu0 %v623
      %1615 = vmatmul.mubr.bf16.gmra.mrb[0].mxu0 %v622
      %v1616 = vpop.f32.mrb[0].mxu0
      %v1617 = vadd.f32 %v1552, %v1616
      %v1618 = vpop.f32.mrb[0].mxu0
      %v1619 = vpop.f32.mrb[0].mxu0
      %v1620 = vadd.f32 %v1555, %v1619
      %v1621 = vpop.f32.mrb[0].mxu0
      %1622 = vmatprep.mubr.bf16.mxu0 %v636
      %1623 = vmatmul.mubr.bf16.gmra.mrb[0].mxu0 %v635
      %v1624 = vpop.f32.mrb[0].mxu0
      %v1625 = vadd.f32 %v1560, %v1624
      %v1626 = vpop.f32.mrb[0].mxu0
      %v1627 = vpop.f32.mrb[0].mxu0
      %v1628 = vadd.f32 %v1563, %v1627
      %v1629 = vpop.f32.mrb[0].mxu0
      %1630 = vmatprep.mubr.bf16.mxu0 %v649
      %1631 = vmatmul.mubr.bf16.gmra.mrb[0].mxu0 %v648
      %v1632 = vpop.f32.mrb[0].mxu0
      %v1633 = vadd.f32 %v1568, %v1632
      %v1634 = vpop.f32.mrb[0].mxu0
      %v1635 = vpop.f32.mrb[0].mxu0
      %v1636 = vadd.f32 %v1571, %v1635
      %v1637 = vpop.f32.mrb[0].mxu0
      %1638 = vdwg.mxu0
      %1639 = vmatprep.subr.bf16.mxu0 0
      %1640 = vmatpush1.bf16.msra.mxu0 %v1181
      %1641 = vmatprep.subr.bf16.mxu0 0
      %1642 = vmatpush1.bf16.msra.mxu0 %v1182
      %1643 = vmatprep.subr.bf16.mxu0 0
      %1644 = vmatpush1.bf16.msra.mxu0 %v1183
      %1645 = vmatprep.subr.bf16.mxu0 0
      %1646 = vmatpush1.bf16.msra.mxu0 %v1184
      %1647 = vmatprep.subr.bf16.mxu0 0
      %1648 = vmatpush1.bf16.msra.mxu0 %v1185
      %1649 = vmatprep.subr.bf16.mxu0 0
      %1650 = vmatpush1.bf16.msra.mxu0 %v1186
      %1651 = vmatprep.subr.bf16.mxu0 0
      %1652 = vmatpush1.bf16.msra.mxu0 %v1187
      %1653 = vmatprep.subr.bf16.mxu0 0
      %1654 = vmatpush1.bf16.msra.mxu0 %v1188
      %1655 = vmatprep.subr.bf16.mxu0 0
      %1656 = vmatpush1.bf16.msra.mxu0 %v1189
      %1657 = vmatprep.subr.bf16.mxu0 0
      %1658 = vmatpush1.bf16.msra.mxu0 %v1190
      %1659 = vmatprep.subr.bf16.mxu0 0
      %1660 = vmatpush1.bf16.msra.mxu0 %v1191
      %1661 = vmatprep.subr.bf16.mxu0 0
      %1662 = vmatpush1.bf16.msra.mxu0 %v1192
      %1663 = vmatprep.subr.bf16.mxu0 0
      %1664 = vmatpush1.bf16.msra.mxu0 %v1193
      %1665 = vmatprep.subr.bf16.mxu0 0
      %1666 = vmatpush1.bf16.msra.mxu0 %v1194
      %1667 = vmatprep.subr.bf16.mxu0 0
      %1668 = vmatpush1.bf16.msra.mxu0 %v1195
      %1669 = vmatprep.subr.bf16.mxu0 0
      %1670 = vmatpush1.bf16.msra.mxu0 %v1196
      %1671 = vmatprep.mubr.bf16.mxu0 %v612
      %1672 = vmatmul.mubr.bf16.gmra.mrb[0].mxu0 %v611
      %v1673 = vpop.f32.mrb[0].mxu0
      %v1674 = vadd.f32 %v1609, %v1673
      %v1675 = vpop.f32.mrb[0].mxu0
      %v1676 = vpop.f32.mrb[0].mxu0
      %v1677 = vadd.f32 %v1612, %v1676
      %v1678 = vpop.f32.mrb[0].mxu0
      %1679 = vmatprep.mubr.bf16.mxu0 %v625
      %1680 = vmatmul.mubr.bf16.gmra.mrb[0].mxu0 %v624
      %v1681 = vpop.f32.mrb[0].mxu0
      %v1682 = vadd.f32 %v1617, %v1681
      %v1683 = vpop.f32.mrb[0].mxu0
      %v1684 = vpop.f32.mrb[0].mxu0
      %v1685 = vadd.f32 %v1620, %v1684
      %v1686 = vpop.f32.mrb[0].mxu0
      %1687 = vmatprep.mubr.bf16.mxu0 %v638
      %1688 = vmatmul.mubr.bf16.gmra.mrb[0].mxu0 %v637
      %v1689 = vpop.f32.mrb[0].mxu0
      %v1690 = vadd.f32 %v1625, %v1689
      %v1691 = vpop.f32.mrb[0].mxu0
      %v1692 = vpop.f32.mrb[0].mxu0
      %v1693 = vadd.f32 %v1628, %v1692
      %v1694 = vpop.f32.mrb[0].mxu0
      %1695 = vmatprep.mubr.bf16.mxu0 %v651
      %1696 = vmatmul.mubr.bf16.gmra.mrb[0].mxu0 %v650
      %v1697 = vpop.f32.mrb[0].mxu0
      %v1698 = vadd.f32 %v1633, %v1697
      %v1699 = vpop.f32.mrb[0].mxu0
      %v1700 = vpop.f32.mrb[0].mxu0
      %v1701 = vadd.f32 %v1636, %v1700
      %v1702 = vpop.f32.mrb[0].mxu0
      %1703 = vdwg.mxu0
      %1704 = vmatprep.subr.bf16.mxu0 0
      %1705 = vmatpush1.bf16.msra.mxu0 %v1197
      %1706 = vmatprep.subr.bf16.mxu0 0
      %1707 = vmatpush1.bf16.msra.mxu0 %v1198
      %1708 = vmatprep.subr.bf16.mxu0 0
      %1709 = vmatpush1.bf16.msra.mxu0 %v1199
      %1710 = vmatprep.subr.bf16.mxu0 0
      %1711 = vmatpush1.bf16.msra.mxu0 %v1200
      %1712 = vmatprep.subr.bf16.mxu0 0
      %1713 = vmatpush1.bf16.msra.mxu0 0
      %1714 = vmatprep.subr.bf16.mxu0 0
      %1715 = vmatpush1.bf16.msra.mxu0 0
      %1716 = vmatprep.subr.bf16.mxu0 0
      %1717 = vmatpush1.bf16.msra.mxu0 0
      %1718 = vmatprep.subr.bf16.mxu0 0
      %1719 = vmatpush1.bf16.msra.mxu0 0
      %1720 = vmatprep.subr.bf16.mxu0 0
      %1721 = vmatpush1.bf16.msra.mxu0 0
      %1722 = vmatprep.subr.bf16.mxu0 0
      %1723 = vmatpush1.bf16.msra.mxu0 0
      %1724 = vmatprep.subr.bf16.mxu0 0
      %1725 = vmatpush1.bf16.msra.mxu0 0
      %1726 = vmatprep.subr.bf16.mxu0 0
      %1727 = vmatpush1.bf16.msra.mxu0 0
      %1728 = vmatprep.subr.bf16.mxu0 0
      %1729 = vmatpush1.bf16.msra.mxu0 0
      %1730 = vmatprep.subr.bf16.mxu0 0
      %1731 = vmatpush1.bf16.msra.mxu0 0
      %1732 = vmatprep.subr.bf16.mxu0 0
      %1733 = vmatpush1.bf16.msra.mxu0 0
      %1734 = vmatprep.subr.bf16.mxu0 0
      %1735 = vmatpush1.bf16.msra.mxu0 0
      %1736 = vmatprep.mubr.bf16.mxu0 0
      %1737 = vmatmul.mubr.bf16.gmra.mrb[0].mxu0 %v1303
      %v1738 = vpop.f32.mrb[0].mxu0
      %v1739 = vadd.f32 %v1674, %v1738
      %v1740 = vpop.f32.mrb[0].mxu0
      %v1741 = vpop.f32.mrb[0].mxu0
      %v1742 = vadd.f32 %v1677, %v1741
      %v1743 = vpop.f32.mrb[0].mxu0
      %1744 = vmatprep.mubr.bf16.mxu0 0
      %1745 = vmatmul.mubr.bf16.gmra.mrb[0].mxu0 %v1306
      %v1746 = vpop.f32.mrb[0].mxu0
      %v1747 = vadd.f32 %v1682, %v1746
      %v1748 = vpop.f32.mrb[0].mxu0
      %v1749 = vpop.f32.mrb[0].mxu0
      %v1750 = vadd.f32 %v1685, %v1749
      %v1751 = vpop.f32.mrb[0].mxu0
      %1752 = vmatprep.mubr.bf16.mxu0 0
      %1753 = vmatmul.mubr.bf16.gmra.mrb[0].mxu0 %v1309
      %v1754 = vpop.f32.mrb[0].mxu0
      %v1755 = vadd.f32 %v1690, %v1754
      %v1756 = vpop.f32.mrb[0].mxu0
      %v1757 = vpop.f32.mrb[0].mxu0
      %v1758 = vadd.f32 %v1693, %v1757
      %v1759 = vpop.f32.mrb[0].mxu0
      %1760 = vmatprep.mubr.bf16.mxu0 0
      %1761 = vmatmul.mubr.bf16.gmra.mrb[0].mxu0 %v1312
      %v1762 = vpop.f32.mrb[0].mxu0
      %v1763 = vadd.f32 %v1698, %v1762
      %v1764 = vpop.f32.mrb[0].mxu0
      %v1765 = vpop.f32.mrb[0].mxu0
      %v1766 = vadd.f32 %v1701, %v1765
      %v1767 = vpop.f32.mrb[0].mxu0
      %1768 = vdwg.mxu0
      %v1769 = vmul.f32 %v1739, 0.2
      %v1770 = vmul.f32 %v1742, 0.2
      %v1771 = vmul.f32 %v1747, 0.2
      %v1772 = vmul.f32 %v1750, 0.2
      %v1773 = vmul.f32 %v1755, 0.2
      %v1774 = vmul.f32 %v1758, 0.2
      %v1775 = vmul.f32 %v1763, 0.2
      %v1776 = vmul.f32 %v1766, 0.2
      %v1777 = vmax.f32 %v1739, %v1769
      %v1778 = vmax.f32 %v1742, %v1770
      %v1779 = vmax.f32 %v1747, %v1771
      %v1780 = vmax.f32 %v1750, %v1772
      %v1781 = vmax.f32 %v1755, %v1773
      %v1782 = vmax.f32 %v1758, %v1774
      %v1783 = vmax.f32 %v1763, %v1775
      %v1784 = vmax.f32 %v1766, %v1776
      %v1785 = vpack.c.bf16 %v1778, %v1777
      %v1786 = vpack.c.bf16 %v1780, %v1779
      %v1787 = vpack.c.bf16 %v1782, %v1781
      %v1788 = vpack.c.bf16 %v1784, %v1783
      %v1793 = vunpack.c.l.b16 %v1785
      %v1794 = vunpack.c.h.b16 %v1785
      %v1795 = vunpack.c.l.b16 %v1786
      %v1796 = vunpack.c.h.b16 %v1786
      %v1797 = vunpack.c.l.b16 %v1787
      %v1798 = vunpack.c.h.b16 %v1787
      %v1799 = vunpack.c.l.b16 %v1788
      %v1800 = vunpack.c.h.b16 %v1788
      %v1801 = vpack.c.b16 %v1793, %v1793
      %v1802 = vpack.c.b16 %v1794, %v1794
      %v1803 = vpack.c.b16 %v1795, %v1795
      %v1804 = vpack.c.b16 %v1796, %v1796
      %v1805 = vpack.c.b16 %v1797, %v1797
      %v1806 = vpack.c.b16 %v1798, %v1798
      %v1807 = vpack.c.b16 %v1799, %v1799
      %v1808 = vpack.c.b16 %v1800, %v1800
      %1817 = vst [vmem:[%s175] sm:$0xf] %v1801
      %1818 = vst [vmem:[%s175 + $0x4] sm:$0xf] %v1802
      %1819 = vst [vmem:[%s175 + $0x8] sm:$0xf] %v1803
      %1820 = vst [vmem:[%s175 + $0xc] sm:$0xf] %v1804
      %1821 = vst [vmem:[%s175 + $0x10] sm:$0xf] %v1805
      %1822 = vst [vmem:[%s175 + $0x14] sm:$0xf] %v1806
      %1823 = vst [vmem:[%s175 + $0x18] sm:$0xf] %v1807
      %1824 = vst [vmem:[%s175 + $0x1c] sm:$0xf] %v1808
      %s1825 = smul.u32 8, %s14
      %p1826 = scmp.lt.s32.totalorder %s1825, 31
      %s1827 = scalar_select %p1826, %s1825, 31
      %s1828 = smul.addr %s1827, 4
      %s1829 = scalar_lea.vmem %s3, %s1828
      // Predicated region
      $region33: #{discriminator_forward.8} parent=31 // pred_check
        %p1830 = pneg %p100
      $region34: #{discriminator_forward.8} parent=31 // pred_check_branch
        %1832 = sbr.rel (%p1830) target = $region36
      $region35: #{discriminator_forward.8} parent=31 // pred_region
        %s1833 = smul.u32 8, %s14
      $region36: #{discriminator_forward.8} parent=31 // pred_fallthru
        _
    $region32: #{discriminator_forward.8} parent=5 // pred_fallthru
      _
    %p1834 = scmp.le.s32.totalorder 2, %s9
    // Predicated region
    $region37: #{discriminator_forward.8} parent=5 // pred_check
      %p1835 = pneg %p1834
    $region38: #{discriminator_forward.8} parent=5 // pred_check_branch
      %1837 = sbr.rel (%p1835) target = $region40
    $region39: #{discriminator_forward.8} parent=5 // pred_region
      %s1838 = ssub.s32 %s9, 2
      // Predicated region
      $region41: #{discriminator_forward.8} parent=39 // pred_check
        %p1839 = pneg %p106
      $region42: #{discriminator_forward.8} parent=39 // pred_check_branch
        %1841 = sbr.rel (%p1839) target = $region44
      $region43: #{discriminator_forward.8} parent=39 // pred_region
        %s1842 = smul.u32 8, %s15
        %p1843 = scmp.lt.s32.totalorder %s1842, 31
        %s1844 = scalar_select %p1843, %s1842, 31
        %s1845 = smul.addr %s1844, 4
        %s1846 = scalar_lea.vmem %s3, %s1845
      $region44: #{discriminator_forward.8} parent=39 // pred_fallthru
        _
    $region40: #{discriminator_forward.8} parent=5 // pred_fallthru
      _
  $region6: #{discriminator_forward.8} parent=0 // loop_footer
    %s13 = sadd.s32 1, %s9
  $region7: #{discriminator_forward.8} parent=0 // loop_footer_branch
    %8 = sbr.rel target = $region3
  $region8: #{discriminator_forward.8} parent=0 // loop_exit
    _

// kernel: discriminator_forward.9
$region0: #{discriminator_forward.9}
  #allocation0 [shape = 'u32[]', space=smem, size = 0x4, offset = 0x4, fixed_abs, tag = 'smem constant byte address 0x4 - core index']
  #allocation1 [shape = 'u32[144,128]{1,0:T(1,128)}', space=vmem, size = 0x12000, scoped, tag = 'internal scratch']
  %s0 = inlined_call_operand.vmem [shape: bf16[98,1600], index: 0, kind: input, shape index: {}]
  %s1 = inlined_call_operand.vmem [shape: bf16[1600,128], index: 1, kind: input, shape index: {}]
  %s2 = inlined_call_operand.vmem [shape: f32[1,128], index: 2, kind: input, shape index: {}]
  %s3 = inlined_call_operand.vmem [shape: f32[9,98,128], index: 3, kind: input, shape index: {}]
  %s4 = inlined_call_operand.vmem [shape: f32[98,2], index: 4, kind: input, shape index: {}]
  %s5 = inlined_call_operand.vmem [shape: f32[9,2], index: 5, kind: output, shape index: {}]
  %s6 = sld [smem:[#allocation0]]
  $region30: #{discriminator_forward.9} parent=0
    _
  %s8 = ssub.s32 1, %s6
  %s9 = scalar_select 0, %s8, %s6
  // Predicated region
  $region2: #{discriminator_forward.9} parent=0 // pred_check
    _
  $region3: #{discriminator_forward.9} parent=0 // pred_check_branch
    %11 = sbr.rel (0) target = $region5
  $region4: #{discriminator_forward.9} parent=0 // pred_region
    _
  $region5: #{discriminator_forward.9} parent=0 // pred_fallthru
    _
  // Predicated region
  $region6: #{discriminator_forward.9} parent=0 // pred_check
    _
  $region7: #{discriminator_forward.9} parent=0 // pred_check_branch
    %13 = sbr.rel (0) target = $region9
  $region8: #{discriminator_forward.9} parent=0 // pred_region
    _
  $region9: #{discriminator_forward.9} parent=0 // pred_fallthru
    _
  // Predicated region
  $region10: #{discriminator_forward.9} parent=0 // pred_check
    _
  $region11: #{discriminator_forward.9} parent=0 // pred_check_branch
    %15 = sbr.rel (0) target = $region13
  $region12: #{discriminator_forward.9} parent=0 // pred_region
    _
  $region13: #{discriminator_forward.9} parent=0 // pred_fallthru
    _
  // Predicated region
  $region14: #{discriminator_forward.9} parent=0 // pred_check
    _
  $region15: #{discriminator_forward.9} parent=0 // pred_check_branch
    %17 = sbr.rel (0) target = $region17
  $region16: #{discriminator_forward.9} parent=0 // pred_region
    _
  $region17: #{discriminator_forward.9} parent=0 // pred_fallthru
    _
  // Predicated region
  $region18: #{discriminator_forward.9} parent=0 // pred_check
    _
  $region19: #{discriminator_forward.9} parent=0 // pred_check_branch
    %19 = sbr.rel (0) target = $region21
  $region20: #{discriminator_forward.9} parent=0 // pred_region
    _
  $region21: #{discriminator_forward.9} parent=0 // pred_fallthru
    _
  %v21 = vld [vmem:[%s0] sm:$0xff]
  %v22 = vld [vmem:[%s0 + $0x8] sm:$0xff]
  %v23 = vld [vmem:[%s0 + $0x10] sm:$0xff]
  %v24 = vld [vmem:[%s0 + $0x18] sm:$0xff]
  %v25 = vld [vmem:[%s0 + $0x20] sm:$0xff]
  %v26 = vld [vmem:[%s0 + $0x28] sm:$0xff]
  %v27 = vld [vmem:[%s0 + $0x30] sm:$0xf]
  %v28 = vld [vmem:[%s0 + $0x34] sm:$0xff]
  %v29 = vld [vmem:[%s0 + $0x3c] sm:$0xff]
  %v30 = vld [vmem:[%s0 + $0x44] sm:$0xff]
  %v31 = vld [vmem:[%s0 + $0x4c] sm:$0xff]
  %v32 = vld [vmem:[%s0 + $0x54] sm:$0xff]
  %v33 = vld [vmem:[%s0 + $0x5c] sm:$0xff]
  %v34 = vld [vmem:[%s0 + $0x64] sm:$0xf]
  %v35 = vld [vmem:[%s0 + $0x68] sm:$0xff]
  %v36 = vld [vmem:[%s0 + $0x70] sm:$0xff]
  %v37 = vld [vmem:[%s0 + $0x78] sm:$0xff]
  %v38 = vld [vmem:[%s0 + $0x80] sm:$0xff]
  %v39 = vld [vmem:[%s0 + $0x88] sm:$0xff]
  %v40 = vld [vmem:[%s0 + $0x90] sm:$0xff]
  %v41 = vld [vmem:[%s0 + $0x98] sm:$0xf]
  %v42 = vld [vmem:[%s0 + $0x9c] sm:$0xff]
  %v43 = vld [vmem:[%s0 + $0xa4] sm:$0xff]
  %v44 = vld [vmem:[%s0 + $0xac] sm:$0xff]
  %v45 = vld [vmem:[%s0 + $0xb4] sm:$0xff]
  %v46 = vld [vmem:[%s0 + $0xbc] sm:$0xff]
  %v47 = vld [vmem:[%s0 + $0xc4] sm:$0xff]
  %v48 = vld [vmem:[%s0 + $0xcc] sm:$0xf]
  %v49 = vld [vmem:[%s0 + $0xd0] sm:$0xff]
  %v50 = vld [vmem:[%s0 + $0xd8] sm:$0xff]
  %v51 = vld [vmem:[%s0 + $0xe0] sm:$0xff]
  %v52 = vld [vmem:[%s0 + $0xe8] sm:$0xff]
  %v53 = vld [vmem:[%s0 + $0xf0] sm:$0xff]
  %v54 = vld [vmem:[%s0 + $0xf8] sm:$0xff]
  %v55 = vld [vmem:[%s0 + $0x100] sm:$0xf]
  %v56 = vld [vmem:[%s0 + $0x104] sm:$0xff]
  %v57 = vld [vmem:[%s0 + $0x10c] sm:$0xff]
  %v58 = vld [vmem:[%s0 + $0x114] sm:$0xff]
  %v59 = vld [vmem:[%s0 + $0x11c] sm:$0xff]
  %v60 = vld [vmem:[%s0 + $0x124] sm:$0xff]
  %v61 = vld [vmem:[%s0 + $0x12c] sm:$0xff]
  %v62 = vld [vmem:[%s0 + $0x134] sm:$0xf]
  %v63 = vld [vmem:[%s0 + $0x138] sm:$0xff]
  %v64 = vld [vmem:[%s0 + $0x140] sm:$0xff]
  %v65 = vld [vmem:[%s0 + $0x148] sm:$0xff]
  %v66 = vld [vmem:[%s0 + $0x150] sm:$0xff]
  %v67 = vld [vmem:[%s0 + $0x158] sm:$0xff]
  %v68 = vld [vmem:[%s0 + $0x160] sm:$0xff]
  %v69 = vld [vmem:[%s0 + $0x168] sm:$0xf]
  %v70 = vld [vmem:[%s0 + $0x16c] sm:$0xff]
  %v71 = vld [vmem:[%s0 + $0x174] sm:$0xff]
  %v72 = vld [vmem:[%s0 + $0x17c] sm:$0xff]
  %v73 = vld [vmem:[%s0 + $0x184] sm:$0xff]
  %v74 = vld [vmem:[%s0 + $0x18c] sm:$0xff]
  %v75 = vld [vmem:[%s0 + $0x194] sm:$0xff]
  %v76 = vld [vmem:[%s0 + $0x19c] sm:$0xf]
  %v77 = vld [vmem:[%s0 + $0x1a0] sm:$0xff]
  %v78 = vld [vmem:[%s0 + $0x1a8] sm:$0xff]
  %v79 = vld [vmem:[%s0 + $0x1b0] sm:$0xff]
  %v80 = vld [vmem:[%s0 + $0x1b8] sm:$0xff]
  %v81 = vld [vmem:[%s0 + $0x1c0] sm:$0xff]
  %v82 = vld [vmem:[%s0 + $0x1c8] sm:$0xff]
  %v83 = vld [vmem:[%s0 + $0x1d0] sm:$0xf]
  %v84 = vld [vmem:[%s0 + $0x1d4] sm:$0xff]
  %v85 = vld [vmem:[%s0 + $0x1dc] sm:$0xff]
  %v86 = vld [vmem:[%s0 + $0x1e4] sm:$0xff]
  %v87 = vld [vmem:[%s0 + $0x1ec] sm:$0xff]
  %v88 = vld [vmem:[%s0 + $0x1f4] sm:$0xff]
  %v89 = vld [vmem:[%s0 + $0x1fc] sm:$0xff]
  %v90 = vld [vmem:[%s0 + $0x204] sm:$0xf]
  %v91 = vld [vmem:[%s0 + $0x208] sm:$0xff]
  %v92 = vld [vmem:[%s0 + $0x210] sm:$0xff]
  %v93 = vld [vmem:[%s0 + $0x218] sm:$0xff]
  %v94 = vld [vmem:[%s0 + $0x220] sm:$0xff]
  %v95 = vld [vmem:[%s0 + $0x228] sm:$0xff]
  %v96 = vld [vmem:[%s0 + $0x230] sm:$0xff]
  %v97 = vld [vmem:[%s0 + $0x238] sm:$0xf]
  %v98 = vld [vmem:[%s0 + $0x23c] sm:$0xff]
  %v99 = vld [vmem:[%s0 + $0x244] sm:$0xff]
  %v100 = vld [vmem:[%s0 + $0x24c] sm:$0xff]
  %v101 = vld [vmem:[%s0 + $0x254] sm:$0xff]
  %v102 = vld [vmem:[%s0 + $0x25c] sm:$0xff]
  %v103 = vld [vmem:[%s0 + $0x264] sm:$0xff]
  %v104 = vld [vmem:[%s0 + $0x26c] sm:$0xf]
  %v105 = vld [vmem:[%s0 + $0x270] sm:$0x11]
  %v106 = vld [vmem:[%s0 + $0x278] sm:$0x11]
  %v107 = vld [vmem:[%s0 + $0x280] sm:$0x11]
  %v108 = vld [vmem:[%s0 + $0x288] sm:$0x11]
  %v109 = vld [vmem:[%s0 + $0x290] sm:$0x11]
  %v110 = vld [vmem:[%s0 + $0x298] sm:$0x11]
  %v111 = vld [vmem:[%s0 + $0x2a0] sm:$0x1]
  %v112 = vld [vmem:[%s1] sm:$0xf]
  %v113 = vld [vmem:[%s1 + $0x4] sm:$0xf]
  %v114 = vld [vmem:[%s1 + $0x8] sm:$0xf]
  %v115 = vld [vmem:[%s1 + $0xc] sm:$0xf]
  %v116 = vld [vmem:[%s1 + $0x10] sm:$0xf]
  %v117 = vld [vmem:[%s1 + $0x14] sm:$0xf]
  %v118 = vld [vmem:[%s1 + $0x18] sm:$0xf]
  %v119 = vld [vmem:[%s1 + $0x1c] sm:$0xf]
  %v120 = vld [vmem:[%s1 + $0x20] sm:$0xf]
  %v121 = vld [vmem:[%s1 + $0x24] sm:$0xf]
  %v122 = vld [vmem:[%s1 + $0x28] sm:$0xf]
  %v123 = vld [vmem:[%s1 + $0x2c] sm:$0xf]
  %v124 = vld [vmem:[%s1 + $0x30] sm:$0xf]
  %v125 = vld [vmem:[%s1 + $0x34] sm:$0xf]
  %v126 = vld [vmem:[%s1 + $0x38] sm:$0xf]
  %v127 = vld [vmem:[%s1 + $0x3c] sm:$0xf]
  %v128 = vld [vmem:[%s1 + $0x40] sm:$0xf]
  %v129 = vld [vmem:[%s1 + $0x44] sm:$0xf]
  %v130 = vld [vmem:[%s1 + $0x48] sm:$0xf]
  %v131 = vld [vmem:[%s1 + $0x4c] sm:$0xf]
  %v132 = vld [vmem:[%s1 + $0x50] sm:$0xf]
  %v133 = vld [vmem:[%s1 + $0x54] sm:$0xf]
  %v134 = vld [vmem:[%s1 + $0x58] sm:$0xf]
  %v135 = vld [vmem:[%s1 + $0x5c] sm:$0xf]
  %v136 = vld [vmem:[%s1 + $0x60] sm:$0xf]
  %v137 = vld [vmem:[%s1 + $0x64] sm:$0xf]
  %v138 = vld [vmem:[%s1 + $0x68] sm:$0xf]
  %v139 = vld [vmem:[%s1 + $0x6c] sm:$0xf]
  %v140 = vld [vmem:[%s1 + $0x70] sm:$0xf]
  %v141 = vld [vmem:[%s1 + $0x74] sm:$0xf]
  %v142 = vld [vmem:[%s1 + $0x78] sm:$0xf]
  %v143 = vld [vmem:[%s1 + $0x7c] sm:$0xf]
  %v144 = vld [vmem:[%s1 + $0x80] sm:$0xf]
  %v145 = vld [vmem:[%s1 + $0x84] sm:$0xf]
  %v146 = vld [vmem:[%s1 + $0x88] sm:$0xf]
  %v147 = vld [vmem:[%s1 + $0x8c] sm:$0xf]
  %v148 = vld [vmem:[%s1 + $0x90] sm:$0xf]
  %v149 = vld [vmem:[%s1 + $0x94] sm:$0xf]
  %v150 = vld [vmem:[%s1 + $0x98] sm:$0xf]
  %v151 = vld [vmem:[%s1 + $0x9c] sm:$0xf]
  %v152 = vld [vmem:[%s1 + $0xa0] sm:$0xf]
  %v153 = vld [vmem:[%s1 + $0xa4] sm:$0xf]
  %v154 = vld [vmem:[%s1 + $0xa8] sm:$0xf]
  %v155 = vld [vmem:[%s1 + $0xac] sm:$0xf]
  %v156 = vld [vmem:[%s1 + $0xb0] sm:$0xf]
  %v157 = vld [vmem:[%s1 + $0xb4] sm:$0xf]
  %v158 = vld [vmem:[%s1 + $0xb8] sm:$0xf]
  %v159 = vld [vmem:[%s1 + $0xbc] sm:$0xf]
  %v160 = vld [vmem:[%s1 + $0xc0] sm:$0xf]
  %v161 = vld [vmem:[%s1 + $0xc4] sm:$0xf]
  %v162 = vld [vmem:[%s1 + $0xc8] sm:$0xf]
  %v163 = vld [vmem:[%s1 + $0xcc] sm:$0xf]
  %v164 = vld [vmem:[%s1 + $0xd0] sm:$0xf]
  %v165 = vld [vmem:[%s1 + $0xd4] sm:$0xf]
  %v166 = vld [vmem:[%s1 + $0xd8] sm:$0xf]
  %v167 = vld [vmem:[%s1 + $0xdc] sm:$0xf]
  %v168 = vld [vmem:[%s1 + $0xe0] sm:$0xf]
  %v169 = vld [vmem:[%s1 + $0xe4] sm:$0xf]
  %v170 = vld [vmem:[%s1 + $0xe8] sm:$0xf]
  %v171 = vld [vmem:[%s1 + $0xec] sm:$0xf]
  %v172 = vld [vmem:[%s1 + $0xf0] sm:$0xf]
  %v173 = vld [vmem:[%s1 + $0xf4] sm:$0xf]
  %v174 = vld [vmem:[%s1 + $0xf8] sm:$0xf]
  %v175 = vld [vmem:[%s1 + $0xfc] sm:$0xf]
  %v176 = vld [vmem:[%s1 + $0x100] sm:$0xf]
  %v177 = vld [vmem:[%s1 + $0x104] sm:$0xf]
  %v178 = vld [vmem:[%s1 + $0x108] sm:$0xf]
  %v179 = vld [vmem:[%s1 + $0x10c] sm:$0xf]
  %v180 = vld [vmem:[%s1 + $0x110] sm:$0xf]
  %v181 = vld [vmem:[%s1 + $0x114] sm:$0xf]
  %v182 = vld [vmem:[%s1 + $0x118] sm:$0xf]
  %v183 = vld [vmem:[%s1 + $0x11c] sm:$0xf]
  %v184 = vld [vmem:[%s1 + $0x120] sm:$0xf]
  %v185 = vld [vmem:[%s1 + $0x124] sm:$0xf]
  %v186 = vld [vmem:[%s1 + $0x128] sm:$0xf]
  %v187 = vld [vmem:[%s1 + $0x12c] sm:$0xf]
  %v188 = vld [vmem:[%s1 + $0x130] sm:$0xf]
  %v189 = vld [vmem:[%s1 + $0x134] sm:$0xf]
  %v190 = vld [vmem:[%s1 + $0x138] sm:$0xf]
  %v191 = vld [vmem:[%s1 + $0x13c] sm:$0xf]
  %v192 = vld [vmem:[%s1 + $0x140] sm:$0xf]
  %v193 = vld [vmem:[%s1 + $0x144] sm:$0xf]
  %v194 = vld [vmem:[%s1 + $0x148] sm:$0xf]
  %v195 = vld [vmem:[%s1 + $0x14c] sm:$0xf]
  %v196 = vld [vmem:[%s1 + $0x150] sm:$0xf]
  %v197 = vld [vmem:[%s1 + $0x154] sm:$0xf]
  %v198 = vld [vmem:[%s1 + $0x158] sm:$0xf]
  %v199 = vld [vmem:[%s1 + $0x15c] sm:$0xf]
  %v200 = vld [vmem:[%s1 + $0x160] sm:$0xf]
  %v201 = vld [vmem:[%s1 + $0x164] sm:$0xf]
  %v202 = vld [vmem:[%s1 + $0x168] sm:$0xf]
  %v203 = vld [vmem:[%s1 + $0x16c] sm:$0xf]
  %v204 = vld [vmem:[%s1 + $0x170] sm:$0xf]
  %v205 = vld [vmem:[%s1 + $0x174] sm:$0xf]
  %v206 = vld [vmem:[%s1 + $0x178] sm:$0xf]
  %v207 = vld [vmem:[%s1 + $0x17c] sm:$0xf]
  %v208 = vld [vmem:[%s1 + $0x180] sm:$0xf]
  %v209 = vld [vmem:[%s1 + $0x184] sm:$0xf]
  %v210 = vld [vmem:[%s1 + $0x188] sm:$0xf]
  %v211 = vld [vmem:[%s1 + $0x18c] sm:$0xf]
  %v212 = vld [vmem:[%s1 + $0x190] sm:$0xf]
  %v213 = vld [vmem:[%s1 + $0x194] sm:$0xf]
  %v214 = vld [vmem:[%s1 + $0x198] sm:$0xf]
  %v215 = vld [vmem:[%s1 + $0x19c] sm:$0xf]
  %v216 = vld [vmem:[%s1 + $0x1a0] sm:$0xf]
  %v217 = vld [vmem:[%s1 + $0x1a4] sm:$0xf]
  %v218 = vld [vmem:[%s1 + $0x1a8] sm:$0xf]
  %v219 = vld [vmem:[%s1 + $0x1ac] sm:$0xf]
  %v220 = vld [vmem:[%s1 + $0x1b0] sm:$0xf]
  %v221 = vld [vmem:[%s1 + $0x1b4] sm:$0xf]
  %v222 = vld [vmem:[%s1 + $0x1b8] sm:$0xf]
  %v223 = vld [vmem:[%s1 + $0x1bc] sm:$0xf]
  %v224 = vld [vmem:[%s1 + $0x1c0] sm:$0xf]
  %v225 = vld [vmem:[%s1 + $0x1c4] sm:$0xf]
  %v226 = vld [vmem:[%s1 + $0x1c8] sm:$0xf]
  %v227 = vld [vmem:[%s1 + $0x1cc] sm:$0xf]
  %v228 = vld [vmem:[%s1 + $0x1d0] sm:$0xf]
  %v229 = vld [vmem:[%s1 + $0x1d4] sm:$0xf]
  %v230 = vld [vmem:[%s1 + $0x1d8] sm:$0xf]
  %v231 = vld [vmem:[%s1 + $0x1dc] sm:$0xf]
  %v232 = vld [vmem:[%s1 + $0x1e0] sm:$0xf]
  %v233 = vld [vmem:[%s1 + $0x1e4] sm:$0xf]
  %v234 = vld [vmem:[%s1 + $0x1e8] sm:$0xf]
  %v235 = vld [vmem:[%s1 + $0x1ec] sm:$0xf]
  %v236 = vld [vmem:[%s1 + $0x1f0] sm:$0xf]
  %v237 = vld [vmem:[%s1 + $0x1f4] sm:$0xf]
  %v238 = vld [vmem:[%s1 + $0x1f8] sm:$0xf]
  %v239 = vld [vmem:[%s1 + $0x1fc] sm:$0xf]
  %v240 = vld [vmem:[%s1 + $0x200] sm:$0xf]
  %v241 = vld [vmem:[%s1 + $0x204] sm:$0xf]
  %v242 = vld [vmem:[%s1 + $0x208] sm:$0xf]
  %v243 = vld [vmem:[%s1 + $0x20c] sm:$0xf]
  %v244 = vld [vmem:[%s1 + $0x210] sm:$0xf]
  %v245 = vld [vmem:[%s1 + $0x214] sm:$0xf]
  %v246 = vld [vmem:[%s1 + $0x218] sm:$0xf]
  %v247 = vld [vmem:[%s1 + $0x21c] sm:$0xf]
  %v248 = vld [vmem:[%s1 + $0x220] sm:$0xf]
  %v249 = vld [vmem:[%s1 + $0x224] sm:$0xf]
  %v250 = vld [vmem:[%s1 + $0x228] sm:$0xf]
  %v251 = vld [vmem:[%s1 + $0x22c] sm:$0xf]
  %v252 = vld [vmem:[%s1 + $0x230] sm:$0xf]
  %v253 = vld [vmem:[%s1 + $0x234] sm:$0xf]
  %v254 = vld [vmem:[%s1 + $0x238] sm:$0xf]
  %v255 = vld [vmem:[%s1 + $0x23c] sm:$0xf]
  %v256 = vld [vmem:[%s1 + $0x240] sm:$0xf]
  %v257 = vld [vmem:[%s1 + $0x244] sm:$0xf]
  %v258 = vld [vmem:[%s1 + $0x248] sm:$0xf]
  %v259 = vld [vmem:[%s1 + $0x24c] sm:$0xf]
  %v260 = vld [vmem:[%s1 + $0x250] sm:$0xf]
  %v261 = vld [vmem:[%s1 + $0x254] sm:$0xf]
  %v262 = vld [vmem:[%s1 + $0x258] sm:$0xf]
  %v263 = vld [vmem:[%s1 + $0x25c] sm:$0xf]
  %v264 = vld [vmem:[%s1 + $0x260] sm:$0xf]
  %v265 = vld [vmem:[%s1 + $0x264] sm:$0xf]
  %v266 = vld [vmem:[%s1 + $0x268] sm:$0xf]
  %v267 = vld [vmem:[%s1 + $0x26c] sm:$0xf]
  %v268 = vld [vmem:[%s1 + $0x270] sm:$0xf]
  %v269 = vld [vmem:[%s1 + $0x274] sm:$0xf]
  %v270 = vld [vmem:[%s1 + $0x278] sm:$0xf]
  %v271 = vld [vmem:[%s1 + $0x27c] sm:$0xf]
  %v272 = vld [vmem:[%s1 + $0x280] sm:$0xf]
  %v273 = vld [vmem:[%s1 + $0x284] sm:$0xf]
  %v274 = vld [vmem:[%s1 + $0x288] sm:$0xf]
  %v275 = vld [vmem:[%s1 + $0x28c] sm:$0xf]
  %v276 = vld [vmem:[%s1 + $0x290] sm:$0xf]
  %v277 = vld [vmem:[%s1 + $0x294] sm:$0xf]
  %v278 = vld [vmem:[%s1 + $0x298] sm:$0xf]
  %v279 = vld [vmem:[%s1 + $0x29c] sm:$0xf]
  %v280 = vld [vmem:[%s1 + $0x2a0] sm:$0xf]
  %v281 = vld [vmem:[%s1 + $0x2a4] sm:$0xf]
  %v282 = vld [vmem:[%s1 + $0x2a8] sm:$0xf]
  %v283 = vld [vmem:[%s1 + $0x2ac] sm:$0xf]
  %v284 = vld [vmem:[%s1 + $0x2b0] sm:$0xf]
  %v285 = vld [vmem:[%s1 + $0x2b4] sm:$0xf]
  %v286 = vld [vmem:[%s1 + $0x2b8] sm:$0xf]
  %v287 = vld [vmem:[%s1 + $0x2bc] sm:$0xf]
  %v288 = vld [vmem:[%s1 + $0x2c0] sm:$0xf]
  %v289 = vld [vmem:[%s1 + $0x2c4] sm:$0xf]
  %v290 = vld [vmem:[%s1 + $0x2c8] sm:$0xf]
  %v291 = vld [vmem:[%s1 + $0x2cc] sm:$0xf]
  %v292 = vld [vmem:[%s1 + $0x2d0] sm:$0xf]
  %v293 = vld [vmem:[%s1 + $0x2d4] sm:$0xf]
  %v294 = vld [vmem:[%s1 + $0x2d8] sm:$0xf]
  %v295 = vld [vmem:[%s1 + $0x2dc] sm:$0xf]
  %v296 = vld [vmem:[%s1 + $0x2e0] sm:$0xf]
  %v297 = vld [vmem:[%s1 + $0x2e4] sm:$0xf]
  %v298 = vld [vmem:[%s1 + $0x2e8] sm:$0xf]
  %v299 = vld [vmem:[%s1 + $0x2ec] sm:$0xf]
  %v300 = vld [vmem:[%s1 + $0x2f0] sm:$0xf]
  %v301 = vld [vmem:[%s1 + $0x2f4] sm:$0xf]
  %v302 = vld [vmem:[%s1 + $0x2f8] sm:$0xf]
  %v303 = vld [vmem:[%s1 + $0x2fc] sm:$0xf]
  %v304 = vld [vmem:[%s1 + $0x300] sm:$0xf]
  %v305 = vld [vmem:[%s1 + $0x304] sm:$0xf]
  %v306 = vld [vmem:[%s1 + $0x308] sm:$0xf]
  %v307 = vld [vmem:[%s1 + $0x30c] sm:$0xf]
  %v308 = vld [vmem:[%s1 + $0x310] sm:$0xf]
  %v309 = vld [vmem:[%s1 + $0x314] sm:$0xf]
  %v310 = vld [vmem:[%s1 + $0x318] sm:$0xf]
  %v311 = vld [vmem:[%s1 + $0x31c] sm:$0xf]
  %v312 = vld [vmem:[%s2] sm:$0x1]
  %v314 = vlaneseq
  %v315 = vshrl.u32 %v314, 7
  %v316 = vsub.s32 0, %v315
  %v317 = vrot.slane %v312, %v316
  %v410 = vunpack.c.l.b16 %v21
  %v411 = vunpack.c.h.b16 %v21
  %v412 = vunpack.c.l.b16 %v22
  %v413 = vunpack.c.h.b16 %v22
  %v414 = vunpack.c.l.b16 %v23
  %v415 = vunpack.c.h.b16 %v23
  %v416 = vunpack.c.l.b16 %v24
  %v417 = vunpack.c.h.b16 %v24
  %v418 = vunpack.c.l.b16 %v25
  %v419 = vunpack.c.h.b16 %v25
  %v420 = vunpack.c.l.b16 %v26
  %v421 = vunpack.c.h.b16 %v26
  %v422 = vunpack.c.l.b16 %v27
  %v423 = vunpack.c.l.b16 %v28
  %v424 = vunpack.c.h.b16 %v28
  %v425 = vunpack.c.l.b16 %v29
  %v426 = vunpack.c.h.b16 %v29
  %v427 = vunpack.c.l.b16 %v30
  %v428 = vunpack.c.h.b16 %v30
  %v429 = vunpack.c.l.b16 %v31
  %v430 = vunpack.c.h.b16 %v31
  %v431 = vunpack.c.l.b16 %v32
  %v432 = vunpack.c.h.b16 %v32
  %v433 = vunpack.c.l.b16 %v33
  %v434 = vunpack.c.h.b16 %v33
  %v435 = vunpack.c.l.b16 %v34
  %v436 = vunpack.c.l.b16 %v35
  %v437 = vunpack.c.h.b16 %v35
  %v438 = vunpack.c.l.b16 %v36
  %v439 = vunpack.c.h.b16 %v36
  %v440 = vunpack.c.l.b16 %v37
  %v441 = vunpack.c.h.b16 %v37
  %v442 = vunpack.c.l.b16 %v38
  %v443 = vunpack.c.h.b16 %v38
  %v444 = vunpack.c.l.b16 %v39
  %v445 = vunpack.c.h.b16 %v39
  %v446 = vunpack.c.l.b16 %v40
  %v447 = vunpack.c.h.b16 %v40
  %v448 = vunpack.c.l.b16 %v41
  %v449 = vunpack.c.l.b16 %v42
  %v450 = vunpack.c.h.b16 %v42
  %v451 = vunpack.c.l.b16 %v43
  %v452 = vunpack.c.h.b16 %v43
  %v453 = vunpack.c.l.b16 %v44
  %v454 = vunpack.c.h.b16 %v44
  %v455 = vunpack.c.l.b16 %v45
  %v456 = vunpack.c.h.b16 %v45
  %v457 = vunpack.c.l.b16 %v46
  %v458 = vunpack.c.h.b16 %v46
  %v459 = vunpack.c.l.b16 %v47
  %v460 = vunpack.c.h.b16 %v47
  %v461 = vunpack.c.l.b16 %v48
  %v462 = vunpack.c.l.b16 %v49
  %v463 = vunpack.c.h.b16 %v49
  %v464 = vunpack.c.l.b16 %v50
  %v465 = vunpack.c.h.b16 %v50
  %v466 = vunpack.c.l.b16 %v51
  %v467 = vunpack.c.h.b16 %v51
  %v468 = vunpack.c.l.b16 %v52
  %v469 = vunpack.c.h.b16 %v52
  %v470 = vunpack.c.l.b16 %v53
  %v471 = vunpack.c.h.b16 %v53
  %v472 = vunpack.c.l.b16 %v54
  %v473 = vunpack.c.h.b16 %v54
  %v474 = vunpack.c.l.b16 %v55
  %v475 = vunpack.c.l.b16 %v56
  %v476 = vunpack.c.h.b16 %v56
  %v477 = vunpack.c.l.b16 %v57
  %v478 = vunpack.c.h.b16 %v57
  %v479 = vunpack.c.l.b16 %v58
  %v480 = vunpack.c.h.b16 %v58
  %v481 = vunpack.c.l.b16 %v59
  %v482 = vunpack.c.h.b16 %v59
  %v483 = vunpack.c.l.b16 %v60
  %v484 = vunpack.c.h.b16 %v60
  %v485 = vunpack.c.l.b16 %v61
  %v486 = vunpack.c.h.b16 %v61
  %v487 = vunpack.c.l.b16 %v62
  %v488 = vunpack.c.l.b16 %v63
  %v489 = vunpack.c.h.b16 %v63
  %v490 = vunpack.c.l.b16 %v64
  %v491 = vunpack.c.h.b16 %v64
  %v492 = vunpack.c.l.b16 %v65
  %v493 = vunpack.c.h.b16 %v65
  %v494 = vunpack.c.l.b16 %v66
  %v495 = vunpack.c.h.b16 %v66
  %v496 = vunpack.c.l.b16 %v67
  %v497 = vunpack.c.h.b16 %v67
  %v498 = vunpack.c.l.b16 %v68
  %v499 = vunpack.c.h.b16 %v68
  %v500 = vunpack.c.l.b16 %v69
  %v501 = vunpack.c.l.b16 %v70
  %v502 = vunpack.c.h.b16 %v70
  %v503 = vunpack.c.l.b16 %v71
  %v504 = vunpack.c.h.b16 %v71
  %v505 = vunpack.c.l.b16 %v72
  %v506 = vunpack.c.h.b16 %v72
  %v507 = vunpack.c.l.b16 %v73
  %v508 = vunpack.c.h.b16 %v73
  %v509 = vunpack.c.l.b16 %v74
  %v510 = vunpack.c.h.b16 %v74
  %v511 = vunpack.c.l.b16 %v75
  %v512 = vunpack.c.h.b16 %v75
  %v513 = vunpack.c.l.b16 %v76
  %v514 = vunpack.c.l.b16 %v77
  %v515 = vunpack.c.h.b16 %v77
  %v516 = vunpack.c.l.b16 %v78
  %v517 = vunpack.c.h.b16 %v78
  %v518 = vunpack.c.l.b16 %v79
  %v519 = vunpack.c.h.b16 %v79
  %v520 = vunpack.c.l.b16 %v80
  %v521 = vunpack.c.h.b16 %v80
  %v522 = vunpack.c.l.b16 %v81
  %v523 = vunpack.c.h.b16 %v81
  %v524 = vunpack.c.l.b16 %v82
  %v525 = vunpack.c.h.b16 %v82
  %v526 = vunpack.c.l.b16 %v83
  %v527 = vunpack.c.l.b16 %v84
  %v528 = vunpack.c.h.b16 %v84
  %v529 = vunpack.c.l.b16 %v85
  %v530 = vunpack.c.h.b16 %v85
  %v531 = vunpack.c.l.b16 %v86
  %v532 = vunpack.c.h.b16 %v86
  %v533 = vunpack.c.l.b16 %v87
  %v534 = vunpack.c.h.b16 %v87
  %v535 = vunpack.c.l.b16 %v88
  %v536 = vunpack.c.h.b16 %v88
  %v537 = vunpack.c.l.b16 %v89
  %v538 = vunpack.c.h.b16 %v89
  %v539 = vunpack.c.l.b16 %v90
  %v540 = vunpack.c.l.b16 %v91
  %v541 = vunpack.c.h.b16 %v91
  %v542 = vunpack.c.l.b16 %v92
  %v543 = vunpack.c.h.b16 %v92
  %v544 = vunpack.c.l.b16 %v93
  %v545 = vunpack.c.h.b16 %v93
  %v546 = vunpack.c.l.b16 %v94
  %v547 = vunpack.c.h.b16 %v94
  %v548 = vunpack.c.l.b16 %v95
  %v549 = vunpack.c.h.b16 %v95
  %v550 = vunpack.c.l.b16 %v96
  %v551 = vunpack.c.h.b16 %v96
  %v552 = vunpack.c.l.b16 %v97
  %v553 = vunpack.c.l.b16 %v98
  %v554 = vunpack.c.h.b16 %v98
  %v555 = vunpack.c.l.b16 %v99
  %v556 = vunpack.c.h.b16 %v99
  %v557 = vunpack.c.l.b16 %v100
  %v558 = vunpack.c.h.b16 %v100
  %v559 = vunpack.c.l.b16 %v101
  %v560 = vunpack.c.h.b16 %v101
  %v561 = vunpack.c.l.b16 %v102
  %v562 = vunpack.c.h.b16 %v102
  %v563 = vunpack.c.l.b16 %v103
  %v564 = vunpack.c.h.b16 %v103
  %v565 = vunpack.c.l.b16 %v104
  %v566 = vunpack.c.l.b16 %v105
  %v567 = vunpack.c.h.b16 %v105
  %v568 = vunpack.c.l.b16 %v106
  %v569 = vunpack.c.h.b16 %v106
  %v570 = vunpack.c.l.b16 %v107
  %v571 = vunpack.c.h.b16 %v107
  %v572 = vunpack.c.l.b16 %v108
  %v573 = vunpack.c.h.b16 %v108
  %v574 = vunpack.c.l.b16 %v109
  %v575 = vunpack.c.h.b16 %v109
  %v576 = vunpack.c.l.b16 %v110
  %v577 = vunpack.c.h.b16 %v110
  %v578 = vunpack.c.l.b16 %v111
  %v579 = vpack.c.b16 %v423, %v410
  %v580 = vpack.c.b16 %v424, %v411
  %v581 = vpack.c.b16 %v425, %v412
  %v582 = vpack.c.b16 %v426, %v413
  %v583 = vpack.c.b16 %v427, %v414
  %v584 = vpack.c.b16 %v428, %v415
  %v585 = vpack.c.b16 %v429, %v416
  %v586 = vpack.c.b16 %v430, %v417
  %v587 = vpack.c.b16 %v431, %v418
  %v588 = vpack.c.b16 %v432, %v419
  %v589 = vpack.c.b16 %v433, %v420
  %v590 = vpack.c.b16 %v434, %v421
  %v591 = vpack.c.b16 %v435, %v422
  %v592 = vpack.c.b16 %v449, %v436
  %v593 = vpack.c.b16 %v450, %v437
  %v594 = vpack.c.b16 %v451, %v438
  %v595 = vpack.c.b16 %v452, %v439
  %v596 = vpack.c.b16 %v453, %v440
  %v597 = vpack.c.b16 %v454, %v441
  %v598 = vpack.c.b16 %v455, %v442
  %v599 = vpack.c.b16 %v456, %v443
  %v600 = vpack.c.b16 %v457, %v444
  %v601 = vpack.c.b16 %v458, %v445
  %v602 = vpack.c.b16 %v459, %v446
  %v603 = vpack.c.b16 %v460, %v447
  %v604 = vpack.c.b16 %v461, %v448
  %v605 = vpack.c.b16 %v475, %v462
  %v606 = vpack.c.b16 %v476, %v463
  %v607 = vpack.c.b16 %v477, %v464
  %v608 = vpack.c.b16 %v478, %v465
  %v609 = vpack.c.b16 %v479, %v466
  %v610 = vpack.c.b16 %v480, %v467
  %v611 = vpack.c.b16 %v481, %v468
  %v612 = vpack.c.b16 %v482, %v469
  %v613 = vpack.c.b16 %v483, %v470
  %v614 = vpack.c.b16 %v484, %v471
  %v615 = vpack.c.b16 %v485, %v472
  %v616 = vpack.c.b16 %v486, %v473
  %v617 = vpack.c.b16 %v487, %v474
  %v618 = vpack.c.b16 %v501, %v488
  %v619 = vpack.c.b16 %v502, %v489
  %v620 = vpack.c.b16 %v503, %v490
  %v621 = vpack.c.b16 %v504, %v491
  %v622 = vpack.c.b16 %v505, %v492
  %v623 = vpack.c.b16 %v506, %v493
  %v624 = vpack.c.b16 %v507, %v494
  %v625 = vpack.c.b16 %v508, %v495
  %v626 = vpack.c.b16 %v509, %v496
  %v627 = vpack.c.b16 %v510, %v497
  %v628 = vpack.c.b16 %v511, %v498
  %v629 = vpack.c.b16 %v512, %v499
  %v630 = vpack.c.b16 %v513, %v500
  %v631 = vpack.c.b16 %v527, %v514
  %v632 = vpack.c.b16 %v528, %v515
  %v633 = vpack.c.b16 %v529, %v516
  %v634 = vpack.c.b16 %v530, %v517
  %v635 = vpack.c.b16 %v531, %v518
  %v636 = vpack.c.b16 %v532, %v519
  %v637 = vpack.c.b16 %v533, %v520
  %v638 = vpack.c.b16 %v534, %v521
  %v639 = vpack.c.b16 %v535, %v522
  %v640 = vpack.c.b16 %v536, %v523
  %v641 = vpack.c.b16 %v537, %v524
  %v642 = vpack.c.b16 %v538, %v525
  %v643 = vpack.c.b16 %v539, %v526
  %v644 = vpack.c.b16 %v553, %v540
  %v645 = vpack.c.b16 %v554, %v541
  %v646 = vpack.c.b16 %v555, %v542
  %v647 = vpack.c.b16 %v556, %v543
  %v648 = vpack.c.b16 %v557, %v544
  %v649 = vpack.c.b16 %v558, %v545
  %v650 = vpack.c.b16 %v559, %v546
  %v651 = vpack.c.b16 %v560, %v547
  %v652 = vpack.c.b16 %v561, %v548
  %v653 = vpack.c.b16 %v562, %v549
  %v654 = vpack.c.b16 %v563, %v550
  %v655 = vpack.c.b16 %v564, %v551
  %v656 = vpack.c.b16 %v565, %v552
  %v657 = vpack.c.b16 %v566, %v566
  %v658 = vpack.c.b16 %v567, %v567
  %v659 = vpack.c.b16 %v568, %v568
  %v660 = vpack.c.b16 %v569, %v569
  %v661 = vpack.c.b16 %v570, %v570
  %v662 = vpack.c.b16 %v571, %v571
  %v663 = vpack.c.b16 %v572, %v572
  %v664 = vpack.c.b16 %v573, %v573
  %v665 = vpack.c.b16 %v574, %v574
  %v666 = vpack.c.b16 %v575, %v575
  %v667 = vpack.c.b16 %v576, %v576
  %v668 = vpack.c.b16 %v577, %v577
  %v669 = vpack.c.b16 %v578, %v578
  %v954 = vunpack.c.l.b16 %v112
  %v955 = vunpack.c.l.b16 %v113
  %v956 = vunpack.c.l.b16 %v114
  %v957 = vunpack.c.l.b16 %v115
  %v958 = vunpack.c.l.b16 %v116
  %v959 = vunpack.c.l.b16 %v117
  %v960 = vunpack.c.l.b16 %v118
  %v961 = vunpack.c.l.b16 %v119
  %v962 = vunpack.c.l.b16 %v120
  %v963 = vunpack.c.l.b16 %v121
  %v964 = vunpack.c.l.b16 %v122
  %v965 = vunpack.c.l.b16 %v123
  %v966 = vunpack.c.l.b16 %v124
  %v967 = vunpack.c.l.b16 %v125
  %v968 = vunpack.c.l.b16 %v126
  %v969 = vunpack.c.l.b16 %v127
  %v970 = vunpack.c.l.b16 %v128
  %v971 = vunpack.c.l.b16 %v129
  %v972 = vunpack.c.l.b16 %v130
  %v973 = vunpack.c.l.b16 %v131
  %v974 = vunpack.c.l.b16 %v132
  %v975 = vunpack.c.l.b16 %v133
  %v976 = vunpack.c.l.b16 %v134
  %v977 = vunpack.c.l.b16 %v135
  %v978 = vunpack.c.l.b16 %v136
  %v979 = vunpack.c.l.b16 %v137
  %v980 = vunpack.c.l.b16 %v138
  %v981 = vunpack.c.l.b16 %v139
  %v982 = vunpack.c.l.b16 %v140
  %v983 = vunpack.c.l.b16 %v141
  %v984 = vunpack.c.l.b16 %v142
  %v985 = vunpack.c.l.b16 %v143
  %v986 = vunpack.c.l.b16 %v144
  %v987 = vunpack.c.l.b16 %v145
  %v988 = vunpack.c.l.b16 %v146
  %v989 = vunpack.c.l.b16 %v147
  %v990 = vunpack.c.l.b16 %v148
  %v991 = vunpack.c.l.b16 %v149
  %v992 = vunpack.c.l.b16 %v150
  %v993 = vunpack.c.l.b16 %v151
  %v994 = vunpack.c.l.b16 %v152
  %v995 = vunpack.c.l.b16 %v153
  %v996 = vunpack.c.l.b16 %v154
  %v997 = vunpack.c.l.b16 %v155
  %v998 = vunpack.c.l.b16 %v156
  %v999 = vunpack.c.l.b16 %v157
  %v1000 = vunpack.c.l.b16 %v158
  %v1001 = vunpack.c.l.b16 %v159
  %v1002 = vunpack.c.l.b16 %v160
  %v1003 = vunpack.c.l.b16 %v161
  %v1004 = vunpack.c.l.b16 %v162
  %v1005 = vunpack.c.l.b16 %v163
  %v1006 = vunpack.c.l.b16 %v164
  %v1007 = vunpack.c.l.b16 %v165
  %v1008 = vunpack.c.l.b16 %v166
  %v1009 = vunpack.c.l.b16 %v167
  %v1010 = vunpack.c.l.b16 %v168
  %v1011 = vunpack.c.l.b16 %v169
  %v1012 = vunpack.c.l.b16 %v170
  %v1013 = vunpack.c.l.b16 %v171
  %v1014 = vunpack.c.l.b16 %v172
  %v1015 = vunpack.c.l.b16 %v173
  %v1016 = vunpack.c.l.b16 %v174
  %v1017 = vunpack.c.l.b16 %v175
  %v1018 = vunpack.c.l.b16 %v176
  %v1019 = vunpack.c.l.b16 %v177
  %v1020 = vunpack.c.l.b16 %v178
  %v1021 = vunpack.c.l.b16 %v179
  %v1022 = vunpack.c.l.b16 %v180
  %v1023 = vunpack.c.l.b16 %v181
  %v1024 = vunpack.c.l.b16 %v182
  %v1025 = vunpack.c.l.b16 %v183
  %v1026 = vunpack.c.l.b16 %v184
  %v1027 = vunpack.c.l.b16 %v185
  %v1028 = vunpack.c.l.b16 %v186
  %v1029 = vunpack.c.l.b16 %v187
  %v1030 = vunpack.c.l.b16 %v188
  %v1031 = vunpack.c.l.b16 %v189
  %v1032 = vunpack.c.l.b16 %v190
  %v1033 = vunpack.c.l.b16 %v191
  %v1034 = vunpack.c.l.b16 %v192
  %v1035 = vunpack.c.l.b16 %v193
  %v1036 = vunpack.c.l.b16 %v194
  %v1037 = vunpack.c.l.b16 %v195
  %v1038 = vunpack.c.l.b16 %v196
  %v1039 = vunpack.c.l.b16 %v197
  %v1040 = vunpack.c.l.b16 %v198
  %v1041 = vunpack.c.l.b16 %v199
  %v1042 = vunpack.c.l.b16 %v200
  %v1043 = vunpack.c.l.b16 %v201
  %v1044 = vunpack.c.l.b16 %v202
  %v1045 = vunpack.c.l.b16 %v203
  %v1046 = vunpack.c.l.b16 %v204
  %v1047 = vunpack.c.l.b16 %v205
  %v1048 = vunpack.c.l.b16 %v206
  %v1049 = vunpack.c.l.b16 %v207
  %v1050 = vunpack.c.l.b16 %v208
  %v1051 = vunpack.c.l.b16 %v209
  %v1052 = vunpack.c.l.b16 %v210
  %v1053 = vunpack.c.l.b16 %v211
  %v1054 = vunpack.c.l.b16 %v212
  %v1055 = vunpack.c.l.b16 %v213
  %v1056 = vunpack.c.l.b16 %v214
  %v1057 = vunpack.c.l.b16 %v215
  %v1058 = vunpack.c.l.b16 %v216
  %v1059 = vunpack.c.l.b16 %v217
  %v1060 = vunpack.c.l.b16 %v218
  %v1061 = vunpack.c.l.b16 %v219
  %v1062 = vunpack.c.l.b16 %v220
  %v1063 = vunpack.c.l.b16 %v221
  %v1064 = vunpack.c.l.b16 %v222
  %v1065 = vunpack.c.l.b16 %v223
  %v1066 = vunpack.c.l.b16 %v224
  %v1067 = vunpack.c.l.b16 %v225
  %v1068 = vunpack.c.l.b16 %v226
  %v1069 = vunpack.c.l.b16 %v227
  %v1070 = vunpack.c.l.b16 %v228
  %v1071 = vunpack.c.l.b16 %v229
  %v1072 = vunpack.c.l.b16 %v230
  %v1073 = vunpack.c.l.b16 %v231
  %v1074 = vunpack.c.l.b16 %v232
  %v1075 = vunpack.c.l.b16 %v233
  %v1076 = vunpack.c.l.b16 %v234
  %v1077 = vunpack.c.l.b16 %v235
  %v1078 = vunpack.c.l.b16 %v236
  %v1079 = vunpack.c.l.b16 %v237
  %v1080 = vunpack.c.l.b16 %v238
  %v1081 = vunpack.c.l.b16 %v239
  %v1082 = vunpack.c.l.b16 %v240
  %v1083 = vunpack.c.l.b16 %v241
  %v1084 = vunpack.c.l.b16 %v242
  %v1085 = vunpack.c.l.b16 %v243
  %v1086 = vunpack.c.l.b16 %v244
  %v1087 = vunpack.c.l.b16 %v245
  %v1088 = vunpack.c.l.b16 %v246
  %v1089 = vunpack.c.l.b16 %v247
  %v1090 = vunpack.c.l.b16 %v248
  %v1091 = vunpack.c.l.b16 %v249
  %v1092 = vunpack.c.l.b16 %v250
  %v1093 = vunpack.c.l.b16 %v251
  %v1094 = vunpack.c.l.b16 %v252
  %v1095 = vunpack.c.l.b16 %v253
  %v1096 = vunpack.c.l.b16 %v254
  %v1097 = vunpack.c.l.b16 %v255
  %v1098 = vunpack.c.l.b16 %v256
  %v1099 = vunpack.c.l.b16 %v257
  %v1100 = vunpack.c.l.b16 %v258
  %v1101 = vunpack.c.l.b16 %v259
  %v1102 = vunpack.c.l.b16 %v260
  %v1103 = vunpack.c.l.b16 %v261
  %v1104 = vunpack.c.l.b16 %v262
  %v1105 = vunpack.c.l.b16 %v263
  %v1106 = vunpack.c.l.b16 %v264
  %v1107 = vunpack.c.l.b16 %v265
  %v1108 = vunpack.c.l.b16 %v266
  %v1109 = vunpack.c.l.b16 %v267
  %v1110 = vunpack.c.l.b16 %v268
  %v1111 = vunpack.c.l.b16 %v269
  %v1112 = vunpack.c.l.b16 %v270
  %v1113 = vunpack.c.l.b16 %v271
  %v1114 = vunpack.c.l.b16 %v272
  %v1115 = vunpack.c.l.b16 %v273
  %v1116 = vunpack.c.l.b16 %v274
  %v1117 = vunpack.c.l.b16 %v275
  %v1118 = vunpack.c.l.b16 %v276
  %v1119 = vunpack.c.l.b16 %v277
  %v1120 = vunpack.c.l.b16 %v278
  %v1121 = vunpack.c.l.b16 %v279
  %v1122 = vunpack.c.l.b16 %v280
  %v1123 = vunpack.c.l.b16 %v281
  %v1124 = vunpack.c.l.b16 %v282
  %v1125 = vunpack.c.l.b16 %v283
  %v1126 = vunpack.c.l.b16 %v284
  %v1127 = vunpack.c.l.b16 %v285
  %v1128 = vunpack.c.l.b16 %v286
  %v1129 = vunpack.c.l.b16 %v287
  %v1130 = vunpack.c.l.b16 %v288
  %v1131 = vunpack.c.l.b16 %v289
  %v1132 = vunpack.c.l.b16 %v290
  %v1133 = vunpack.c.l.b16 %v291
  %v1134 = vunpack.c.l.b16 %v292
  %v1135 = vunpack.c.l.b16 %v293
  %v1136 = vunpack.c.l.b16 %v294
  %v1137 = vunpack.c.l.b16 %v295
  %v1138 = vunpack.c.l.b16 %v296
  %v1139 = vunpack.c.l.b16 %v297
  %v1140 = vunpack.c.l.b16 %v298
  %v1141 = vunpack.c.l.b16 %v299
  %v1142 = vunpack.c.l.b16 %v300
  %v1143 = vunpack.c.l.b16 %v301
  %v1144 = vunpack.c.l.b16 %v302
  %v1145 = vunpack.c.l.b16 %v303
  %v1146 = vunpack.c.l.b16 %v304
  %v1147 = vunpack.c.l.b16 %v305
  %v1148 = vunpack.c.l.b16 %v306
  %v1149 = vunpack.c.l.b16 %v307
  %v1150 = vunpack.c.l.b16 %v308
  %v1151 = vunpack.c.l.b16 %v309
  %v1152 = vunpack.c.l.b16 %v310
  %v1153 = vunpack.c.l.b16 %v311
  %v1154 = vpack.c.b16 %v955, %v954
  %v1155 = vpack.c.b16 %v957, %v956
  %v1156 = vpack.c.b16 %v959, %v958
  %v1157 = vpack.c.b16 %v961, %v960
  %v1158 = vpack.c.b16 %v963, %v962
  %v1159 = vpack.c.b16 %v965, %v964
  %v1160 = vpack.c.b16 %v967, %v966
  %v1161 = vpack.c.b16 %v969, %v968
  %v1162 = vpack.c.b16 %v971, %v970
  %v1163 = vpack.c.b16 %v973, %v972
  %v1164 = vpack.c.b16 %v975, %v974
  %v1165 = vpack.c.b16 %v977, %v976
  %v1166 = vpack.c.b16 %v979, %v978
  %v1167 = vpack.c.b16 %v981, %v980
  %v1168 = vpack.c.b16 %v983, %v982
  %v1169 = vpack.c.b16 %v985, %v984
  %v1170 = vpack.c.b16 %v987, %v986
  %v1171 = vpack.c.b16 %v989, %v988
  %v1172 = vpack.c.b16 %v991, %v990
  %v1173 = vpack.c.b16 %v993, %v992
  %v1174 = vpack.c.b16 %v995, %v994
  %v1175 = vpack.c.b16 %v997, %v996
  %v1176 = vpack.c.b16 %v999, %v998
  %v1177 = vpack.c.b16 %v1001, %v1000
  %v1178 = vpack.c.b16 %v1003, %v1002
  %v1179 = vpack.c.b16 %v1005, %v1004
  %v1180 = vpack.c.b16 %v1007, %v1006
  %v1181 = vpack.c.b16 %v1009, %v1008
  %v1182 = vpack.c.b16 %v1011, %v1010
  %v1183 = vpack.c.b16 %v1013, %v1012
  %v1184 = vpack.c.b16 %v1015, %v1014
  %v1185 = vpack.c.b16 %v1017, %v1016
  %v1186 = vpack.c.b16 %v1019, %v1018
  %v1187 = vpack.c.b16 %v1021, %v1020
  %v1188 = vpack.c.b16 %v1023, %v1022
  %v1189 = vpack.c.b16 %v1025, %v1024
  %v1190 = vpack.c.b16 %v1027, %v1026
  %v1191 = vpack.c.b16 %v1029, %v1028
  %v1192 = vpack.c.b16 %v1031, %v1030
  %v1193 = vpack.c.b16 %v1033, %v1032
  %v1194 = vpack.c.b16 %v1035, %v1034
  %v1195 = vpack.c.b16 %v1037, %v1036
  %v1196 = vpack.c.b16 %v1039, %v1038
  %v1197 = vpack.c.b16 %v1041, %v1040
  %v1198 = vpack.c.b16 %v1043, %v1042
  %v1199 = vpack.c.b16 %v1045, %v1044
  %v1200 = vpack.c.b16 %v1047, %v1046
  %v1201 = vpack.c.b16 %v1049, %v1048
  %v1202 = vpack.c.b16 %v1051, %v1050
  %v1203 = vpack.c.b16 %v1053, %v1052
  %v1204 = vpack.c.b16 %v1055, %v1054
  %v1205 = vpack.c.b16 %v1057, %v1056
  %v1206 = vpack.c.b16 %v1059, %v1058
  %v1207 = vpack.c.b16 %v1061, %v1060
  %v1208 = vpack.c.b16 %v1063, %v1062
  %v1209 = vpack.c.b16 %v1065, %v1064
  %v1210 = vpack.c.b16 %v1067, %v1066
  %v1211 = vpack.c.b16 %v1069, %v1068
  %v1212 = vpack.c.b16 %v1071, %v1070
  %v1213 = vpack.c.b16 %v1073, %v1072
  %v1214 = vpack.c.b16 %v1075, %v1074
  %v1215 = vpack.c.b16 %v1077, %v1076
  %v1216 = vpack.c.b16 %v1079, %v1078
  %v1217 = vpack.c.b16 %v1081, %v1080
  %v1218 = vpack.c.b16 %v1083, %v1082
  %v1219 = vpack.c.b16 %v1085, %v1084
  %v1220 = vpack.c.b16 %v1087, %v1086
  %v1221 = vpack.c.b16 %v1089, %v1088
  %v1222 = vpack.c.b16 %v1091, %v1090
  %v1223 = vpack.c.b16 %v1093, %v1092
  %v1224 = vpack.c.b16 %v1095, %v1094
  %v1225 = vpack.c.b16 %v1097, %v1096
  %v1226 = vpack.c.b16 %v1099, %v1098
  %v1227 = vpack.c.b16 %v1101, %v1100
  %v1228 = vpack.c.b16 %v1103, %v1102
  %v1229 = vpack.c.b16 %v1105, %v1104
  %v1230 = vpack.c.b16 %v1107, %v1106
  %v1231 = vpack.c.b16 %v1109, %v1108
  %v1232 = vpack.c.b16 %v1111, %v1110
  %v1233 = vpack.c.b16 %v1113, %v1112
  %v1234 = vpack.c.b16 %v1115, %v1114
  %v1235 = vpack.c.b16 %v1117, %v1116
  %v1236 = vpack.c.b16 %v1119, %v1118
  %v1237 = vpack.c.b16 %v1121, %v1120
  %v1238 = vpack.c.b16 %v1123, %v1122
  %v1239 = vpack.c.b16 %v1125, %v1124
  %v1240 = vpack.c.b16 %v1127, %v1126
  %v1241 = vpack.c.b16 %v1129, %v1128
  %v1242 = vpack.c.b16 %v1131, %v1130
  %v1243 = vpack.c.b16 %v1133, %v1132
  %v1244 = vpack.c.b16 %v1135, %v1134
  %v1245 = vpack.c.b16 %v1137, %v1136
  %v1246 = vpack.c.b16 %v1139, %v1138
  %v1247 = vpack.c.b16 %v1141, %v1140
  %v1248 = vpack.c.b16 %v1143, %v1142
  %v1249 = vpack.c.b16 %v1145, %v1144
  %v1250 = vpack.c.b16 %v1147, %v1146
  %v1251 = vpack.c.b16 %v1149, %v1148
  %v1252 = vpack.c.b16 %v1151, %v1150
  %v1253 = vpack.c.b16 %v1153, %v1152
  %vm1354 = vcmask 523264
  %v1356 = vsel %vm1354, %v591, 0
  %v1359 = vsel %vm1354, %v604, 0
  %v1362 = vsel %vm1354, %v617, 0
  %v1365 = vsel %vm1354, %v630, 0
  %v1368 = vsel %vm1354, %v643, 0
  %v1371 = vsel %vm1354, %v656, 0
  %v1374 = vsel %vm1354, %v669, 0
  %1376 = vmatprep.subr.bf16.mxu0 0
  %1377 = vmatpush1.bf16.msra.mxu0 %v1154
  %1378 = vmatprep.subr.bf16.mxu0 0
  %1379 = vmatpush1.bf16.msra.mxu0 %v1155
  %1380 = vmatprep.subr.bf16.mxu0 0
  %1381 = vmatpush1.bf16.msra.mxu0 %v1156
  %1382 = vmatprep.subr.bf16.mxu0 0
  %1383 = vmatpush1.bf16.msra.mxu0 %v1157
  %1384 = vmatprep.subr.bf16.mxu0 0
  %1385 = vmatpush1.bf16.msra.mxu0 %v1158
  %1386 = vmatprep.subr.bf16.mxu0 0
  %1387 = vmatpush1.bf16.msra.mxu0 %v1159
  %1388 = vmatprep.subr.bf16.mxu0 0
  %1389 = vmatpush1.bf16.msra.mxu0 %v1160
  %1390 = vmatprep.subr.bf16.mxu0 0
  %1391 = vmatpush1.bf16.msra.mxu0 %v1161
  %1392 = vmatprep.subr.bf16.mxu0 0
  %1393 = vmatpush1.bf16.msra.mxu0 %v1162
  %1394 = vmatprep.subr.bf16.mxu0 0
  %1395 = vmatpush1.bf16.msra.mxu0 %v1163
  %1396 = vmatprep.subr.bf16.mxu0 0
  %1397 = vmatpush1.bf16.msra.mxu0 %v1164
  %1398 = vmatprep.subr.bf16.mxu0 0
  %1399 = vmatpush1.bf16.msra.mxu0 %v1165
  %1400 = vmatprep.subr.bf16.mxu0 0
  %1401 = vmatpush1.bf16.msra.mxu0 %v1166
  %1402 = vmatprep.subr.bf16.mxu0 0
  %1403 = vmatpush1.bf16.msra.mxu0 %v1167
  %1404 = vmatprep.subr.bf16.mxu0 0
  %1405 = vmatpush1.bf16.msra.mxu0 %v1168
  %1406 = vmatprep.subr.bf16.mxu0 0
  %1407 = vmatpush1.bf16.msra.mxu0 %v1169
  %1408 = vmatprep.mubr.bf16.mxu0 %v580
  %1409 = vmatmul.mubr.bf16.gmra.mrb[0].mxu0 %v579
  %v1410 = vpop.f32.mrb[0].mxu0
  %v1411 = vadd.f32 %v317, %v1410
  %v1412 = vpop.f32.mrb[0].mxu0
  %v1413 = vpop.f32.mrb[0].mxu0
  %v1414 = vadd.f32 %v317, %v1413
  %v1415 = vpop.f32.mrb[0].mxu0
  %1416 = vmatprep.mubr.bf16.mxu0 %v593
  %1417 = vmatmul.mubr.bf16.gmra.mrb[0].mxu0 %v592
  %v1418 = vpop.f32.mrb[0].mxu0
  %v1419 = vadd.f32 %v317, %v1418
  %v1420 = vpop.f32.mrb[0].mxu0
  %v1421 = vpop.f32.mrb[0].mxu0
  %v1422 = vadd.f32 %v317, %v1421
  %v1423 = vpop.f32.mrb[0].mxu0
  %1424 = vmatprep.mubr.bf16.mxu0 %v606
  %1425 = vmatmul.mubr.bf16.gmra.mrb[0].mxu0 %v605
  %v1426 = vpop.f32.mrb[0].mxu0
  %v1427 = vadd.f32 %v317, %v1426
  %v1428 = vpop.f32.mrb[0].mxu0
  %v1429 = vpop.f32.mrb[0].mxu0
  %v1430 = vadd.f32 %v317, %v1429
  %v1431 = vpop.f32.mrb[0].mxu0
  %1432 = vmatprep.mubr.bf16.mxu0 %v619
  %1433 = vmatmul.mubr.bf16.gmra.mrb[0].mxu0 %v618
  %v1434 = vpop.f32.mrb[0].mxu0
  %v1435 = vadd.f32 %v317, %v1434
  %v1436 = vpop.f32.mrb[0].mxu0
  %v1437 = vpop.f32.mrb[0].mxu0
  %v1438 = vadd.f32 %v317, %v1437
  %v1439 = vpop.f32.mrb[0].mxu0
  %1440 = vmatprep.mubr.bf16.mxu0 %v632
  %1441 = vmatmul.mubr.bf16.gmra.mrb[0].mxu0 %v631
  %v1442 = vpop.f32.mrb[0].mxu0
  %v1443 = vadd.f32 %v317, %v1442
  %v1444 = vpop.f32.mrb[0].mxu0
  %v1445 = vpop.f32.mrb[0].mxu0
  %v1446 = vadd.f32 %v317, %v1445
  %v1447 = vpop.f32.mrb[0].mxu0
  %1448 = vmatprep.mubr.bf16.mxu0 %v645
  %1449 = vmatmul.mubr.bf16.gmra.mrb[0].mxu0 %v644
  %v1450 = vpop.f32.mrb[0].mxu0
  %v1451 = vadd.f32 %v317, %v1450
  %v1452 = vpop.f32.mrb[0].mxu0
  %v1453 = vpop.f32.mrb[0].mxu0
  %v1454 = vadd.f32 %v317, %v1453
  %v1455 = vpop.f32.mrb[0].mxu0
  %1456 = vmatprep.mubr.bf16.mxu0 %v658
  %1457 = vmatmul.mubr.bf16.gmra.mrb[0].mxu0 %v657
  %v1458 = vpop.f32.mrb[0].mxu0
  %v1459 = vadd.f32 %v317, %v1458
  %v1460 = vpop.f32.mrb[0].mxu0
  %v1461 = vpop.f32.mrb[0].mxu0
  %v1462 = vpop.f32.mrb[0].mxu0
  %1463 = vdwg.mxu0
  %1464 = vmatprep.subr.bf16.mxu0 0
  %1465 = vmatpush1.bf16.msra.mxu0 %v1170
  %1466 = vmatprep.subr.bf16.mxu0 0
  %1467 = vmatpush1.bf16.msra.mxu0 %v1171
  %1468 = vmatprep.subr.bf16.mxu0 0
  %1469 = vmatpush1.bf16.msra.mxu0 %v1172
  %1470 = vmatprep.subr.bf16.mxu0 0
  %1471 = vmatpush1.bf16.msra.mxu0 %v1173
  %1472 = vmatprep.subr.bf16.mxu0 0
  %1473 = vmatpush1.bf16.msra.mxu0 %v1174
  %1474 = vmatprep.subr.bf16.mxu0 0
  %1475 = vmatpush1.bf16.msra.mxu0 %v1175
  %1476 = vmatprep.subr.bf16.mxu0 0
  %1477 = vmatpush1.bf16.msra.mxu0 %v1176
  %1478 = vmatprep.subr.bf16.mxu0 0
  %1479 = vmatpush1.bf16.msra.mxu0 %v1177
  %1480 = vmatprep.subr.bf16.mxu0 0
  %1481 = vmatpush1.bf16.msra.mxu0 %v1178
  %1482 = vmatprep.subr.bf16.mxu0 0
  %1483 = vmatpush1.bf16.msra.mxu0 %v1179
  %1484 = vmatprep.subr.bf16.mxu0 0
  %1485 = vmatpush1.bf16.msra.mxu0 %v1180
  %1486 = vmatprep.subr.bf16.mxu0 0
  %1487 = vmatpush1.bf16.msra.mxu0 %v1181
  %1488 = vmatprep.subr.bf16.mxu0 0
  %1489 = vmatpush1.bf16.msra.mxu0 %v1182
  %1490 = vmatprep.subr.bf16.mxu0 0
  %1491 = vmatpush1.bf16.msra.mxu0 %v1183
  %1492 = vmatprep.subr.bf16.mxu0 0
  %1493 = vmatpush1.bf16.msra.mxu0 %v1184
  %1494 = vmatprep.subr.bf16.mxu0 0
  %1495 = vmatpush1.bf16.msra.mxu0 %v1185
  %1496 = vmatprep.mubr.bf16.mxu0 %v582
  %1497 = vmatmul.mubr.bf16.gmra.mrb[0].mxu0 %v581
  %v1498 = vpop.f32.mrb[0].mxu0
  %v1499 = vadd.f32 %v1411, %v1498
  %v1500 = vpop.f32.mrb[0].mxu0
  %v1501 = vpop.f32.mrb[0].mxu0
  %v1502 = vadd.f32 %v1414, %v1501
  %v1503 = vpop.f32.mrb[0].mxu0
  %1504 = vmatprep.mubr.bf16.mxu0 %v595
  %1505 = vmatmul.mubr.bf16.gmra.mrb[0].mxu0 %v594
  %v1506 = vpop.f32.mrb[0].mxu0
  %v1507 = vadd.f32 %v1419, %v1506
  %v1508 = vpop.f32.mrb[0].mxu0
  %v1509 = vpop.f32.mrb[0].mxu0
  %v1510 = vadd.f32 %v1422, %v1509
  %v1511 = vpop.f32.mrb[0].mxu0
  %1512 = vmatprep.mubr.bf16.mxu0 %v608
  %1513 = vmatmul.mubr.bf16.gmra.mrb[0].mxu0 %v607
  %v1514 = vpop.f32.mrb[0].mxu0
  %v1515 = vadd.f32 %v1427, %v1514
  %v1516 = vpop.f32.mrb[0].mxu0
  %v1517 = vpop.f32.mrb[0].mxu0
  %v1518 = vadd.f32 %v1430, %v1517
  %v1519 = vpop.f32.mrb[0].mxu0
  %1520 = vmatprep.mubr.bf16.mxu0 %v621
  %1521 = vmatmul.mubr.bf16.gmra.mrb[0].mxu0 %v620
  %v1522 = vpop.f32.mrb[0].mxu0
  %v1523 = vadd.f32 %v1435, %v1522
  %v1524 = vpop.f32.mrb[0].mxu0
  %v1525 = vpop.f32.mrb[0].mxu0
  %v1526 = vadd.f32 %v1438, %v1525
  %v1527 = vpop.f32.mrb[0].mxu0
  %1528 = vmatprep.mubr.bf16.mxu0 %v634
  %1529 = vmatmul.mubr.bf16.gmra.mrb[0].mxu0 %v633
  %v1530 = vpop.f32.mrb[0].mxu0
  %v1531 = vadd.f32 %v1443, %v1530
  %v1532 = vpop.f32.mrb[0].mxu0
  %v1533 = vpop.f32.mrb[0].mxu0
  %v1534 = vadd.f32 %v1446, %v1533
  %v1535 = vpop.f32.mrb[0].mxu0
  %1536 = vmatprep.mubr.bf16.mxu0 %v647
  %1537 = vmatmul.mubr.bf16.gmra.mrb[0].mxu0 %v646
  %v1538 = vpop.f32.mrb[0].mxu0
  %v1539 = vadd.f32 %v1451, %v1538
  %v1540 = vpop.f32.mrb[0].mxu0
  %v1541 = vpop.f32.mrb[0].mxu0
  %v1542 = vadd.f32 %v1454, %v1541
  %v1543 = vpop.f32.mrb[0].mxu0
  %1544 = vmatprep.mubr.bf16.mxu0 %v660
  %1545 = vmatmul.mubr.bf16.gmra.mrb[0].mxu0 %v659
  %v1546 = vpop.f32.mrb[0].mxu0
  %v1547 = vadd.f32 %v1459, %v1546
  %v1548 = vpop.f32.mrb[0].mxu0
  %v1549 = vpop.f32.mrb[0].mxu0
  %v1550 = vpop.f32.mrb[0].mxu0
  %1551 = vdwg.mxu0
  %1552 = vmatprep.subr.bf16.mxu0 0
  %1553 = vmatpush1.bf16.msra.mxu0 %v1186
  %1554 = vmatprep.subr.bf16.mxu0 0
  %1555 = vmatpush1.bf16.msra.mxu0 %v1187
  %1556 = vmatprep.subr.bf16.mxu0 0
  %1557 = vmatpush1.bf16.msra.mxu0 %v1188
  %1558 = vmatprep.subr.bf16.mxu0 0
  %1559 = vmatpush1.bf16.msra.mxu0 %v1189
  %1560 = vmatprep.subr.bf16.mxu0 0
  %1561 = vmatpush1.bf16.msra.mxu0 %v1190
  %1562 = vmatprep.subr.bf16.mxu0 0
  %1563 = vmatpush1.bf16.msra.mxu0 %v1191
  %1564 = vmatprep.subr.bf16.mxu0 0
  %1565 = vmatpush1.bf16.msra.mxu0 %v1192
  %1566 = vmatprep.subr.bf16.mxu0 0
  %1567 = vmatpush1.bf16.msra.mxu0 %v1193
  %1568 = vmatprep.subr.bf16.mxu0 0
  %1569 = vmatpush1.bf16.msra.mxu0 %v1194
  %1570 = vmatprep.subr.bf16.mxu0 0
  %1571 = vmatpush1.bf16.msra.mxu0 %v1195
  %1572 = vmatprep.subr.bf16.mxu0 0
  %1573 = vmatpush1.bf16.msra.mxu0 %v1196
  %1574 = vmatprep.subr.bf16.mxu0 0
  %1575 = vmatpush1.bf16.msra.mxu0 %v1197
  %1576 = vmatprep.subr.bf16.mxu0 0
  %1577 = vmatpush1.bf16.msra.mxu0 %v1198
  %1578 = vmatprep.subr.bf16.mxu0 0
  %1579 = vmatpush1.bf16.msra.mxu0 %v1199
  %1580 = vmatprep.subr.bf16.mxu0 0
  %1581 = vmatpush1.bf16.msra.mxu0 %v1200
  %1582 = vmatprep.subr.bf16.mxu0 0
  %1583 = vmatpush1.bf16.msra.mxu0 %v1201
  %1584 = vmatprep.mubr.bf16.mxu0 %v584
  %1585 = vmatmul.mubr.bf16.gmra.mrb[0].mxu0 %v583
  %v1586 = vpop.f32.mrb[0].mxu0
  %v1587 = vadd.f32 %v1499, %v1586
  %v1588 = vpop.f32.mrb[0].mxu0
  %v1589 = vpop.f32.mrb[0].mxu0
  %v1590 = vadd.f32 %v1502, %v1589
  %v1591 = vpop.f32.mrb[0].mxu0
  %1592 = vmatprep.mubr.bf16.mxu0 %v597
  %1593 = vmatmul.mubr.bf16.gmra.mrb[0].mxu0 %v596
  %v1594 = vpop.f32.mrb[0].mxu0
  %v1595 = vadd.f32 %v1507, %v1594
  %v1596 = vpop.f32.mrb[0].mxu0
  %v1597 = vpop.f32.mrb[0].mxu0
  %v1598 = vadd.f32 %v1510, %v1597
  %v1599 = vpop.f32.mrb[0].mxu0
  %1600 = vmatprep.mubr.bf16.mxu0 %v610
  %1601 = vmatmul.mubr.bf16.gmra.mrb[0].mxu0 %v609
  %v1602 = vpop.f32.mrb[0].mxu0
  %v1603 = vadd.f32 %v1515, %v1602
  %v1604 = vpop.f32.mrb[0].mxu0
  %v1605 = vpop.f32.mrb[0].mxu0
  %v1606 = vadd.f32 %v1518, %v1605
  %v1607 = vpop.f32.mrb[0].mxu0
  %1608 = vmatprep.mubr.bf16.mxu0 %v623
  %1609 = vmatmul.mubr.bf16.gmra.mrb[0].mxu0 %v622
  %v1610 = vpop.f32.mrb[0].mxu0
  %v1611 = vadd.f32 %v1523, %v1610
  %v1612 = vpop.f32.mrb[0].mxu0
  %v1613 = vpop.f32.mrb[0].mxu0
  %v1614 = vadd.f32 %v1526, %v1613
  %v1615 = vpop.f32.mrb[0].mxu0
  %1616 = vmatprep.mubr.bf16.mxu0 %v636
  %1617 = vmatmul.mubr.bf16.gmra.mrb[0].mxu0 %v635
  %v1618 = vpop.f32.mrb[0].mxu0
  %v1619 = vadd.f32 %v1531, %v1618
  %v1620 = vpop.f32.mrb[0].mxu0
  %v1621 = vpop.f32.mrb[0].mxu0
  %v1622 = vadd.f32 %v1534, %v1621
  %v1623 = vpop.f32.mrb[0].mxu0
  %1624 = vmatprep.mubr.bf16.mxu0 %v649
  %1625 = vmatmul.mubr.bf16.gmra.mrb[0].mxu0 %v648
  %v1626 = vpop.f32.mrb[0].mxu0
  %v1627 = vadd.f32 %v1539, %v1626
  %v1628 = vpop.f32.mrb[0].mxu0
  %v1629 = vpop.f32.mrb[0].mxu0
  %v1630 = vadd.f32 %v1542, %v1629
  %v1631 = vpop.f32.mrb[0].mxu0
  %1632 = vmatprep.mubr.bf16.mxu0 %v662
  %1633 = vmatmul.mubr.bf16.gmra.mrb[0].mxu0 %v661
  %v1634 = vpop.f32.mrb[0].mxu0
  %v1635 = vadd.f32 %v1547, %v1634
  %v1636 = vpop.f32.mrb[0].mxu0
  %v1637 = vpop.f32.mrb[0].mxu0
  %v1638 = vpop.f32.mrb[0].mxu0
  %1639 = vdwg.mxu0
  %1640 = vmatprep.subr.bf16.mxu0 0
  %1641 = vmatpush1.bf16.msra.mxu0 %v1202
  %1642 = vmatprep.subr.bf16.mxu0 0
  %1643 = vmatpush1.bf16.msra.mxu0 %v1203
  %1644 = vmatprep.subr.bf16.mxu0 0
  %1645 = vmatpush1.bf16.msra.mxu0 %v1204
  %1646 = vmatprep.subr.bf16.mxu0 0
  %1647 = vmatpush1.bf16.msra.mxu0 %v1205
  %1648 = vmatprep.subr.bf16.mxu0 0
  %1649 = vmatpush1.bf16.msra.mxu0 %v1206
  %1650 = vmatprep.subr.bf16.mxu0 0
  %1651 = vmatpush1.bf16.msra.mxu0 %v1207
  %1652 = vmatprep.subr.bf16.mxu0 0
  %1653 = vmatpush1.bf16.msra.mxu0 %v1208
  %1654 = vmatprep.subr.bf16.mxu0 0
  %1655 = vmatpush1.bf16.msra.mxu0 %v1209
  %1656 = vmatprep.subr.bf16.mxu0 0
  %1657 = vmatpush1.bf16.msra.mxu0 %v1210
  %1658 = vmatprep.subr.bf16.mxu0 0
  %1659 = vmatpush1.bf16.msra.mxu0 %v1211
  %1660 = vmatprep.subr.bf16.mxu0 0
  %1661 = vmatpush1.bf16.msra.mxu0 %v1212
  %1662 = vmatprep.subr.bf16.mxu0 0
  %1663 = vmatpush1.bf16.msra.mxu0 %v1213
  %1664 = vmatprep.subr.bf16.mxu0 0
  %1665 = vmatpush1.bf16.msra.mxu0 %v1214
  %1666 = vmatprep.subr.bf16.mxu0 0
  %1667 = vmatpush1.bf16.msra.mxu0 %v1215
  %1668 = vmatprep.subr.bf16.mxu0 0
  %1669 = vmatpush1.bf16.msra.mxu0 %v1216
  %1670 = vmatprep.subr.bf16.mxu0 0
  %1671 = vmatpush1.bf16.msra.mxu0 %v1217
  %1672 = vmatprep.mubr.bf16.mxu0 %v586
  %1673 = vmatmul.mubr.bf16.gmra.mrb[0].mxu0 %v585
  %v1674 = vpop.f32.mrb[0].mxu0
  %v1675 = vadd.f32 %v1587, %v1674
  %v1676 = vpop.f32.mrb[0].mxu0
  %v1677 = vpop.f32.mrb[0].mxu0
  %v1678 = vadd.f32 %v1590, %v1677
  %v1679 = vpop.f32.mrb[0].mxu0
  %1680 = vmatprep.mubr.bf16.mxu0 %v599
  %1681 = vmatmul.mubr.bf16.gmra.mrb[0].mxu0 %v598
  %v1682 = vpop.f32.mrb[0].mxu0
  %v1683 = vadd.f32 %v1595, %v1682
  %v1684 = vpop.f32.mrb[0].mxu0
  %v1685 = vpop.f32.mrb[0].mxu0
  %v1686 = vadd.f32 %v1598, %v1685
  %v1687 = vpop.f32.mrb[0].mxu0
  %1688 = vmatprep.mubr.bf16.mxu0 %v612
  %1689 = vmatmul.mubr.bf16.gmra.mrb[0].mxu0 %v611
  %v1690 = vpop.f32.mrb[0].mxu0
  %v1691 = vadd.f32 %v1603, %v1690
  %v1692 = vpop.f32.mrb[0].mxu0
  %v1693 = vpop.f32.mrb[0].mxu0
  %v1694 = vadd.f32 %v1606, %v1693
  %v1695 = vpop.f32.mrb[0].mxu0
  %1696 = vmatprep.mubr.bf16.mxu0 %v625
  %1697 = vmatmul.mubr.bf16.gmra.mrb[0].mxu0 %v624
  %v1698 = vpop.f32.mrb[0].mxu0
  %v1699 = vadd.f32 %v1611, %v1698
  %v1700 = vpop.f32.mrb[0].mxu0
  %v1701 = vpop.f32.mrb[0].mxu0
  %v1702 = vadd.f32 %v1614, %v1701
  %v1703 = vpop.f32.mrb[0].mxu0
  %1704 = vmatprep.mubr.bf16.mxu0 %v638
  %1705 = vmatmul.mubr.bf16.gmra.mrb[0].mxu0 %v637
  %v1706 = vpop.f32.mrb[0].mxu0
  %v1707 = vadd.f32 %v1619, %v1706
  %v1708 = vpop.f32.mrb[0].mxu0
  %v1709 = vpop.f32.mrb[0].mxu0
  %v1710 = vadd.f32 %v1622, %v1709
  %v1711 = vpop.f32.mrb[0].mxu0
  %1712 = vmatprep.mubr.bf16.mxu0 %v651
  %1713 = vmatmul.mubr.bf16.gmra.mrb[0].mxu0 %v650
  %v1714 = vpop.f32.mrb[0].mxu0
  %v1715 = vadd.f32 %v1627, %v1714
  %v1716 = vpop.f32.mrb[0].mxu0
  %v1717 = vpop.f32.mrb[0].mxu0
  %v1718 = vadd.f32 %v1630, %v1717
  %v1719 = vpop.f32.mrb[0].mxu0
  %1720 = vmatprep.mubr.bf16.mxu0 %v664
  %1721 = vmatmul.mubr.bf16.gmra.mrb[0].mxu0 %v663
  %v1722 = vpop.f32.mrb[0].mxu0
  %v1723 = vadd.f32 %v1635, %v1722
  %v1724 = vpop.f32.mrb[0].mxu0
  %v1725 = vpop.f32.mrb[0].mxu0
  %v1726 = vpop.f32.mrb[0].mxu0
  %1727 = vdwg.mxu0
  %1728 = vmatprep.subr.bf16.mxu0 0
  %1729 = vmatpush1.bf16.msra.mxu0 %v1218
  %1730 = vmatprep.subr.bf16.mxu0 0
  %1731 = vmatpush1.bf16.msra.mxu0 %v1219
  %1732 = vmatprep.subr.bf16.mxu0 0
  %1733 = vmatpush1.bf16.msra.mxu0 %v1220
  %1734 = vmatprep.subr.bf16.mxu0 0
  %1735 = vmatpush1.bf16.msra.mxu0 %v1221
  %1736 = vmatprep.subr.bf16.mxu0 0
  %1737 = vmatpush1.bf16.msra.mxu0 %v1222
  %1738 = vmatprep.subr.bf16.mxu0 0
  %1739 = vmatpush1.bf16.msra.mxu0 %v1223
  %1740 = vmatprep.subr.bf16.mxu0 0
  %1741 = vmatpush1.bf16.msra.mxu0 %v1224
  %1742 = vmatprep.subr.bf16.mxu0 0
  %1743 = vmatpush1.bf16.msra.mxu0 %v1225
  %1744 = vmatprep.subr.bf16.mxu0 0
  %1745 = vmatpush1.bf16.msra.mxu0 %v1226
  %1746 = vmatprep.subr.bf16.mxu0 0
  %1747 = vmatpush1.bf16.msra.mxu0 %v1227
  %1748 = vmatprep.subr.bf16.mxu0 0
  %1749 = vmatpush1.bf16.msra.mxu0 %v1228
  %1750 = vmatprep.subr.bf16.mxu0 0
  %1751 = vmatpush1.bf16.msra.mxu0 %v1229
  %1752 = vmatprep.subr.bf16.mxu0 0
  %1753 = vmatpush1.bf16.msra.mxu0 %v1230
  %1754 = vmatprep.subr.bf16.mxu0 0
  %1755 = vmatpush1.bf16.msra.mxu0 %v1231
  %1756 = vmatprep.subr.bf16.mxu0 0
  %1757 = vmatpush1.bf16.msra.mxu0 %v1232
  %1758 = vmatprep.subr.bf16.mxu0 0
  %1759 = vmatpush1.bf16.msra.mxu0 %v1233
  %1760 = vmatprep.mubr.bf16.mxu0 %v588
  %1761 = vmatmul.mubr.bf16.gmra.mrb[0].mxu0 %v587
  %v1762 = vpop.f32.mrb[0].mxu0
  %v1763 = vadd.f32 %v1675, %v1762
  %v1764 = vpop.f32.mrb[0].mxu0
  %v1765 = vpop.f32.mrb[0].mxu0
  %v1766 = vadd.f32 %v1678, %v1765
  %v1767 = vpop.f32.mrb[0].mxu0
  %1768 = vmatprep.mubr.bf16.mxu0 %v601
  %1769 = vmatmul.mubr.bf16.gmra.mrb[0].mxu0 %v600
  %v1770 = vpop.f32.mrb[0].mxu0
  %v1771 = vadd.f32 %v1683, %v1770
  %v1772 = vpop.f32.mrb[0].mxu0
  %v1773 = vpop.f32.mrb[0].mxu0
  %v1774 = vadd.f32 %v1686, %v1773
  %v1775 = vpop.f32.mrb[0].mxu0
  %1776 = vmatprep.mubr.bf16.mxu0 %v614
  %1777 = vmatmul.mubr.bf16.gmra.mrb[0].mxu0 %v613
  %v1778 = vpop.f32.mrb[0].mxu0
  %v1779 = vadd.f32 %v1691, %v1778
  %v1780 = vpop.f32.mrb[0].mxu0
  %v1781 = vpop.f32.mrb[0].mxu0
  %v1782 = vadd.f32 %v1694, %v1781
  %v1783 = vpop.f32.mrb[0].mxu0
  %1784 = vmatprep.mubr.bf16.mxu0 %v627
  %1785 = vmatmul.mubr.bf16.gmra.mrb[0].mxu0 %v626
  %v1786 = vpop.f32.mrb[0].mxu0
  %v1787 = vadd.f32 %v1699, %v1786
  %v1788 = vpop.f32.mrb[0].mxu0
  %v1789 = vpop.f32.mrb[0].mxu0
  %v1790 = vadd.f32 %v1702, %v1789
  %v1791 = vpop.f32.mrb[0].mxu0
  %1792 = vmatprep.mubr.bf16.mxu0 %v640
  %1793 = vmatmul.mubr.bf16.gmra.mrb[0].mxu0 %v639
  %v1794 = vpop.f32.mrb[0].mxu0
  %v1795 = vadd.f32 %v1707, %v1794
  %v1796 = vpop.f32.mrb[0].mxu0
  %v1797 = vpop.f32.mrb[0].mxu0
  %v1798 = vadd.f32 %v1710, %v1797
  %v1799 = vpop.f32.mrb[0].mxu0
  %1800 = vmatprep.mubr.bf16.mxu0 %v653
  %1801 = vmatmul.mubr.bf16.gmra.mrb[0].mxu0 %v652
  %v1802 = vpop.f32.mrb[0].mxu0
  %v1803 = vadd.f32 %v1715, %v1802
  %v1804 = vpop.f32.mrb[0].mxu0
  %v1805 = vpop.f32.mrb[0].mxu0
  %v1806 = vadd.f32 %v1718, %v1805
  %v1807 = vpop.f32.mrb[0].mxu0
  %1808 = vmatprep.mubr.bf16.mxu0 %v666
  %1809 = vmatmul.mubr.bf16.gmra.mrb[0].mxu0 %v665
  %v1810 = vpop.f32.mrb[0].mxu0
  %v1811 = vadd.f32 %v1723, %v1810
  %v1812 = vpop.f32.mrb[0].mxu0
  %v1813 = vpop.f32.mrb[0].mxu0
  %v1814 = vpop.f32.mrb[0].mxu0
  %1815 = vdwg.mxu0
  %1816 = vmatprep.subr.bf16.mxu0 0
  %1817 = vmatpush1.bf16.msra.mxu0 %v1234
  %1818 = vmatprep.subr.bf16.mxu0 0
  %1819 = vmatpush1.bf16.msra.mxu0 %v1235
  %1820 = vmatprep.subr.bf16.mxu0 0
  %1821 = vmatpush1.bf16.msra.mxu0 %v1236
  %1822 = vmatprep.subr.bf16.mxu0 0
  %1823 = vmatpush1.bf16.msra.mxu0 %v1237
  %1824 = vmatprep.subr.bf16.mxu0 0
  %1825 = vmatpush1.bf16.msra.mxu0 %v1238
  %1826 = vmatprep.subr.bf16.mxu0 0
  %1827 = vmatpush1.bf16.msra.mxu0 %v1239
  %1828 = vmatprep.subr.bf16.mxu0 0
  %1829 = vmatpush1.bf16.msra.mxu0 %v1240
  %1830 = vmatprep.subr.bf16.mxu0 0
  %1831 = vmatpush1.bf16.msra.mxu0 %v1241
  %1832 = vmatprep.subr.bf16.mxu0 0
  %1833 = vmatpush1.bf16.msra.mxu0 %v1242
  %1834 = vmatprep.subr.bf16.mxu0 0
  %1835 = vmatpush1.bf16.msra.mxu0 %v1243
  %1836 = vmatprep.subr.bf16.mxu0 0
  %1837 = vmatpush1.bf16.msra.mxu0 %v1244
  %1838 = vmatprep.subr.bf16.mxu0 0
  %1839 = vmatpush1.bf16.msra.mxu0 %v1245
  %1840 = vmatprep.subr.bf16.mxu0 0
  %1841 = vmatpush1.bf16.msra.mxu0 %v1246
  %1842 = vmatprep.subr.bf16.mxu0 0
  %1843 = vmatpush1.bf16.msra.mxu0 %v1247
  %1844 = vmatprep.subr.bf16.mxu0 0
  %1845 = vmatpush1.bf16.msra.mxu0 %v1248
  %1846 = vmatprep.subr.bf16.mxu0 0
  %1847 = vmatpush1.bf16.msra.mxu0 %v1249
  %1848 = vmatprep.mubr.bf16.mxu0 %v590
  %1849 = vmatmul.mubr.bf16.gmra.mrb[0].mxu0 %v589
  %v1850 = vpop.f32.mrb[0].mxu0
  %v1851 = vadd.f32 %v1763, %v1850
  %v1852 = vpop.f32.mrb[0].mxu0
  %v1853 = vpop.f32.mrb[0].mxu0
  %v1854 = vadd.f32 %v1766, %v1853
  %v1855 = vpop.f32.mrb[0].mxu0
  %1856 = vmatprep.mubr.bf16.mxu0 %v603
  %1857 = vmatmul.mubr.bf16.gmra.mrb[0].mxu0 %v602
  %v1858 = vpop.f32.mrb[0].mxu0
  %v1859 = vadd.f32 %v1771, %v1858
  %v1860 = vpop.f32.mrb[0].mxu0
  %v1861 = vpop.f32.mrb[0].mxu0
  %v1862 = vadd.f32 %v1774, %v1861
  %v1863 = vpop.f32.mrb[0].mxu0
  %1864 = vmatprep.mubr.bf16.mxu0 %v616
  %1865 = vmatmul.mubr.bf16.gmra.mrb[0].mxu0 %v615
  %v1866 = vpop.f32.mrb[0].mxu0
  %v1867 = vadd.f32 %v1779, %v1866
  %v1868 = vpop.f32.mrb[0].mxu0
  %v1869 = vpop.f32.mrb[0].mxu0
  %v1870 = vadd.f32 %v1782, %v1869
  %v1871 = vpop.f32.mrb[0].mxu0
  %1872 = vmatprep.mubr.bf16.mxu0 %v629
  %1873 = vmatmul.mubr.bf16.gmra.mrb[0].mxu0 %v628
  %v1874 = vpop.f32.mrb[0].mxu0
  %v1875 = vadd.f32 %v1787, %v1874
  %v1876 = vpop.f32.mrb[0].mxu0
  %v1877 = vpop.f32.mrb[0].mxu0
  %v1878 = vadd.f32 %v1790, %v1877
  %v1879 = vpop.f32.mrb[0].mxu0
  %1880 = vmatprep.mubr.bf16.mxu0 %v642
  %1881 = vmatmul.mubr.bf16.gmra.mrb[0].mxu0 %v641
  %v1882 = vpop.f32.mrb[0].mxu0
  %v1883 = vadd.f32 %v1795, %v1882
  %v1884 = vpop.f32.mrb[0].mxu0
  %v1885 = vpop.f32.mrb[0].mxu0
  %v1886 = vadd.f32 %v1798, %v1885
  %v1887 = vpop.f32.mrb[0].mxu0
  %1888 = vmatprep.mubr.bf16.mxu0 %v655
  %1889 = vmatmul.mubr.bf16.gmra.mrb[0].mxu0 %v654
  %v1890 = vpop.f32.mrb[0].mxu0
  %v1891 = vadd.f32 %v1803, %v1890
  %v1892 = vpop.f32.mrb[0].mxu0
  %v1893 = vpop.f32.mrb[0].mxu0
  %v1894 = vadd.f32 %v1806, %v1893
  %v1895 = vpop.f32.mrb[0].mxu0
  %1896 = vmatprep.mubr.bf16.mxu0 %v668
  %1897 = vmatmul.mubr.bf16.gmra.mrb[0].mxu0 %v667
  %v1898 = vpop.f32.mrb[0].mxu0
  %v1899 = vadd.f32 %v1811, %v1898
  %v1900 = vpop.f32.mrb[0].mxu0
  %v1901 = vpop.f32.mrb[0].mxu0
  %v1902 = vpop.f32.mrb[0].mxu0
  %1903 = vdwg.mxu0
  %1904 = vmatprep.subr.bf16.mxu0 0
  %1905 = vmatpush1.bf16.msra.mxu0 %v1250
  %1906 = vmatprep.subr.bf16.mxu0 0
  %1907 = vmatpush1.bf16.msra.mxu0 %v1251
  %1908 = vmatprep.subr.bf16.mxu0 0
  %1909 = vmatpush1.bf16.msra.mxu0 %v1252
  %1910 = vmatprep.subr.bf16.mxu0 0
  %1911 = vmatpush1.bf16.msra.mxu0 %v1253
  %1912 = vmatprep.subr.bf16.mxu0 0
  %1913 = vmatpush1.bf16.msra.mxu0 0
  %1914 = vmatprep.subr.bf16.mxu0 0
  %1915 = vmatpush1.bf16.msra.mxu0 0
  %1916 = vmatprep.subr.bf16.mxu0 0
  %1917 = vmatpush1.bf16.msra.mxu0 0
  %1918 = vmatprep.subr.bf16.mxu0 0
  %1919 = vmatpush1.bf16.msra.mxu0 0
  %1920 = vmatprep.subr.bf16.mxu0 0
  %1921 = vmatpush1.bf16.msra.mxu0 0
  %1922 = vmatprep.subr.bf16.mxu0 0
  %1923 = vmatpush1.bf16.msra.mxu0 0
  %1924 = vmatprep.subr.bf16.mxu0 0
  %1925 = vmatpush1.bf16.msra.mxu0 0
  %1926 = vmatprep.subr.bf16.mxu0 0
  %1927 = vmatpush1.bf16.msra.mxu0 0
  %1928 = vmatprep.subr.bf16.mxu0 0
  %1929 = vmatpush1.bf16.msra.mxu0 0
  %1930 = vmatprep.subr.bf16.mxu0 0
  %1931 = vmatpush1.bf16.msra.mxu0 0
  %1932 = vmatprep.subr.bf16.mxu0 0
  %1933 = vmatpush1.bf16.msra.mxu0 0
  %1934 = vmatprep.subr.bf16.mxu0 0
  %1935 = vmatpush1.bf16.msra.mxu0 0
  %1936 = vmatprep.mubr.bf16.mxu0 0
  %1937 = vmatmul.mubr.bf16.gmra.mrb[0].mxu0 %v1356
  %v1938 = vpop.f32.mrb[0].mxu0
  %v1939 = vadd.f32 %v1851, %v1938
  %v1940 = vpop.f32.mrb[0].mxu0
  %v1941 = vpop.f32.mrb[0].mxu0
  %v1942 = vadd.f32 %v1854, %v1941
  %v1943 = vpop.f32.mrb[0].mxu0
  %1944 = vmatprep.mubr.bf16.mxu0 0
  %1945 = vmatmul.mubr.bf16.gmra.mrb[0].mxu0 %v1359
  %v1946 = vpop.f32.mrb[0].mxu0
  %v1947 = vadd.f32 %v1859, %v1946
  %v1948 = vpop.f32.mrb[0].mxu0
  %v1949 = vpop.f32.mrb[0].mxu0
  %v1950 = vadd.f32 %v1862, %v1949
  %v1951 = vpop.f32.mrb[0].mxu0
  %1952 = vmatprep.mubr.bf16.mxu0 0
  %1953 = vmatmul.mubr.bf16.gmra.mrb[0].mxu0 %v1362
  %v1954 = vpop.f32.mrb[0].mxu0
  %v1955 = vadd.f32 %v1867, %v1954
  %v1956 = vpop.f32.mrb[0].mxu0
  %v1957 = vpop.f32.mrb[0].mxu0
  %v1958 = vadd.f32 %v1870, %v1957
  %v1959 = vpop.f32.mrb[0].mxu0
  %1960 = vmatprep.mubr.bf16.mxu0 0
  %1961 = vmatmul.mubr.bf16.gmra.mrb[0].mxu0 %v1365
  %v1962 = vpop.f32.mrb[0].mxu0
  %v1963 = vadd.f32 %v1875, %v1962
  %v1964 = vpop.f32.mrb[0].mxu0
  %v1965 = vpop.f32.mrb[0].mxu0
  %v1966 = vadd.f32 %v1878, %v1965
  %v1967 = vpop.f32.mrb[0].mxu0
  %1968 = vmatprep.mubr.bf16.mxu0 0
  %1969 = vmatmul.mubr.bf16.gmra.mrb[0].mxu0 %v1368
  %v1970 = vpop.f32.mrb[0].mxu0
  %v1971 = vadd.f32 %v1883, %v1970
  %v1972 = vpop.f32.mrb[0].mxu0
  %v1973 = vpop.f32.mrb[0].mxu0
  %v1974 = vadd.f32 %v1886, %v1973
  %v1975 = vpop.f32.mrb[0].mxu0
  %1976 = vmatprep.mubr.bf16.mxu0 0
  %1977 = vmatmul.mubr.bf16.gmra.mrb[0].mxu0 %v1371
  %v1978 = vpop.f32.mrb[0].mxu0
  %v1979 = vadd.f32 %v1891, %v1978
  %v1980 = vpop.f32.mrb[0].mxu0
  %v1981 = vpop.f32.mrb[0].mxu0
  %v1982 = vadd.f32 %v1894, %v1981
  %v1983 = vpop.f32.mrb[0].mxu0
  %1984 = vmatprep.mubr.bf16.mxu0 0
  %1985 = vmatmul.mubr.bf16.gmra.mrb[0].mxu0 %v1374
  %v1986 = vpop.f32.mrb[0].mxu0
  %v1987 = vadd.f32 %v1899, %v1986
  %v1988 = vpop.f32.mrb[0].mxu0
  %v1989 = vpop.f32.mrb[0].mxu0
  %v1990 = vpop.f32.mrb[0].mxu0
  %1991 = vdwg.mxu0
  %v1992 = vmul.f32 %v1939, 0.2
  %v1993 = vmul.f32 %v1942, 0.2
  %v1994 = vmul.f32 %v1947, 0.2
  %v1995 = vmul.f32 %v1950, 0.2
  %v1996 = vmul.f32 %v1955, 0.2
  %v1997 = vmul.f32 %v1958, 0.2
  %v1998 = vmul.f32 %v1963, 0.2
  %v1999 = vmul.f32 %v1966, 0.2
  %v2000 = vmul.f32 %v1971, 0.2
  %v2001 = vmul.f32 %v1974, 0.2
  %v2002 = vmul.f32 %v1979, 0.2
  %v2003 = vmul.f32 %v1982, 0.2
  %v2004 = vmul.f32 %v1987, 0.2
  %v2005 = vmax.f32 %v1939, %v1992
  %v2006 = vmax.f32 %v1942, %v1993
  %v2007 = vmax.f32 %v1947, %v1994
  %v2008 = vmax.f32 %v1950, %v1995
  %v2009 = vmax.f32 %v1955, %v1996
  %v2010 = vmax.f32 %v1958, %v1997
  %v2011 = vmax.f32 %v1963, %v1998
  %v2012 = vmax.f32 %v1966, %v1999
  %v2013 = vmax.f32 %v1971, %v2000
  %v2014 = vmax.f32 %v1974, %v2001
  %v2015 = vmax.f32 %v1979, %v2002
  %v2016 = vmax.f32 %v1982, %v2003
  %v2017 = vmax.f32 %v1987, %v2004
  %v2018 = vld [vmem:[%s3] sm:$0xff]
  %v2019 = vld [vmem:[%s3 + $0x8] sm:$0xff]
  %v2020 = vld [vmem:[%s3 + $0x10] sm:$0xff]
  %v2021 = vld [vmem:[%s3 + $0x18] sm:$0xff]
  %v2022 = vld [vmem:[%s3 + $0x20] sm:$0xff]
  %v2023 = vld [vmem:[%s3 + $0x28] sm:$0xff]
  %v2024 = vld [vmem:[%s3 + $0x30] sm:$0xff]
  %v2025 = vld [vmem:[%s3 + $0x38] sm:$0xff]
  %v2026 = vld [vmem:[%s3 + $0x40] sm:$0xff]
  %v2027 = vld [vmem:[%s3 + $0x48] sm:$0xff]
  %v2028 = vld [vmem:[%s3 + $0x50] sm:$0xff]
  %v2029 = vld [vmem:[%s3 + $0x58] sm:$0xff]
  %v2030 = vld [vmem:[%s3 + $0x60] sm:$0x3]
  %v2031 = vld [vmem:[%s3 + $0x68] sm:$0xff]
  %v2032 = vld [vmem:[%s3 + $0x70] sm:$0xff]
  %v2033 = vld [vmem:[%s3 + $0x78] sm:$0xff]
  %v2034 = vld [vmem:[%s3 + $0x80] sm:$0xff]
  %v2035 = vld [vmem:[%s3 + $0x88] sm:$0xff]
  %v2036 = vld [vmem:[%s3 + $0x90] sm:$0xff]
  %v2037 = vld [vmem:[%s3 + $0x98] sm:$0xff]
  %v2038 = vld [vmem:[%s3 + $0xa0] sm:$0xff]
  %v2039 = vld [vmem:[%s3 + $0xa8] sm:$0xff]
  %v2040 = vld [vmem:[%s3 + $0xb0] sm:$0xff]
  %v2041 = vld [vmem:[%s3 + $0xb8] sm:$0xff]
  %v2042 = vld [vmem:[%s3 + $0xc0] sm:$0xff]
  %v2043 = vld [vmem:[%s3 + $0xc8] sm:$0x3]
  %v2044 = vld [vmem:[%s3 + $0xd0] sm:$0xff]
  %v2045 = vld [vmem:[%s3 + $0xd8] sm:$0xff]
  %v2046 = vld [vmem:[%s3 + $0xe0] sm:$0xff]
  %v2047 = vld [vmem:[%s3 + $0xe8] sm:$0xff]
  %v2048 = vld [vmem:[%s3 + $0xf0] sm:$0xff]
  %v2049 = vld [vmem:[%s3 + $0xf8] sm:$0xff]
  %v2050 = vld [vmem:[%s3 + $0x100] sm:$0xff]
  %v2051 = vld [vmem:[%s3 + $0x108] sm:$0xff]
  %v2052 = vld [vmem:[%s3 + $0x110] sm:$0xff]
  %v2053 = vld [vmem:[%s3 + $0x118] sm:$0xff]
  %v2054 = vld [vmem:[%s3 + $0x120] sm:$0xff]
  %v2055 = vld [vmem:[%s3 + $0x128] sm:$0xff]
  %v2056 = vld [vmem:[%s3 + $0x130] sm:$0x3]
  %v2057 = vld [vmem:[%s3 + $0x138] sm:$0xff]
  %v2058 = vld [vmem:[%s3 + $0x140] sm:$0xff]
  %v2059 = vld [vmem:[%s3 + $0x148] sm:$0xff]
  %v2060 = vld [vmem:[%s3 + $0x150] sm:$0xff]
  %v2061 = vld [vmem:[%s3 + $0x158] sm:$0xff]
  %v2062 = vld [vmem:[%s3 + $0x160] sm:$0xff]
  %v2063 = vld [vmem:[%s3 + $0x168] sm:$0xff]
  %v2064 = vld [vmem:[%s3 + $0x170] sm:$0xff]
  %v2065 = vld [vmem:[%s3 + $0x178] sm:$0xff]
  %v2066 = vld [vmem:[%s3 + $0x180] sm:$0xff]
  %v2067 = vld [vmem:[%s3 + $0x188] sm:$0xff]
  %v2068 = vld [vmem:[%s3 + $0x190] sm:$0xff]
  %v2069 = vld [vmem:[%s3 + $0x198] sm:$0x3]
  %v2070 = vld [vmem:[%s3 + $0x1a0] sm:$0xff]
  %v2071 = vld [vmem:[%s3 + $0x1a8] sm:$0xff]
  %v2072 = vld [vmem:[%s3 + $0x1b0] sm:$0xff]
  %v2073 = vld [vmem:[%s3 + $0x1b8] sm:$0xff]
  %v2074 = vld [vmem:[%s3 + $0x1c0] sm:$0xff]
  %v2075 = vld [vmem:[%s3 + $0x1c8] sm:$0xff]
  %v2076 = vld [vmem:[%s3 + $0x1d0] sm:$0xff]
  %v2077 = vld [vmem:[%s3 + $0x1d8] sm:$0xff]
  %v2078 = vld [vmem:[%s3 + $0x1e0] sm:$0xff]
  %v2079 = vld [vmem:[%s3 + $0x1e8] sm:$0xff]
  %v2080 = vld [vmem:[%s3 + $0x1f0] sm:$0xff]
  %v2081 = vld [vmem:[%s3 + $0x1f8] sm:$0xff]
  %v2082 = vld [vmem:[%s3 + $0x200] sm:$0x3]
  %v2083 = vld [vmem:[%s3 + $0x208] sm:$0xff]
  %v2084 = vld [vmem:[%s3 + $0x210] sm:$0xff]
  %v2085 = vld [vmem:[%s3 + $0x218] sm:$0xff]
  %v2086 = vld [vmem:[%s3 + $0x220] sm:$0xff]
  %v2087 = vld [vmem:[%s3 + $0x228] sm:$0xff]
  %v2088 = vld [vmem:[%s3 + $0x230] sm:$0xff]
  %v2089 = vld [vmem:[%s3 + $0x238] sm:$0xff]
  %v2090 = vld [vmem:[%s3 + $0x240] sm:$0xff]
  %v2091 = vld [vmem:[%s3 + $0x248] sm:$0xff]
  %v2092 = vld [vmem:[%s3 + $0x250] sm:$0xff]
  %v2093 = vld [vmem:[%s3 + $0x258] sm:$0xff]
  %v2094 = vld [vmem:[%s3 + $0x260] sm:$0xff]
  %v2095 = vld [vmem:[%s3 + $0x268] sm:$0x3]
  %v2096 = vld [vmem:[%s3 + $0x270] sm:$0xff]
  %v2097 = vld [vmem:[%s3 + $0x278] sm:$0xff]
  %v2098 = vld [vmem:[%s3 + $0x280] sm:$0xff]
  %v2099 = vld [vmem:[%s3 + $0x288] sm:$0xff]
  %v2100 = vld [vmem:[%s3 + $0x290] sm:$0xff]
  %v2101 = vld [vmem:[%s3 + $0x298] sm:$0xff]
  %v2102 = vld [vmem:[%s3 + $0x2a0] sm:$0xff]
  %v2103 = vld [vmem:[%s3 + $0x2a8] sm:$0xff]
  %v2104 = vld [vmem:[%s3 + $0x2b0] sm:$0xff]
  %v2105 = vld [vmem:[%s3 + $0x2b8] sm:$0xff]
  %v2106 = vld [vmem:[%s3 + $0x2c0] sm:$0xff]
  %v2107 = vld [vmem:[%s3 + $0x2c8] sm:$0xff]
  %v2108 = vld [vmem:[%s3 + $0x2d0] sm:$0x3]
  %v2109 = vld [vmem:[%s3 + $0x2d8] sm:$0xff]
  %v2110 = vld [vmem:[%s3 + $0x2e0] sm:$0xff]
  %v2111 = vld [vmem:[%s3 + $0x2e8] sm:$0xff]
  %v2112 = vld [vmem:[%s3 + $0x2f0] sm:$0xff]
  %v2113 = vld [vmem:[%s3 + $0x2f8] sm:$0xff]
  %v2114 = vld [vmem:[%s3 + $0x300] sm:$0xff]
  %v2115 = vld [vmem:[%s3 + $0x308] sm:$0xff]
  %v2116 = vld [vmem:[%s3 + $0x310] sm:$0xff]
  %v2117 = vld [vmem:[%s3 + $0x318] sm:$0xff]
  %v2118 = vld [vmem:[%s3 + $0x320] sm:$0xff]
  %v2119 = vld [vmem:[%s3 + $0x328] sm:$0xff]
  %v2120 = vld [vmem:[%s3 + $0x330] sm:$0xff]
  %v2121 = vld [vmem:[%s3 + $0x338] sm:$0x3]
  %v2122 = vld [vmem:[%s3 + $0x340] sm:$0xff]
  %v2123 = vld [vmem:[%s3 + $0x348] sm:$0xff]
  %v2124 = vld [vmem:[%s3 + $0x350] sm:$0xff]
  %v2125 = vld [vmem:[%s3 + $0x358] sm:$0xff]
  %v2126 = vld [vmem:[%s3 + $0x360] sm:$0xff]
  %v2127 = vld [vmem:[%s3 + $0x368] sm:$0xff]
  %v2128 = vld [vmem:[%s3 + $0x370] sm:$0xff]
  %v2129 = vld [vmem:[%s3 + $0x378] sm:$0xff]
  %v2130 = vld [vmem:[%s3 + $0x380] sm:$0xff]
  %v2131 = vld [vmem:[%s3 + $0x388] sm:$0xff]
  %v2132 = vld [vmem:[%s3 + $0x390] sm:$0xff]
  %v2133 = vld [vmem:[%s3 + $0x398] sm:$0xff]
  %v2134 = vld [vmem:[%s3 + $0x3a0] sm:$0x3]
  %v2135 = vmul.f32 %v2005, %v2018
  %v2136 = vmul.f32 %v2006, %v2019
  %v2137 = vmul.f32 %v2007, %v2020
  %v2138 = vmul.f32 %v2008, %v2021
  %v2139 = vmul.f32 %v2009, %v2022
  %v2140 = vmul.f32 %v2010, %v2023
  %v2141 = vmul.f32 %v2011, %v2024
  %v2142 = vmul.f32 %v2012, %v2025
  %v2143 = vmul.f32 %v2013, %v2026
  %v2144 = vmul.f32 %v2014, %v2027
  %v2145 = vmul.f32 %v2015, %v2028
  %v2146 = vmul.f32 %v2016, %v2029
  %v2147 = vmul.f32 %v2017, %v2030
  %v2148 = vmul.f32 %v2005, %v2031
  %v2149 = vmul.f32 %v2006, %v2032
  %v2150 = vmul.f32 %v2007, %v2033
  %v2151 = vmul.f32 %v2008, %v2034
  %v2152 = vmul.f32 %v2009, %v2035
  %v2153 = vmul.f32 %v2010, %v2036
  %v2154 = vmul.f32 %v2011, %v2037
  %v2155 = vmul.f32 %v2012, %v2038
  %v2156 = vmul.f32 %v2013, %v2039
  %v2157 = vmul.f32 %v2014, %v2040
  %v2158 = vmul.f32 %v2015, %v2041
  %v2159 = vmul.f32 %v2016, %v2042
  %v2160 = vmul.f32 %v2017, %v2043
  %v2161 = vmul.f32 %v2005, %v2044
  %v2162 = vmul.f32 %v2006, %v2045
  %v2163 = vmul.f32 %v2007, %v2046
  %v2164 = vmul.f32 %v2008, %v2047
  %v2165 = vmul.f32 %v2009, %v2048
  %v2166 = vmul.f32 %v2010, %v2049
  %v2167 = vmul.f32 %v2011, %v2050
  %v2168 = vmul.f32 %v2012, %v2051
  %v2169 = vmul.f32 %v2013, %v2052
  %v2170 = vmul.f32 %v2014, %v2053
  %v2171 = vmul.f32 %v2015, %v2054
  %v2172 = vmul.f32 %v2016, %v2055
  %v2173 = vmul.f32 %v2017, %v2056
  %v2174 = vmul.f32 %v2005, %v2057
  %v2175 = vmul.f32 %v2006, %v2058
  %v2176 = vmul.f32 %v2007, %v2059
  %v2177 = vmul.f32 %v2008, %v2060
  %v2178 = vmul.f32 %v2009, %v2061
  %v2179 = vmul.f32 %v2010, %v2062
  %v2180 = vmul.f32 %v2011, %v2063
  %v2181 = vmul.f32 %v2012, %v2064
  %v2182 = vmul.f32 %v2013, %v2065
  %v2183 = vmul.f32 %v2014, %v2066
  %v2184 = vmul.f32 %v2015, %v2067
  %v2185 = vmul.f32 %v2016, %v2068
  %v2186 = vmul.f32 %v2017, %v2069
  %v2187 = vmul.f32 %v2005, %v2070
  %v2188 = vmul.f32 %v2006, %v2071
  %v2189 = vmul.f32 %v2007, %v2072
  %v2190 = vmul.f32 %v2008, %v2073
  %v2191 = vmul.f32 %v2009, %v2074
  %v2192 = vmul.f32 %v2010, %v2075
  %v2193 = vmul.f32 %v2011, %v2076
  %v2194 = vmul.f32 %v2012, %v2077
  %v2195 = vmul.f32 %v2013, %v2078
  %v2196 = vmul.f32 %v2014, %v2079
  %v2197 = vmul.f32 %v2015, %v2080
  %v2198 = vmul.f32 %v2016, %v2081
  %v2199 = vmul.f32 %v2017, %v2082
  %v2200 = vmul.f32 %v2005, %v2083
  %v2201 = vmul.f32 %v2006, %v2084
  %v2202 = vmul.f32 %v2007, %v2085
  %v2203 = vmul.f32 %v2008, %v2086
  %v2204 = vmul.f32 %v2009, %v2087
  %v2205 = vmul.f32 %v2010, %v2088
  %v2206 = vmul.f32 %v2011, %v2089
  %v2207 = vmul.f32 %v2012, %v2090
  %v2208 = vmul.f32 %v2013, %v2091
  %v2209 = vmul.f32 %v2014, %v2092
  %v2210 = vmul.f32 %v2015, %v2093
  %v2211 = vmul.f32 %v2016, %v2094
  %v2212 = vmul.f32 %v2017, %v2095
  %v2213 = vmul.f32 %v2005, %v2096
  %v2214 = vmul.f32 %v2006, %v2097
  %v2215 = vmul.f32 %v2007, %v2098
  %v2216 = vmul.f32 %v2008, %v2099
  %v2217 = vmul.f32 %v2009, %v2100
  %v2218 = vmul.f32 %v2010, %v2101
  %v2219 = vmul.f32 %v2011, %v2102
  %v2220 = vmul.f32 %v2012, %v2103
  %v2221 = vmul.f32 %v2013, %v2104
  %v2222 = vmul.f32 %v2014, %v2105
  %v2223 = vmul.f32 %v2015, %v2106
  %v2224 = vmul.f32 %v2016, %v2107
  %v2225 = vmul.f32 %v2017, %v2108
  %v2226 = vmul.f32 %v2005, %v2109
  %v2227 = vmul.f32 %v2006, %v2110
  %v2228 = vmul.f32 %v2007, %v2111
  %v2229 = vmul.f32 %v2008, %v2112
  %v2230 = vmul.f32 %v2009, %v2113
  %v2231 = vmul.f32 %v2010, %v2114
  %v2232 = vmul.f32 %v2011, %v2115
  %v2233 = vmul.f32 %v2012, %v2116
  %v2234 = vmul.f32 %v2013, %v2117
  %v2235 = vmul.f32 %v2014, %v2118
  %v2236 = vmul.f32 %v2015, %v2119
  %v2237 = vmul.f32 %v2016, %v2120
  %v2238 = vmul.f32 %v2017, %v2121
  %v2239 = vmul.f32 %v2005, %v2122
  %v2240 = vmul.f32 %v2006, %v2123
  %v2241 = vmul.f32 %v2007, %v2124
  %v2242 = vmul.f32 %v2008, %v2125
  %v2243 = vmul.f32 %v2009, %v2126
  %v2244 = vmul.f32 %v2010, %v2127
  %v2245 = vmul.f32 %v2011, %v2128
  %v2246 = vmul.f32 %v2012, %v2129
  %v2247 = vmul.f32 %v2013, %v2130
  %v2248 = vmul.f32 %v2014, %v2131
  %v2249 = vmul.f32 %v2015, %v2132
  %v2250 = vmul.f32 %v2016, %v2133
  %v2251 = vmul.f32 %v2017, %v2134
  %2252 = vadd.xlane.f32.xlu0 %v2135
  %v2253 = vpop.xlane.xlu0 %2252
  %2254 = vadd.xlane.f32.xlu0 %v2136
  %v2255 = vpop.xlane.xlu0 %2254
  %2256 = vadd.xlane.f32.xlu0 %v2137
  %v2257 = vpop.xlane.xlu0 %2256
  %2258 = vadd.xlane.f32.xlu0 %v2138
  %v2259 = vpop.xlane.xlu0 %2258
  %2260 = vadd.xlane.f32.xlu0 %v2139
  %v2261 = vpop.xlane.xlu0 %2260
  %2262 = vadd.xlane.f32.xlu0 %v2140
  %v2263 = vpop.xlane.xlu0 %2262
  %2264 = vadd.xlane.f32.xlu0 %v2141
  %v2265 = vpop.xlane.xlu0 %2264
  %2266 = vadd.xlane.f32.xlu0 %v2142
  %v2267 = vpop.xlane.xlu0 %2266
  %2268 = vadd.xlane.f32.xlu0 %v2143
  %v2269 = vpop.xlane.xlu0 %2268
  %2270 = vadd.xlane.f32.xlu0 %v2144
  %v2271 = vpop.xlane.xlu0 %2270
  %2272 = vadd.xlane.f32.xlu0 %v2145
  %v2273 = vpop.xlane.xlu0 %2272
  %2274 = vadd.xlane.f32.xlu0 %v2146
  %v2275 = vpop.xlane.xlu0 %2274
  %vm2276 = vcmask 1041408
  %v2277 = vsel %vm2276, %v2147, 0.0
  %2278 = vadd.xlane.f32.xlu0 %v2277
  %v2279 = vpop.xlane.xlu0 %2278
  %2280 = vadd.xlane.f32.xlu0 %v2148
  %v2281 = vpop.xlane.xlu0 %2280
  %2282 = vadd.xlane.f32.xlu0 %v2149
  %v2283 = vpop.xlane.xlu0 %2282
  %2284 = vadd.xlane.f32.xlu0 %v2150
  %v2285 = vpop.xlane.xlu0 %2284
  %2286 = vadd.xlane.f32.xlu0 %v2151
  %v2287 = vpop.xlane.xlu0 %2286
  %2288 = vadd.xlane.f32.xlu0 %v2152
  %v2289 = vpop.xlane.xlu0 %2288
  %2290 = vadd.xlane.f32.xlu0 %v2153
  %v2291 = vpop.xlane.xlu0 %2290
  %2292 = vadd.xlane.f32.xlu0 %v2154
  %v2293 = vpop.xlane.xlu0 %2292
  %2294 = vadd.xlane.f32.xlu0 %v2155
  %v2295 = vpop.xlane.xlu0 %2294
  %2296 = vadd.xlane.f32.xlu0 %v2156
  %v2297 = vpop.xlane.xlu0 %2296
  %2298 = vadd.xlane.f32.xlu0 %v2157
  %v2299 = vpop.xlane.xlu0 %2298
  %2300 = vadd.xlane.f32.xlu0 %v2158
  %v2301 = vpop.xlane.xlu0 %2300
  %2302 = vadd.xlane.f32.xlu0 %v2159
  %v2303 = vpop.xlane.xlu0 %2302
  %v2304 = vsel %vm2276, %v2160, 0.0
  %2305 = vadd.xlane.f32.xlu0 %v2304
  %v2306 = vpop.xlane.xlu0 %2305
  %2307 = vadd.xlane.f32.xlu0 %v2161
  %v2308 = vpop.xlane.xlu0 %2307
  %2309 = vadd.xlane.f32.xlu0 %v2162
  %v2310 = vpop.xlane.xlu0 %2309
  %2311 = vadd.xlane.f32.xlu0 %v2163
  %v2312 = vpop.xlane.xlu0 %2311
  %2313 = vadd.xlane.f32.xlu0 %v2164
  %v2314 = vpop.xlane.xlu0 %2313
  %2315 = vadd.xlane.f32.xlu0 %v2165
  %v2316 = vpop.xlane.xlu0 %2315
  %2317 = vadd.xlane.f32.xlu0 %v2166
  %v2318 = vpop.xlane.xlu0 %2317
  %2319 = vadd.xlane.f32.xlu0 %v2167
  %v2320 = vpop.xlane.xlu0 %2319
  %2321 = vadd.xlane.f32.xlu0 %v2168
  %v2322 = vpop.xlane.xlu0 %2321
  %2323 = vadd.xlane.f32.xlu0 %v2169
  %v2324 = vpop.xlane.xlu0 %2323
  %2325 = vadd.xlane.f32.xlu0 %v2170
  %v2326 = vpop.xlane.xlu0 %2325
  %2327 = vadd.xlane.f32.xlu0 %v2171
  %v2328 = vpop.xlane.xlu0 %2327
  %2329 = vadd.xlane.f32.xlu0 %v2172
  %v2330 = vpop.xlane.xlu0 %2329
  %v2331 = vsel %vm2276, %v2173, 0.0
  %2332 = vadd.xlane.f32.xlu0 %v2331
  %v2333 = vpop.xlane.xlu0 %2332
  %2334 = vadd.xlane.f32.xlu0 %v2174
  %v2335 = vpop.xlane.xlu0 %2334
  %2336 = vadd.xlane.f32.xlu0 %v2175
  %v2337 = vpop.xlane.xlu0 %2336
  %2338 = vadd.xlane.f32.xlu0 %v2176
  %v2339 = vpop.xlane.xlu0 %2338
  %2340 = vadd.xlane.f32.xlu0 %v2177
  %v2341 = vpop.xlane.xlu0 %2340
  %2342 = vadd.xlane.f32.xlu0 %v2178
  %v2343 = vpop.xlane.xlu0 %2342
  %2344 = vadd.xlane.f32.xlu0 %v2179
  %v2345 = vpop.xlane.xlu0 %2344
  %2346 = vadd.xlane.f32.xlu0 %v2180
  %v2347 = vpop.xlane.xlu0 %2346
  %2348 = vadd.xlane.f32.xlu0 %v2181
  %v2349 = vpop.xlane.xlu0 %2348
  %2350 = vadd.xlane.f32.xlu0 %v2182
  %v2351 = vpop.xlane.xlu0 %2350
  %2352 = vadd.xlane.f32.xlu0 %v2183
  %v2353 = vpop.xlane.xlu0 %2352
  %2354 = vadd.xlane.f32.xlu0 %v2184
  %v2355 = vpop.xlane.xlu0 %2354
  %2356 = vadd.xlane.f32.xlu0 %v2185
  %v2357 = vpop.xlane.xlu0 %2356
  %v2358 = vsel %vm2276, %v2186, 0.0
  %2359 = vadd.xlane.f32.xlu0 %v2358
  %v2360 = vpop.xlane.xlu0 %2359
  %2361 = vadd.xlane.f32.xlu0 %v2187
  %v2362 = vpop.xlane.xlu0 %2361
  %2363 = vadd.xlane.f32.xlu0 %v2188
  %v2364 = vpop.xlane.xlu0 %2363
  %2365 = vadd.xlane.f32.xlu0 %v2189
  %v2366 = vpop.xlane.xlu0 %2365
  %2367 = vadd.xlane.f32.xlu0 %v2190
  %v2368 = vpop.xlane.xlu0 %2367
  %2369 = vadd.xlane.f32.xlu0 %v2191
  %v2370 = vpop.xlane.xlu0 %2369
  %2371 = vadd.xlane.f32.xlu0 %v2192
  %v2372 = vpop.xlane.xlu0 %2371
  %2373 = vadd.xlane.f32.xlu0 %v2193
  %v2374 = vpop.xlane.xlu0 %2373
  %2375 = vadd.xlane.f32.xlu0 %v2194
  %v2376 = vpop.xlane.xlu0 %2375
  %2377 = vadd.xlane.f32.xlu0 %v2195
  %v2378 = vpop.xlane.xlu0 %2377
  %2379 = vadd.xlane.f32.xlu0 %v2196
  %v2380 = vpop.xlane.xlu0 %2379
  %2381 = vadd.xlane.f32.xlu0 %v2197
  %v2382 = vpop.xlane.xlu0 %2381
  %2383 = vadd.xlane.f32.xlu0 %v2198
  %v2384 = vpop.xlane.xlu0 %2383
  %v2385 = vsel %vm2276, %v2199, 0.0
  %2386 = vadd.xlane.f32.xlu0 %v2385
  %v2387 = vpop.xlane.xlu0 %2386
  %2388 = vadd.xlane.f32.xlu0 %v2200
  %v2389 = vpop.xlane.xlu0 %2388
  %2390 = vadd.xlane.f32.xlu0 %v2201
  %v2391 = vpop.xlane.xlu0 %2390
  %2392 = vadd.xlane.f32.xlu0 %v2202
  %v2393 = vpop.xlane.xlu0 %2392
  %2394 = vadd.xlane.f32.xlu0 %v2203
  %v2395 = vpop.xlane.xlu0 %2394
  %2396 = vadd.xlane.f32.xlu0 %v2204
  %v2397 = vpop.xlane.xlu0 %2396
  %2398 = vadd.xlane.f32.xlu0 %v2205
  %v2399 = vpop.xlane.xlu0 %2398
  %2400 = vadd.xlane.f32.xlu0 %v2206
  %v2401 = vpop.xlane.xlu0 %2400
  %2402 = vadd.xlane.f32.xlu0 %v2207
  %v2403 = vpop.xlane.xlu0 %2402
  %2404 = vadd.xlane.f32.xlu0 %v2208
  %v2405 = vpop.xlane.xlu0 %2404
  %2406 = vadd.xlane.f32.xlu0 %v2209
  %v2407 = vpop.xlane.xlu0 %2406
  %2408 = vadd.xlane.f32.xlu0 %v2210
  %v2409 = vpop.xlane.xlu0 %2408
  %2410 = vadd.xlane.f32.xlu0 %v2211
  %v2411 = vpop.xlane.xlu0 %2410
  %v2412 = vsel %vm2276, %v2212, 0.0
  %2413 = vadd.xlane.f32.xlu0 %v2412
  %v2414 = vpop.xlane.xlu0 %2413
  %2415 = vadd.xlane.f32.xlu0 %v2213
  %v2416 = vpop.xlane.xlu0 %2415
  %2417 = vadd.xlane.f32.xlu0 %v2214
  %v2418 = vpop.xlane.xlu0 %2417
  %2419 = vadd.xlane.f32.xlu0 %v2215
  %v2420 = vpop.xlane.xlu0 %2419
  %2421 = vadd.xlane.f32.xlu0 %v2216
  %v2422 = vpop.xlane.xlu0 %2421
  %2423 = vadd.xlane.f32.xlu0 %v2217
  %v2424 = vpop.xlane.xlu0 %2423
  %2425 = vadd.xlane.f32.xlu0 %v2218
  %v2426 = vpop.xlane.xlu0 %2425
  %2427 = vadd.xlane.f32.xlu0 %v2219
  %v2428 = vpop.xlane.xlu0 %2427
  %2429 = vadd.xlane.f32.xlu0 %v2220
  %v2430 = vpop.xlane.xlu0 %2429
  %2431 = vadd.xlane.f32.xlu0 %v2221
  %v2432 = vpop.xlane.xlu0 %2431
  %2433 = vadd.xlane.f32.xlu0 %v2222
  %v2434 = vpop.xlane.xlu0 %2433
  %2435 = vadd.xlane.f32.xlu0 %v2223
  %v2436 = vpop.xlane.xlu0 %2435
  %2437 = vadd.xlane.f32.xlu0 %v2224
  %v2438 = vpop.xlane.xlu0 %2437
  %v2439 = vsel %vm2276, %v2225, 0.0
  %2440 = vadd.xlane.f32.xlu0 %v2439
  %v2441 = vpop.xlane.xlu0 %2440
  %2442 = vadd.xlane.f32.xlu0 %v2226
  %v2443 = vpop.xlane.xlu0 %2442
  %2444 = vadd.xlane.f32.xlu0 %v2227
  %v2445 = vpop.xlane.xlu0 %2444
  %2446 = vadd.xlane.f32.xlu0 %v2228
  %v2447 = vpop.xlane.xlu0 %2446
  %2448 = vadd.xlane.f32.xlu0 %v2229
  %v2449 = vpop.xlane.xlu0 %2448
  %2450 = vadd.xlane.f32.xlu0 %v2230
  %v2451 = vpop.xlane.xlu0 %2450
  %2452 = vadd.xlane.f32.xlu0 %v2231
  %v2453 = vpop.xlane.xlu0 %2452
  %2454 = vadd.xlane.f32.xlu0 %v2232
  %v2455 = vpop.xlane.xlu0 %2454
  %2456 = vadd.xlane.f32.xlu0 %v2233
  %v2457 = vpop.xlane.xlu0 %2456
  %2458 = vadd.xlane.f32.xlu0 %v2234
  %v2459 = vpop.xlane.xlu0 %2458
  %2460 = vadd.xlane.f32.xlu0 %v2235
  %v2461 = vpop.xlane.xlu0 %2460
  %2462 = vadd.xlane.f32.xlu0 %v2236
  %v2463 = vpop.xlane.xlu0 %2462
  %2464 = vadd.xlane.f32.xlu0 %v2237
  %v2465 = vpop.xlane.xlu0 %2464
  %v2466 = vsel %vm2276, %v2238, 0.0
  %2467 = vadd.xlane.f32.xlu0 %v2466
  %v2468 = vpop.xlane.xlu0 %2467
  %2469 = vadd.xlane.f32.xlu0 %v2239
  %v2470 = vpop.xlane.xlu0 %2469
  %2471 = vadd.xlane.f32.xlu0 %v2240
  %v2472 = vpop.xlane.xlu0 %2471
  %2473 = vadd.xlane.f32.xlu0 %v2241
  %v2474 = vpop.xlane.xlu0 %2473
  %2475 = vadd.xlane.f32.xlu0 %v2242
  %v2476 = vpop.xlane.xlu0 %2475
  %2477 = vadd.xlane.f32.xlu0 %v2243
  %v2478 = vpop.xlane.xlu0 %2477
  %2479 = vadd.xlane.f32.xlu0 %v2244
  %v2480 = vpop.xlane.xlu0 %2479
  %2481 = vadd.xlane.f32.xlu0 %v2245
  %v2482 = vpop.xlane.xlu0 %2481
  %2483 = vadd.xlane.f32.xlu0 %v2246
  %v2484 = vpop.xlane.xlu0 %2483
  %2485 = vadd.xlane.f32.xlu0 %v2247
  %v2486 = vpop.xlane.xlu0 %2485
  %2487 = vadd.xlane.f32.xlu0 %v2248
  %v2488 = vpop.xlane.xlu0 %2487
  %2489 = vadd.xlane.f32.xlu0 %v2249
  %v2490 = vpop.xlane.xlu0 %2489
  %2491 = vadd.xlane.f32.xlu0 %v2250
  %v2492 = vpop.xlane.xlu0 %2491
  %v2493 = vsel %vm2276, %v2251, 0.0
  %2494 = vadd.xlane.f32.xlu0 %v2493
  %v2495 = vpop.xlane.xlu0 %2494
  %v2496 = vld [vmem:[%s4] sm:$0xff]
  %v2497 = vld [vmem:[%s4 + $0x8] sm:$0xff]
  %v2498 = vld [vmem:[%s4 + $0x10] sm:$0xff]
  %v2499 = vld [vmem:[%s4 + $0x18] sm:$0xff]
  %v2500 = vld [vmem:[%s4 + $0x20] sm:$0xff]
  %v2501 = vld [vmem:[%s4 + $0x28] sm:$0xff]
  %v2502 = vld [vmem:[%s4 + $0x30] sm:$0xff]
  %v2503 = vld [vmem:[%s4 + $0x38] sm:$0xff]
  %v2504 = vld [vmem:[%s4 + $0x40] sm:$0xff]
  %v2505 = vld [vmem:[%s4 + $0x48] sm:$0xff]
  %v2506 = vld [vmem:[%s4 + $0x50] sm:$0xff]
  %v2507 = vld [vmem:[%s4 + $0x58] sm:$0xff]
  %v2508 = vld [vmem:[%s4 + $0x60] sm:$0x3]
  %v2626 = vlaneseq
  %v2627 = vand.u32 %v2626, 127
  %v2628 = vlaneseq
  %v2629 = vshrl.u32 %v2628, 7
  %v2630 = vsub.s32 %v2627, %v2629
  %v2631 = vrot.slane %v2253, %v2630
  %v2632 = vadd.s32 %v2627, 4294967288
  %v2633 = vlaneseq
  %v2634 = vshrl.u32 %v2633, 7
  %v2635 = vsub.s32 %v2632, %v2634
  %v2636 = vrot.slane %v2255, %v2635
  %vm2637 = vcmask 130112
  %v2638 = vsel %vm2637, %v2636, %v2631
  %v2639 = vadd.s32 %v2627, 4294967280
  %v2640 = vlaneseq
  %v2641 = vshrl.u32 %v2640, 7
  %v2642 = vsub.s32 %v2639, %v2641
  %v2643 = vrot.slane %v2257, %v2642
  %vm2644 = vcmask 195712
  %v2645 = vsel %vm2644, %v2643, %v2638
  %v2646 = vadd.s32 %v2627, 4294967272
  %v2647 = vlaneseq
  %v2648 = vshrl.u32 %v2647, 7
  %v2649 = vsub.s32 %v2646, %v2648
  %v2650 = vrot.slane %v2259, %v2649
  %vm2651 = vcmask 261312
  %v2652 = vsel %vm2651, %v2650, %v2645
  %v2653 = vadd.s32 %v2627, 4294967264
  %v2654 = vlaneseq
  %v2655 = vshrl.u32 %v2654, 7
  %v2656 = vsub.s32 %v2653, %v2655
  %v2657 = vrot.slane %v2261, %v2656
  %vm2658 = vcmask 326912
  %v2659 = vsel %vm2658, %v2657, %v2652
  %v2660 = vadd.s32 %v2627, 4294967256
  %v2661 = vlaneseq
  %v2662 = vshrl.u32 %v2661, 7
  %v2663 = vsub.s32 %v2660, %v2662
  %v2664 = vrot.slane %v2263, %v2663
  %vm2665 = vcmask 392512
  %v2666 = vsel %vm2665, %v2664, %v2659
  %v2667 = vadd.s32 %v2627, 4294967248
  %v2668 = vlaneseq
  %v2669 = vshrl.u32 %v2668, 7
  %v2670 = vsub.s32 %v2667, %v2669
  %v2671 = vrot.slane %v2265, %v2670
  %vm2672 = vcmask 458112
  %v2673 = vsel %vm2672, %v2671, %v2666
  %v2674 = vadd.s32 %v2627, 4294967240
  %v2675 = vlaneseq
  %v2676 = vshrl.u32 %v2675, 7
  %v2677 = vsub.s32 %v2674, %v2676
  %v2678 = vrot.slane %v2267, %v2677
  %vm2679 = vcmask 523712
  %v2680 = vsel %vm2679, %v2678, %v2673
  %v2681 = vadd.s32 %v2627, 4294967232
  %v2682 = vlaneseq
  %v2683 = vshrl.u32 %v2682, 7
  %v2684 = vsub.s32 %v2681, %v2683
  %v2685 = vrot.slane %v2269, %v2684
  %vm2686 = vcmask 589312
  %v2687 = vsel %vm2686, %v2685, %v2680
  %v2688 = vadd.s32 %v2627, 4294967224
  %v2689 = vlaneseq
  %v2690 = vshrl.u32 %v2689, 7
  %v2691 = vsub.s32 %v2688, %v2690
  %v2692 = vrot.slane %v2271, %v2691
  %vm2693 = vcmask 654912
  %v2694 = vsel %vm2693, %v2692, %v2687
  %v2695 = vadd.s32 %v2627, 4294967216
  %v2696 = vlaneseq
  %v2697 = vshrl.u32 %v2696, 7
  %v2698 = vsub.s32 %v2695, %v2697
  %v2699 = vrot.slane %v2273, %v2698
  %vm2700 = vcmask 720512
  %v2701 = vsel %vm2700, %v2699, %v2694
  %v2702 = vadd.s32 %v2627, 4294967208
  %v2703 = vlaneseq
  %v2704 = vshrl.u32 %v2703, 7
  %v2705 = vsub.s32 %v2702, %v2704
  %v2706 = vrot.slane %v2275, %v2705
  %vm2707 = vcmask 786112
  %v2708 = vsel %vm2707, %v2706, %v2701
  %v2709 = vadd.s32 %v2627, 4294967200
  %v2710 = vlaneseq
  %v2711 = vshrl.u32 %v2710, 7
  %v2712 = vsub.s32 %v2709, %v2711
  %v2713 = vrot.slane %v2279, %v2712
  %vm2714 = vcmask 851712
  %v2715 = vsel %vm2714, %v2713, %v2708
  %v2716 = vlaneseq
  %v2717 = vshrl.u32 %v2716, 7
  %v2718 = vsub.s32 %v2627, %v2717
  %v2719 = vrot.slane %v2281, %v2718
  %v2720 = vlaneseq
  %v2721 = vshrl.u32 %v2720, 7
  %v2722 = vsub.s32 %v2632, %v2721
  %v2723 = vrot.slane %v2283, %v2722
  %v2724 = vsel %vm2637, %v2723, %v2719
  %v2725 = vlaneseq
  %v2726 = vshrl.u32 %v2725, 7
  %v2727 = vsub.s32 %v2639, %v2726
  %v2728 = vrot.slane %v2285, %v2727
  %v2729 = vsel %vm2644, %v2728, %v2724
  %v2730 = vlaneseq
  %v2731 = vshrl.u32 %v2730, 7
  %v2732 = vsub.s32 %v2646, %v2731
  %v2733 = vrot.slane %v2287, %v2732
  %v2734 = vsel %vm2651, %v2733, %v2729
  %v2735 = vlaneseq
  %v2736 = vshrl.u32 %v2735, 7
  %v2737 = vsub.s32 %v2653, %v2736
  %v2738 = vrot.slane %v2289, %v2737
  %v2739 = vsel %vm2658, %v2738, %v2734
  %v2740 = vlaneseq
  %v2741 = vshrl.u32 %v2740, 7
  %v2742 = vsub.s32 %v2660, %v2741
  %v2743 = vrot.slane %v2291, %v2742
  %v2744 = vsel %vm2665, %v2743, %v2739
  %v2745 = vlaneseq
  %v2746 = vshrl.u32 %v2745, 7
  %v2747 = vsub.s32 %v2667, %v2746
  %v2748 = vrot.slane %v2293, %v2747
  %v2749 = vsel %vm2672, %v2748, %v2744
  %v2750 = vlaneseq
  %v2751 = vshrl.u32 %v2750, 7
  %v2752 = vsub.s32 %v2674, %v2751
  %v2753 = vrot.slane %v2295, %v2752
  %v2754 = vsel %vm2679, %v2753, %v2749
  %v2755 = vlaneseq
  %v2756 = vshrl.u32 %v2755, 7
  %v2757 = vsub.s32 %v2681, %v2756
  %v2758 = vrot.slane %v2297, %v2757
  %v2759 = vsel %vm2686, %v2758, %v2754
  %v2760 = vlaneseq
  %v2761 = vshrl.u32 %v2760, 7
  %v2762 = vsub.s32 %v2688, %v2761
  %v2763 = vrot.slane %v2299, %v2762
  %v2764 = vsel %vm2693, %v2763, %v2759
  %v2765 = vlaneseq
  %v2766 = vshrl.u32 %v2765, 7
  %v2767 = vsub.s32 %v2695, %v2766
  %v2768 = vrot.slane %v2301, %v2767
  %v2769 = vsel %vm2700, %v2768, %v2764
  %v2770 = vlaneseq
  %v2771 = vshrl.u32 %v2770, 7
  %v2772 = vsub.s32 %v2702, %v2771
  %v2773 = vrot.slane %v2303, %v2772
  %v2774 = vsel %vm2707, %v2773, %v2769
  %v2775 = vlaneseq
  %v2776 = vshrl.u32 %v2775, 7
  %v2777 = vsub.s32 %v2709, %v2776
  %v2778 = vrot.slane %v2306, %v2777
  %v2779 = vsel %vm2714, %v2778, %v2774
  %v2780 = vlaneseq
  %v2781 = vshrl.u32 %v2780, 7
  %v2782 = vsub.s32 %v2627, %v2781
  %v2783 = vrot.slane %v2308, %v2782
  %v2784 = vlaneseq
  %v2785 = vshrl.u32 %v2784, 7
  %v2786 = vsub.s32 %v2632, %v2785
  %v2787 = vrot.slane %v2310, %v2786
  %v2788 = vsel %vm2637, %v2787, %v2783
  %v2789 = vlaneseq
  %v2790 = vshrl.u32 %v2789, 7
  %v2791 = vsub.s32 %v2639, %v2790
  %v2792 = vrot.slane %v2312, %v2791
  %v2793 = vsel %vm2644, %v2792, %v2788
  %v2794 = vlaneseq
  %v2795 = vshrl.u32 %v2794, 7
  %v2796 = vsub.s32 %v2646, %v2795
  %v2797 = vrot.slane %v2314, %v2796
  %v2798 = vsel %vm2651, %v2797, %v2793
  %v2799 = vlaneseq
  %v2800 = vshrl.u32 %v2799, 7
  %v2801 = vsub.s32 %v2653, %v2800
  %v2802 = vrot.slane %v2316, %v2801
  %v2803 = vsel %vm2658, %v2802, %v2798
  %v2804 = vlaneseq
  %v2805 = vshrl.u32 %v2804, 7
  %v2806 = vsub.s32 %v2660, %v2805
  %v2807 = vrot.slane %v2318, %v2806
  %v2808 = vsel %vm2665, %v2807, %v2803
  %v2809 = vlaneseq
  %v2810 = vshrl.u32 %v2809, 7
  %v2811 = vsub.s32 %v2667, %v2810
  %v2812 = vrot.slane %v2320, %v2811
  %v2813 = vsel %vm2672, %v2812, %v2808
  %v2814 = vlaneseq
  %v2815 = vshrl.u32 %v2814, 7
  %v2816 = vsub.s32 %v2674, %v2815
  %v2817 = vrot.slane %v2322, %v2816
  %v2818 = vsel %vm2679, %v2817, %v2813
  %v2819 = vlaneseq
  %v2820 = vshrl.u32 %v2819, 7
  %v2821 = vsub.s32 %v2681, %v2820
  %v2822 = vrot.slane %v2324, %v2821
  %v2823 = vsel %vm2686, %v2822, %v2818
  %v2824 = vlaneseq
  %v2825 = vshrl.u32 %v2824, 7
  %v2826 = vsub.s32 %v2688, %v2825
  %v2827 = vrot.slane %v2326, %v2826
  %v2828 = vsel %vm2693, %v2827, %v2823
  %v2829 = vlaneseq
  %v2830 = vshrl.u32 %v2829, 7
  %v2831 = vsub.s32 %v2695, %v2830
  %v2832 = vrot.slane %v2328, %v2831
  %v2833 = vsel %vm2700, %v2832, %v2828
  %v2834 = vlaneseq
  %v2835 = vshrl.u32 %v2834, 7
  %v2836 = vsub.s32 %v2702, %v2835
  %v2837 = vrot.slane %v2330, %v2836
  %v2838 = vsel %vm2707, %v2837, %v2833
  %v2839 = vlaneseq
  %v2840 = vshrl.u32 %v2839, 7
  %v2841 = vsub.s32 %v2709, %v2840
  %v2842 = vrot.slane %v2333, %v2841
  %v2843 = vsel %vm2714, %v2842, %v2838
  %v2844 = vlaneseq
  %v2845 = vshrl.u32 %v2844, 7
  %v2846 = vsub.s32 %v2627, %v2845
  %v2847 = vrot.slane %v2335, %v2846
  %v2848 = vlaneseq
  %v2849 = vshrl.u32 %v2848, 7
  %v2850 = vsub.s32 %v2632, %v2849
  %v2851 = vrot.slane %v2337, %v2850
  %v2852 = vsel %vm2637, %v2851, %v2847
  %v2853 = vlaneseq
  %v2854 = vshrl.u32 %v2853, 7
  %v2855 = vsub.s32 %v2639, %v2854
  %v2856 = vrot.slane %v2339, %v2855
  %v2857 = vsel %vm2644, %v2856, %v2852
  %v2858 = vlaneseq
  %v2859 = vshrl.u32 %v2858, 7
  %v2860 = vsub.s32 %v2646, %v2859
  %v2861 = vrot.slane %v2341, %v2860
  %v2862 = vsel %vm2651, %v2861, %v2857
  %v2863 = vlaneseq
  %v2864 = vshrl.u32 %v2863, 7
  %v2865 = vsub.s32 %v2653, %v2864
  %v2866 = vrot.slane %v2343, %v2865
  %v2867 = vsel %vm2658, %v2866, %v2862
  %v2868 = vlaneseq
  %v2869 = vshrl.u32 %v2868, 7
  %v2870 = vsub.s32 %v2660, %v2869
  %v2871 = vrot.slane %v2345, %v2870
  %v2872 = vsel %vm2665, %v2871, %v2867
  %v2873 = vlaneseq
  %v2874 = vshrl.u32 %v2873, 7
  %v2875 = vsub.s32 %v2667, %v2874
  %v2876 = vrot.slane %v2347, %v2875
  %v2877 = vsel %vm2672, %v2876, %v2872
  %v2878 = vlaneseq
  %v2879 = vshrl.u32 %v2878, 7
  %v2880 = vsub.s32 %v2674, %v2879
  %v2881 = vrot.slane %v2349, %v2880
  %v2882 = vsel %vm2679, %v2881, %v2877
  %v2883 = vlaneseq
  %v2884 = vshrl.u32 %v2883, 7
  %v2885 = vsub.s32 %v2681, %v2884
  %v2886 = vrot.slane %v2351, %v2885
  %v2887 = vsel %vm2686, %v2886, %v2882
  %v2888 = vlaneseq
  %v2889 = vshrl.u32 %v2888, 7
  %v2890 = vsub.s32 %v2688, %v2889
  %v2891 = vrot.slane %v2353, %v2890
  %v2892 = vsel %vm2693, %v2891, %v2887
  %v2893 = vlaneseq
  %v2894 = vshrl.u32 %v2893, 7
  %v2895 = vsub.s32 %v2695, %v2894
  %v2896 = vrot.slane %v2355, %v2895
  %v2897 = vsel %vm2700, %v2896, %v2892
  %v2898 = vlaneseq
  %v2899 = vshrl.u32 %v2898, 7
  %v2900 = vsub.s32 %v2702, %v2899
  %v2901 = vrot.slane %v2357, %v2900
  %v2902 = vsel %vm2707, %v2901, %v2897
  %v2903 = vlaneseq
  %v2904 = vshrl.u32 %v2903, 7
  %v2905 = vsub.s32 %v2709, %v2904
  %v2906 = vrot.slane %v2360, %v2905
  %v2907 = vsel %vm2714, %v2906, %v2902
  %v2908 = vlaneseq
  %v2909 = vshrl.u32 %v2908, 7
  %v2910 = vsub.s32 %v2627, %v2909
  %v2911 = vrot.slane %v2362, %v2910
  %v2912 = vlaneseq
  %v2913 = vshrl.u32 %v2912, 7
  %v2914 = vsub.s32 %v2632, %v2913
  %v2915 = vrot.slane %v2364, %v2914
  %v2916 = vsel %vm2637, %v2915, %v2911
  %v2917 = vlaneseq
  %v2918 = vshrl.u32 %v2917, 7
  %v2919 = vsub.s32 %v2639, %v2918
  %v2920 = vrot.slane %v2366, %v2919
  %v2921 = vsel %vm2644, %v2920, %v2916
  %v2922 = vlaneseq
  %v2923 = vshrl.u32 %v2922, 7
  %v2924 = vsub.s32 %v2646, %v2923
  %v2925 = vrot.slane %v2368, %v2924
  %v2926 = vsel %vm2651, %v2925, %v2921
  %v2927 = vlaneseq
  %v2928 = vshrl.u32 %v2927, 7
  %v2929 = vsub.s32 %v2653, %v2928
  %v2930 = vrot.slane %v2370, %v2929
  %v2931 = vsel %vm2658, %v2930, %v2926
  %v2932 = vlaneseq
  %v2933 = vshrl.u32 %v2932, 7
  %v2934 = vsub.s32 %v2660, %v2933
  %v2935 = vrot.slane %v2372, %v2934
  %v2936 = vsel %vm2665, %v2935, %v2931
  %v2937 = vlaneseq
  %v2938 = vshrl.u32 %v2937, 7
  %v2939 = vsub.s32 %v2667, %v2938
  %v2940 = vrot.slane %v2374, %v2939
  %v2941 = vsel %vm2672, %v2940, %v2936
  %v2942 = vlaneseq
  %v2943 = vshrl.u32 %v2942, 7
  %v2944 = vsub.s32 %v2674, %v2943
  %v2945 = vrot.slane %v2376, %v2944
  %v2946 = vsel %vm2679, %v2945, %v2941
  %v2947 = vlaneseq
  %v2948 = vshrl.u32 %v2947, 7
  %v2949 = vsub.s32 %v2681, %v2948
  %v2950 = vrot.slane %v2378, %v2949
  %v2951 = vsel %vm2686, %v2950, %v2946
  %v2952 = vlaneseq
  %v2953 = vshrl.u32 %v2952, 7
  %v2954 = vsub.s32 %v2688, %v2953
  %v2955 = vrot.slane %v2380, %v2954
  %v2956 = vsel %vm2693, %v2955, %v2951
  %v2957 = vlaneseq
  %v2958 = vshrl.u32 %v2957, 7
  %v2959 = vsub.s32 %v2695, %v2958
  %v2960 = vrot.slane %v2382, %v2959
  %v2961 = vsel %vm2700, %v2960, %v2956
  %v2962 = vlaneseq
  %v2963 = vshrl.u32 %v2962, 7
  %v2964 = vsub.s32 %v2702, %v2963
  %v2965 = vrot.slane %v2384, %v2964
  %v2966 = vsel %vm2707, %v2965, %v2961
  %v2967 = vlaneseq
  %v2968 = vshrl.u32 %v2967, 7
  %v2969 = vsub.s32 %v2709, %v2968
  %v2970 = vrot.slane %v2387, %v2969
  %v2971 = vsel %vm2714, %v2970, %v2966
  %v2972 = vlaneseq
  %v2973 = vshrl.u32 %v2972, 7
  %v2974 = vsub.s32 %v2627, %v2973
  %v2975 = vrot.slane %v2389, %v2974
  %v2976 = vlaneseq
  %v2977 = vshrl.u32 %v2976, 7
  %v2978 = vsub.s32 %v2632, %v2977
  %v2979 = vrot.slane %v2391, %v2978
  %v2980 = vsel %vm2637, %v2979, %v2975
  %v2981 = vlaneseq
  %v2982 = vshrl.u32 %v2981, 7
  %v2983 = vsub.s32 %v2639, %v2982
  %v2984 = vrot.slane %v2393, %v2983
  %v2985 = vsel %vm2644, %v2984, %v2980
  %v2986 = vlaneseq
  %v2987 = vshrl.u32 %v2986, 7
  %v2988 = vsub.s32 %v2646, %v2987
  %v2989 = vrot.slane %v2395, %v2988
  %v2990 = vsel %vm2651, %v2989, %v2985
  %v2991 = vlaneseq
  %v2992 = vshrl.u32 %v2991, 7
  %v2993 = vsub.s32 %v2653, %v2992
  %v2994 = vrot.slane %v2397, %v2993
  %v2995 = vsel %vm2658, %v2994, %v2990
  %v2996 = vlaneseq
  %v2997 = vshrl.u32 %v2996, 7
  %v2998 = vsub.s32 %v2660, %v2997
  %v2999 = vrot.slane %v2399, %v2998
  %v3000 = vsel %vm2665, %v2999, %v2995
  %v3001 = vlaneseq
  %v3002 = vshrl.u32 %v3001, 7
  %v3003 = vsub.s32 %v2667, %v3002
  %v3004 = vrot.slane %v2401, %v3003
  %v3005 = vsel %vm2672, %v3004, %v3000
  %v3006 = vlaneseq
  %v3007 = vshrl.u32 %v3006, 7
  %v3008 = vsub.s32 %v2674, %v3007
  %v3009 = vrot.slane %v2403, %v3008
  %v3010 = vsel %vm2679, %v3009, %v3005
  %v3011 = vlaneseq
  %v3012 = vshrl.u32 %v3011, 7
  %v3013 = vsub.s32 %v2681, %v3012
  %v3014 = vrot.slane %v2405, %v3013
  %v3015 = vsel %vm2686, %v3014, %v3010
  %v3016 = vlaneseq
  %v3017 = vshrl.u32 %v3016, 7
  %v3018 = vsub.s32 %v2688, %v3017
  %v3019 = vrot.slane %v2407, %v3018
  %v3020 = vsel %vm2693, %v3019, %v3015
  %v3021 = vlaneseq
  %v3022 = vshrl.u32 %v3021, 7
  %v3023 = vsub.s32 %v2695, %v3022
  %v3024 = vrot.slane %v2409, %v3023
  %v3025 = vsel %vm2700, %v3024, %v3020
  %v3026 = vlaneseq
  %v3027 = vshrl.u32 %v3026, 7
  %v3028 = vsub.s32 %v2702, %v3027
  %v3029 = vrot.slane %v2411, %v3028
  %v3030 = vsel %vm2707, %v3029, %v3025
  %v3031 = vlaneseq
  %v3032 = vshrl.u32 %v3031, 7
  %v3033 = vsub.s32 %v2709, %v3032
  %v3034 = vrot.slane %v2414, %v3033
  %v3035 = vsel %vm2714, %v3034, %v3030
  %v3036 = vlaneseq
  %v3037 = vshrl.u32 %v3036, 7
  %v3038 = vsub.s32 %v2627, %v3037
  %v3039 = vrot.slane %v2416, %v3038
  %v3040 = vlaneseq
  %v3041 = vshrl.u32 %v3040, 7
  %v3042 = vsub.s32 %v2632, %v3041
  %v3043 = vrot.slane %v2418, %v3042
  %v3044 = vsel %vm2637, %v3043, %v3039
  %v3045 = vlaneseq
  %v3046 = vshrl.u32 %v3045, 7
  %v3047 = vsub.s32 %v2639, %v3046
  %v3048 = vrot.slane %v2420, %v3047
  %v3049 = vsel %vm2644, %v3048, %v3044
  %v3050 = vlaneseq
  %v3051 = vshrl.u32 %v3050, 7
  %v3052 = vsub.s32 %v2646, %v3051
  %v3053 = vrot.slane %v2422, %v3052
  %v3054 = vsel %vm2651, %v3053, %v3049
  %v3055 = vlaneseq
  %v3056 = vshrl.u32 %v3055, 7
  %v3057 = vsub.s32 %v2653, %v3056
  %v3058 = vrot.slane %v2424, %v3057
  %v3059 = vsel %vm2658, %v3058, %v3054
  %v3060 = vlaneseq
  %v3061 = vshrl.u32 %v3060, 7
  %v3062 = vsub.s32 %v2660, %v3061
  %v3063 = vrot.slane %v2426, %v3062
  %v3064 = vsel %vm2665, %v3063, %v3059
  %v3065 = vlaneseq
  %v3066 = vshrl.u32 %v3065, 7
  %v3067 = vsub.s32 %v2667, %v3066
  %v3068 = vrot.slane %v2428, %v3067
  %v3069 = vsel %vm2672, %v3068, %v3064
  %v3070 = vlaneseq
  %v3071 = vshrl.u32 %v3070, 7
  %v3072 = vsub.s32 %v2674, %v3071
  %v3073 = vrot.slane %v2430, %v3072
  %v3074 = vsel %vm2679, %v3073, %v3069
  %v3075 = vlaneseq
  %v3076 = vshrl.u32 %v3075, 7
  %v3077 = vsub.s32 %v2681, %v3076
  %v3078 = vrot.slane %v2432, %v3077
  %v3079 = vsel %vm2686, %v3078, %v3074
  %v3080 = vlaneseq
  %v3081 = vshrl.u32 %v3080, 7
  %v3082 = vsub.s32 %v2688, %v3081
  %v3083 = vrot.slane %v2434, %v3082
  %v3084 = vsel %vm2693, %v3083, %v3079
  %v3085 = vlaneseq
  %v3086 = vshrl.u32 %v3085, 7
  %v3087 = vsub.s32 %v2695, %v3086
  %v3088 = vrot.slane %v2436, %v3087
  %v3089 = vsel %vm2700, %v3088, %v3084
  %v3090 = vlaneseq
  %v3091 = vshrl.u32 %v3090, 7
  %v3092 = vsub.s32 %v2702, %v3091
  %v3093 = vrot.slane %v2438, %v3092
  %v3094 = vsel %vm2707, %v3093, %v3089
  %v3095 = vlaneseq
  %v3096 = vshrl.u32 %v3095, 7
  %v3097 = vsub.s32 %v2709, %v3096
  %v3098 = vrot.slane %v2441, %v3097
  %v3099 = vsel %vm2714, %v3098, %v3094
  %v3100 = vlaneseq
  %v3101 = vshrl.u32 %v3100, 7
  %v3102 = vsub.s32 %v2627, %v3101
  %v3103 = vrot.slane %v2443, %v3102
  %v3104 = vlaneseq
  %v3105 = vshrl.u32 %v3104, 7
  %v3106 = vsub.s32 %v2632, %v3105
  %v3107 = vrot.slane %v2445, %v3106
  %v3108 = vsel %vm2637, %v3107, %v3103
  %v3109 = vlaneseq
  %v3110 = vshrl.u32 %v3109, 7
  %v3111 = vsub.s32 %v2639, %v3110
  %v3112 = vrot.slane %v2447, %v3111
  %v3113 = vsel %vm2644, %v3112, %v3108
  %v3114 = vlaneseq
  %v3115 = vshrl.u32 %v3114, 7
  %v3116 = vsub.s32 %v2646, %v3115
  %v3117 = vrot.slane %v2449, %v3116
  %v3118 = vsel %vm2651, %v3117, %v3113
  %v3119 = vlaneseq
  %v3120 = vshrl.u32 %v3119, 7
  %v3121 = vsub.s32 %v2653, %v3120
  %v3122 = vrot.slane %v2451, %v3121
  %v3123 = vsel %vm2658, %v3122, %v3118
  %v3124 = vlaneseq
  %v3125 = vshrl.u32 %v3124, 7
  %v3126 = vsub.s32 %v2660, %v3125
  %v3127 = vrot.slane %v2453, %v3126
  %v3128 = vsel %vm2665, %v3127, %v3123
  %v3129 = vlaneseq
  %v3130 = vshrl.u32 %v3129, 7
  %v3131 = vsub.s32 %v2667, %v3130
  %v3132 = vrot.slane %v2455, %v3131
  %v3133 = vsel %vm2672, %v3132, %v3128
  %v3134 = vlaneseq
  %v3135 = vshrl.u32 %v3134, 7
  %v3136 = vsub.s32 %v2674, %v3135
  %v3137 = vrot.slane %v2457, %v3136
  %v3138 = vsel %vm2679, %v3137, %v3133
  %v3139 = vlaneseq
  %v3140 = vshrl.u32 %v3139, 7
  %v3141 = vsub.s32 %v2681, %v3140
  %v3142 = vrot.slane %v2459, %v3141
  %v3143 = vsel %vm2686, %v3142, %v3138
  %v3144 = vlaneseq
  %v3145 = vshrl.u32 %v3144, 7
  %v3146 = vsub.s32 %v2688, %v3145
  %v3147 = vrot.slane %v2461, %v3146
  %v3148 = vsel %vm2693, %v3147, %v3143
  %v3149 = vlaneseq
  %v3150 = vshrl.u32 %v3149, 7
  %v3151 = vsub.s32 %v2695, %v3150
  %v3152 = vrot.slane %v2463, %v3151
  %v3153 = vsel %vm2700, %v3152, %v3148
  %v3154 = vlaneseq
  %v3155 = vshrl.u32 %v3154, 7
  %v3156 = vsub.s32 %v2702, %v3155
  %v3157 = vrot.slane %v2465, %v3156
  %v3158 = vsel %vm2707, %v3157, %v3153
  %v3159 = vlaneseq
  %v3160 = vshrl.u32 %v3159, 7
  %v3161 = vsub.s32 %v2709, %v3160
  %v3162 = vrot.slane %v2468, %v3161
  %v3163 = vsel %vm2714, %v3162, %v3158
  %v3164 = vlaneseq
  %v3165 = vshrl.u32 %v3164, 7
  %v3166 = vsub.s32 %v2627, %v3165
  %v3167 = vrot.slane %v2470, %v3166
  %v3168 = vlaneseq
  %v3169 = vshrl.u32 %v3168, 7
  %v3170 = vsub.s32 %v2632, %v3169
  %v3171 = vrot.slane %v2472, %v3170
  %v3172 = vsel %vm2637, %v3171, %v3167
  %v3173 = vlaneseq
  %v3174 = vshrl.u32 %v3173, 7
  %v3175 = vsub.s32 %v2639, %v3174
  %v3176 = vrot.slane %v2474, %v3175
  %v3177 = vsel %vm2644, %v3176, %v3172
  %v3178 = vlaneseq
  %v3179 = vshrl.u32 %v3178, 7
  %v3180 = vsub.s32 %v2646, %v3179
  %v3181 = vrot.slane %v2476, %v3180
  %v3182 = vsel %vm2651, %v3181, %v3177
  %v3183 = vlaneseq
  %v3184 = vshrl.u32 %v3183, 7
  %v3185 = vsub.s32 %v2653, %v3184
  %v3186 = vrot.slane %v2478, %v3185
  %v3187 = vsel %vm2658, %v3186, %v3182
  %v3188 = vlaneseq
  %v3189 = vshrl.u32 %v3188, 7
  %v3190 = vsub.s32 %v2660, %v3189
  %v3191 = vrot.slane %v2480, %v3190
  %v3192 = vsel %vm2665, %v3191, %v3187
  %v3193 = vlaneseq
  %v3194 = vshrl.u32 %v3193, 7
  %v3195 = vsub.s32 %v2667, %v3194
  %v3196 = vrot.slane %v2482, %v3195
  %v3197 = vsel %vm2672, %v3196, %v3192
  %v3198 = vlaneseq
  %v3199 = vshrl.u32 %v3198, 7
  %v3200 = vsub.s32 %v2674, %v3199
  %v3201 = vrot.slane %v2484, %v3200
  %v3202 = vsel %vm2679, %v3201, %v3197
  %v3203 = vlaneseq
  %v3204 = vshrl.u32 %v3203, 7
  %v3205 = vsub.s32 %v2681, %v3204
  %v3206 = vrot.slane %v2486, %v3205
  %v3207 = vsel %vm2686, %v3206, %v3202
  %v3208 = vlaneseq
  %v3209 = vshrl.u32 %v3208, 7
  %v3210 = vsub.s32 %v2688, %v3209
  %v3211 = vrot.slane %v2488, %v3210
  %v3212 = vsel %vm2693, %v3211, %v3207
  %v3213 = vlaneseq
  %v3214 = vshrl.u32 %v3213, 7
  %v3215 = vsub.s32 %v2695, %v3214
  %v3216 = vrot.slane %v2490, %v3215
  %v3217 = vsel %vm2700, %v3216, %v3212
  %v3218 = vlaneseq
  %v3219 = vshrl.u32 %v3218, 7
  %v3220 = vsub.s32 %v2702, %v3219
  %v3221 = vrot.slane %v2492, %v3220
  %v3222 = vsel %vm2707, %v3221, %v3217
  %v3223 = vlaneseq
  %v3224 = vshrl.u32 %v3223, 7
  %v3225 = vsub.s32 %v2709, %v3224
  %v3226 = vrot.slane %v2495, %v3225
  %v3227 = vsel %vm2714, %v3226, %v3222
  %vm3228 = vcmask 1041409
  %v3229 = vsel %vm3228, %v2779, %v2715
  %vm3230 = vcmask 1042434
  %v3231 = vsel %vm3230, %v2843, %v3229
  %vm3232 = vcmask 1043459
  %v3233 = vsel %vm3232, %v2907, %v3231
  %vm3234 = vcmask 1044484
  %v3235 = vsel %vm3234, %v2971, %v3233
  %vm3236 = vcmask 1045509
  %v3237 = vsel %vm3236, %v3035, %v3235
  %vm3238 = vcmask 1046534
  %v3239 = vsel %vm3238, %v3099, %v3237
  %vm3240 = vcmask 1047559
  %v3241 = vsel %vm3240, %v3163, %v3239
  %vm3242 = vcmask 801792
  %v3243 = vsel %vm3242, %v3241, 0
  %v3245 = vsel %vm3242, %v3227, 0
  %v3248 = vsel %vm2276, %v2508, 0
  %3250 = vmatprep.subr.mxu0 0.0
  %3251 = vmatpush1.msra.mxu0 %v2496
  %3252 = vmatprep.subr.mxu0 0.0
  %3253 = vmatpush1.msra.mxu0 %v2497
  %3254 = vmatprep.subr.mxu0 0.0
  %3255 = vmatpush1.msra.mxu0 %v2498
  %3256 = vmatprep.subr.mxu0 0.0
  %3257 = vmatpush1.msra.mxu0 %v2499
  %3258 = vmatprep.subr.mxu0 0.0
  %3259 = vmatpush1.msra.mxu0 %v2500
  %3260 = vmatprep.subr.mxu0 0.0
  %3261 = vmatpush1.msra.mxu0 %v2501
  %3262 = vmatprep.subr.mxu0 0.0
  %3263 = vmatpush1.msra.mxu0 %v2502
  %3264 = vmatprep.subr.mxu0 0.0
  %3265 = vmatpush1.msra.mxu0 %v2503
  %3266 = vmatprep.subr.mxu0 0.0
  %3267 = vmatpush1.msra.mxu0 %v2504
  %3268 = vmatprep.subr.mxu0 0.0
  %3269 = vmatpush1.msra.mxu0 %v2505
  %3270 = vmatprep.subr.mxu0 0.0
  %3271 = vmatpush1.msra.mxu0 %v2506
  %3272 = vmatprep.subr.mxu0 0.0
  %3273 = vmatpush1.msra.mxu0 %v2507
  %3274 = vmatprep.subr.mxu0 0.0
  %3275 = vmatpush1.msra.mxu0 %v3248
  %3276 = vmatprep.subr.mxu0 0.0
  %3277 = vmatpush1.msra.mxu0 0.0
  %3278 = vmatprep.subr.mxu0 0.0
  %3279 = vmatpush1.msra.mxu0 0.0
  %3280 = vmatprep.subr.mxu0 0.0
  %3281 = vmatpush1.msra.mxu0 0.0
  %3282 = vmatprep.subr.mxu0 0.0
  %3283 = vmatpush1.msra.mxu0 0.0
  %3284 = vmatprep.subr.mxu0 0.0
  %3285 = vmatpush1.msra.mxu0 0.0
  %3286 = vmatprep.subr.mxu0 0.0
  %3287 = vmatpush1.msra.mxu0 0.0
  %3288 = vmatprep.subr.mxu0 0.0
  %3289 = vmatpush1.msra.mxu0 0.0
  %3290 = vmatprep.subr.mxu0 0.0
  %3291 = vmatpush1.msra.mxu0 0.0
  %3292 = vmatprep.subr.mxu0 0.0
  %3293 = vmatpush1.msra.mxu0 0.0
  %3294 = vmatprep.subr.mxu0 0.0
  %3295 = vmatpush1.msra.mxu0 0.0
  %3296 = vmatprep.subr.mxu0 0.0
  %3297 = vmatpush1.msra.mxu0 0.0
  %3298 = vmatprep.subr.mxu0 0.0
  %3299 = vmatpush1.msra.mxu0 0.0
  %3300 = vmatprep.subr.mxu0 0.0
  %3301 = vmatpush1.msra.mxu0 0.0
  %3302 = vmatprep.subr.mxu0 0.0
  %3303 = vmatpush1.msra.mxu0 0.0
  %3304 = vmatprep.subr.mxu0 0.0
  %3305 = vmatpush1.msra.mxu0 0.0
  %3306 = vmatprep.subr.mxu0 0.0
  %3307 = vmatpush1.msra.mxu0 0.0
  %3308 = vmatprep.subr.mxu0 0.0
  %3309 = vmatpush1.msra.mxu0 0.0
  %3310 = vmatprep.subr.mxu0 0.0
  %3311 = vmatpush1.msra.mxu0 0.0
  %3312 = vmatprep.subr.mxu0 0.0
  %3313 = vmatpush1.msra.mxu0 0.0
  %3314 = vmatprep.mubr.f32.mxu0 0.0
  %3315 = vmatmul.mubr.f32.gmra.mrb[0].mxu0 %v3243
  %v3316 = vpop.f32.mrb[0].mxu0
  %v3317 = vadd.f32 0.0, %v3316
  %v3318 = vpop.f32.mrb[0].mxu0
  %3319 = vmatprep.mubr.f32.mxu0 0.0
  %3320 = vmatmul.mubr.f32.gmra.mrb[0].mxu0 %v3245
  %v3321 = vpop.f32.mrb[0].mxu0
  %v3322 = vadd.f32 0.0, %v3321
  %v3323 = vpop.f32.mrb[0].mxu0
  %3324 = vdwg.mxu0
  %vm3325 = vcmask 15360
  %3326 = vst.msk [vmem:[%s5] sm:$0xff] %vm3325, %v3317
  %vm3327 = vcmask 8192
  %3328 = vst.msk [vmem:[%s5 + $0x8] sm:$0x1] %vm3327, %v3322
  // Predicated region
  $region22: #{discriminator_forward.9} parent=0 // pred_check
    _
  $region23: #{discriminator_forward.9} parent=0 // pred_check_branch
    %3330 = sbr.rel (0) target = $region25
  $region24: #{discriminator_forward.9} parent=0 // pred_region
    _
  $region25: #{discriminator_forward.9} parent=0 // pred_fallthru
    _
  // Predicated region
  $region26: #{discriminator_forward.9} parent=0 // pred_check
    _
  $region27: #{discriminator_forward.9} parent=0 // pred_check_branch
    %3332 = sbr.rel (0) target = $region29
  $region28: #{discriminator_forward.9} parent=0 // pred_region
    _
  $region29: #{discriminator_forward.9} parent=0 // pred_fallthru
    _

</llo_original>
